<compile_context>
chip_gen: v7x
topology: tpu7x:2x2x1
jax: 0.10.0
libtpu: 0.0.40
codegen_flags: <defaults>
</compile_context>

<pallas_src>
import functools
import math

import jax
import jax.numpy as jnp
from jax import lax
from jax.experimental import pallas as pl
from jax.experimental.pallas import tpu as pltpu


_MXU_DTYPE = jnp.bfloat16          # matmul operand dtype (accumulation is always f32)
_LN_EPS = 1e-5
_LANE = 128                        # pad d_model (trailing/lane dim) to a multiple of this
_VMEM_LIMIT = 48 * 1024 * 1024     # explicit scoped-VMEM budget (fits v7x's 64 MiB physical)


def _round_up(x, m):
    return (x + m - 1) // m * m


# ----------------------------------------------------------------------------
# In-kernel helpers (values already resident in VMEM / vregs)
# ----------------------------------------------------------------------------

def _linear(x, w, b, relu=False):
    """y = x @ w + b.  Weights are pre-transposed (in_features, out_features) bf16."""
    y = lax.dot_general(x.astype(_MXU_DTYPE), w.astype(_MXU_DTYPE),
                        (((1,), (0,)), ((), ())),
                        preferred_element_type=jnp.float32)
    y = y + b.astype(jnp.float32)
    if relu:
        y = jnp.maximum(y, 0.0)
    return y


def _layernorm(x, g, b, d_model):
    """LayerNorm over the true (unpadded) d_model lanes; padded lanes stay exactly zero."""
    ep = x.shape[-1]
    x = x.astype(jnp.float32)
    inv_n = 1.0 / d_model
    mu = jnp.sum(x, axis=-1, keepdims=True) * inv_n         # padded lanes are zero
    xc = x - mu
    if ep > d_model:
        lane = lax.broadcasted_iota(jnp.int32, x.shape, x.ndim - 1)
        xc = jnp.where(lane < d_model, xc, 0.0)
    var = jnp.sum(xc * xc, axis=-1, keepdims=True) * inv_n
    return xc * lax.rsqrt(var + _LN_EPS) * g.astype(jnp.float32) + b.astype(jnp.float32)


def _mha_context(q, k, v, *, nhead, d_model):
    """Batched multi-head attention context (without the output projection).

    q: (B, Lq, Ep), k/v: (B, Lk, Ep); the nhead heads occupy lanes [0, d_model) (the trailing
    dim may be lane-padded with zeros).  Scores are computed per batch element via dot_general
    batch dims -- no (B*L)^2 block-diagonal slab, no masking.  Head outputs are packed side by
    side into one lane-dense (B, Lq, Ep) slab so the caller runs a single output projection.
    """
    dh = d_model // nhead
    ep = q.shape[-1]
    qs = (q * (1.0 / math.sqrt(dh))).astype(_MXU_DTYPE)
    ks = k.astype(_MXU_DTYPE)
    vs = v.astype(_MXU_DTYPE)
    heads = []
    for h in range(nhead):
        sl = slice(h * dh, (h + 1) * dh)
        s = jnp.einsum('bqd,bkd->bqk', qs[..., sl], ks[..., sl],
                       preferred_element_type=jnp.float32)
        s = s - jnp.max(s, axis=-1, keepdims=True)
        p = jnp.exp(s)
        p = p / jnp.sum(p, axis=-1, keepdims=True)           # exact softmax (f32)
        heads.append(jnp.einsum('bqk,bkd->bqd', p.astype(_MXU_DTYPE), vs[..., sl],
                                preferred_element_type=jnp.float32))
    if ep > d_model:
        heads.append(jnp.zeros(q.shape[:-1] + (ep - d_model,), jnp.float32))
    return jnp.concatenate(heads, axis=-1)                   # (B, Lq, Ep), pad lanes zero


# ----------------------------------------------------------------------------
# Fused stack kernels: one grid step == one transformer layer for one batch block
# ----------------------------------------------------------------------------

def _encoder_layer_kernel(x_ref, in_w, in_b, out_w, out_b, n1_g, n1_b,
                          lin1_w, lin1_b, lin2_w, lin2_b, n2_g, n2_b,
                          fin_g, fin_b, o_ref, *, nhead, d_model, n_layers):
    layer = pl.program_id(1)

    @pl.when(layer == 0)
    def _():
        o_ref[...] = x_ref[...]

    nb, s, ep = o_ref.shape
    rows = nb * s
    x = o_ref[...].astype(jnp.float32).reshape(rows, ep)

    # --- self attention (fused QKV projection, per-batch scores, single out-proj) -----
    qkv = _linear(x, in_w[...], in_b[...])                   # (rows, 3*Ep)
    q = qkv[:, :ep].reshape(nb, s, ep)
    k = qkv[:, ep:2 * ep].reshape(nb, s, ep)
    v = qkv[:, 2 * ep:].reshape(nb, s, ep)
    ctx = _mha_context(q, k, v, nhead=nhead, d_model=d_model).reshape(rows, ep)
    a = _linear(ctx, out_w[...], out_b[...])
    x = _layernorm(x + a, n1_g[...], n1_b[...], d_model)

    # --- feed-forward (the (rows, 2048) intermediate never leaves VMEM) ----------------
    h = _linear(x, lin1_w[...], lin1_b[...], relu=True)
    h = _linear(h, lin2_w[...], lin2_b[...])
    x = _layernorm(x + h, n2_g[...], n2_b[...], d_model)

    is_last = layer == n_layers - 1

    @pl.when(layer != n_layers - 1)
    def _():
        o_ref[...] = x.reshape(nb, s, ep).astype(o_ref.dtype)

    @pl.when(is_last)
    def _():
        xf = _layernorm(x, fin_g[...], fin_b[...], d_model)   # final encoder LayerNorm
        o_ref[...] = xf.reshape(nb, s, ep).astype(o_ref.dtype)


def _decoder_layer_kernel(y_ref, mem_ref,
                          sa_v_w, sa_v_b, sa_out_w, sa_out_b, n1_g, n1_b,
                          ca_q_w, ca_q_b, ca_kv_w, ca_kv_b, ca_out_w, ca_out_b,
                          n2_g, n2_b, lin1_w, lin1_b, lin2_w, lin2_b, n3_g, n3_b,
                          fin_g, fin_b, o_ref, *, nhead, d_model, n_layers):
    layer = pl.program_id(1)

    @pl.when(layer == 0)
    def _():
        o_ref[...] = y_ref[...]

    nb, t, ep = o_ref.shape                  # t == 1: one target position per batch element
    y = o_ref[...].astype(jnp.float32).reshape(nb, ep)
    mem3 = mem_ref[...].astype(jnp.float32)  # (nb, S, Ep) encoder memory (VMEM resident)
    s_len = mem3.shape[1]

    # --- self attention: tgt length 1 => softmax over a single key is identity, so the
    #     attention output is exactly the V projection (Q/K/scores/softmax elided, exact).
    v = _linear(y, sa_v_w[...], sa_v_b[...])
    a = _linear(v, sa_out_w[...], sa_out_b[...])
    y = _layernorm(y + a, n1_g[...], n1_b[...], d_model)

    # --- cross attention over the encoder memory ---------------------------------------
    q = _linear(y, ca_q_w[...], ca_q_b[...]).reshape(nb, 1, ep)
    kv = _linear(mem3.reshape(nb * s_len, ep), ca_kv_w[...], ca_kv_b[...])   # (nb*S, 2Ep)
    k = kv[:, :ep].reshape(nb, s_len, ep)
    vv = kv[:, ep:].reshape(nb, s_len, ep)
    ctx = _mha_context(q, k, vv, nhead=nhead, d_model=d_model).reshape(nb, ep)
    a = _linear(ctx, ca_out_w[...], ca_out_b[...])
    y = _layernorm(y + a, n2_g[...], n2_b[...], d_model)

    # --- feed-forward -------------------------------------------------------------------
    h = _linear(y, lin1_w[...], lin1_b[...], relu=True)
    h = _linear(h, lin2_w[...], lin2_b[...])
    y = _layernorm(y + h, n3_g[...], n3_b[...], d_model)

    is_last = layer == n_layers - 1

    @pl.when(layer != n_layers - 1)
    def _():
        o_ref[...] = y.reshape(nb, t, ep).astype(o_ref.dtype)

    @pl.when(is_last)
    def _():
        yf = _layernorm(y, fin_g[...], fin_b[...], d_model)   # final decoder LayerNorm
        o_ref[...] = yf.reshape(nb, t, ep).astype(o_ref.dtype)


# ----------------------------------------------------------------------------
# pallas_call wrappers
# ----------------------------------------------------------------------------

def _weight_spec(shape):
    """Per-layer stacked weight: leading layer axis squeezed, indexed by the layer grid dim."""
    nd = len(shape)

    def idx(b, l):
        return (l,) + (0,) * nd

    return pl.BlockSpec((None,) + tuple(shape), idx)


def _shared_spec(shape):
    nd = len(shape)

    def idx(b, l):
        return (0,) * nd

    return pl.BlockSpec(tuple(shape), idx)


def _batch_spec(block_batch, tail_shape):
    nd = len(tail_shape)

    def idx(b, l):
        return (b,) + (0,) * nd

    return pl.BlockSpec((block_batch,) + tuple(tail_shape), idx)


def encoder_stack(x, p, *, nhead, d_model, batch_block=1, vmem_limit=_VMEM_LIMIT):
    n, s, ep = x.shape
    assert n % batch_block == 0
    n_layers = p["in_w"].shape[0]
    dff = p["lin1_w"].shape[-1]
    kernel = functools.partial(_encoder_layer_kernel, nhead=nhead,
                               d_model=d_model, n_layers=n_layers)
    act = _batch_spec(batch_block, (s, ep))
    return pl.pallas_call(
        kernel,
        out_shape=jax.ShapeDtypeStruct((n, s, ep), jnp.float32),
        grid=(n // batch_block, n_layers),
        in_specs=[
            act,
            _weight_spec((ep, 3 * ep)), _weight_spec((1, 3 * ep)),
            _weight_spec((ep, ep)), _weight_spec((1, ep)),
            _weight_spec((1, ep)), _weight_spec((1, ep)),
            _weight_spec((ep, dff)), _weight_spec((1, dff)),
            _weight_spec((dff, ep)), _weight_spec((1, ep)),
            _weight_spec((1, ep)), _weight_spec((1, ep)),
            _shared_spec((1, ep)), _shared_spec((1, ep)),
        ],
        out_specs=act,
        compiler_params=pltpu.CompilerParams(
            dimension_semantics=("parallel", "arbitrary"),
            vmem_limit_bytes=vmem_limit),
    )(x, p["in_w"], p["in_b"], p["out_w"], p["out_b"], p["n1_g"], p["n1_b"],
      p["lin1_w"], p["lin1_b"], p["lin2_w"], p["lin2_b"], p["n2_g"], p["n2_b"],
      p["norm_g"], p["norm_b"])


def decoder_stack(y, mem, p, *, nhead, d_model, batch_block=None, vmem_limit=_VMEM_LIMIT):
    n, t, ep = y.shape                        # t == 1
    s = mem.shape[1]
    if batch_block is None:
        batch_block = n                       # decoder activations are tiny: one block
    assert n % batch_block == 0
    n_layers = p["sa_v_w"].shape[0]
    dff = p["lin1_w"].shape[-1]
    kernel = functools.partial(_decoder_layer_kernel, nhead=nhead,
                               d_model=d_model, n_layers=n_layers)
    act = _batch_spec(batch_block, (t, ep))
    mem_spec = _batch_spec(batch_block, (s, ep))
    return pl.pallas_call(
        kernel,
        out_shape=jax.ShapeDtypeStruct((n, t, ep), jnp.float32),
        grid=(n // batch_block, n_layers),
        in_specs=[
            act, mem_spec,
            _weight_spec((ep, ep)), _weight_spec((1, ep)),          # self-attn V proj
            _weight_spec((ep, ep)), _weight_spec((1, ep)),          # self-attn out proj
            _weight_spec((1, ep)), _weight_spec((1, ep)),           # norm1
            _weight_spec((ep, ep)), _weight_spec((1, ep)),          # cross-attn Q proj
            _weight_spec((ep, 2 * ep)), _weight_spec((1, 2 * ep)),  # cross-attn KV proj
            _weight_spec((ep, ep)), _weight_spec((1, ep)),          # cross-attn out proj
            _weight_spec((1, ep)), _weight_spec((1, ep)),           # norm2
            _weight_spec((ep, dff)), _weight_spec((1, dff)),        # ffn lin1
            _weight_spec((dff, ep)), _weight_spec((1, ep)),         # ffn lin2
            _weight_spec((1, ep)), _weight_spec((1, ep)),           # norm3
            _shared_spec((1, ep)), _shared_spec((1, ep)),           # final decoder norm
        ],
        out_specs=act,
        compiler_params=pltpu.CompilerParams(
            dimension_semantics=("parallel", "arbitrary"),
            vmem_limit_bytes=vmem_limit),
    )(y, mem,
      p["sa_v_w"], p["sa_v_b"], p["sa_out_w"], p["sa_out_b"], p["n1_g"], p["n1_b"],
      p["ca_q_w"], p["ca_q_b"], p["ca_kv_w"], p["ca_kv_b"],
      p["ca_out_w"], p["ca_out_b"], p["n2_g"], p["n2_b"],
      p["lin1_w"], p["lin1_b"], p["lin2_w"], p["lin2_b"], p["n3_g"], p["n3_b"],
      p["norm_g"], p["norm_b"])


# ----------------------------------------------------------------------------
# Model forward (only input-prep reshapes / lane padding live outside the kernels)
# ----------------------------------------------------------------------------

def transformer_model_forward(params, src, *, d_feat, nhead):
    n = src.shape[0]
    ep = _round_up(d_feat, _LANE)
    x = src.reshape(n, d_feat, -1)               # (N, E, T)
    t = x.shape[-1]
    x = jnp.transpose(x, (0, 2, 1))              # (N, T, E)
    if ep > d_feat:
        x = jnp.pad(x, ((0, 0), (0, 0), (0, ep - d_feat)))   # lane-pad d_model
    s = t - 1
    enc_in = x[:, :s, :]                          # (N, S, Ep) encoder input
    dec_in = x[:, s:, :]                          # (N, 1, Ep) decoder input (last position)

    # batch_block=1 shards batch elements over the "parallel" grid axis (v7x megacore);
    # tune upward at large d_model / small batch to amortise per-layer weight streaming.
    mem = encoder_stack(enc_in, params["enc"], nhead=nhead, d_model=d_feat, batch_block=1)
    out = decoder_stack(dec_in, mem, params["dec"], nhead=nhead, d_model=d_feat)
    out = out[:, 0, :d_feat]                      # strip lane padding -> (N, d_feat)
    return jnp.squeeze(out)                       # matches the reference .squeeze()


# ----------------------------------------------------------------------------
# Parameter preparation: torch-layout weights -> pre-transposed, lane-padded, bf16,
# stacked along a leading layer axis for layer streaming.
# ----------------------------------------------------------------------------

def _pad_to(x, shape):
    return jnp.pad(x, [(0, t - s) for s, t in zip(x.shape, shape)])


def _prep_linear(w, b, pad_in, pad_out):
    """torch nn.Linear layout (out, in) -> ((pad_in, pad_out) bf16, (1, pad_out) f32)."""
    wt = _pad_to(jnp.asarray(w, jnp.float32).T, (pad_in, pad_out)).astype(_MXU_DTYPE)
    bp = _pad_to(jnp.asarray(b, jnp.float32).reshape(1, -1), (1, pad_out))
    return wt, bp


def _prep_proj_blocks(w, b, e, ep, blocks):
    """Select Q/K/V blocks of a torch in_proj (3e, e) weight / (3e,) bias; pad each block
    to (ep, ep)/(1, ep) independently and concatenate along the output (lane) axis."""
    ws, bs = [], []
    for i in blocks:
        wt, bp = _prep_linear(w[i * e:(i + 1) * e, :], b[i * e:(i + 1) * e], ep, ep)
        ws.append(wt)
        bs.append(bp)
    return jnp.concatenate(ws, axis=1), jnp.concatenate(bs, axis=1)


def _stack_layers(layers):
    return {k: jnp.stack([lyr[k] for lyr in layers]) for k in layers[0]}


def init_params(key, d_model, nhead, dff, n_enc, n_dec):
    assert d_model % nhead == 0
    e = d_model
    ep = _round_up(e, _LANE)

    def dense(k, out_f, in_f):
        return jax.random.normal(k, (out_f, in_f), jnp.float32) / math.sqrt(in_f)

    def norm():
        return (_pad_to(jnp.ones((1, e), jnp.float32), (1, ep)),
                jnp.zeros((1, ep), jnp.float32))

    def enc_layer(k):
        ks = jax.random.split(k, 4)
        in_w, in_b = _prep_proj_blocks(dense(ks[0], 3 * e, e), jnp.zeros((3 * e,)), e, ep,
                                       (0, 1, 2))
        out_w, out_b = _prep_linear(dense(ks[1], e, e), jnp.zeros((e,)), ep, ep)
        lin1_w, lin1_b = _prep_linear(dense(ks[2], dff, e), jnp.zeros((dff,)), ep, dff)
        lin2_w, lin2_b = _prep_linear(dense(ks[3], e, dff), jnp.zeros((e,)), dff, ep)
        n1_g, n1_b = norm()
        n2_g, n2_b = norm()
        return dict(in_w=in_w, in_b=in_b, out_w=out_w, out_b=out_b,
                    n1_g=n1_g, n1_b=n1_b,
                    lin1_w=lin1_w, lin1_b=lin1_b, lin2_w=lin2_w, lin2_b=lin2_b,
                    n2_g=n2_g, n2_b=n2_b)

    def dec_layer(k):
        ks = jax.random.split(k, 6)
        sa = dense(ks[0], 3 * e, e)
        # Decoder self-attention has target length 1 in this model: only the V block is
        # ever needed (exact), so Q/K weights are not even stored/streamed.
        sa_v_w, sa_v_b = _prep_proj_blocks(sa, jnp.zeros((3 * e,)), e, ep, (2,))
        sa_out_w, sa_out_b = _prep_linear(dense(ks[1], e, e), jnp.zeros((e,)), ep, ep)
        ca = dense(ks[2], 3 * e, e)
        ca_q_w, ca_q_b = _prep_proj_blocks(ca, jnp.zeros((3 * e,)), e, ep, (0,))
        ca_kv_w, ca_kv_b = _prep_proj_blocks(ca, jnp.zeros((3 * e,)), e, ep, (1, 2))
        ca_out_w, ca_out_b = _prep_linear(dense(ks[3], e, e), jnp.zeros((e,)), ep, ep)
        lin1_w, lin1_b = _prep_linear(dense(ks[4], dff, e), jnp.zeros((dff,)), ep, dff)
        lin2_w, lin2_b = _prep_linear(dense(ks[5], e, dff), jnp.zeros((e,)), dff, ep)
        n1_g, n1_b = norm()
        n2_g, n2_b = norm()
        n3_g, n3_b = norm()
        return dict(sa_v_w=sa_v_w, sa_v_b=sa_v_b, sa_out_w=sa_out_w, sa_out_b=sa_out_b,
                    n1_g=n1_g, n1_b=n1_b,
                    ca_q_w=ca_q_w, ca_q_b=ca_q_b, ca_kv_w=ca_kv_w, ca_kv_b=ca_kv_b,
                    ca_out_w=ca_out_w, ca_out_b=ca_out_b, n2_g=n2_g, n2_b=n2_b,
                    lin1_w=lin1_w, lin1_b=lin1_b, lin2_w=lin2_w, lin2_b=lin2_b,
                    n3_g=n3_g, n3_b=n3_b)

    keys = jax.random.split(key, n_enc + n_dec)
    enc = _stack_layers([enc_layer(keys[i]) for i in range(n_enc)])
    dec = _stack_layers([dec_layer(keys[n_enc + i]) for i in range(n_dec)])
    enc["norm_g"], enc["norm_b"] = norm()
    dec["norm_g"], dec["norm_b"] = norm()
    return dict(enc=enc, dec=dec)


# ----------------------------------------------------------------------------
# Driver
# ----------------------------------------------------------------------------

if __name__ == "__main__":
    D_FEAT = 32     # d_model (small stand-in for the default 600)
    NHEAD = 4
    T = 5           # sequence length implied by the reshape (T-1 enc steps, 1 dec step)
    BATCH = 2
    DFF = 2048      # torch.nn.Transformer default dim_feedforward
    N_ENC, N_DEC = 6, 6   # torch.nn.Transformer defaults

    key = jax.random.PRNGKey(0)
    pkey, xkey = jax.random.split(key)
    params = init_params(pkey, D_FEAT, NHEAD, DFF, N_ENC, N_DEC)

    # input layout: (batch, d_feat * T), matching the PyTorch module's reshape.
    src = jax.random.normal(xkey, (BATCH, D_FEAT * T), jnp.float32)

    fwd = jax.jit(functools.partial(transformer_model_forward,
                                    d_feat=D_FEAT, nhead=NHEAD))
    out = fwd(params, src)
    jax.block_until_ready(out)

    assert out.shape == (BATCH, D_FEAT), out.shape
    assert bool(jnp.all(jnp.isfinite(out)))
    print("KERNEL_OK")
</pallas_src>

<mosaic_0001>
module attributes {stable_mosaic.version = 11 : i64} {
  func.func @_decoder_layer_kernel(%arg0: i32, %arg1: i32, %arg2: memref<2x1x128xf32, #tpu.memory_space<vmem>>, %arg3: memref<2x4x128xf32, #tpu.memory_space<vmem>>, %arg4: memref<1x128x128xbf16, #tpu.memory_space<vmem>>, %arg5: memref<1x1x128xf32, #tpu.memory_space<vmem>>, %arg6: memref<1x128x128xbf16, #tpu.memory_space<vmem>>, %arg7: memref<1x1x128xf32, #tpu.memory_space<vmem>>, %arg8: memref<1x1x128xf32, #tpu.memory_space<vmem>>, %arg9: memref<1x1x128xf32, #tpu.memory_space<vmem>>, %arg10: memref<1x128x128xbf16, #tpu.memory_space<vmem>>, %arg11: memref<1x1x128xf32, #tpu.memory_space<vmem>>, %arg12: memref<1x128x256xbf16, #tpu.memory_space<vmem>>, %arg13: memref<1x1x256xf32, #tpu.memory_space<vmem>>, %arg14: memref<1x128x128xbf16, #tpu.memory_space<vmem>>, %arg15: memref<1x1x128xf32, #tpu.memory_space<vmem>>, %arg16: memref<1x1x128xf32, #tpu.memory_space<vmem>>, %arg17: memref<1x1x128xf32, #tpu.memory_space<vmem>>, %arg18: memref<1x128x2048xbf16, #tpu.memory_space<vmem>>, %arg19: memref<1x1x2048xf32, #tpu.memory_space<vmem>>, %arg20: memref<1x2048x128xbf16, #tpu.memory_space<vmem>>, %arg21: memref<1x1x128xf32, #tpu.memory_space<vmem>>, %arg22: memref<1x1x128xf32, #tpu.memory_space<vmem>>, %arg23: memref<1x1x128xf32, #tpu.memory_space<vmem>>, %arg24: memref<1x128xf32, #tpu.memory_space<vmem>>, %arg25: memref<1x128xf32, #tpu.memory_space<vmem>>, %arg26: memref<2x1x128xf32, #tpu.memory_space<vmem>>) attributes {dimension_semantics = [#tpu.dimension_semantics<parallel>, #tpu.dimension_semantics<arbitrary>], iteration_bounds = array<i64: 1, 6>, scalar_prefetch = 0 : i64, scratch_operands = 0 : i64, tpu.core_type = #tpu.core_type<tc>, window_params = [{transform_indices = @transform_0, window_bounds = array<i64: 2, 1, 128>}, {transform_indices = @transform_1, window_bounds = array<i64: 2, 4, 128>}, {transform_indices = @transform_2, window_bounds = array<i64: 1, 128, 128>}, {transform_indices = @transform_3, window_bounds = array<i64: 1, 1, 128>}, {transform_indices = @transform_4, window_bounds = array<i64: 1, 128, 128>}, {transform_indices = @transform_5, window_bounds = array<i64: 1, 1, 128>}, {transform_indices = @transform_6, window_bounds = array<i64: 1, 1, 128>}, {transform_indices = @transform_7, window_bounds = array<i64: 1, 1, 128>}, {transform_indices = @transform_8, window_bounds = array<i64: 1, 128, 128>}, {transform_indices = @transform_9, window_bounds = array<i64: 1, 1, 128>}, {transform_indices = @transform_10, window_bounds = array<i64: 1, 128, 256>}, {transform_indices = @transform_11, window_bounds = array<i64: 1, 1, 256>}, {transform_indices = @transform_12, window_bounds = array<i64: 1, 128, 128>}, {transform_indices = @transform_13, window_bounds = array<i64: 1, 1, 128>}, {transform_indices = @transform_14, window_bounds = array<i64: 1, 1, 128>}, {transform_indices = @transform_15, window_bounds = array<i64: 1, 1, 128>}, {transform_indices = @transform_16, window_bounds = array<i64: 1, 128, 2048>}, {transform_indices = @transform_17, window_bounds = array<i64: 1, 1, 2048>}, {transform_indices = @transform_18, window_bounds = array<i64: 1, 2048, 128>}, {transform_indices = @transform_19, window_bounds = array<i64: 1, 1, 128>}, {transform_indices = @transform_20, window_bounds = array<i64: 1, 1, 128>}, {transform_indices = @transform_21, window_bounds = array<i64: 1, 1, 128>}, {pipeline_mode = #tpu.pipeline_mode<synchronous>, transform_indices = @transform_22, window_bounds = array<i64: 1, 128>}, {pipeline_mode = #tpu.pipeline_mode<synchronous>, transform_indices = @transform_23, window_bounds = array<i64: 1, 128>}, {transform_indices = @transform_24, window_bounds = array<i64: 2, 1, 128>}]} {
    %c0_i32 = arith.constant 0 : i32
    %0 = arith.cmpi eq, %arg1, %c0_i32 : i32
    %1 = arith.extui %0 : i1 to i32
    %c0_i32_0 = arith.constant 0 : i32
    %2 = arith.cmpi ne, %1, %c0_i32_0 : i32
    scf.if %2 {
      %c0_114 = arith.constant 0 : index
      %c0_115 = arith.constant 0 : index
      %c0_116 = arith.constant 0 : index
      %234 = vector.load %arg2[%c0_114, %c0_115, %c0_116] : memref<2x1x128xf32, #tpu.memory_space<vmem>>, vector<2x1x128xf32>
      %c0_117 = arith.constant 0 : index
      %c0_118 = arith.constant 0 : index
      %c0_119 = arith.constant 0 : index
      %235 = vector.load %arg26[%c0_117, %c0_118, %c0_119] : memref<2x1x128xf32, #tpu.memory_space<vmem>>, vector<2x1x128xf32>
      tpu.vector_store %arg26[%c0_117, %c0_118, %c0_119], %234 {strides = array<i32>} : memref<2x1x128xf32, #tpu.memory_space<vmem>>, vector<2x1x128xf32>,
    } else {
    }
    %c0 = arith.constant 0 : index
    %c0_1 = arith.constant 0 : index
    %c0_2 = arith.constant 0 : index
    %3 = vector.load %arg26[%c0, %c0_1, %c0_2] : memref<2x1x128xf32, #tpu.memory_space<vmem>>, vector<2x1x128xf32>
    %4 = vector.shape_cast %3 : vector<2x1x128xf32> to vector<2x128xf32>
    %c0_3 = arith.constant 0 : index
    %c0_4 = arith.constant 0 : index
    %c0_5 = arith.constant 0 : index
    %5 = vector.load %arg3[%c0_3, %c0_4, %c0_5] : memref<2x4x128xf32, #tpu.memory_space<vmem>>, vector<2x4x128xf32>
    %c0_6 = arith.constant 0 : index
    %c0_7 = arith.constant 0 : index
    %c0_8 = arith.constant 0 : index
    %6 = vector.load %arg4[%c0_6, %c0_7, %c0_8] : memref<1x128x128xbf16, #tpu.memory_space<vmem>>, vector<1x128x128xbf16>
    %7 = vector.shape_cast %6 : vector<1x128x128xbf16> to vector<128x128xbf16>
    %c0_9 = arith.constant 0 : index
    %c0_10 = arith.constant 0 : index
    %c0_11 = arith.constant 0 : index
    %8 = vector.load %arg5[%c0_9, %c0_10, %c0_11] : memref<1x1x128xf32, #tpu.memory_space<vmem>>, vector<1x1x128xf32>
    %9 = vector.shape_cast %8 : vector<1x1x128xf32> to vector<1x128xf32>
    %10 = arith.truncf %4 : vector<2x128xf32> to vector<2x128xbf16>
    %cst = arith.constant dense<0.000000e+00> : vector<2x128xf32>
    %11 = tpu.matmul %10, %7, %cst {dimension_numbers = #tpu.dot_dimension_numbers<[1], [0], [0], [1], [0, 0, 1, 1], [], []>} : vector<2x128xbf16>, vector<128x128xbf16>, vector<2x128xf32> -> vector<2x128xf32>
    %12 = vector.broadcast %9 : vector<1x128xf32> to vector<2x128xf32>
    %13 = arith.addf %11, %12 : vector<2x128xf32>
    %c0_12 = arith.constant 0 : index
    %c0_13 = arith.constant 0 : index
    %c0_14 = arith.constant 0 : index
    %14 = vector.load %arg6[%c0_12, %c0_13, %c0_14] : memref<1x128x128xbf16, #tpu.memory_space<vmem>>, vector<1x128x128xbf16>
    %15 = vector.shape_cast %14 : vector<1x128x128xbf16> to vector<128x128xbf16>
    %c0_15 = arith.constant 0 : index
    %c0_16 = arith.constant 0 : index
    %c0_17 = arith.constant 0 : index
    %16 = vector.load %arg7[%c0_15, %c0_16, %c0_17] : memref<1x1x128xf32, #tpu.memory_space<vmem>>, vector<1x1x128xf32>
    %17 = vector.shape_cast %16 : vector<1x1x128xf32> to vector<1x128xf32>
    %18 = arith.truncf %13 : vector<2x128xf32> to vector<2x128xbf16>
    %cst_18 = arith.constant dense<0.000000e+00> : vector<2x128xf32>
    %19 = tpu.matmul %18, %15, %cst_18 {dimension_numbers = #tpu.dot_dimension_numbers<[1], [0], [0], [1], [0, 0, 1, 1], [], []>} : vector<2x128xbf16>, vector<128x128xbf16>, vector<2x128xf32> -> vector<2x128xf32>
    %20 = vector.broadcast %17 : vector<1x128xf32> to vector<2x128xf32>
    %21 = arith.addf %19, %20 : vector<2x128xf32>
    %22 = arith.addf %4, %21 : vector<2x128xf32>
    %c0_19 = arith.constant 0 : index
    %c0_20 = arith.constant 0 : index
    %c0_21 = arith.constant 0 : index
    %23 = vector.load %arg8[%c0_19, %c0_20, %c0_21] : memref<1x1x128xf32, #tpu.memory_space<vmem>>, vector<1x1x128xf32>
    %24 = vector.shape_cast %23 : vector<1x1x128xf32> to vector<1x128xf32>
    %c0_22 = arith.constant 0 : index
    %c0_23 = arith.constant 0 : index
    %c0_24 = arith.constant 0 : index
    %25 = vector.load %arg9[%c0_22, %c0_23, %c0_24] : memref<1x1x128xf32, #tpu.memory_space<vmem>>, vector<1x1x128xf32>
    %26 = vector.shape_cast %25 : vector<1x1x128xf32> to vector<1x128xf32>
    %cst_25 = arith.constant dense<0.000000e+00> : vector<2xf32>
    %27 = vector.multi_reduction <add>, %22, %cst_25 [1] : vector<2x128xf32> to vector<2xf32>
    %28 = vector.shape_cast %27 : vector<2xf32> to vector<2x1xf32>
    %cst_26 = arith.constant 3.125000e-02 : f32
    %29 = vector.broadcast %cst_26 : f32 to vector<2x1xf32>
    %30 = arith.mulf %28, %29 : vector<2x1xf32>
    %31 = vector.broadcast %30 : vector<2x1xf32> to vector<2x128xf32>
    %32 = arith.subf %22, %31 : vector<2x128xf32>
    %33 = tpu.iota {dimensions = array<i32: 1>} : vector<2x128xi32>
    %c32_i32 = arith.constant 32 : i32
    %34 = vector.broadcast %c32_i32 : i32 to vector<2x128xi32>
    %35 = arith.cmpi slt, %33, %34 : vector<2x128xi32>
    %cst_27 = arith.constant 0.000000e+00 : f32
    %36 = vector.broadcast %cst_27 : f32 to vector<2x128xf32>
    %37 = arith.select %35, %32, %36 : vector<2x128xi1>, vector<2x128xf32>
    %38 = arith.mulf %37, %37 : vector<2x128xf32>
    %cst_28 = arith.constant dense<0.000000e+00> : vector<2xf32>
    %39 = vector.multi_reduction <add>, %38, %cst_28 [1] : vector<2x128xf32> to vector<2xf32>
    %40 = vector.shape_cast %39 : vector<2xf32> to vector<2x1xf32>
    %cst_29 = arith.constant 3.125000e-02 : f32
    %41 = vector.broadcast %cst_29 : f32 to vector<2x1xf32>
    %42 = arith.mulf %40, %41 : vector<2x1xf32>
    %cst_30 = arith.constant 9.99999974E-6 : f32
    %43 = vector.broadcast %cst_30 : f32 to vector<2x1xf32>
    %44 = arith.addf %42, %43 : vector<2x1xf32>
    %45 = math.rsqrt %44 : vector<2x1xf32>
    %46 = vector.broadcast %45 : vector<2x1xf32> to vector<2x128xf32>
    %47 = arith.mulf %37, %46 : vector<2x128xf32>
    %48 = vector.broadcast %24 : vector<1x128xf32> to vector<2x128xf32>
    %49 = arith.mulf %47, %48 : vector<2x128xf32>
    %50 = vector.broadcast %26 : vector<1x128xf32> to vector<2x128xf32>
    %51 = arith.addf %49, %50 : vector<2x128xf32>
    %c0_31 = arith.constant 0 : index
    %c0_32 = arith.constant 0 : index
    %c0_33 = arith.constant 0 : index
    %52 = vector.load %arg10[%c0_31, %c0_32, %c0_33] : memref<1x128x128xbf16, #tpu.memory_space<vmem>>, vector<1x128x128xbf16>
    %53 = vector.shape_cast %52 : vector<1x128x128xbf16> to vector<128x128xbf16>
    %c0_34 = arith.constant 0 : index
    %c0_35 = arith.constant 0 : index
    %c0_36 = arith.constant 0 : index
    %54 = vector.load %arg11[%c0_34, %c0_35, %c0_36] : memref<1x1x128xf32, #tpu.memory_space<vmem>>, vector<1x1x128xf32>
    %55 = vector.shape_cast %54 : vector<1x1x128xf32> to vector<1x128xf32>
    %56 = arith.truncf %51 : vector<2x128xf32> to vector<2x128xbf16>
    %cst_37 = arith.constant dense<0.000000e+00> : vector<2x128xf32>
    %57 = tpu.matmul %56, %53, %cst_37 {dimension_numbers = #tpu.dot_dimension_numbers<[1], [0], [0], [1], [0, 0, 1, 1], [], []>} : vector<2x128xbf16>, vector<128x128xbf16>, vector<2x128xf32> -> vector<2x128xf32>
    %58 = vector.broadcast %55 : vector<1x128xf32> to vector<2x128xf32>
    %59 = arith.addf %57, %58 : vector<2x128xf32>
    %60 = vector.shape_cast %59 : vector<2x128xf32> to vector<2x1x128xf32>
    %61 = vector.shape_cast %5 : vector<2x4x128xf32> to vector<8x128xf32>
    %c0_38 = arith.constant 0 : index
    %c0_39 = arith.constant 0 : index
    %c0_40 = arith.constant 0 : index
    %62 = vector.load %arg12[%c0_38, %c0_39, %c0_40] : memref<1x128x256xbf16, #tpu.memory_space<vmem>>, vector<1x128x256xbf16>
    %63 = vector.shape_cast %62 : vector<1x128x256xbf16> to vector<128x256xbf16>
    %c0_41 = arith.constant 0 : index
    %c0_42 = arith.constant 0 : index
    %c0_43 = arith.constant 0 : index
    %64 = vector.load %arg13[%c0_41, %c0_42, %c0_43] : memref<1x1x256xf32, #tpu.memory_space<vmem>>, vector<1x1x256xf32>
    %65 = vector.shape_cast %64 : vector<1x1x256xf32> to vector<1x256xf32>
    %66 = arith.truncf %61 : vector<8x128xf32> to vector<8x128xbf16>
    %cst_44 = arith.constant dense<0.000000e+00> : vector<8x256xf32>
    %67 = tpu.matmul %66, %63, %cst_44 {dimension_numbers = #tpu.dot_dimension_numbers<[1], [0], [0], [1], [0, 0, 1, 1], [], []>} : vector<8x128xbf16>, vector<128x256xbf16>, vector<8x256xf32> -> vector<8x256xf32>
    %68 = vector.broadcast %65 : vector<1x256xf32> to vector<8x256xf32>
    %69 = arith.addf %67, %68 : vector<8x256xf32>
    %70 = vector.extract_strided_slice %69 {offsets = [0, 0], sizes = [8, 128], strides = [1, 1]} : vector<8x256xf32> to vector<8x128xf32>
    %71 = vector.shape_cast %70 : vector<8x128xf32> to vector<2x4x128xf32>
    %72 = vector.extract_strided_slice %69 {offsets = [0, 128], sizes = [8, 128], strides = [1, 1]} : vector<8x256xf32> to vector<8x128xf32>
    %73 = vector.shape_cast %72 : vector<8x128xf32> to vector<2x4x128xf32>
    %cst_45 = arith.constant 0.353553385 : f32
    %74 = vector.broadcast %cst_45 : f32 to vector<2x1x128xf32>
    %75 = arith.mulf %60, %74 : vector<2x1x128xf32>
    %76 = arith.truncf %75 : vector<2x1x128xf32> to vector<2x1x128xbf16>
    %77 = arith.truncf %71 : vector<2x4x128xf32> to vector<2x4x128xbf16>
    %78 = arith.truncf %73 : vector<2x4x128xf32> to vector<2x4x128xbf16>
    %79 = vector.extract_strided_slice %76 {offsets = [0, 0, 0], sizes = [2, 1, 8], strides = [1, 1, 1]} : vector<2x1x128xbf16> to vector<2x1x8xbf16>
    %80 = vector.extract_strided_slice %77 {offsets = [0, 0, 0], sizes = [2, 4, 8], strides = [1, 1, 1]} : vector<2x4x128xbf16> to vector<2x4x8xbf16>
    "tpu.trace_start"() <{level = 10 : i32, message = "bqd,bkd->bqk"}> : () -> ()
    %cst_46 = arith.constant dense<0.000000e+00> : vector<2x1x4xf32>
    %81 = tpu.matmul %79, %80, %cst_46 {dimension_numbers = #tpu.dot_dimension_numbers<[2], [2], [1], [1], [0, 0, 0, 1, 1, 1], [0], [0]>} : vector<2x1x8xbf16>, vector<2x4x8xbf16>, vector<2x1x4xf32> -> vector<2x1x4xf32>
    "tpu.trace_stop"() : () -> ()
    %cst_47 = arith.constant dense<0xFF800000> : vector<2x1xf32>
    %82 = vector.multi_reduction <maximumf>, %81, %cst_47 [2] : vector<2x1x4xf32> to vector<2x1xf32>
    %83 = vector.shape_cast %82 : vector<2x1xf32> to vector<2x1x1xf32>
    %84 = vector.broadcast %83 : vector<2x1x1xf32> to vector<2x1x4xf32>
    %85 = arith.subf %81, %84 : vector<2x1x4xf32>
    %86 = math.exp %85 : vector<2x1x4xf32>
    %cst_48 = arith.constant dense<0.000000e+00> : vector<2x1xf32>
    %87 = vector.multi_reduction <add>, %86, %cst_48 [2] : vector<2x1x4xf32> to vector<2x1xf32>
    %88 = vector.shape_cast %87 : vector<2x1xf32> to vector<2x1x1xf32>
    %89 = vector.broadcast %88 : vector<2x1x1xf32> to vector<2x1x4xf32>
    %90 = arith.divf %86, %89 : vector<2x1x4xf32>
    %91 = arith.truncf %90 : vector<2x1x4xf32> to vector<2x1x4xbf16>
    %92 = vector.extract_strided_slice %78 {offsets = [0, 0, 0], sizes = [2, 4, 8], strides = [1, 1, 1]} : vector<2x4x128xbf16> to vector<2x4x8xbf16>
    "tpu.trace_start"() <{level = 10 : i32, message = "bqk,bkd->bqd"}> : () -> ()
    %cst_49 = arith.constant dense<0.000000e+00> : vector<2x1x8xf32>
    %93 = tpu.matmul %91, %92, %cst_49 {dimension_numbers = #tpu.dot_dimension_numbers<[2], [1], [1], [2], [0, 0, 0, 1, 1, 2], [0], [0]>} : vector<2x1x4xbf16>, vector<2x4x8xbf16>, vector<2x1x8xf32> -> vector<2x1x8xf32>
    "tpu.trace_stop"() : () -> ()
    %94 = vector.extract_strided_slice %76 {offsets = [0, 0, 8], sizes = [2, 1, 8], strides = [1, 1, 1]} : vector<2x1x128xbf16> to vector<2x1x8xbf16>
    %95 = vector.extract_strided_slice %77 {offsets = [0, 0, 8], sizes = [2, 4, 8], strides = [1, 1, 1]} : vector<2x4x128xbf16> to vector<2x4x8xbf16>
    "tpu.trace_start"() <{level = 10 : i32, message = "bqd,bkd->bqk"}> : () -> ()
    %cst_50 = arith.constant dense<0.000000e+00> : vector<2x1x4xf32>
    %96 = tpu.matmul %94, %95, %cst_50 {dimension_numbers = #tpu.dot_dimension_numbers<[2], [2], [1], [1], [0, 0, 0, 1, 1, 1], [0], [0]>} : vector<2x1x8xbf16>, vector<2x4x8xbf16>, vector<2x1x4xf32> -> vector<2x1x4xf32>
    "tpu.trace_stop"() : () -> ()
    %cst_51 = arith.constant dense<0xFF800000> : vector<2x1xf32>
    %97 = vector.multi_reduction <maximumf>, %96, %cst_51 [2] : vector<2x1x4xf32> to vector<2x1xf32>
    %98 = vector.shape_cast %97 : vector<2x1xf32> to vector<2x1x1xf32>
    %99 = vector.broadcast %98 : vector<2x1x1xf32> to vector<2x1x4xf32>
    %100 = arith.subf %96, %99 : vector<2x1x4xf32>
    %101 = math.exp %100 : vector<2x1x4xf32>
    %cst_52 = arith.constant dense<0.000000e+00> : vector<2x1xf32>
    %102 = vector.multi_reduction <add>, %101, %cst_52 [2] : vector<2x1x4xf32> to vector<2x1xf32>
    %103 = vector.shape_cast %102 : vector<2x1xf32> to vector<2x1x1xf32>
    %104 = vector.broadcast %103 : vector<2x1x1xf32> to vector<2x1x4xf32>
    %105 = arith.divf %101, %104 : vector<2x1x4xf32>
    %106 = arith.truncf %105 : vector<2x1x4xf32> to vector<2x1x4xbf16>
    %107 = vector.extract_strided_slice %78 {offsets = [0, 0, 8], sizes = [2, 4, 8], strides = [1, 1, 1]} : vector<2x4x128xbf16> to vector<2x4x8xbf16>
    "tpu.trace_start"() <{level = 10 : i32, message = "bqk,bkd->bqd"}> : () -> ()
    %cst_53 = arith.constant dense<0.000000e+00> : vector<2x1x8xf32>
    %108 = tpu.matmul %106, %107, %cst_53 {dimension_numbers = #tpu.dot_dimension_numbers<[2], [1], [1], [2], [0, 0, 0, 1, 1, 2], [0], [0]>} : vector<2x1x4xbf16>, vector<2x4x8xbf16>, vector<2x1x8xf32> -> vector<2x1x8xf32>
    "tpu.trace_stop"() : () -> ()
    %109 = vector.extract_strided_slice %76 {offsets = [0, 0, 16], sizes = [2, 1, 8], strides = [1, 1, 1]} : vector<2x1x128xbf16> to vector<2x1x8xbf16>
    %110 = vector.extract_strided_slice %77 {offsets = [0, 0, 16], sizes = [2, 4, 8], strides = [1, 1, 1]} : vector<2x4x128xbf16> to vector<2x4x8xbf16>
    "tpu.trace_start"() <{level = 10 : i32, message = "bqd,bkd->bqk"}> : () -> ()
    %cst_54 = arith.constant dense<0.000000e+00> : vector<2x1x4xf32>
    %111 = tpu.matmul %109, %110, %cst_54 {dimension_numbers = #tpu.dot_dimension_numbers<[2], [2], [1], [1], [0, 0, 0, 1, 1, 1], [0], [0]>} : vector<2x1x8xbf16>, vector<2x4x8xbf16>, vector<2x1x4xf32> -> vector<2x1x4xf32>
    "tpu.trace_stop"() : () -> ()
    %cst_55 = arith.constant dense<0xFF800000> : vector<2x1xf32>
    %112 = vector.multi_reduction <maximumf>, %111, %cst_55 [2] : vector<2x1x4xf32> to vector<2x1xf32>
    %113 = vector.shape_cast %112 : vector<2x1xf32> to vector<2x1x1xf32>
    %114 = vector.broadcast %113 : vector<2x1x1xf32> to vector<2x1x4xf32>
    %115 = arith.subf %111, %114 : vector<2x1x4xf32>
    %116 = math.exp %115 : vector<2x1x4xf32>
    %cst_56 = arith.constant dense<0.000000e+00> : vector<2x1xf32>
    %117 = vector.multi_reduction <add>, %116, %cst_56 [2] : vector<2x1x4xf32> to vector<2x1xf32>
    %118 = vector.shape_cast %117 : vector<2x1xf32> to vector<2x1x1xf32>
    %119 = vector.broadcast %118 : vector<2x1x1xf32> to vector<2x1x4xf32>
    %120 = arith.divf %116, %119 : vector<2x1x4xf32>
    %121 = arith.truncf %120 : vector<2x1x4xf32> to vector<2x1x4xbf16>
    %122 = vector.extract_strided_slice %78 {offsets = [0, 0, 16], sizes = [2, 4, 8], strides = [1, 1, 1]} : vector<2x4x128xbf16> to vector<2x4x8xbf16>
    "tpu.trace_start"() <{level = 10 : i32, message = "bqk,bkd->bqd"}> : () -> ()
    %cst_57 = arith.constant dense<0.000000e+00> : vector<2x1x8xf32>
    %123 = tpu.matmul %121, %122, %cst_57 {dimension_numbers = #tpu.dot_dimension_numbers<[2], [1], [1], [2], [0, 0, 0, 1, 1, 2], [0], [0]>} : vector<2x1x4xbf16>, vector<2x4x8xbf16>, vector<2x1x8xf32> -> vector<2x1x8xf32>
    "tpu.trace_stop"() : () -> ()
    %124 = vector.extract_strided_slice %76 {offsets = [0, 0, 24], sizes = [2, 1, 8], strides = [1, 1, 1]} : vector<2x1x128xbf16> to vector<2x1x8xbf16>
    %125 = vector.extract_strided_slice %77 {offsets = [0, 0, 24], sizes = [2, 4, 8], strides = [1, 1, 1]} : vector<2x4x128xbf16> to vector<2x4x8xbf16>
    "tpu.trace_start"() <{level = 10 : i32, message = "bqd,bkd->bqk"}> : () -> ()
    %cst_58 = arith.constant dense<0.000000e+00> : vector<2x1x4xf32>
    %126 = tpu.matmul %124, %125, %cst_58 {dimension_numbers = #tpu.dot_dimension_numbers<[2], [2], [1], [1], [0, 0, 0, 1, 1, 1], [0], [0]>} : vector<2x1x8xbf16>, vector<2x4x8xbf16>, vector<2x1x4xf32> -> vector<2x1x4xf32>
    "tpu.trace_stop"() : () -> ()
    %cst_59 = arith.constant dense<0xFF800000> : vector<2x1xf32>
    %127 = vector.multi_reduction <maximumf>, %126, %cst_59 [2] : vector<2x1x4xf32> to vector<2x1xf32>
    %128 = vector.shape_cast %127 : vector<2x1xf32> to vector<2x1x1xf32>
    %129 = vector.broadcast %128 : vector<2x1x1xf32> to vector<2x1x4xf32>
    %130 = arith.subf %126, %129 : vector<2x1x4xf32>
    %131 = math.exp %130 : vector<2x1x4xf32>
    %cst_60 = arith.constant dense<0.000000e+00> : vector<2x1xf32>
    %132 = vector.multi_reduction <add>, %131, %cst_60 [2] : vector<2x1x4xf32> to vector<2x1xf32>
    %133 = vector.shape_cast %132 : vector<2x1xf32> to vector<2x1x1xf32>
    %134 = vector.broadcast %133 : vector<2x1x1xf32> to vector<2x1x4xf32>
    %135 = arith.divf %131, %134 : vector<2x1x4xf32>
    %136 = arith.truncf %135 : vector<2x1x4xf32> to vector<2x1x4xbf16>
    %137 = vector.extract_strided_slice %78 {offsets = [0, 0, 24], sizes = [2, 4, 8], strides = [1, 1, 1]} : vector<2x4x128xbf16> to vector<2x4x8xbf16>
    "tpu.trace_start"() <{level = 10 : i32, message = "bqk,bkd->bqd"}> : () -> ()
    %cst_61 = arith.constant dense<0.000000e+00> : vector<2x1x8xf32>
    %138 = tpu.matmul %136, %137, %cst_61 {dimension_numbers = #tpu.dot_dimension_numbers<[2], [1], [1], [2], [0, 0, 0, 1, 1, 2], [0], [0]>} : vector<2x1x4xbf16>, vector<2x4x8xbf16>, vector<2x1x8xf32> -> vector<2x1x8xf32>
    %cst_62 = arith.constant 0.000000e+00 : f32
    "tpu.trace_stop"() : () -> ()
    %139 = vector.broadcast %cst_62 : f32 to vector<2x1x96xf32>
    %140 = tpu.concatenate %93, %108, %123, %138, %139 in 2 : vector<2x1x8xf32>, vector<2x1x8xf32>, vector<2x1x8xf32>, vector<2x1x8xf32>, vector<2x1x96xf32> -> vector<2x1x128xf32>
    %141 = vector.shape_cast %140 : vector<2x1x128xf32> to vector<2x128xf32>
    %c0_63 = arith.constant 0 : index
    %c0_64 = arith.constant 0 : index
    %c0_65 = arith.constant 0 : index
    %142 = vector.load %arg14[%c0_63, %c0_64, %c0_65] : memref<1x128x128xbf16, #tpu.memory_space<vmem>>, vector<1x128x128xbf16>
    %143 = vector.shape_cast %142 : vector<1x128x128xbf16> to vector<128x128xbf16>
    %c0_66 = arith.constant 0 : index
    %c0_67 = arith.constant 0 : index
    %c0_68 = arith.constant 0 : index
    %144 = vector.load %arg15[%c0_66, %c0_67, %c0_68] : memref<1x1x128xf32, #tpu.memory_space<vmem>>, vector<1x1x128xf32>
    %145 = vector.shape_cast %144 : vector<1x1x128xf32> to vector<1x128xf32>
    %146 = arith.truncf %141 : vector<2x128xf32> to vector<2x128xbf16>
    %cst_69 = arith.constant dense<0.000000e+00> : vector<2x128xf32>
    %147 = tpu.matmul %146, %143, %cst_69 {dimension_numbers = #tpu.dot_dimension_numbers<[1], [0], [0], [1], [0, 0, 1, 1], [], []>} : vector<2x128xbf16>, vector<128x128xbf16>, vector<2x128xf32> -> vector<2x128xf32>
    %148 = vector.broadcast %145 : vector<1x128xf32> to vector<2x128xf32>
    %149 = arith.addf %147, %148 : vector<2x128xf32>
    %150 = arith.addf %51, %149 : vector<2x128xf32>
    %c0_70 = arith.constant 0 : index
    %c0_71 = arith.constant 0 : index
    %c0_72 = arith.constant 0 : index
    %151 = vector.load %arg16[%c0_70, %c0_71, %c0_72] : memref<1x1x128xf32, #tpu.memory_space<vmem>>, vector<1x1x128xf32>
    %152 = vector.shape_cast %151 : vector<1x1x128xf32> to vector<1x128xf32>
    %c0_73 = arith.constant 0 : index
    %c0_74 = arith.constant 0 : index
    %c0_75 = arith.constant 0 : index
    %153 = vector.load %arg17[%c0_73, %c0_74, %c0_75] : memref<1x1x128xf32, #tpu.memory_space<vmem>>, vector<1x1x128xf32>
    %154 = vector.shape_cast %153 : vector<1x1x128xf32> to vector<1x128xf32>
    %cst_76 = arith.constant dense<0.000000e+00> : vector<2xf32>
    %155 = vector.multi_reduction <add>, %150, %cst_76 [1] : vector<2x128xf32> to vector<2xf32>
    %156 = vector.shape_cast %155 : vector<2xf32> to vector<2x1xf32>
    %cst_77 = arith.constant 3.125000e-02 : f32
    %157 = vector.broadcast %cst_77 : f32 to vector<2x1xf32>
    %158 = arith.mulf %156, %157 : vector<2x1xf32>
    %159 = vector.broadcast %158 : vector<2x1xf32> to vector<2x128xf32>
    %160 = arith.subf %150, %159 : vector<2x128xf32>
    %161 = tpu.iota {dimensions = array<i32: 1>} : vector<2x128xi32>
    %c32_i32_78 = arith.constant 32 : i32
    %162 = vector.broadcast %c32_i32_78 : i32 to vector<2x128xi32>
    %163 = arith.cmpi slt, %161, %162 : vector<2x128xi32>
    %cst_79 = arith.constant 0.000000e+00 : f32
    %164 = vector.broadcast %cst_79 : f32 to vector<2x128xf32>
    %165 = arith.select %163, %160, %164 : vector<2x128xi1>, vector<2x128xf32>
    %166 = arith.mulf %165, %165 : vector<2x128xf32>
    %cst_80 = arith.constant dense<0.000000e+00> : vector<2xf32>
    %167 = vector.multi_reduction <add>, %166, %cst_80 [1] : vector<2x128xf32> to vector<2xf32>
    %168 = vector.shape_cast %167 : vector<2xf32> to vector<2x1xf32>
    %cst_81 = arith.constant 3.125000e-02 : f32
    %169 = vector.broadcast %cst_81 : f32 to vector<2x1xf32>
    %170 = arith.mulf %168, %169 : vector<2x1xf32>
    %cst_82 = arith.constant 9.99999974E-6 : f32
    %171 = vector.broadcast %cst_82 : f32 to vector<2x1xf32>
    %172 = arith.addf %170, %171 : vector<2x1xf32>
    %173 = math.rsqrt %172 : vector<2x1xf32>
    %174 = vector.broadcast %173 : vector<2x1xf32> to vector<2x128xf32>
    %175 = arith.mulf %165, %174 : vector<2x128xf32>
    %176 = vector.broadcast %152 : vector<1x128xf32> to vector<2x128xf32>
    %177 = arith.mulf %175, %176 : vector<2x128xf32>
    %178 = vector.broadcast %154 : vector<1x128xf32> to vector<2x128xf32>
    %179 = arith.addf %177, %178 : vector<2x128xf32>
    %c0_83 = arith.constant 0 : index
    %c0_84 = arith.constant 0 : index
    %c0_85 = arith.constant 0 : index
    %180 = vector.load %arg18[%c0_83, %c0_84, %c0_85] : memref<1x128x2048xbf16, #tpu.memory_space<vmem>>, vector<1x128x2048xbf16>
    %181 = vector.shape_cast %180 : vector<1x128x2048xbf16> to vector<128x2048xbf16>
    %c0_86 = arith.constant 0 : index
    %c0_87 = arith.constant 0 : index
    %c0_88 = arith.constant 0 : index
    %182 = vector.load %arg19[%c0_86, %c0_87, %c0_88] : memref<1x1x2048xf32, #tpu.memory_space<vmem>>, vector<1x1x2048xf32>
    %183 = vector.shape_cast %182 : vector<1x1x2048xf32> to vector<1x2048xf32>
    %184 = arith.truncf %179 : vector<2x128xf32> to vector<2x128xbf16>
    %cst_89 = arith.constant dense<0.000000e+00> : vector<2x2048xf32>
    %185 = tpu.matmul %184, %181, %cst_89 {dimension_numbers = #tpu.dot_dimension_numbers<[1], [0], [0], [1], [0, 0, 1, 1], [], []>} : vector<2x128xbf16>, vector<128x2048xbf16>, vector<2x2048xf32> -> vector<2x2048xf32>
    %186 = vector.broadcast %183 : vector<1x2048xf32> to vector<2x2048xf32>
    %187 = arith.addf %185, %186 : vector<2x2048xf32>
    %cst_90 = arith.constant 0.000000e+00 : f32
    %188 = vector.broadcast %cst_90 : f32 to vector<2x2048xf32>
    %189 = arith.maximumf %187, %188 : vector<2x2048xf32>
    %c0_91 = arith.constant 0 : index
    %c0_92 = arith.constant 0 : index
    %c0_93 = arith.constant 0 : index
    %190 = vector.load %arg20[%c0_91, %c0_92, %c0_93] : memref<1x2048x128xbf16, #tpu.memory_space<vmem>>, vector<1x2048x128xbf16>
    %191 = vector.shape_cast %190 : vector<1x2048x128xbf16> to vector<2048x128xbf16>
    %c0_94 = arith.constant 0 : index
    %c0_95 = arith.constant 0 : index
    %c0_96 = arith.constant 0 : index
    %192 = vector.load %arg21[%c0_94, %c0_95, %c0_96] : memref<1x1x128xf32, #tpu.memory_space<vmem>>, vector<1x1x128xf32>
    %193 = vector.shape_cast %192 : vector<1x1x128xf32> to vector<1x128xf32>
    %194 = arith.truncf %189 : vector<2x2048xf32> to vector<2x2048xbf16>
    %cst_97 = arith.constant dense<0.000000e+00> : vector<2x128xf32>
    %195 = tpu.matmul %194, %191, %cst_97 {dimension_numbers = #tpu.dot_dimension_numbers<[1], [0], [0], [1], [0, 0, 1, 1], [], []>} : vector<2x2048xbf16>, vector<2048x128xbf16>, vector<2x128xf32> -> vector<2x128xf32>
    %196 = vector.broadcast %193 : vector<1x128xf32> to vector<2x128xf32>
    %197 = arith.addf %195, %196 : vector<2x128xf32>
    %198 = arith.addf %179, %197 : vector<2x128xf32>
    %c0_98 = arith.constant 0 : index
    %c0_99 = arith.constant 0 : index
    %c0_100 = arith.constant 0 : index
    %199 = vector.load %arg22[%c0_98, %c0_99, %c0_100] : memref<1x1x128xf32, #tpu.memory_space<vmem>>, vector<1x1x128xf32>
    %200 = vector.shape_cast %199 : vector<1x1x128xf32> to vector<1x128xf32>
    %c0_101 = arith.constant 0 : index
    %c0_102 = arith.constant 0 : index
    %c0_103 = arith.constant 0 : index
    %201 = vector.load %arg23[%c0_101, %c0_102, %c0_103] : memref<1x1x128xf32, #tpu.memory_space<vmem>>, vector<1x1x128xf32>
    %202 = vector.shape_cast %201 : vector<1x1x128xf32> to vector<1x128xf32>
    %cst_104 = arith.constant dense<0.000000e+00> : vector<2xf32>
    %203 = vector.multi_reduction <add>, %198, %cst_104 [1] : vector<2x128xf32> to vector<2xf32>
    %204 = vector.shape_cast %203 : vector<2xf32> to vector<2x1xf32>
    %cst_105 = arith.constant 3.125000e-02 : f32
    %205 = vector.broadcast %cst_105 : f32 to vector<2x1xf32>
    %206 = arith.mulf %204, %205 : vector<2x1xf32>
    %207 = vector.broadcast %206 : vector<2x1xf32> to vector<2x128xf32>
    %208 = arith.subf %198, %207 : vector<2x128xf32>
    %209 = tpu.iota {dimensions = array<i32: 1>} : vector<2x128xi32>
    %c32_i32_106 = arith.constant 32 : i32
    %210 = vector.broadcast %c32_i32_106 : i32 to vector<2x128xi32>
    %211 = arith.cmpi slt, %209, %210 : vector<2x128xi32>
    %cst_107 = arith.constant 0.000000e+00 : f32
    %212 = vector.broadcast %cst_107 : f32 to vector<2x128xf32>
    %213 = arith.select %211, %208, %212 : vector<2x128xi1>, vector<2x128xf32>
    %214 = arith.mulf %213, %213 : vector<2x128xf32>
    %cst_108 = arith.constant dense<0.000000e+00> : vector<2xf32>
    %215 = vector.multi_reduction <add>, %214, %cst_108 [1] : vector<2x128xf32> to vector<2xf32>
    %216 = vector.shape_cast %215 : vector<2xf32> to vector<2x1xf32>
    %cst_109 = arith.constant 3.125000e-02 : f32
    %217 = vector.broadcast %cst_109 : f32 to vector<2x1xf32>
    %218 = arith.mulf %216, %217 : vector<2x1xf32>
    %cst_110 = arith.constant 9.99999974E-6 : f32
    %219 = vector.broadcast %cst_110 : f32 to vector<2x1xf32>
    %220 = arith.addf %218, %219 : vector<2x1xf32>
    %221 = math.rsqrt %220 : vector<2x1xf32>
    %222 = vector.broadcast %221 : vector<2x1xf32> to vector<2x128xf32>
    %223 = arith.mulf %213, %222 : vector<2x128xf32>
    %224 = vector.broadcast %200 : vector<1x128xf32> to vector<2x128xf32>
    %225 = arith.mulf %223, %224 : vector<2x128xf32>
    %226 = vector.broadcast %202 : vector<1x128xf32> to vector<2x128xf32>
    %227 = arith.addf %225, %226 : vector<2x128xf32>
    %c5_i32 = arith.constant 5 : i32
    %228 = arith.cmpi eq, %arg1, %c5_i32 : i32
    %c5_i32_111 = arith.constant 5 : i32
    %229 = arith.cmpi ne, %arg1, %c5_i32_111 : i32
    %230 = arith.extui %229 : i1 to i32
    %c0_i32_112 = arith.constant 0 : i32
    %231 = arith.cmpi ne, %230, %c0_i32_112 : i32
    scf.if %231 {
      %234 = vector.shape_cast %227 : vector<2x128xf32> to vector<2x1x128xf32>
      %c0_114 = arith.constant 0 : index
      %c0_115 = arith.constant 0 : index
      %c0_116 = arith.constant 0 : index
      %235 = vector.load %arg26[%c0_114, %c0_115, %c0_116] : memref<2x1x128xf32, #tpu.memory_space<vmem>>, vector<2x1x128xf32>
      tpu.vector_store %arg26[%c0_114, %c0_115, %c0_116], %234 {strides = array<i32>} : memref<2x1x128xf32, #tpu.memory_space<vmem>>, vector<2x1x128xf32>,
    } else {
    }
    %232 = arith.extui %228 : i1 to i32
    %c0_i32_113 = arith.constant 0 : i32
    %233 = arith.cmpi ne, %232, %c0_i32_113 : i32
    scf.if %233 {
      %c0_114 = arith.constant 0 : index
      %c0_115 = arith.constant 0 : index
      %234 = vector.load %arg24[%c0_114, %c0_115] : memref<1x128xf32, #tpu.memory_space<vmem>>, vector<1x128xf32>
      %c0_116 = arith.constant 0 : index
      %c0_117 = arith.constant 0 : index
      %235 = vector.load %arg25[%c0_116, %c0_117] : memref<1x128xf32, #tpu.memory_space<vmem>>, vector<1x128xf32>
      %cst_118 = arith.constant dense<0.000000e+00> : vector<2xf32>
      %236 = vector.multi_reduction <add>, %227, %cst_118 [1] : vector<2x128xf32> to vector<2xf32>
      %237 = vector.shape_cast %236 : vector<2xf32> to vector<2x1xf32>
      %cst_119 = arith.constant 3.125000e-02 : f32
      %238 = vector.broadcast %cst_119 : f32 to vector<2x1xf32>
      %239 = arith.mulf %237, %238 : vector<2x1xf32>
      %240 = vector.broadcast %239 : vector<2x1xf32> to vector<2x128xf32>
      %241 = arith.subf %227, %240 : vector<2x128xf32>
      %242 = tpu.iota {dimensions = array<i32: 1>} : vector<2x128xi32>
      %c32_i32_120 = arith.constant 32 : i32
      %243 = vector.broadcast %c32_i32_120 : i32 to vector<2x128xi32>
      %244 = arith.cmpi slt, %242, %243 : vector<2x128xi32>
      %cst_121 = arith.constant 0.000000e+00 : f32
      %245 = vector.broadcast %cst_121 : f32 to vector<2x128xf32>
      %246 = arith.select %244, %241, %245 : vector<2x128xi1>, vector<2x128xf32>
      %247 = arith.mulf %246, %246 : vector<2x128xf32>
      %cst_122 = arith.constant dense<0.000000e+00> : vector<2xf32>
      %248 = vector.multi_reduction <add>, %247, %cst_122 [1] : vector<2x128xf32> to vector<2xf32>
      %249 = vector.shape_cast %248 : vector<2xf32> to vector<2x1xf32>
      %cst_123 = arith.constant 3.125000e-02 : f32
      %250 = vector.broadcast %cst_123 : f32 to vector<2x1xf32>
      %251 = arith.mulf %249, %250 : vector<2x1xf32>
      %cst_124 = arith.constant 9.99999974E-6 : f32
      %252 = vector.broadcast %cst_124 : f32 to vector<2x1xf32>
      %253 = arith.addf %251, %252 : vector<2x1xf32>
      %254 = math.rsqrt %253 : vector<2x1xf32>
      %255 = vector.broadcast %254 : vector<2x1xf32> to vector<2x128xf32>
      %256 = arith.mulf %246, %255 : vector<2x128xf32>
      %257 = vector.broadcast %234 : vector<1x128xf32> to vector<2x128xf32>
      %258 = arith.mulf %256, %257 : vector<2x128xf32>
      %259 = vector.broadcast %235 : vector<1x128xf32> to vector<2x128xf32>
      %260 = arith.addf %258, %259 : vector<2x128xf32>
      %261 = vector.shape_cast %260 : vector<2x128xf32> to vector<2x1x128xf32>
      %c0_125 = arith.constant 0 : index
      %c0_126 = arith.constant 0 : index
      %c0_127 = arith.constant 0 : index
      %262 = vector.load %arg26[%c0_125, %c0_126, %c0_127] : memref<2x1x128xf32, #tpu.memory_space<vmem>>, vector<2x1x128xf32>
      tpu.vector_store %arg26[%c0_125, %c0_126, %c0_127], %261 {strides = array<i32>} : memref<2x1x128xf32, #tpu.memory_space<vmem>>, vector<2x1x128xf32>,
    } else {
    }
    return
  }
  func.func @transform_0(%arg0: i32, %arg1: i32) -> (i32, i32, i32) {
    %c0_i32 = arith.constant 0 : i32
    %c0_i32_0 = arith.constant 0 : i32
    %c0_i32_1 = arith.constant 0 : i32
    return %arg0, %c0_i32, %c0_i32_0 : i32, i32, i32
  }
  func.func @transform_1(%arg0: i32, %arg1: i32) -> (i32, i32, i32) {
    %c0_i32 = arith.constant 0 : i32
    %c0_i32_0 = arith.constant 0 : i32
    %c0_i32_1 = arith.constant 0 : i32
    return %arg0, %c0_i32, %c0_i32_0 : i32, i32, i32
  }
  func.func @transform_2(%arg0: i32, %arg1: i32) -> (i32, i32, i32) {
    %c0_i32 = arith.constant 0 : i32
    %c0_i32_0 = arith.constant 0 : i32
    %c0_i32_1 = arith.constant 0 : i32
    return %arg1, %c0_i32, %c0_i32_0 : i32, i32, i32
  }
  func.func @transform_3(%arg0: i32, %arg1: i32) -> (i32, i32, i32) {
    %c0_i32 = arith.constant 0 : i32
    %c0_i32_0 = arith.constant 0 : i32
    %c0_i32_1 = arith.constant 0 : i32
    return %arg1, %c0_i32, %c0_i32_0 : i32, i32, i32
  }
  func.func @transform_4(%arg0: i32, %arg1: i32) -> (i32, i32, i32) {
    %c0_i32 = arith.constant 0 : i32
    %c0_i32_0 = arith.constant 0 : i32
    %c0_i32_1 = arith.constant 0 : i32
    return %arg1, %c0_i32, %c0_i32_0 : i32, i32, i32
  }
  func.func @transform_5(%arg0: i32, %arg1: i32) -> (i32, i32, i32) {
    %c0_i32 = arith.constant 0 : i32
    %c0_i32_0 = arith.constant 0 : i32
    %c0_i32_1 = arith.constant 0 : i32
    return %arg1, %c0_i32, %c0_i32_0 : i32, i32, i32
  }
  func.func @transform_6(%arg0: i32, %arg1: i32) -> (i32, i32, i32) {
    %c0_i32 = arith.constant 0 : i32
    %c0_i32_0 = arith.constant 0 : i32
    %c0_i32_1 = arith.constant 0 : i32
    return %arg1, %c0_i32, %c0_i32_0 : i32, i32, i32
  }
  func.func @transform_7(%arg0: i32, %arg1: i32) -> (i32, i32, i32) {
    %c0_i32 = arith.constant 0 : i32
    %c0_i32_0 = arith.constant 0 : i32
    %c0_i32_1 = arith.constant 0 : i32
    return %arg1, %c0_i32, %c0_i32_0 : i32, i32, i32
  }
  func.func @transform_8(%arg0: i32, %arg1: i32) -> (i32, i32, i32) {
    %c0_i32 = arith.constant 0 : i32
    %c0_i32_0 = arith.constant 0 : i32
    %c0_i32_1 = arith.constant 0 : i32
    return %arg1, %c0_i32, %c0_i32_0 : i32, i32, i32
  }
  func.func @transform_9(%arg0: i32, %arg1: i32) -> (i32, i32, i32) {
    %c0_i32 = arith.constant 0 : i32
    %c0_i32_0 = arith.constant 0 : i32
    %c0_i32_1 = arith.constant 0 : i32
    return %arg1, %c0_i32, %c0_i32_0 : i32, i32, i32
  }
  func.func @transform_10(%arg0: i32, %arg1: i32) -> (i32, i32, i32) {
    %c0_i32 = arith.constant 0 : i32
    %c0_i32_0 = arith.constant 0 : i32
    %c0_i32_1 = arith.constant 0 : i32
    return %arg1, %c0_i32, %c0_i32_0 : i32, i32, i32
  }
  func.func @transform_11(%arg0: i32, %arg1: i32) -> (i32, i32, i32) {
    %c0_i32 = arith.constant 0 : i32
    %c0_i32_0 = arith.constant 0 : i32
    %c0_i32_1 = arith.constant 0 : i32
    return %arg1, %c0_i32, %c0_i32_0 : i32, i32, i32
  }
  func.func @transform_12(%arg0: i32, %arg1: i32) -> (i32, i32, i32) {
    %c0_i32 = arith.constant 0 : i32
    %c0_i32_0 = arith.constant 0 : i32
    %c0_i32_1 = arith.constant 0 : i32
    return %arg1, %c0_i32, %c0_i32_0 : i32, i32, i32
  }
  func.func @transform_13(%arg0: i32, %arg1: i32) -> (i32, i32, i32) {
    %c0_i32 = arith.constant 0 : i32
    %c0_i32_0 = arith.constant 0 : i32
    %c0_i32_1 = arith.constant 0 : i32
    return %arg1, %c0_i32, %c0_i32_0 : i32, i32, i32
  }
  func.func @transform_14(%arg0: i32, %arg1: i32) -> (i32, i32, i32) {
    %c0_i32 = arith.constant 0 : i32
    %c0_i32_0 = arith.constant 0 : i32
    %c0_i32_1 = arith.constant 0 : i32
    return %arg1, %c0_i32, %c0_i32_0 : i32, i32, i32
  }
  func.func @transform_15(%arg0: i32, %arg1: i32) -> (i32, i32, i32) {
    %c0_i32 = arith.constant 0 : i32
    %c0_i32_0 = arith.constant 0 : i32
    %c0_i32_1 = arith.constant 0 : i32
    return %arg1, %c0_i32, %c0_i32_0 : i32, i32, i32
  }
  func.func @transform_16(%arg0: i32, %arg1: i32) -> (i32, i32, i32) {
    %c0_i32 = arith.constant 0 : i32
    %c0_i32_0 = arith.constant 0 : i32
    %c0_i32_1 = arith.constant 0 : i32
    return %arg1, %c0_i32, %c0_i32_0 : i32, i32, i32
  }
  func.func @transform_17(%arg0: i32, %arg1: i32) -> (i32, i32, i32) {
    %c0_i32 = arith.constant 0 : i32
    %c0_i32_0 = arith.constant 0 : i32
    %c0_i32_1 = arith.constant 0 : i32
    return %arg1, %c0_i32, %c0_i32_0 : i32, i32, i32
  }
  func.func @transform_18(%arg0: i32, %arg1: i32) -> (i32, i32, i32) {
    %c0_i32 = arith.constant 0 : i32
    %c0_i32_0 = arith.constant 0 : i32
    %c0_i32_1 = arith.constant 0 : i32
    return %arg1, %c0_i32, %c0_i32_0 : i32, i32, i32
  }
  func.func @transform_19(%arg0: i32, %arg1: i32) -> (i32, i32, i32) {
    %c0_i32 = arith.constant 0 : i32
    %c0_i32_0 = arith.constant 0 : i32
    %c0_i32_1 = arith.constant 0 : i32
    return %arg1, %c0_i32, %c0_i32_0 : i32, i32, i32
  }
  func.func @transform_20(%arg0: i32, %arg1: i32) -> (i32, i32, i32) {
    %c0_i32 = arith.constant 0 : i32
    %c0_i32_0 = arith.constant 0 : i32
    %c0_i32_1 = arith.constant 0 : i32
    return %arg1, %c0_i32, %c0_i32_0 : i32, i32, i32
  }
  func.func @transform_21(%arg0: i32, %arg1: i32) -> (i32, i32, i32) {
    %c0_i32 = arith.constant 0 : i32
    %c0_i32_0 = arith.constant 0 : i32
    %c0_i32_1 = arith.constant 0 : i32
    return %arg1, %c0_i32, %c0_i32_0 : i32, i32, i32
  }
  func.func @transform_22(%arg0: i32, %arg1: i32) -> (i32, i32) {
    %c0_i32 = arith.constant 0 : i32
    %c0_i32_0 = arith.constant 0 : i32
    %c0_i32_1 = arith.constant 0 : i32
    return %c0_i32, %c0_i32_0 : i32, i32
  }
  func.func @transform_23(%arg0: i32, %arg1: i32) -> (i32, i32) {
    %c0_i32 = arith.constant 0 : i32
    %c0_i32_0 = arith.constant 0 : i32
    %c0_i32_1 = arith.constant 0 : i32
    return %c0_i32, %c0_i32_0 : i32, i32
  }
  func.func @transform_24(%arg0: i32, %arg1: i32) -> (i32, i32, i32) {
    %c0_i32 = arith.constant 0 : i32
    %c0_i32_0 = arith.constant 0 : i32
    %c0_i32_1 = arith.constant 0 : i32
    return %arg0, %c0_i32, %c0_i32_0 : i32, i32, i32
  }
}

module attributes {stable_mosaic.version = 11 : i64} {
  func.func @_encoder_layer_kernel(%arg0: i32, %arg1: i32, %arg2: memref<1x4x128xf32, #tpu.memory_space<vmem>>, %arg3: memref<1x128x384xbf16, #tpu.memory_space<vmem>>, %arg4: memref<1x1x384xf32, #tpu.memory_space<vmem>>, %arg5: memref<1x128x128xbf16, #tpu.memory_space<vmem>>, %arg6: memref<1x1x128xf32, #tpu.memory_space<vmem>>, %arg7: memref<1x1x128xf32, #tpu.memory_space<vmem>>, %arg8: memref<1x1x128xf32, #tpu.memory_space<vmem>>, %arg9: memref<1x128x2048xbf16, #tpu.memory_space<vmem>>, %arg10: memref<1x1x2048xf32, #tpu.memory_space<vmem>>, %arg11: memref<1x2048x128xbf16, #tpu.memory_space<vmem>>, %arg12: memref<1x1x128xf32, #tpu.memory_space<vmem>>, %arg13: memref<1x1x128xf32, #tpu.memory_space<vmem>>, %arg14: memref<1x1x128xf32, #tpu.memory_space<vmem>>, %arg15: memref<1x128xf32, #tpu.memory_space<vmem>>, %arg16: memref<1x128xf32, #tpu.memory_space<vmem>>, %arg17: memref<1x4x128xf32, #tpu.memory_space<vmem>>) attributes {dimension_semantics = [#tpu.dimension_semantics<parallel>, #tpu.dimension_semantics<arbitrary>], iteration_bounds = array<i64: 2, 6>, scalar_prefetch = 0 : i64, scratch_operands = 0 : i64, tpu.core_type = #tpu.core_type<tc>, window_params = [{transform_indices = @transform_0, window_bounds = array<i64: 1, 4, 128>}, {transform_indices = @transform_1, window_bounds = array<i64: 1, 128, 384>}, {transform_indices = @transform_2, window_bounds = array<i64: 1, 1, 384>}, {transform_indices = @transform_3, window_bounds = array<i64: 1, 128, 128>}, {transform_indices = @transform_4, window_bounds = array<i64: 1, 1, 128>}, {transform_indices = @transform_5, window_bounds = array<i64: 1, 1, 128>}, {transform_indices = @transform_6, window_bounds = array<i64: 1, 1, 128>}, {transform_indices = @transform_7, window_bounds = array<i64: 1, 128, 2048>}, {transform_indices = @transform_8, window_bounds = array<i64: 1, 1, 2048>}, {transform_indices = @transform_9, window_bounds = array<i64: 1, 2048, 128>}, {transform_indices = @transform_10, window_bounds = array<i64: 1, 1, 128>}, {transform_indices = @transform_11, window_bounds = array<i64: 1, 1, 128>}, {transform_indices = @transform_12, window_bounds = array<i64: 1, 1, 128>}, {pipeline_mode = #tpu.pipeline_mode<synchronous>, transform_indices = @transform_13, window_bounds = array<i64: 1, 128>}, {pipeline_mode = #tpu.pipeline_mode<synchronous>, transform_indices = @transform_14, window_bounds = array<i64: 1, 128>}, {transform_indices = @transform_15, window_bounds = array<i64: 1, 4, 128>}]} {
    %c0_i32 = arith.constant 0 : i32
    %0 = arith.cmpi eq, %arg1, %c0_i32 : i32
    %1 = arith.extui %0 : i1 to i32
    %c0_i32_0 = arith.constant 0 : i32
    %2 = arith.cmpi ne, %1, %c0_i32_0 : i32
    scf.if %2 {
      %c0_77 = arith.constant 0 : index
      %c0_78 = arith.constant 0 : index
      %c0_79 = arith.constant 0 : index
      %179 = vector.load %arg2[%c0_77, %c0_78, %c0_79] : memref<1x4x128xf32, #tpu.memory_space<vmem>>, vector<1x4x128xf32>
      %c0_80 = arith.constant 0 : index
      %c0_81 = arith.constant 0 : index
      %c0_82 = arith.constant 0 : index
      %180 = vector.load %arg17[%c0_80, %c0_81, %c0_82] : memref<1x4x128xf32, #tpu.memory_space<vmem>>, vector<1x4x128xf32>
      tpu.vector_store %arg17[%c0_80, %c0_81, %c0_82], %179 {strides = array<i32>} : memref<1x4x128xf32, #tpu.memory_space<vmem>>, vector<1x4x128xf32>,
    } else {
    }
    %c0 = arith.constant 0 : index
    %c0_1 = arith.constant 0 : index
    %c0_2 = arith.constant 0 : index
    %3 = vector.load %arg17[%c0, %c0_1, %c0_2] : memref<1x4x128xf32, #tpu.memory_space<vmem>>, vector<1x4x128xf32>
    %4 = vector.shape_cast %3 : vector<1x4x128xf32> to vector<4x128xf32>
    %c0_3 = arith.constant 0 : index
    %c0_4 = arith.constant 0 : index
    %c0_5 = arith.constant 0 : index
    %5 = vector.load %arg3[%c0_3, %c0_4, %c0_5] : memref<1x128x384xbf16, #tpu.memory_space<vmem>>, vector<1x128x384xbf16>
    %6 = vector.shape_cast %5 : vector<1x128x384xbf16> to vector<128x384xbf16>
    %c0_6 = arith.constant 0 : index
    %c0_7 = arith.constant 0 : index
    %c0_8 = arith.constant 0 : index
    %7 = vector.load %arg4[%c0_6, %c0_7, %c0_8] : memref<1x1x384xf32, #tpu.memory_space<vmem>>, vector<1x1x384xf32>
    %8 = vector.shape_cast %7 : vector<1x1x384xf32> to vector<1x384xf32>
    %9 = arith.truncf %4 : vector<4x128xf32> to vector<4x128xbf16>
    %cst = arith.constant dense<0.000000e+00> : vector<4x384xf32>
    %10 = tpu.matmul %9, %6, %cst {dimension_numbers = #tpu.dot_dimension_numbers<[1], [0], [0], [1], [0, 0, 1, 1], [], []>} : vector<4x128xbf16>, vector<128x384xbf16>, vector<4x384xf32> -> vector<4x384xf32>
    %11 = vector.broadcast %8 : vector<1x384xf32> to vector<4x384xf32>
    %12 = arith.addf %10, %11 : vector<4x384xf32>
    %13 = vector.extract_strided_slice %12 {offsets = [0, 0], sizes = [4, 128], strides = [1, 1]} : vector<4x384xf32> to vector<4x128xf32>
    %14 = vector.shape_cast %13 : vector<4x128xf32> to vector<1x4x128xf32>
    %15 = vector.extract_strided_slice %12 {offsets = [0, 128], sizes = [4, 128], strides = [1, 1]} : vector<4x384xf32> to vector<4x128xf32>
    %16 = vector.shape_cast %15 : vector<4x128xf32> to vector<1x4x128xf32>
    %17 = vector.extract_strided_slice %12 {offsets = [0, 256], sizes = [4, 128], strides = [1, 1]} : vector<4x384xf32> to vector<4x128xf32>
    %18 = vector.shape_cast %17 : vector<4x128xf32> to vector<1x4x128xf32>
    %cst_9 = arith.constant 0.353553385 : f32
    %19 = vector.broadcast %cst_9 : f32 to vector<1x4x128xf32>
    %20 = arith.mulf %14, %19 : vector<1x4x128xf32>
    %21 = arith.truncf %20 : vector<1x4x128xf32> to vector<1x4x128xbf16>
    %22 = arith.truncf %16 : vector<1x4x128xf32> to vector<1x4x128xbf16>
    %23 = arith.truncf %18 : vector<1x4x128xf32> to vector<1x4x128xbf16>
    %24 = vector.extract_strided_slice %21 {offsets = [0, 0, 0], sizes = [1, 4, 8], strides = [1, 1, 1]} : vector<1x4x128xbf16> to vector<1x4x8xbf16>
    %25 = vector.extract_strided_slice %22 {offsets = [0, 0, 0], sizes = [1, 4, 8], strides = [1, 1, 1]} : vector<1x4x128xbf16> to vector<1x4x8xbf16>
    "tpu.trace_start"() <{level = 10 : i32, message = "bqd,bkd->bqk"}> : () -> ()
    %cst_10 = arith.constant dense<0.000000e+00> : vector<1x4x4xf32>
    %26 = tpu.matmul %24, %25, %cst_10 {dimension_numbers = #tpu.dot_dimension_numbers<[2], [2], [1], [1], [0, 0, 0, 1, 1, 1], [0], [0]>} : vector<1x4x8xbf16>, vector<1x4x8xbf16>, vector<1x4x4xf32> -> vector<1x4x4xf32>
    "tpu.trace_stop"() : () -> ()
    %cst_11 = arith.constant dense<0xFF800000> : vector<1x4xf32>
    %27 = vector.multi_reduction <maximumf>, %26, %cst_11 [2] : vector<1x4x4xf32> to vector<1x4xf32>
    %28 = vector.shape_cast %27 : vector<1x4xf32> to vector<1x4x1xf32>
    %29 = vector.broadcast %28 : vector<1x4x1xf32> to vector<1x4x4xf32>
    %30 = arith.subf %26, %29 : vector<1x4x4xf32>
    %31 = math.exp %30 : vector<1x4x4xf32>
    %cst_12 = arith.constant dense<0.000000e+00> : vector<1x4xf32>
    %32 = vector.multi_reduction <add>, %31, %cst_12 [2] : vector<1x4x4xf32> to vector<1x4xf32>
    %33 = vector.shape_cast %32 : vector<1x4xf32> to vector<1x4x1xf32>
    %34 = vector.broadcast %33 : vector<1x4x1xf32> to vector<1x4x4xf32>
    %35 = arith.divf %31, %34 : vector<1x4x4xf32>
    %36 = arith.truncf %35 : vector<1x4x4xf32> to vector<1x4x4xbf16>
    %37 = vector.extract_strided_slice %23 {offsets = [0, 0, 0], sizes = [1, 4, 8], strides = [1, 1, 1]} : vector<1x4x128xbf16> to vector<1x4x8xbf16>
    "tpu.trace_start"() <{level = 10 : i32, message = "bqk,bkd->bqd"}> : () -> ()
    %cst_13 = arith.constant dense<0.000000e+00> : vector<1x4x8xf32>
    %38 = tpu.matmul %36, %37, %cst_13 {dimension_numbers = #tpu.dot_dimension_numbers<[2], [1], [1], [2], [0, 0, 0, 1, 1, 2], [0], [0]>} : vector<1x4x4xbf16>, vector<1x4x8xbf16>, vector<1x4x8xf32> -> vector<1x4x8xf32>
    "tpu.trace_stop"() : () -> ()
    %39 = vector.extract_strided_slice %21 {offsets = [0, 0, 8], sizes = [1, 4, 8], strides = [1, 1, 1]} : vector<1x4x128xbf16> to vector<1x4x8xbf16>
    %40 = vector.extract_strided_slice %22 {offsets = [0, 0, 8], sizes = [1, 4, 8], strides = [1, 1, 1]} : vector<1x4x128xbf16> to vector<1x4x8xbf16>
    "tpu.trace_start"() <{level = 10 : i32, message = "bqd,bkd->bqk"}> : () -> ()
    %cst_14 = arith.constant dense<0.000000e+00> : vector<1x4x4xf32>
    %41 = tpu.matmul %39, %40, %cst_14 {dimension_numbers = #tpu.dot_dimension_numbers<[2], [2], [1], [1], [0, 0, 0, 1, 1, 1], [0], [0]>} : vector<1x4x8xbf16>, vector<1x4x8xbf16>, vector<1x4x4xf32> -> vector<1x4x4xf32>
    "tpu.trace_stop"() : () -> ()
    %cst_15 = arith.constant dense<0xFF800000> : vector<1x4xf32>
    %42 = vector.multi_reduction <maximumf>, %41, %cst_15 [2] : vector<1x4x4xf32> to vector<1x4xf32>
    %43 = vector.shape_cast %42 : vector<1x4xf32> to vector<1x4x1xf32>
    %44 = vector.broadcast %43 : vector<1x4x1xf32> to vector<1x4x4xf32>
    %45 = arith.subf %41, %44 : vector<1x4x4xf32>
    %46 = math.exp %45 : vector<1x4x4xf32>
    %cst_16 = arith.constant dense<0.000000e+00> : vector<1x4xf32>
    %47 = vector.multi_reduction <add>, %46, %cst_16 [2] : vector<1x4x4xf32> to vector<1x4xf32>
    %48 = vector.shape_cast %47 : vector<1x4xf32> to vector<1x4x1xf32>
    %49 = vector.broadcast %48 : vector<1x4x1xf32> to vector<1x4x4xf32>
    %50 = arith.divf %46, %49 : vector<1x4x4xf32>
    %51 = arith.truncf %50 : vector<1x4x4xf32> to vector<1x4x4xbf16>
    %52 = vector.extract_strided_slice %23 {offsets = [0, 0, 8], sizes = [1, 4, 8], strides = [1, 1, 1]} : vector<1x4x128xbf16> to vector<1x4x8xbf16>
    "tpu.trace_start"() <{level = 10 : i32, message = "bqk,bkd->bqd"}> : () -> ()
    %cst_17 = arith.constant dense<0.000000e+00> : vector<1x4x8xf32>
    %53 = tpu.matmul %51, %52, %cst_17 {dimension_numbers = #tpu.dot_dimension_numbers<[2], [1], [1], [2], [0, 0, 0, 1, 1, 2], [0], [0]>} : vector<1x4x4xbf16>, vector<1x4x8xbf16>, vector<1x4x8xf32> -> vector<1x4x8xf32>
    "tpu.trace_stop"() : () -> ()
    %54 = vector.extract_strided_slice %21 {offsets = [0, 0, 16], sizes = [1, 4, 8], strides = [1, 1, 1]} : vector<1x4x128xbf16> to vector<1x4x8xbf16>
    %55 = vector.extract_strided_slice %22 {offsets = [0, 0, 16], sizes = [1, 4, 8], strides = [1, 1, 1]} : vector<1x4x128xbf16> to vector<1x4x8xbf16>
    "tpu.trace_start"() <{level = 10 : i32, message = "bqd,bkd->bqk"}> : () -> ()
    %cst_18 = arith.constant dense<0.000000e+00> : vector<1x4x4xf32>
    %56 = tpu.matmul %54, %55, %cst_18 {dimension_numbers = #tpu.dot_dimension_numbers<[2], [2], [1], [1], [0, 0, 0, 1, 1, 1], [0], [0]>} : vector<1x4x8xbf16>, vector<1x4x8xbf16>, vector<1x4x4xf32> -> vector<1x4x4xf32>
    "tpu.trace_stop"() : () -> ()
    %cst_19 = arith.constant dense<0xFF800000> : vector<1x4xf32>
    %57 = vector.multi_reduction <maximumf>, %56, %cst_19 [2] : vector<1x4x4xf32> to vector<1x4xf32>
    %58 = vector.shape_cast %57 : vector<1x4xf32> to vector<1x4x1xf32>
    %59 = vector.broadcast %58 : vector<1x4x1xf32> to vector<1x4x4xf32>
    %60 = arith.subf %56, %59 : vector<1x4x4xf32>
    %61 = math.exp %60 : vector<1x4x4xf32>
    %cst_20 = arith.constant dense<0.000000e+00> : vector<1x4xf32>
    %62 = vector.multi_reduction <add>, %61, %cst_20 [2] : vector<1x4x4xf32> to vector<1x4xf32>
    %63 = vector.shape_cast %62 : vector<1x4xf32> to vector<1x4x1xf32>
    %64 = vector.broadcast %63 : vector<1x4x1xf32> to vector<1x4x4xf32>
    %65 = arith.divf %61, %64 : vector<1x4x4xf32>
    %66 = arith.truncf %65 : vector<1x4x4xf32> to vector<1x4x4xbf16>
    %67 = vector.extract_strided_slice %23 {offsets = [0, 0, 16], sizes = [1, 4, 8], strides = [1, 1, 1]} : vector<1x4x128xbf16> to vector<1x4x8xbf16>
    "tpu.trace_start"() <{level = 10 : i32, message = "bqk,bkd->bqd"}> : () -> ()
    %cst_21 = arith.constant dense<0.000000e+00> : vector<1x4x8xf32>
    %68 = tpu.matmul %66, %67, %cst_21 {dimension_numbers = #tpu.dot_dimension_numbers<[2], [1], [1], [2], [0, 0, 0, 1, 1, 2], [0], [0]>} : vector<1x4x4xbf16>, vector<1x4x8xbf16>, vector<1x4x8xf32> -> vector<1x4x8xf32>
    "tpu.trace_stop"() : () -> ()
    %69 = vector.extract_strided_slice %21 {offsets = [0, 0, 24], sizes = [1, 4, 8], strides = [1, 1, 1]} : vector<1x4x128xbf16> to vector<1x4x8xbf16>
    %70 = vector.extract_strided_slice %22 {offsets = [0, 0, 24], sizes = [1, 4, 8], strides = [1, 1, 1]} : vector<1x4x128xbf16> to vector<1x4x8xbf16>
    "tpu.trace_start"() <{level = 10 : i32, message = "bqd,bkd->bqk"}> : () -> ()
    %cst_22 = arith.constant dense<0.000000e+00> : vector<1x4x4xf32>
    %71 = tpu.matmul %69, %70, %cst_22 {dimension_numbers = #tpu.dot_dimension_numbers<[2], [2], [1], [1], [0, 0, 0, 1, 1, 1], [0], [0]>} : vector<1x4x8xbf16>, vector<1x4x8xbf16>, vector<1x4x4xf32> -> vector<1x4x4xf32>
    "tpu.trace_stop"() : () -> ()
    %cst_23 = arith.constant dense<0xFF800000> : vector<1x4xf32>
    %72 = vector.multi_reduction <maximumf>, %71, %cst_23 [2] : vector<1x4x4xf32> to vector<1x4xf32>
    %73 = vector.shape_cast %72 : vector<1x4xf32> to vector<1x4x1xf32>
    %74 = vector.broadcast %73 : vector<1x4x1xf32> to vector<1x4x4xf32>
    %75 = arith.subf %71, %74 : vector<1x4x4xf32>
    %76 = math.exp %75 : vector<1x4x4xf32>
    %cst_24 = arith.constant dense<0.000000e+00> : vector<1x4xf32>
    %77 = vector.multi_reduction <add>, %76, %cst_24 [2] : vector<1x4x4xf32> to vector<1x4xf32>
    %78 = vector.shape_cast %77 : vector<1x4xf32> to vector<1x4x1xf32>
    %79 = vector.broadcast %78 : vector<1x4x1xf32> to vector<1x4x4xf32>
    %80 = arith.divf %76, %79 : vector<1x4x4xf32>
    %81 = arith.truncf %80 : vector<1x4x4xf32> to vector<1x4x4xbf16>
    %82 = vector.extract_strided_slice %23 {offsets = [0, 0, 24], sizes = [1, 4, 8], strides = [1, 1, 1]} : vector<1x4x128xbf16> to vector<1x4x8xbf16>
    "tpu.trace_start"() <{level = 10 : i32, message = "bqk,bkd->bqd"}> : () -> ()
    %cst_25 = arith.constant dense<0.000000e+00> : vector<1x4x8xf32>
    %83 = tpu.matmul %81, %82, %cst_25 {dimension_numbers = #tpu.dot_dimension_numbers<[2], [1], [1], [2], [0, 0, 0, 1, 1, 2], [0], [0]>} : vector<1x4x4xbf16>, vector<1x4x8xbf16>, vector<1x4x8xf32> -> vector<1x4x8xf32>
    %cst_26 = arith.constant 0.000000e+00 : f32
    "tpu.trace_stop"() : () -> ()
    %84 = vector.broadcast %cst_26 : f32 to vector<1x4x96xf32>
    %85 = tpu.concatenate %38, %53, %68, %83, %84 in 2 : vector<1x4x8xf32>, vector<1x4x8xf32>, vector<1x4x8xf32>, vector<1x4x8xf32>, vector<1x4x96xf32> -> vector<1x4x128xf32>
    %86 = vector.shape_cast %85 : vector<1x4x128xf32> to vector<4x128xf32>
    %c0_27 = arith.constant 0 : index
    %c0_28 = arith.constant 0 : index
    %c0_29 = arith.constant 0 : index
    %87 = vector.load %arg5[%c0_27, %c0_28, %c0_29] : memref<1x128x128xbf16, #tpu.memory_space<vmem>>, vector<1x128x128xbf16>
    %88 = vector.shape_cast %87 : vector<1x128x128xbf16> to vector<128x128xbf16>
    %c0_30 = arith.constant 0 : index
    %c0_31 = arith.constant 0 : index
    %c0_32 = arith.constant 0 : index
    %89 = vector.load %arg6[%c0_30, %c0_31, %c0_32] : memref<1x1x128xf32, #tpu.memory_space<vmem>>, vector<1x1x128xf32>
    %90 = vector.shape_cast %89 : vector<1x1x128xf32> to vector<1x128xf32>
    %91 = arith.truncf %86 : vector<4x128xf32> to vector<4x128xbf16>
    %cst_33 = arith.constant dense<0.000000e+00> : vector<4x128xf32>
    %92 = tpu.matmul %91, %88, %cst_33 {dimension_numbers = #tpu.dot_dimension_numbers<[1], [0], [0], [1], [0, 0, 1, 1], [], []>} : vector<4x128xbf16>, vector<128x128xbf16>, vector<4x128xf32> -> vector<4x128xf32>
    %93 = vector.broadcast %90 : vector<1x128xf32> to vector<4x128xf32>
    %94 = arith.addf %92, %93 : vector<4x128xf32>
    %95 = arith.addf %4, %94 : vector<4x128xf32>
    %c0_34 = arith.constant 0 : index
    %c0_35 = arith.constant 0 : index
    %c0_36 = arith.constant 0 : index
    %96 = vector.load %arg7[%c0_34, %c0_35, %c0_36] : memref<1x1x128xf32, #tpu.memory_space<vmem>>, vector<1x1x128xf32>
    %97 = vector.shape_cast %96 : vector<1x1x128xf32> to vector<1x128xf32>
    %c0_37 = arith.constant 0 : index
    %c0_38 = arith.constant 0 : index
    %c0_39 = arith.constant 0 : index
    %98 = vector.load %arg8[%c0_37, %c0_38, %c0_39] : memref<1x1x128xf32, #tpu.memory_space<vmem>>, vector<1x1x128xf32>
    %99 = vector.shape_cast %98 : vector<1x1x128xf32> to vector<1x128xf32>
    %cst_40 = arith.constant dense<0.000000e+00> : vector<4xf32>
    %100 = vector.multi_reduction <add>, %95, %cst_40 [1] : vector<4x128xf32> to vector<4xf32>
    %101 = vector.shape_cast %100 : vector<4xf32> to vector<4x1xf32>
    %cst_41 = arith.constant 3.125000e-02 : f32
    %102 = vector.broadcast %cst_41 : f32 to vector<4x1xf32>
    %103 = arith.mulf %101, %102 : vector<4x1xf32>
    %104 = vector.broadcast %103 : vector<4x1xf32> to vector<4x128xf32>
    %105 = arith.subf %95, %104 : vector<4x128xf32>
    %106 = tpu.iota {dimensions = array<i32: 1>} : vector<4x128xi32>
    %c32_i32 = arith.constant 32 : i32
    %107 = vector.broadcast %c32_i32 : i32 to vector<4x128xi32>
    %108 = arith.cmpi slt, %106, %107 : vector<4x128xi32>
    %cst_42 = arith.constant 0.000000e+00 : f32
    %109 = vector.broadcast %cst_42 : f32 to vector<4x128xf32>
    %110 = arith.select %108, %105, %109 : vector<4x128xi1>, vector<4x128xf32>
    %111 = arith.mulf %110, %110 : vector<4x128xf32>
    %cst_43 = arith.constant dense<0.000000e+00> : vector<4xf32>
    %112 = vector.multi_reduction <add>, %111, %cst_43 [1] : vector<4x128xf32> to vector<4xf32>
    %113 = vector.shape_cast %112 : vector<4xf32> to vector<4x1xf32>
    %cst_44 = arith.constant 3.125000e-02 : f32
    %114 = vector.broadcast %cst_44 : f32 to vector<4x1xf32>
    %115 = arith.mulf %113, %114 : vector<4x1xf32>
    %cst_45 = arith.constant 9.99999974E-6 : f32
    %116 = vector.broadcast %cst_45 : f32 to vector<4x1xf32>
    %117 = arith.addf %115, %116 : vector<4x1xf32>
    %118 = math.rsqrt %117 : vector<4x1xf32>
    %119 = vector.broadcast %118 : vector<4x1xf32> to vector<4x128xf32>
    %120 = arith.mulf %110, %119 : vector<4x128xf32>
    %121 = vector.broadcast %97 : vector<1x128xf32> to vector<4x128xf32>
    %122 = arith.mulf %120, %121 : vector<4x128xf32>
    %123 = vector.broadcast %99 : vector<1x128xf32> to vector<4x128xf32>
    %124 = arith.addf %122, %123 : vector<4x128xf32>
    %c0_46 = arith.constant 0 : index
    %c0_47 = arith.constant 0 : index
    %c0_48 = arith.constant 0 : index
    %125 = vector.load %arg9[%c0_46, %c0_47, %c0_48] : memref<1x128x2048xbf16, #tpu.memory_space<vmem>>, vector<1x128x2048xbf16>
    %126 = vector.shape_cast %125 : vector<1x128x2048xbf16> to vector<128x2048xbf16>
    %c0_49 = arith.constant 0 : index
    %c0_50 = arith.constant 0 : index
    %c0_51 = arith.constant 0 : index
    %127 = vector.load %arg10[%c0_49, %c0_50, %c0_51] : memref<1x1x2048xf32, #tpu.memory_space<vmem>>, vector<1x1x2048xf32>
    %128 = vector.shape_cast %127 : vector<1x1x2048xf32> to vector<1x2048xf32>
    %129 = arith.truncf %124 : vector<4x128xf32> to vector<4x128xbf16>
    %cst_52 = arith.constant dense<0.000000e+00> : vector<4x2048xf32>
    %130 = tpu.matmul %129, %126, %cst_52 {dimension_numbers = #tpu.dot_dimension_numbers<[1], [0], [0], [1], [0, 0, 1, 1], [], []>} : vector<4x128xbf16>, vector<128x2048xbf16>, vector<4x2048xf32> -> vector<4x2048xf32>
    %131 = vector.broadcast %128 : vector<1x2048xf32> to vector<4x2048xf32>
    %132 = arith.addf %130, %131 : vector<4x2048xf32>
    %cst_53 = arith.constant 0.000000e+00 : f32
    %133 = vector.broadcast %cst_53 : f32 to vector<4x2048xf32>
    %134 = arith.maximumf %132, %133 : vector<4x2048xf32>
    %c0_54 = arith.constant 0 : index
    %c0_55 = arith.constant 0 : index
    %c0_56 = arith.constant 0 : index
    %135 = vector.load %arg11[%c0_54, %c0_55, %c0_56] : memref<1x2048x128xbf16, #tpu.memory_space<vmem>>, vector<1x2048x128xbf16>
    %136 = vector.shape_cast %135 : vector<1x2048x128xbf16> to vector<2048x128xbf16>
    %c0_57 = arith.constant 0 : index
    %c0_58 = arith.constant 0 : index
    %c0_59 = arith.constant 0 : index
    %137 = vector.load %arg12[%c0_57, %c0_58, %c0_59] : memref<1x1x128xf32, #tpu.memory_space<vmem>>, vector<1x1x128xf32>
    %138 = vector.shape_cast %137 : vector<1x1x128xf32> to vector<1x128xf32>
    %139 = arith.truncf %134 : vector<4x2048xf32> to vector<4x2048xbf16>
    %cst_60 = arith.constant dense<0.000000e+00> : vector<4x128xf32>
    %140 = tpu.matmul %139, %136, %cst_60 {dimension_numbers = #tpu.dot_dimension_numbers<[1], [0], [0], [1], [0, 0, 1, 1], [], []>} : vector<4x2048xbf16>, vector<2048x128xbf16>, vector<4x128xf32> -> vector<4x128xf32>
    %141 = vector.broadcast %138 : vector<1x128xf32> to vector<4x128xf32>
    %142 = arith.addf %140, %141 : vector<4x128xf32>
    %143 = arith.addf %124, %142 : vector<4x128xf32>
    %c0_61 = arith.constant 0 : index
    %c0_62 = arith.constant 0 : index
    %c0_63 = arith.constant 0 : index
    %144 = vector.load %arg13[%c0_61, %c0_62, %c0_63] : memref<1x1x128xf32, #tpu.memory_space<vmem>>, vector<1x1x128xf32>
    %145 = vector.shape_cast %144 : vector<1x1x128xf32> to vector<1x128xf32>
    %c0_64 = arith.constant 0 : index
    %c0_65 = arith.constant 0 : index
    %c0_66 = arith.constant 0 : index
    %146 = vector.load %arg14[%c0_64, %c0_65, %c0_66] : memref<1x1x128xf32, #tpu.memory_space<vmem>>, vector<1x1x128xf32>
    %147 = vector.shape_cast %146 : vector<1x1x128xf32> to vector<1x128xf32>
    %cst_67 = arith.constant dense<0.000000e+00> : vector<4xf32>
    %148 = vector.multi_reduction <add>, %143, %cst_67 [1] : vector<4x128xf32> to vector<4xf32>
    %149 = vector.shape_cast %148 : vector<4xf32> to vector<4x1xf32>
    %cst_68 = arith.constant 3.125000e-02 : f32
    %150 = vector.broadcast %cst_68 : f32 to vector<4x1xf32>
    %151 = arith.mulf %149, %150 : vector<4x1xf32>
    %152 = vector.broadcast %151 : vector<4x1xf32> to vector<4x128xf32>
    %153 = arith.subf %143, %152 : vector<4x128xf32>
    %154 = tpu.iota {dimensions = array<i32: 1>} : vector<4x128xi32>
    %c32_i32_69 = arith.constant 32 : i32
    %155 = vector.broadcast %c32_i32_69 : i32 to vector<4x128xi32>
    %156 = arith.cmpi slt, %154, %155 : vector<4x128xi32>
    %cst_70 = arith.constant 0.000000e+00 : f32
    %157 = vector.broadcast %cst_70 : f32 to vector<4x128xf32>
    %158 = arith.select %156, %153, %157 : vector<4x128xi1>, vector<4x128xf32>
    %159 = arith.mulf %158, %158 : vector<4x128xf32>
    %cst_71 = arith.constant dense<0.000000e+00> : vector<4xf32>
    %160 = vector.multi_reduction <add>, %159, %cst_71 [1] : vector<4x128xf32> to vector<4xf32>
    %161 = vector.shape_cast %160 : vector<4xf32> to vector<4x1xf32>
    %cst_72 = arith.constant 3.125000e-02 : f32
    %162 = vector.broadcast %cst_72 : f32 to vector<4x1xf32>
    %163 = arith.mulf %161, %162 : vector<4x1xf32>
    %cst_73 = arith.constant 9.99999974E-6 : f32
    %164 = vector.broadcast %cst_73 : f32 to vector<4x1xf32>
    %165 = arith.addf %163, %164 : vector<4x1xf32>
    %166 = math.rsqrt %165 : vector<4x1xf32>
    %167 = vector.broadcast %166 : vector<4x1xf32> to vector<4x128xf32>
    %168 = arith.mulf %158, %167 : vector<4x128xf32>
    %169 = vector.broadcast %145 : vector<1x128xf32> to vector<4x128xf32>
    %170 = arith.mulf %168, %169 : vector<4x128xf32>
    %171 = vector.broadcast %147 : vector<1x128xf32> to vector<4x128xf32>
    %172 = arith.addf %170, %171 : vector<4x128xf32>
    %c5_i32 = arith.constant 5 : i32
    %173 = arith.cmpi eq, %arg1, %c5_i32 : i32
    %c5_i32_74 = arith.constant 5 : i32
    %174 = arith.cmpi ne, %arg1, %c5_i32_74 : i32
    %175 = arith.extui %174 : i1 to i32
    %c0_i32_75 = arith.constant 0 : i32
    %176 = arith.cmpi ne, %175, %c0_i32_75 : i32
    scf.if %176 {
      %179 = vector.shape_cast %172 : vector<4x128xf32> to vector<1x4x128xf32>
      %c0_77 = arith.constant 0 : index
      %c0_78 = arith.constant 0 : index
      %c0_79 = arith.constant 0 : index
      %180 = vector.load %arg17[%c0_77, %c0_78, %c0_79] : memref<1x4x128xf32, #tpu.memory_space<vmem>>, vector<1x4x128xf32>
      tpu.vector_store %arg17[%c0_77, %c0_78, %c0_79], %179 {strides = array<i32>} : memref<1x4x128xf32, #tpu.memory_space<vmem>>, vector<1x4x128xf32>,
    } else {
    }
    %177 = arith.extui %173 : i1 to i32
    %c0_i32_76 = arith.constant 0 : i32
    %178 = arith.cmpi ne, %177, %c0_i32_76 : i32
    scf.if %178 {
      %c0_77 = arith.constant 0 : index
      %c0_78 = arith.constant 0 : index
      %179 = vector.load %arg15[%c0_77, %c0_78] : memref<1x128xf32, #tpu.memory_space<vmem>>, vector<1x128xf32>
      %c0_79 = arith.constant 0 : index
      %c0_80 = arith.constant 0 : index
      %180 = vector.load %arg16[%c0_79, %c0_80] : memref<1x128xf32, #tpu.memory_space<vmem>>, vector<1x128xf32>
      %cst_81 = arith.constant dense<0.000000e+00> : vector<4xf32>
      %181 = vector.multi_reduction <add>, %172, %cst_81 [1] : vector<4x128xf32> to vector<4xf32>
      %182 = vector.shape_cast %181 : vector<4xf32> to vector<4x1xf32>
      %cst_82 = arith.constant 3.125000e-02 : f32
      %183 = vector.broadcast %cst_82 : f32 to vector<4x1xf32>
      %184 = arith.mulf %182, %183 : vector<4x1xf32>
      %185 = vector.broadcast %184 : vector<4x1xf32> to vector<4x128xf32>
      %186 = arith.subf %172, %185 : vector<4x128xf32>
      %187 = tpu.iota {dimensions = array<i32: 1>} : vector<4x128xi32>
      %c32_i32_83 = arith.constant 32 : i32
      %188 = vector.broadcast %c32_i32_83 : i32 to vector<4x128xi32>
      %189 = arith.cmpi slt, %187, %188 : vector<4x128xi32>
      %cst_84 = arith.constant 0.000000e+00 : f32
      %190 = vector.broadcast %cst_84 : f32 to vector<4x128xf32>
      %191 = arith.select %189, %186, %190 : vector<4x128xi1>, vector<4x128xf32>
      %192 = arith.mulf %191, %191 : vector<4x128xf32>
      %cst_85 = arith.constant dense<0.000000e+00> : vector<4xf32>
      %193 = vector.multi_reduction <add>, %192, %cst_85 [1] : vector<4x128xf32> to vector<4xf32>
      %194 = vector.shape_cast %193 : vector<4xf32> to vector<4x1xf32>
      %cst_86 = arith.constant 3.125000e-02 : f32
      %195 = vector.broadcast %cst_86 : f32 to vector<4x1xf32>
      %196 = arith.mulf %194, %195 : vector<4x1xf32>
      %cst_87 = arith.constant 9.99999974E-6 : f32
      %197 = vector.broadcast %cst_87 : f32 to vector<4x1xf32>
      %198 = arith.addf %196, %197 : vector<4x1xf32>
      %199 = math.rsqrt %198 : vector<4x1xf32>
      %200 = vector.broadcast %199 : vector<4x1xf32> to vector<4x128xf32>
      %201 = arith.mulf %191, %200 : vector<4x128xf32>
      %202 = vector.broadcast %179 : vector<1x128xf32> to vector<4x128xf32>
      %203 = arith.mulf %201, %202 : vector<4x128xf32>
      %204 = vector.broadcast %180 : vector<1x128xf32> to vector<4x128xf32>
      %205 = arith.addf %203, %204 : vector<4x128xf32>
      %206 = vector.shape_cast %205 : vector<4x128xf32> to vector<1x4x128xf32>
      %c0_88 = arith.constant 0 : index
      %c0_89 = arith.constant 0 : index
      %c0_90 = arith.constant 0 : index
      %207 = vector.load %arg17[%c0_88, %c0_89, %c0_90] : memref<1x4x128xf32, #tpu.memory_space<vmem>>, vector<1x4x128xf32>
      tpu.vector_store %arg17[%c0_88, %c0_89, %c0_90], %206 {strides = array<i32>} : memref<1x4x128xf32, #tpu.memory_space<vmem>>, vector<1x4x128xf32>,
    } else {
    }
    return
  }
  func.func @transform_0(%arg0: i32, %arg1: i32) -> (i32, i32, i32) {
    %c0_i32 = arith.constant 0 : i32
    %c0_i32_0 = arith.constant 0 : i32
    %c0_i32_1 = arith.constant 0 : i32
    return %arg0, %c0_i32, %c0_i32_0 : i32, i32, i32
  }
  func.func @transform_1(%arg0: i32, %arg1: i32) -> (i32, i32, i32) {
    %c0_i32 = arith.constant 0 : i32
    %c0_i32_0 = arith.constant 0 : i32
    %c0_i32_1 = arith.constant 0 : i32
    return %arg1, %c0_i32, %c0_i32_0 : i32, i32, i32
  }
  func.func @transform_2(%arg0: i32, %arg1: i32) -> (i32, i32, i32) {
    %c0_i32 = arith.constant 0 : i32
    %c0_i32_0 = arith.constant 0 : i32
    %c0_i32_1 = arith.constant 0 : i32
    return %arg1, %c0_i32, %c0_i32_0 : i32, i32, i32
  }
  func.func @transform_3(%arg0: i32, %arg1: i32) -> (i32, i32, i32) {
    %c0_i32 = arith.constant 0 : i32
    %c0_i32_0 = arith.constant 0 : i32
    %c0_i32_1 = arith.constant 0 : i32
    return %arg1, %c0_i32, %c0_i32_0 : i32, i32, i32
  }
  func.func @transform_4(%arg0: i32, %arg1: i32) -> (i32, i32, i32) {
    %c0_i32 = arith.constant 0 : i32
    %c0_i32_0 = arith.constant 0 : i32
    %c0_i32_1 = arith.constant 0 : i32
    return %arg1, %c0_i32, %c0_i32_0 : i32, i32, i32
  }
  func.func @transform_5(%arg0: i32, %arg1: i32) -> (i32, i32, i32) {
    %c0_i32 = arith.constant 0 : i32
    %c0_i32_0 = arith.constant 0 : i32
    %c0_i32_1 = arith.constant 0 : i32
    return %arg1, %c0_i32, %c0_i32_0 : i32, i32, i32
  }
  func.func @transform_6(%arg0: i32, %arg1: i32) -> (i32, i32, i32) {
    %c0_i32 = arith.constant 0 : i32
    %c0_i32_0 = arith.constant 0 : i32
    %c0_i32_1 = arith.constant 0 : i32
    return %arg1, %c0_i32, %c0_i32_0 : i32, i32, i32
  }
  func.func @transform_7(%arg0: i32, %arg1: i32) -> (i32, i32, i32) {
    %c0_i32 = arith.constant 0 : i32
    %c0_i32_0 = arith.constant 0 : i32
    %c0_i32_1 = arith.constant 0 : i32
    return %arg1, %c0_i32, %c0_i32_0 : i32, i32, i32
  }
  func.func @transform_8(%arg0: i32, %arg1: i32) -> (i32, i32, i32) {
    %c0_i32 = arith.constant 0 : i32
    %c0_i32_0 = arith.constant 0 : i32
    %c0_i32_1 = arith.constant 0 : i32
    return %arg1, %c0_i32, %c0_i32_0 : i32, i32, i32
  }
  func.func @transform_9(%arg0: i32, %arg1: i32) -> (i32, i32, i32) {
    %c0_i32 = arith.constant 0 : i32
    %c0_i32_0 = arith.constant 0 : i32
    %c0_i32_1 = arith.constant 0 : i32
    return %arg1, %c0_i32, %c0_i32_0 : i32, i32, i32
  }
  func.func @transform_10(%arg0: i32, %arg1: i32) -> (i32, i32, i32) {
    %c0_i32 = arith.constant 0 : i32
    %c0_i32_0 = arith.constant 0 : i32
    %c0_i32_1 = arith.constant 0 : i32
    return %arg1, %c0_i32, %c0_i32_0 : i32, i32, i32
  }
  func.func @transform_11(%arg0: i32, %arg1: i32) -> (i32, i32, i32) {
    %c0_i32 = arith.constant 0 : i32
    %c0_i32_0 = arith.constant 0 : i32
    %c0_i32_1 = arith.constant 0 : i32
    return %arg1, %c0_i32, %c0_i32_0 : i32, i32, i32
  }
  func.func @transform_12(%arg0: i32, %arg1: i32) -> (i32, i32, i32) {
    %c0_i32 = arith.constant 0 : i32
    %c0_i32_0 = arith.constant 0 : i32
    %c0_i32_1 = arith.constant 0 : i32
    return %arg1, %c0_i32, %c0_i32_0 : i32, i32, i32
  }
  func.func @transform_13(%arg0: i32, %arg1: i32) -> (i32, i32) {
    %c0_i32 = arith.constant 0 : i32
    %c0_i32_0 = arith.constant 0 : i32
    %c0_i32_1 = arith.constant 0 : i32
    return %c0_i32, %c0_i32_0 : i32, i32
  }
  func.func @transform_14(%arg0: i32, %arg1: i32) -> (i32, i32) {
    %c0_i32 = arith.constant 0 : i32
    %c0_i32_0 = arith.constant 0 : i32
    %c0_i32_1 = arith.constant 0 : i32
    return %c0_i32, %c0_i32_0 : i32, i32
  }
  func.func @transform_15(%arg0: i32, %arg1: i32) -> (i32, i32, i32) {
    %c0_i32 = arith.constant 0 : i32
    %c0_i32_0 = arith.constant 0 : i32
    %c0_i32_1 = arith.constant 0 : i32
    return %arg0, %c0_i32, %c0_i32_0 : i32, i32, i32
  }
}

</mosaic_0001>

<llo_original>
// kernel: transformer_model_forward.2
$region0: #{transformer_model_forward.2}
  #allocation0 [shape = 'u32[]', space=smem, size = 0x4, offset = 0x4, fixed_abs, tag = 'smem constant byte address 0x4 - core index']
  #allocation1 [shape = 'u32[144,128]{1,0:T(1,128)}', space=vmem, size = 0x12000, scoped, tag = 'internal scratch']
  %s0 = inlined_call_operand.vmem [shape: f32[2,4,128], index: 0, kind: input, shape index: {}]
  %s1 = inlined_call_operand.hbm [shape: bf16[6,128,384], index: 1, kind: input, shape index: {}]
  %s2 = inlined_call_operand.hbm [shape: f32[6,1,384], index: 2, kind: input, shape index: {}]
  %s3 = inlined_call_operand.hbm [shape: bf16[6,128,128], index: 3, kind: input, shape index: {}]
  %s4 = inlined_call_operand.hbm [shape: f32[6,1,128], index: 4, kind: input, shape index: {}]
  %s5 = inlined_call_operand.hbm [shape: f32[6,1,128], index: 5, kind: input, shape index: {}]
  %s6 = inlined_call_operand.hbm [shape: f32[6,1,128], index: 6, kind: input, shape index: {}]
  %s7 = inlined_call_operand.hbm [shape: bf16[6,128,2048], index: 7, kind: input, shape index: {}]
  %s8 = inlined_call_operand.hbm [shape: f32[6,1,2048], index: 8, kind: input, shape index: {}]
  %s9 = inlined_call_operand.hbm [shape: bf16[6,2048,128], index: 9, kind: input, shape index: {}]
  %s10 = inlined_call_operand.hbm [shape: f32[6,1,128], index: 10, kind: input, shape index: {}]
  %s11 = inlined_call_operand.hbm [shape: f32[6,1,128], index: 11, kind: input, shape index: {}]
  %s12 = inlined_call_operand.hbm [shape: f32[6,1,128], index: 12, kind: input, shape index: {}]
  %s13 = inlined_call_operand.hbm [shape: f32[1,128], index: 13, kind: input, shape index: {}]
  %s14 = inlined_call_operand.hbm [shape: f32[1,128], index: 14, kind: input, shape index: {}]
  %s15 = inlined_call_operand.vmem [shape: f32[2,4,128], index: 15, kind: output, shape index: {}]
  %s16 = sld [smem:[#allocation0]]
  $region161: #{transformer_model_forward.2} parent=0
    _
  %s18 = ssub.s32 1, %s16
  %s19 = scalar_select 0, %s18, %s16
  $region1: #{transformer_model_forward.2} parent=0
    #allocation2 [shape = 'u8[196608]{0}', space=vmem, size = 0x30000, scoped, tag = 'input window, operand 1']
    #allocation3 [shape = 's32[2]{0}', space=sflag, size = 0x8, scoped, tag = 'scoped memory for transformer_model_forward.2']
    #allocation4 [shape = 'u8[3072]{0}', space=vmem, size = 0xc00, scoped, tag = 'input window, operand 2']
    #allocation5 [shape = 's32[2]{0}', space=sflag, size = 0x8, scoped, tag = 'scoped memory for transformer_model_forward.2']
    #allocation6 [shape = 'u8[65536]{0}', space=vmem, size = 0x10000, scoped, tag = 'input window, operand 3']
    #allocation7 [shape = 'u8[1024]{0}', space=vmem, size = 0x400, scoped, tag = 'input window, operand 4']
    #allocation8 [shape = 's32[2]{0}', space=sflag, size = 0x8, scoped, tag = 'scoped memory for transformer_model_forward.2']
    #allocation9 [shape = 'u8[1024]{0}', space=vmem, size = 0x400, scoped, tag = 'input window, operand 5']
    #allocation10 [shape = 'u8[1024]{0}', space=vmem, size = 0x400, scoped, tag = 'input window, operand 6']
    #allocation11 [shape = 's32[2]{0}', space=sflag, size = 0x8, scoped, tag = 'scoped memory for transformer_model_forward.2']
    #allocation12 [shape = 'u8[1048576]{0}', space=vmem, size = 0x100000, scoped, tag = 'input window, operand 7']
    #allocation13 [shape = 'u8[16384]{0}', space=vmem, size = 0x4000, scoped, tag = 'input window, operand 8']
    #allocation14 [shape = 's32[2]{0}', space=sflag, size = 0x8, scoped, tag = 'scoped memory for transformer_model_forward.2']
    #allocation15 [shape = 'u8[1048576]{0}', space=vmem, size = 0x100000, scoped, tag = 'input window, operand 9']
    #allocation16 [shape = 'u8[1024]{0}', space=vmem, size = 0x400, scoped, tag = 'input window, operand 10']
    #allocation17 [shape = 's32[2]{0}', space=sflag, size = 0x8, scoped, tag = 'scoped memory for transformer_model_forward.2']
    #allocation18 [shape = 'u8[1024]{0}', space=vmem, size = 0x400, scoped, tag = 'input window, operand 11']
    #allocation19 [shape = 'u8[1024]{0}', space=vmem, size = 0x400, scoped, tag = 'input window, operand 12']
    #allocation20 [shape = 's32[2]{0}', space=sflag, size = 0x8, scoped, tag = 'scoped memory for transformer_model_forward.2']
    #allocation21 [shape = 'u8[512]{0}', space=vmem, size = 0x400, scoped, tag = 'input window, operand 13, single buffered']
    #allocation22 [shape = 'u8[512]{0}', space=vmem, size = 0x400, scoped, tag = 'input window, operand 14, single buffered']
    #allocation23 [shape = 's32[1]{0}', space=sflag, size = 0x4, scoped, tag = 'scoped memory for transformer_model_forward.2']
    %20 = vsyncpa [#allocation3], 0
    %s21 = scalar_lea.sflag [#allocation3], 1
    %22 = vsyncpa %s21, 0
    %23 = vsyncpa [#allocation5], 0
    %s24 = scalar_lea.sflag [#allocation5], 1
    %25 = vsyncpa %s24, 0
    %26 = vsyncpa [#allocation8], 0
    %s27 = scalar_lea.sflag [#allocation8], 1
    %28 = vsyncpa %s27, 0
    %29 = vsyncpa [#allocation11], 0
    %s30 = scalar_lea.sflag [#allocation11], 1
    %31 = vsyncpa %s30, 0
    %32 = vsyncpa [#allocation14], 0
    %s33 = scalar_lea.sflag [#allocation14], 1
    %34 = vsyncpa %s33, 0
    %35 = vsyncpa [#allocation17], 0
    %s36 = scalar_lea.sflag [#allocation17], 1
    %37 = vsyncpa %s36, 0
    %38 = vsyncpa [#allocation20], 0
    %s39 = scalar_lea.sflag [#allocation20], 1
    %40 = vsyncpa %s39, 0
    %41 = vsyncpa [#allocation23], 0
    loop: start=0, step=1, limit=14
    $region2: #{transformer_model_forward.2} parent=1 // loop_pre_header
      _
    $region3: #{transformer_model_forward.2} parent=1 // loop_header
      %s43 = sphi 0, %s47
      %p44 = scmp.ge.s32.totalorder %s43, 14
      %s50 = sphi 0, %s62
      %s51 = sphi 0, %s58
      %s52 = sphi 0, %s50
      %s53 = sphi 0, %s51
      %s54 = sphi 0, %s52
      %s55 = sphi 0, %s53
      %s65 = sphi 0, %s67
      %s68 = sphi 0, %s65
      %s69 = sphi 0, %s68
      %s85 = sphi 0, %s69
      %s91 = sphi 0, %s93
      %s94 = sphi 0, %s91
      %s95 = sphi 0, %s94
      %s111 = sphi 0, %s95
      %s117 = sphi 0, %s119
      %s120 = sphi 0, %s117
      %s121 = sphi 0, %s120
      %s137 = sphi 0, %s121
      %s143 = sphi 0, %s145
      %s146 = sphi 0, %s143
      %s147 = sphi 0, %s146
      %s163 = sphi 0, %s147
      %s169 = sphi 0, %s171
      %s172 = sphi 0, %s169
      %s173 = sphi 0, %s172
      %s189 = sphi 0, %s173
      %s195 = sphi 0, %s197
      %s198 = sphi 0, %s195
      %s199 = sphi 0, %s198
      %s215 = sphi 0, %s199
      %s221 = sphi 0, %s223
      %s224 = sphi 0, %s221
      %s225 = sphi 0, %s224
      %s241 = sphi 0, %s225
      %s247 = sphi 0, %s249
      %s250 = sphi 0, %s247
      %s251 = sphi 0, %s250
      %s267 = sphi 0, %s251
      %s273 = sphi 0, %s275
      %s276 = sphi 0, %s273
      %s277 = sphi 0, %s276
      %s293 = sphi 0, %s277
      %s299 = sphi 0, %s301
      %s302 = sphi 0, %s299
      %s303 = sphi 0, %s302
      %s319 = sphi 0, %s303
      %s325 = sphi 0, %s327
      %s328 = sphi 0, %s325
      %s329 = sphi 0, %s328
      %s345 = sphi 0, %s329
      %s351 = sphi 0, %s353
      %s354 = sphi 0, %s351
      %s355 = sphi 0, %s354
      %s371 = sphi 0, %s355
      %s377 = sphi 0, %s379
      %s380 = sphi 0, %s377
      %s381 = sphi 0, %s380
      %s397 = sphi 0, %s381
      %s401 = sphi 0, %s401
      %s403 = sphi 0, %s401
      %s404 = sphi 0, %s403
      %s418 = sphi 0, %s404
      %s422 = sphi 0, %s422
      %s424 = sphi 0, %s422
      %s425 = sphi 0, %s424
      %s439 = sphi 0, %s425
      %s445 = sphi 0, %s447
      %s448 = sphi 0, %s445
      %s449 = sphi 0, %s448
      %s465 = sphi 0, %s449
    $region4: #{transformer_model_forward.2} parent=1 // loop_header_branch
      %46 = sbr.rel (%p44) target = $region8
    $region5: #{transformer_model_forward.2} parent=1 // loop_body
      %s48 = ssub.s32 %s43, 1
      %s49 = ssub.s32 %s43, 2
      %s56 = sadd.s32 1, %s51
      %p57 = scmp.ge.s32.totalorder %s56, 6
      %s58 = scalar_select %p57, 0, %s56
      %s59 = sadd.s32 1, %s50
      %s60 = scalar_select %p57, %s59, %s50
      %p61 = scmp.ge.s32.totalorder %s60, 2
      %s62 = scalar_select %p61, 0, %s60
      %s63 = ssub.s32 %s50, %s62
      %p64 = scmp.eq.s32.totalorder %s63, 0
      %s66 = sadd.s32 %s65, 1
      %s67 = scalar_select %p64, %s65, %s66
      %p70 = pneg %p64
      %p71 = scmp.eq.s32.totalorder %s43, 11
      %p72 = por %p70, %p71
      %p73 = scmp.ne.s32.totalorder %s65, %s68
      %p74 = scmp.eq.s32.totalorder %s43, 0
      %p75 = por %p73, %p74
      %p76 = scmp.ne.s32.totalorder %s65, %s68
      %p77 = scmp.eq.s32.totalorder %s48, 11
      %p78 = por %p76, %p77
      %p79 = scmp.ne.s32.totalorder %s68, %s69
      %p80 = scmp.eq.s32.totalorder %s48, 0
      %p81 = por %p79, %p80
      %p82 = scmp.ne.s32.totalorder %s68, %s69
      %p83 = scmp.eq.s32.totalorder %s49, 11
      %p84 = por %p82, %p83
      %p86 = scmp.ne.s32.totalorder %s69, %s85
      %p87 = scmp.eq.s32.totalorder %s49, 0
      %p88 = por %p86, %p87
      %s89 = ssub.s32 %s51, %s58
      %p90 = scmp.eq.s32.totalorder %s89, 0
      %s92 = sadd.s32 %s91, 1
      %s93 = scalar_select %p90, %s91, %s92
      %p96 = pneg %p90
      %p97 = scmp.eq.s32.totalorder %s43, 11
      %p98 = por %p96, %p97
      %p99 = scmp.ne.s32.totalorder %s91, %s94
      %p100 = scmp.eq.s32.totalorder %s43, 0
      %p101 = por %p99, %p100
      %p102 = scmp.ne.s32.totalorder %s91, %s94
      %p103 = scmp.eq.s32.totalorder %s48, 11
      %p104 = por %p102, %p103
      %p105 = scmp.ne.s32.totalorder %s94, %s95
      %p106 = scmp.eq.s32.totalorder %s48, 0
      %p107 = por %p105, %p106
      %p108 = scmp.ne.s32.totalorder %s94, %s95
      %p109 = scmp.eq.s32.totalorder %s49, 11
      %p110 = por %p108, %p109
      %p112 = scmp.ne.s32.totalorder %s95, %s111
      %p113 = scmp.eq.s32.totalorder %s49, 0
      %p114 = por %p112, %p113
      %s115 = ssub.s32 %s51, %s58
      %p116 = scmp.eq.s32.totalorder %s115, 0
      %s118 = sadd.s32 %s117, 1
      %s119 = scalar_select %p116, %s117, %s118
      %p122 = pneg %p116
      %p123 = scmp.eq.s32.totalorder %s43, 11
      %p124 = por %p122, %p123
      %p125 = scmp.ne.s32.totalorder %s117, %s120
      %p126 = scmp.eq.s32.totalorder %s43, 0
      %p127 = por %p125, %p126
      %p128 = scmp.ne.s32.totalorder %s117, %s120
      %p129 = scmp.eq.s32.totalorder %s48, 11
      %p130 = por %p128, %p129
      %p131 = scmp.ne.s32.totalorder %s120, %s121
      %p132 = scmp.eq.s32.totalorder %s48, 0
      %p133 = por %p131, %p132
      %p134 = scmp.ne.s32.totalorder %s120, %s121
      %p135 = scmp.eq.s32.totalorder %s49, 11
      %p136 = por %p134, %p135
      %p138 = scmp.ne.s32.totalorder %s121, %s137
      %p139 = scmp.eq.s32.totalorder %s49, 0
      %p140 = por %p138, %p139
      %s141 = ssub.s32 %s51, %s58
      %p142 = scmp.eq.s32.totalorder %s141, 0
      %s144 = sadd.s32 %s143, 1
      %s145 = scalar_select %p142, %s143, %s144
      %p148 = pneg %p142
      %p149 = scmp.eq.s32.totalorder %s43, 11
      %p150 = por %p148, %p149
      %p151 = scmp.ne.s32.totalorder %s143, %s146
      %p152 = scmp.eq.s32.totalorder %s43, 0
      %p153 = por %p151, %p152
      %p154 = scmp.ne.s32.totalorder %s143, %s146
      %p155 = scmp.eq.s32.totalorder %s48, 11
      %p156 = por %p154, %p155
      %p157 = scmp.ne.s32.totalorder %s146, %s147
      %p158 = scmp.eq.s32.totalorder %s48, 0
      %p159 = por %p157, %p158
      %p160 = scmp.ne.s32.totalorder %s146, %s147
      %p161 = scmp.eq.s32.totalorder %s49, 11
      %p162 = por %p160, %p161
      %p164 = scmp.ne.s32.totalorder %s147, %s163
      %p165 = scmp.eq.s32.totalorder %s49, 0
      %p166 = por %p164, %p165
      %s167 = ssub.s32 %s51, %s58
      %p168 = scmp.eq.s32.totalorder %s167, 0
      %s170 = sadd.s32 %s169, 1
      %s171 = scalar_select %p168, %s169, %s170
      %p174 = pneg %p168
      %p175 = scmp.eq.s32.totalorder %s43, 11
      %p176 = por %p174, %p175
      %p177 = scmp.ne.s32.totalorder %s169, %s172
      %p178 = scmp.eq.s32.totalorder %s43, 0
      %p179 = por %p177, %p178
      %p180 = scmp.ne.s32.totalorder %s169, %s172
      %p181 = scmp.eq.s32.totalorder %s48, 11
      %p182 = por %p180, %p181
      %p183 = scmp.ne.s32.totalorder %s172, %s173
      %p184 = scmp.eq.s32.totalorder %s48, 0
      %p185 = por %p183, %p184
      %p186 = scmp.ne.s32.totalorder %s172, %s173
      %p187 = scmp.eq.s32.totalorder %s49, 11
      %p188 = por %p186, %p187
      %p190 = scmp.ne.s32.totalorder %s173, %s189
      %p191 = scmp.eq.s32.totalorder %s49, 0
      %p192 = por %p190, %p191
      %s193 = ssub.s32 %s51, %s58
      %p194 = scmp.eq.s32.totalorder %s193, 0
      %s196 = sadd.s32 %s195, 1
      %s197 = scalar_select %p194, %s195, %s196
      %p200 = pneg %p194
      %p201 = scmp.eq.s32.totalorder %s43, 11
      %p202 = por %p200, %p201
      %p203 = scmp.ne.s32.totalorder %s195, %s198
      %p204 = scmp.eq.s32.totalorder %s43, 0
      %p205 = por %p203, %p204
      %p206 = scmp.ne.s32.totalorder %s195, %s198
      %p207 = scmp.eq.s32.totalorder %s48, 11
      %p208 = por %p206, %p207
      %p209 = scmp.ne.s32.totalorder %s198, %s199
      %p210 = scmp.eq.s32.totalorder %s48, 0
      %p211 = por %p209, %p210
      %p212 = scmp.ne.s32.totalorder %s198, %s199
      %p213 = scmp.eq.s32.totalorder %s49, 11
      %p214 = por %p212, %p213
      %p216 = scmp.ne.s32.totalorder %s199, %s215
      %p217 = scmp.eq.s32.totalorder %s49, 0
      %p218 = por %p216, %p217
      %s219 = ssub.s32 %s51, %s58
      %p220 = scmp.eq.s32.totalorder %s219, 0
      %s222 = sadd.s32 %s221, 1
      %s223 = scalar_select %p220, %s221, %s222
      %p226 = pneg %p220
      %p227 = scmp.eq.s32.totalorder %s43, 11
      %p228 = por %p226, %p227
      %p229 = scmp.ne.s32.totalorder %s221, %s224
      %p230 = scmp.eq.s32.totalorder %s43, 0
      %p231 = por %p229, %p230
      %p232 = scmp.ne.s32.totalorder %s221, %s224
      %p233 = scmp.eq.s32.totalorder %s48, 11
      %p234 = por %p232, %p233
      %p235 = scmp.ne.s32.totalorder %s224, %s225
      %p236 = scmp.eq.s32.totalorder %s48, 0
      %p237 = por %p235, %p236
      %p238 = scmp.ne.s32.totalorder %s224, %s225
      %p239 = scmp.eq.s32.totalorder %s49, 11
      %p240 = por %p238, %p239
      %p242 = scmp.ne.s32.totalorder %s225, %s241
      %p243 = scmp.eq.s32.totalorder %s49, 0
      %p244 = por %p242, %p243
      %s245 = ssub.s32 %s51, %s58
      %p246 = scmp.eq.s32.totalorder %s245, 0
      %s248 = sadd.s32 %s247, 1
      %s249 = scalar_select %p246, %s247, %s248
      %p252 = pneg %p246
      %p253 = scmp.eq.s32.totalorder %s43, 11
      %p254 = por %p252, %p253
      %p255 = scmp.ne.s32.totalorder %s247, %s250
      %p256 = scmp.eq.s32.totalorder %s43, 0
      %p257 = por %p255, %p256
      %p258 = scmp.ne.s32.totalorder %s247, %s250
      %p259 = scmp.eq.s32.totalorder %s48, 11
      %p260 = por %p258, %p259
      %p261 = scmp.ne.s32.totalorder %s250, %s251
      %p262 = scmp.eq.s32.totalorder %s48, 0
      %p263 = por %p261, %p262
      %p264 = scmp.ne.s32.totalorder %s250, %s251
      %p265 = scmp.eq.s32.totalorder %s49, 11
      %p266 = por %p264, %p265
      %p268 = scmp.ne.s32.totalorder %s251, %s267
      %p269 = scmp.eq.s32.totalorder %s49, 0
      %p270 = por %p268, %p269
      %s271 = ssub.s32 %s51, %s58
      %p272 = scmp.eq.s32.totalorder %s271, 0
      %s274 = sadd.s32 %s273, 1
      %s275 = scalar_select %p272, %s273, %s274
      %p278 = pneg %p272
      %p279 = scmp.eq.s32.totalorder %s43, 11
      %p280 = por %p278, %p279
      %p281 = scmp.ne.s32.totalorder %s273, %s276
      %p282 = scmp.eq.s32.totalorder %s43, 0
      %p283 = por %p281, %p282
      %p284 = scmp.ne.s32.totalorder %s273, %s276
      %p285 = scmp.eq.s32.totalorder %s48, 11
      %p286 = por %p284, %p285
      %p287 = scmp.ne.s32.totalorder %s276, %s277
      %p288 = scmp.eq.s32.totalorder %s48, 0
      %p289 = por %p287, %p288
      %p290 = scmp.ne.s32.totalorder %s276, %s277
      %p291 = scmp.eq.s32.totalorder %s49, 11
      %p292 = por %p290, %p291
      %p294 = scmp.ne.s32.totalorder %s277, %s293
      %p295 = scmp.eq.s32.totalorder %s49, 0
      %p296 = por %p294, %p295
      %s297 = ssub.s32 %s51, %s58
      %p298 = scmp.eq.s32.totalorder %s297, 0
      %s300 = sadd.s32 %s299, 1
      %s301 = scalar_select %p298, %s299, %s300
      %p304 = pneg %p298
      %p305 = scmp.eq.s32.totalorder %s43, 11
      %p306 = por %p304, %p305
      %p307 = scmp.ne.s32.totalorder %s299, %s302
      %p308 = scmp.eq.s32.totalorder %s43, 0
      %p309 = por %p307, %p308
      %p310 = scmp.ne.s32.totalorder %s299, %s302
      %p311 = scmp.eq.s32.totalorder %s48, 11
      %p312 = por %p310, %p311
      %p313 = scmp.ne.s32.totalorder %s302, %s303
      %p314 = scmp.eq.s32.totalorder %s48, 0
      %p315 = por %p313, %p314
      %p316 = scmp.ne.s32.totalorder %s302, %s303
      %p317 = scmp.eq.s32.totalorder %s49, 11
      %p318 = por %p316, %p317
      %p320 = scmp.ne.s32.totalorder %s303, %s319
      %p321 = scmp.eq.s32.totalorder %s49, 0
      %p322 = por %p320, %p321
      %s323 = ssub.s32 %s51, %s58
      %p324 = scmp.eq.s32.totalorder %s323, 0
      %s326 = sadd.s32 %s325, 1
      %s327 = scalar_select %p324, %s325, %s326
      %p330 = pneg %p324
      %p331 = scmp.eq.s32.totalorder %s43, 11
      %p332 = por %p330, %p331
      %p333 = scmp.ne.s32.totalorder %s325, %s328
      %p334 = scmp.eq.s32.totalorder %s43, 0
      %p335 = por %p333, %p334
      %p336 = scmp.ne.s32.totalorder %s325, %s328
      %p337 = scmp.eq.s32.totalorder %s48, 11
      %p338 = por %p336, %p337
      %p339 = scmp.ne.s32.totalorder %s328, %s329
      %p340 = scmp.eq.s32.totalorder %s48, 0
      %p341 = por %p339, %p340
      %p342 = scmp.ne.s32.totalorder %s328, %s329
      %p343 = scmp.eq.s32.totalorder %s49, 11
      %p344 = por %p342, %p343
      %p346 = scmp.ne.s32.totalorder %s329, %s345
      %p347 = scmp.eq.s32.totalorder %s49, 0
      %p348 = por %p346, %p347
      %s349 = ssub.s32 %s51, %s58
      %p350 = scmp.eq.s32.totalorder %s349, 0
      %s352 = sadd.s32 %s351, 1
      %s353 = scalar_select %p350, %s351, %s352
      %p356 = pneg %p350
      %p357 = scmp.eq.s32.totalorder %s43, 11
      %p358 = por %p356, %p357
      %p359 = scmp.ne.s32.totalorder %s351, %s354
      %p360 = scmp.eq.s32.totalorder %s43, 0
      %p361 = por %p359, %p360
      %p362 = scmp.ne.s32.totalorder %s351, %s354
      %p363 = scmp.eq.s32.totalorder %s48, 11
      %p364 = por %p362, %p363
      %p365 = scmp.ne.s32.totalorder %s354, %s355
      %p366 = scmp.eq.s32.totalorder %s48, 0
      %p367 = por %p365, %p366
      %p368 = scmp.ne.s32.totalorder %s354, %s355
      %p369 = scmp.eq.s32.totalorder %s49, 11
      %p370 = por %p368, %p369
      %p372 = scmp.ne.s32.totalorder %s355, %s371
      %p373 = scmp.eq.s32.totalorder %s49, 0
      %p374 = por %p372, %p373
      %s375 = ssub.s32 %s51, %s58
      %p376 = scmp.eq.s32.totalorder %s375, 0
      %s378 = sadd.s32 %s377, 1
      %s379 = scalar_select %p376, %s377, %s378
      %p382 = pneg %p376
      %p383 = scmp.eq.s32.totalorder %s43, 11
      %p384 = por %p382, %p383
      %p385 = scmp.ne.s32.totalorder %s377, %s380
      %p386 = scmp.eq.s32.totalorder %s43, 0
      %p387 = por %p385, %p386
      %p388 = scmp.ne.s32.totalorder %s377, %s380
      %p389 = scmp.eq.s32.totalorder %s48, 11
      %p390 = por %p388, %p389
      %p391 = scmp.ne.s32.totalorder %s380, %s381
      %p392 = scmp.eq.s32.totalorder %s48, 0
      %p393 = por %p391, %p392
      %p394 = scmp.ne.s32.totalorder %s380, %s381
      %p395 = scmp.eq.s32.totalorder %s49, 11
      %p396 = por %p394, %p395
      %p398 = scmp.ne.s32.totalorder %s381, %s397
      %p399 = scmp.eq.s32.totalorder %s49, 0
      %p400 = por %p398, %p399
      %s402 = sadd.s32 %s401, 1
      %p405 = scmp.eq.s32.totalorder %s43, 11
      %p406 = scmp.ne.s32.totalorder %s401, %s403
      %p407 = scmp.eq.s32.totalorder %s43, 0
      %p408 = por %p406, %p407
      %p409 = scmp.ne.s32.totalorder %s401, %s403
      %p410 = scmp.eq.s32.totalorder %s48, 11
      %p411 = por %p409, %p410
      %p412 = scmp.ne.s32.totalorder %s403, %s404
      %p413 = scmp.eq.s32.totalorder %s48, 0
      %p414 = por %p412, %p413
      %p415 = scmp.ne.s32.totalorder %s403, %s404
      %p416 = scmp.eq.s32.totalorder %s49, 11
      %p417 = por %p415, %p416
      %p419 = scmp.ne.s32.totalorder %s404, %s418
      %p420 = scmp.eq.s32.totalorder %s49, 0
      %p421 = por %p419, %p420
      %s423 = sadd.s32 %s422, 1
      %p426 = scmp.eq.s32.totalorder %s43, 11
      %p427 = scmp.ne.s32.totalorder %s422, %s424
      %p428 = scmp.eq.s32.totalorder %s43, 0
      %p429 = por %p427, %p428
      %p430 = scmp.ne.s32.totalorder %s422, %s424
      %p431 = scmp.eq.s32.totalorder %s48, 11
      %p432 = por %p430, %p431
      %p433 = scmp.ne.s32.totalorder %s424, %s425
      %p434 = scmp.eq.s32.totalorder %s48, 0
      %p435 = por %p433, %p434
      %p436 = scmp.ne.s32.totalorder %s424, %s425
      %p437 = scmp.eq.s32.totalorder %s49, 11
      %p438 = por %p436, %p437
      %p440 = scmp.ne.s32.totalorder %s425, %s439
      %p441 = scmp.eq.s32.totalorder %s49, 0
      %p442 = por %p440, %p441
      %s443 = ssub.s32 %s50, %s62
      %p444 = scmp.eq.s32.totalorder %s443, 0
      %s446 = sadd.s32 %s445, 1
      %s447 = scalar_select %p444, %s445, %s446
      %p450 = pneg %p444
      %p451 = scmp.eq.s32.totalorder %s43, 11
      %p452 = por %p450, %p451
      %p453 = scmp.ne.s32.totalorder %s445, %s448
      %p454 = scmp.eq.s32.totalorder %s43, 0
      %p455 = por %p453, %p454
      %p456 = scmp.ne.s32.totalorder %s445, %s448
      %p457 = scmp.eq.s32.totalorder %s48, 11
      %p458 = por %p456, %p457
      %p459 = scmp.ne.s32.totalorder %s448, %s449
      %p460 = scmp.eq.s32.totalorder %s48, 0
      %p461 = por %p459, %p460
      %p462 = scmp.ne.s32.totalorder %s448, %s449
      %p463 = scmp.eq.s32.totalorder %s49, 11
      %p464 = por %p462, %p463
      %p466 = scmp.ne.s32.totalorder %s449, %s465
      %p467 = scmp.eq.s32.totalorder %s49, 0
      %p468 = por %p466, %p467
      %p469 = scmp.le.s32.totalorder 1, %s43
      %p470 = scmp.lt.s32.totalorder %s43, 13
      %p471 = pnand %p469, %p470
      %p472 = pneg %p471
      // Predicated region
      $region9: #{transformer_model_forward.2} parent=5 // pred_check
        _
      $region10: #{transformer_model_forward.2} parent=5 // pred_check_branch
        %474 = sbr.rel (%p471) target = $region12
      $region11: #{transformer_model_forward.2} parent=5 // pred_region
        %s475 = ssub.s32 %s43, 1
        // Predicated region
        $region13: #{transformer_model_forward.2} parent=11 // pred_check
          %p476 = pneg %p414
        $region14: #{transformer_model_forward.2} parent=11 // pred_check_branch
          %478 = sbr.rel (%p476) target = $region16
        $region15: #{transformer_model_forward.2} parent=11 // pred_region
          %s480 = ssub.s32 16, 16
          %481 = vsyncadd [#allocation20], %s480
          %s483 = sshll.u32 [#allocation21], 4
          %s484 = int_to_ptr.vmem [resolvable:$true] %s483
          %486 = dma.hbm_to_vmem [thread:$0]  %s13, 16, %s484, [#allocation20]
        $region16: #{transformer_model_forward.2} parent=11 // pred_fallthru
          _
        // Predicated region
        $region17: #{transformer_model_forward.2} parent=11 // pred_check
          %p487 = pneg %p435
        $region18: #{transformer_model_forward.2} parent=11 // pred_check_branch
          %489 = sbr.rel (%p487) target = $region20
        $region19: #{transformer_model_forward.2} parent=11 // pred_region
          %s491 = ssub.s32 16, 16
          %492 = vsyncadd [#allocation23], %s491
          %s494 = sshll.u32 [#allocation22], 4
          %s495 = int_to_ptr.vmem [resolvable:$true] %s494
          %497 = dma.hbm_to_vmem [thread:$0]  %s14, 16, %s495, [#allocation23]
        $region20: #{transformer_model_forward.2} parent=11 // pred_fallthru
          _
      $region12: #{transformer_model_forward.2} parent=5 // pred_fallthru
        _
      %p498 = scmp.lt.s32.totalorder %s43, 12
      // Predicated region
      $region21: #{transformer_model_forward.2} parent=5 // pred_check
        %p499 = pneg %p498
      $region22: #{transformer_model_forward.2} parent=5 // pred_check_branch
        %501 = sbr.rel (%p499) target = $region24
      $region23: #{transformer_model_forward.2} parent=5 // pred_region
        // Predicated region
        $region25: #{transformer_model_forward.2} parent=23 // pred_check
          %p502 = pneg %p75
        $region26: #{transformer_model_forward.2} parent=23 // pred_check_branch
          %504 = sbr.rel (%p502) target = $region28
        $region27: #{transformer_model_forward.2} parent=23 // pred_region
          %p505 = scmp.lt.s32.totalorder %s50, 1
          %s506 = scalar_select %p505, %s50, 1
          %s507 = smul.addr %s506, 4
          %s508 = scalar_lea.vmem %s0, %s507
        $region28: #{transformer_model_forward.2} parent=23 // pred_fallthru
          _
        // Predicated region
        $region29: #{transformer_model_forward.2} parent=23 // pred_check
          %p509 = pneg %p101
        $region30: #{transformer_model_forward.2} parent=23 // pred_check_branch
          %511 = sbr.rel (%p509) target = $region32
        $region31: #{transformer_model_forward.2} parent=23 // pred_region
          %s512 = sand.u32 %s91, 1
          %s513 = scalar_lea.sflag [#allocation3], %s512
          %s514 = sand.u32 %s91, 1
          %s515 = smul.addr %s514, 192
          %s516 = scalar_lea.vmem [#allocation2], %s515
          %s518 = ssub.s32 3072, 3072
          %519 = vsyncadd %s513, %s518
          %s520 = smul.addr %s51, 48
          %s521 = smul.addr %s520, 64
          %s522 = scalar_lea.hbm %s1, %s521
          %s523 = sshll.u32 %s516, 4
          %s524 = int_to_ptr.vmem [resolvable:$true] %s523
          %529 = dma.hbm_to_vmem [thread:$0]  %s522, 3072, %s524, %s513, 192, 192, 12
        $region32: #{transformer_model_forward.2} parent=23 // pred_fallthru
          _
        // Predicated region
        $region33: #{transformer_model_forward.2} parent=23 // pred_check
          %p530 = pneg %p127
        $region34: #{transformer_model_forward.2} parent=23 // pred_check_branch
          %532 = sbr.rel (%p530) target = $region36
        $region35: #{transformer_model_forward.2} parent=23 // pred_region
          %s533 = sand.u32 %s43, 1
          %s534 = scalar_lea.sflag [#allocation5], %s533
          %s535 = sand.u32 %s117, 1
          %s536 = smul.addr %s535, 3
          %s537 = scalar_lea.vmem [#allocation4], %s536
          %s539 = ssub.s32 48, 48
          %540 = vsyncadd %s534, %s539
          %s541 = smul.addr %s51, 3
          %s542 = smul.addr %s541, 16
          %s543 = scalar_lea.hbm %s2, %s542
          %s545 = sshll.u32 %s537, 4
          %s546 = int_to_ptr.vmem [resolvable:$true] %s545
          %548 = dma.hbm_to_vmem [thread:$0]  %s543, 48, %s546, %s534
        $region36: #{transformer_model_forward.2} parent=23 // pred_fallthru
          _
        // Predicated region
        $region37: #{transformer_model_forward.2} parent=23 // pred_check
          %p549 = pneg %p153
        $region38: #{transformer_model_forward.2} parent=23 // pred_check_branch
          %551 = sbr.rel (%p549) target = $region40
        $region39: #{transformer_model_forward.2} parent=23 // pred_region
          %s552 = sand.u32 %s43, 1
          %s553 = scalar_lea.sflag [#allocation5], %s552
          %s554 = sand.u32 %s143, 1
          %s555 = smul.addr %s554, 64
          %s556 = scalar_lea.vmem [#allocation6], %s555
          %s558 = ssub.s32 1024, 1024
          %559 = vsyncadd %s553, %s558
          %s560 = smul.addr %s51, 16
          %s561 = smul.addr %s560, 64
          %s562 = scalar_lea.hbm %s3, %s561
          %s563 = sshll.u32 %s556, 4
          %s564 = int_to_ptr.vmem [resolvable:$true] %s563
          %569 = dma.hbm_to_vmem [thread:$0]  %s562, 1024, %s564, %s553, 64, 64, 4
        $region40: #{transformer_model_forward.2} parent=23 // pred_fallthru
          _
        // Predicated region
        $region41: #{transformer_model_forward.2} parent=23 // pred_check
          %p570 = pneg %p179
        $region42: #{transformer_model_forward.2} parent=23 // pred_check_branch
          %572 = sbr.rel (%p570) target = $region44
        $region43: #{transformer_model_forward.2} parent=23 // pred_region
          %s573 = sand.u32 %s43, 1
          %s574 = scalar_lea.sflag [#allocation8], %s573
          %s575 = sand.u32 %s169, 1
          %s576 = scalar_lea.vmem [#allocation7], %s575
          %s578 = ssub.s32 16, 16
          %579 = vsyncadd %s574, %s578
          %s580 = smul.addr %s51, 16
          %s581 = scalar_lea.hbm %s4, %s580
          %s583 = sshll.u32 %s576, 4
          %s584 = int_to_ptr.vmem [resolvable:$true] %s583
          %586 = dma.hbm_to_vmem [thread:$0]  %s581, 16, %s584, %s574
        $region44: #{transformer_model_forward.2} parent=23 // pred_fallthru
          _
        // Predicated region
        $region45: #{transformer_model_forward.2} parent=23 // pred_check
          %p587 = pneg %p205
        $region46: #{transformer_model_forward.2} parent=23 // pred_check_branch
          %589 = sbr.rel (%p587) target = $region48
        $region47: #{transformer_model_forward.2} parent=23 // pred_region
          %s590 = sand.u32 %s43, 1
          %s591 = scalar_lea.sflag [#allocation8], %s590
          %s592 = sand.u32 %s195, 1
          %s593 = scalar_lea.vmem [#allocation9], %s592
          %s595 = ssub.s32 16, 16
          %596 = vsyncadd %s591, %s595
          %s597 = smul.addr %s51, 16
          %s598 = scalar_lea.hbm %s5, %s597
          %s600 = sshll.u32 %s593, 4
          %s601 = int_to_ptr.vmem [resolvable:$true] %s600
          %603 = dma.hbm_to_vmem [thread:$0]  %s598, 16, %s601, %s591
        $region48: #{transformer_model_forward.2} parent=23 // pred_fallthru
          _
        // Predicated region
        $region49: #{transformer_model_forward.2} parent=23 // pred_check
          %p604 = pneg %p231
        $region50: #{transformer_model_forward.2} parent=23 // pred_check_branch
          %606 = sbr.rel (%p604) target = $region52
        $region51: #{transformer_model_forward.2} parent=23 // pred_region
          %s607 = sand.u32 %s43, 1
          %s608 = scalar_lea.sflag [#allocation11], %s607
          %s609 = sand.u32 %s221, 1
          %s610 = scalar_lea.vmem [#allocation10], %s609
          %s612 = ssub.s32 16, 16
          %613 = vsyncadd %s608, %s612
          %s614 = smul.addr %s51, 16
          %s615 = scalar_lea.hbm %s6, %s614
          %s617 = sshll.u32 %s610, 4
          %s618 = int_to_ptr.vmem [resolvable:$true] %s617
          %620 = dma.hbm_to_vmem [thread:$0]  %s615, 16, %s618, %s608
        $region52: #{transformer_model_forward.2} parent=23 // pred_fallthru
          _
        // Predicated region
        $region53: #{transformer_model_forward.2} parent=23 // pred_check
          %p621 = pneg %p257
        $region54: #{transformer_model_forward.2} parent=23 // pred_check_branch
          %623 = sbr.rel (%p621) target = $region56
        $region55: #{transformer_model_forward.2} parent=23 // pred_region
          %s624 = sand.u32 %s43, 1
          %s625 = scalar_lea.sflag [#allocation11], %s624
          %s626 = sand.u32 %s247, 1
          %s627 = smul.addr %s626, 1024
          %s628 = scalar_lea.vmem [#allocation12], %s627
          %s630 = ssub.s32 16384, 16384
          %631 = vsyncadd %s625, %s630
          %s632 = smul.addr %s51, 256
          %s633 = smul.addr %s632, 64
          %s634 = scalar_lea.hbm %s7, %s633
          %s635 = sshll.u32 %s628, 4
          %s636 = int_to_ptr.vmem [resolvable:$true] %s635
          %641 = dma.hbm_to_vmem [thread:$0]  %s634, 16384, %s636, %s625, 1024, 1024, 64
        $region56: #{transformer_model_forward.2} parent=23 // pred_fallthru
          _
        // Predicated region
        $region57: #{transformer_model_forward.2} parent=23 // pred_check
          %p642 = pneg %p283
        $region58: #{transformer_model_forward.2} parent=23 // pred_check_branch
          %644 = sbr.rel (%p642) target = $region60
        $region59: #{transformer_model_forward.2} parent=23 // pred_region
          %s645 = sand.u32 %s43, 1
          %s646 = scalar_lea.sflag [#allocation14], %s645
          %s647 = sand.u32 %s273, 1
          %s648 = smul.addr %s647, 16
          %s649 = scalar_lea.vmem [#allocation13], %s648
          %s651 = ssub.s32 256, 256
          %652 = vsyncadd %s646, %s651
          %s653 = smul.addr %s51, 16
          %s654 = smul.addr %s653, 16
          %s655 = scalar_lea.hbm %s8, %s654
          %s657 = sshll.u32 %s649, 4
          %s658 = int_to_ptr.vmem [resolvable:$true] %s657
          %660 = dma.hbm_to_vmem [thread:$0]  %s655, 256, %s658, %s646
        $region60: #{transformer_model_forward.2} parent=23 // pred_fallthru
          _
        // Predicated region
        $region61: #{transformer_model_forward.2} parent=23 // pred_check
          %p661 = pneg %p309
        $region62: #{transformer_model_forward.2} parent=23 // pred_check_branch
          %663 = sbr.rel (%p661) target = $region64
        $region63: #{transformer_model_forward.2} parent=23 // pred_region
          %s664 = sand.u32 %s43, 1
          %s665 = scalar_lea.sflag [#allocation14], %s664
          %s666 = sand.u32 %s299, 1
          %s667 = smul.addr %s666, 1024
          %s668 = scalar_lea.vmem [#allocation15], %s667
          %s670 = ssub.s32 16384, 16384
          %671 = vsyncadd %s665, %s670
          %s672 = smul.addr %s51, 256
          %s673 = smul.addr %s672, 64
          %s674 = scalar_lea.hbm %s9, %s673
          %s675 = sshll.u32 %s668, 4
          %s676 = int_to_ptr.vmem [resolvable:$true] %s675
          %681 = dma.hbm_to_vmem [thread:$0]  %s674, 16384, %s676, %s665, 64, 64, 4
        $region64: #{transformer_model_forward.2} parent=23 // pred_fallthru
          _
        // Predicated region
        $region65: #{transformer_model_forward.2} parent=23 // pred_check
          %p682 = pneg %p335
        $region66: #{transformer_model_forward.2} parent=23 // pred_check_branch
          %684 = sbr.rel (%p682) target = $region68
        $region67: #{transformer_model_forward.2} parent=23 // pred_region
          %s685 = sand.u32 %s43, 1
          %s686 = scalar_lea.sflag [#allocation17], %s685
          %s687 = sand.u32 %s325, 1
          %s688 = scalar_lea.vmem [#allocation16], %s687
          %s690 = ssub.s32 16, 16
          %691 = vsyncadd %s686, %s690
          %s692 = smul.addr %s51, 16
          %s693 = scalar_lea.hbm %s10, %s692
          %s695 = sshll.u32 %s688, 4
          %s696 = int_to_ptr.vmem [resolvable:$true] %s695
          %698 = dma.hbm_to_vmem [thread:$0]  %s693, 16, %s696, %s686
        $region68: #{transformer_model_forward.2} parent=23 // pred_fallthru
          _
        // Predicated region
        $region69: #{transformer_model_forward.2} parent=23 // pred_check
          %p699 = pneg %p361
        $region70: #{transformer_model_forward.2} parent=23 // pred_check_branch
          %701 = sbr.rel (%p699) target = $region72
        $region71: #{transformer_model_forward.2} parent=23 // pred_region
          %s702 = sand.u32 %s43, 1
          %s703 = scalar_lea.sflag [#allocation17], %s702
          %s704 = sand.u32 %s351, 1
          %s705 = scalar_lea.vmem [#allocation18], %s704
          %s707 = ssub.s32 16, 16
          %708 = vsyncadd %s703, %s707
          %s709 = smul.addr %s51, 16
          %s710 = scalar_lea.hbm %s11, %s709
          %s712 = sshll.u32 %s705, 4
          %s713 = int_to_ptr.vmem [resolvable:$true] %s712
          %715 = dma.hbm_to_vmem [thread:$0]  %s710, 16, %s713, %s703
        $region72: #{transformer_model_forward.2} parent=23 // pred_fallthru
          _
        // Predicated region
        $region73: #{transformer_model_forward.2} parent=23 // pred_check
          %p716 = pneg %p387
        $region74: #{transformer_model_forward.2} parent=23 // pred_check_branch
          %718 = sbr.rel (%p716) target = $region76
        $region75: #{transformer_model_forward.2} parent=23 // pred_region
          %s719 = sand.u32 %s43, 1
          %s720 = scalar_lea.sflag [#allocation20], %s719
          %s721 = sand.u32 %s377, 1
          %s722 = scalar_lea.vmem [#allocation19], %s721
          %s724 = ssub.s32 16, 16
          %725 = vsyncadd %s720, %s724
          %s726 = smul.addr %s51, 16
          %s727 = scalar_lea.hbm %s12, %s726
          %s729 = sshll.u32 %s722, 4
          %s730 = int_to_ptr.vmem [resolvable:$true] %s729
          %732 = dma.hbm_to_vmem [thread:$0]  %s727, 16, %s730, %s720
        $region76: #{transformer_model_forward.2} parent=23 // pred_fallthru
          _
      $region24: #{transformer_model_forward.2} parent=5 // pred_fallthru
        _
      %p733 = scmp.le.s32.totalorder 1, %s43
      %p734 = scmp.lt.s32.totalorder %s43, 13
      %p735 = pnand %p733, %p734
      %p736 = pneg %p735
      // Predicated region
      $region77: #{transformer_model_forward.2} parent=5 // pred_check
        _
      $region78: #{transformer_model_forward.2} parent=5 // pred_check_branch
        %738 = sbr.rel (%p735) target = $region80
      $region79: #{transformer_model_forward.2} parent=5 // pred_region
        %s739 = ssub.s32 %s43, 1
        %s740 = sand.u32 %s94, 1
        %s741 = scalar_lea.sflag [#allocation3], %s740
        %s742 = sand.u32 %s94, 1
        %s743 = smul.addr %s742, 192
        %s744 = scalar_lea.vmem [#allocation2], %s743
        // Predicated region
        $region81: #{transformer_model_forward.2} parent=79 // pred_check
          %p745 = pneg %p107
        $region82: #{transformer_model_forward.2} parent=79 // pred_check_branch
          %747 = sbr.rel (%p745) target = $region84
        $region83: #{transformer_model_forward.2} parent=79 // pred_region
          %748 = dma.done %s741, 3072
        $region84: #{transformer_model_forward.2} parent=79 // pred_fallthru
          _
        %s749 = sand.u32 %s48, 1
        %s750 = scalar_lea.sflag [#allocation5], %s749
        %s751 = sand.u32 %s120, 1
        %s752 = smul.addr %s751, 3
        %s753 = scalar_lea.vmem [#allocation4], %s752
        // Predicated region
        $region85: #{transformer_model_forward.2} parent=79 // pred_check
          %p754 = pneg %p133
        $region86: #{transformer_model_forward.2} parent=79 // pred_check_branch
          %756 = sbr.rel (%p754) target = $region88
        $region87: #{transformer_model_forward.2} parent=79 // pred_region
          %757 = dma.done %s750, 48
        $region88: #{transformer_model_forward.2} parent=79 // pred_fallthru
          _
        %s758 = sand.u32 %s48, 1
        %s759 = scalar_lea.sflag [#allocation5], %s758
        %s760 = sand.u32 %s146, 1
        %s761 = smul.addr %s760, 64
        %s762 = scalar_lea.vmem [#allocation6], %s761
        // Predicated region
        $region89: #{transformer_model_forward.2} parent=79 // pred_check
          %p763 = pneg %p159
        $region90: #{transformer_model_forward.2} parent=79 // pred_check_branch
          %765 = sbr.rel (%p763) target = $region92
        $region91: #{transformer_model_forward.2} parent=79 // pred_region
          %766 = dma.done %s759, 1024
        $region92: #{transformer_model_forward.2} parent=79 // pred_fallthru
          _
        %s767 = sand.u32 %s48, 1
        %s768 = scalar_lea.sflag [#allocation8], %s767
        %s769 = sand.u32 %s172, 1
        %s770 = scalar_lea.vmem [#allocation7], %s769
        // Predicated region
        $region93: #{transformer_model_forward.2} parent=79 // pred_check
          %p771 = pneg %p185
        $region94: #{transformer_model_forward.2} parent=79 // pred_check_branch
          %773 = sbr.rel (%p771) target = $region96
        $region95: #{transformer_model_forward.2} parent=79 // pred_region
          %774 = dma.done %s768, 16
        $region96: #{transformer_model_forward.2} parent=79 // pred_fallthru
          _
        %s775 = sand.u32 %s48, 1
        %s776 = scalar_lea.sflag [#allocation8], %s775
        %s777 = sand.u32 %s198, 1
        %s778 = scalar_lea.vmem [#allocation9], %s777
        // Predicated region
        $region97: #{transformer_model_forward.2} parent=79 // pred_check
          %p779 = pneg %p211
        $region98: #{transformer_model_forward.2} parent=79 // pred_check_branch
          %781 = sbr.rel (%p779) target = $region100
        $region99: #{transformer_model_forward.2} parent=79 // pred_region
          %782 = dma.done %s776, 16
        $region100: #{transformer_model_forward.2} parent=79 // pred_fallthru
          _
        %s783 = sand.u32 %s48, 1
        %s784 = scalar_lea.sflag [#allocation11], %s783
        %s785 = sand.u32 %s224, 1
        %s786 = scalar_lea.vmem [#allocation10], %s785
        // Predicated region
        $region101: #{transformer_model_forward.2} parent=79 // pred_check
          %p787 = pneg %p237
        $region102: #{transformer_model_forward.2} parent=79 // pred_check_branch
          %789 = sbr.rel (%p787) target = $region104
        $region103: #{transformer_model_forward.2} parent=79 // pred_region
          %790 = dma.done %s784, 16
        $region104: #{transformer_model_forward.2} parent=79 // pred_fallthru
          _
        %s791 = sand.u32 %s48, 1
        %s792 = scalar_lea.sflag [#allocation11], %s791
        %s793 = sand.u32 %s250, 1
        %s794 = smul.addr %s793, 1024
        %s795 = scalar_lea.vmem [#allocation12], %s794
        // Predicated region
        $region105: #{transformer_model_forward.2} parent=79 // pred_check
          %p796 = pneg %p263
        $region106: #{transformer_model_forward.2} parent=79 // pred_check_branch
          %798 = sbr.rel (%p796) target = $region108
        $region107: #{transformer_model_forward.2} parent=79 // pred_region
          %799 = dma.done %s792, 16384
        $region108: #{transformer_model_forward.2} parent=79 // pred_fallthru
          _
        %s800 = sand.u32 %s48, 1
        %s801 = scalar_lea.sflag [#allocation14], %s800
        %s802 = sand.u32 %s276, 1
        %s803 = smul.addr %s802, 16
        %s804 = scalar_lea.vmem [#allocation13], %s803
        // Predicated region
        $region109: #{transformer_model_forward.2} parent=79 // pred_check
          %p805 = pneg %p289
        $region110: #{transformer_model_forward.2} parent=79 // pred_check_branch
          %807 = sbr.rel (%p805) target = $region112
        $region111: #{transformer_model_forward.2} parent=79 // pred_region
          %808 = dma.done %s801, 256
        $region112: #{transformer_model_forward.2} parent=79 // pred_fallthru
          _
        %s809 = sand.u32 %s48, 1
        %s810 = scalar_lea.sflag [#allocation14], %s809
        %s811 = sand.u32 %s302, 1
        %s812 = smul.addr %s811, 1024
        %s813 = scalar_lea.vmem [#allocation15], %s812
        // Predicated region
        $region113: #{transformer_model_forward.2} parent=79 // pred_check
          %p814 = pneg %p315
        $region114: #{transformer_model_forward.2} parent=79 // pred_check_branch
          %816 = sbr.rel (%p814) target = $region116
        $region115: #{transformer_model_forward.2} parent=79 // pred_region
          %817 = dma.done %s810, 16384
        $region116: #{transformer_model_forward.2} parent=79 // pred_fallthru
          _
        %s818 = sand.u32 %s48, 1
        %s819 = scalar_lea.sflag [#allocation17], %s818
        %s820 = sand.u32 %s328, 1
        %s821 = scalar_lea.vmem [#allocation16], %s820
        // Predicated region
        $region117: #{transformer_model_forward.2} parent=79 // pred_check
          %p822 = pneg %p341
        $region118: #{transformer_model_forward.2} parent=79 // pred_check_branch
          %824 = sbr.rel (%p822) target = $region120
        $region119: #{transformer_model_forward.2} parent=79 // pred_region
          %825 = dma.done %s819, 16
        $region120: #{transformer_model_forward.2} parent=79 // pred_fallthru
          _
        %s826 = sand.u32 %s48, 1
        %s827 = scalar_lea.sflag [#allocation17], %s826
        %s828 = sand.u32 %s354, 1
        %s829 = scalar_lea.vmem [#allocation18], %s828
        // Predicated region
        $region121: #{transformer_model_forward.2} parent=79 // pred_check
          %p830 = pneg %p367
        $region122: #{transformer_model_forward.2} parent=79 // pred_check_branch
          %832 = sbr.rel (%p830) target = $region124
        $region123: #{transformer_model_forward.2} parent=79 // pred_region
          %833 = dma.done %s827, 16
        $region124: #{transformer_model_forward.2} parent=79 // pred_fallthru
          _
        %s834 = sand.u32 %s48, 1
        %s835 = scalar_lea.sflag [#allocation20], %s834
        %s836 = sand.u32 %s380, 1
        %s837 = scalar_lea.vmem [#allocation19], %s836
        // Predicated region
        $region125: #{transformer_model_forward.2} parent=79 // pred_check
          %p838 = pneg %p393
        $region126: #{transformer_model_forward.2} parent=79 // pred_check_branch
          %840 = sbr.rel (%p838) target = $region128
        $region127: #{transformer_model_forward.2} parent=79 // pred_region
          %841 = dma.done %s835, 16
        $region128: #{transformer_model_forward.2} parent=79 // pred_fallthru
          _
        // Predicated region
        $region129: #{transformer_model_forward.2} parent=79 // pred_check
          %p842 = pneg %p414
        $region130: #{transformer_model_forward.2} parent=79 // pred_check_branch
          %844 = sbr.rel (%p842) target = $region132
        $region131: #{transformer_model_forward.2} parent=79 // pred_region
          %845 = dma.done [#allocation20], 16
        $region132: #{transformer_model_forward.2} parent=79 // pred_fallthru
          _
        // Predicated region
        $region133: #{transformer_model_forward.2} parent=79 // pred_check
          %p846 = pneg %p435
        $region134: #{transformer_model_forward.2} parent=79 // pred_check_branch
          %848 = sbr.rel (%p846) target = $region136
        $region135: #{transformer_model_forward.2} parent=79 // pred_region
          %849 = dma.done [#allocation23], 16
        $region136: #{transformer_model_forward.2} parent=79 // pred_fallthru
          _
        %p850 = scmp.lt.s32.totalorder %s52, 1
        %s851 = scalar_select %p850, %s52, 1
        %s852 = smul.addr %s851, 4
        %s853 = scalar_lea.vmem %s0, %s852
        %p854 = pneg %p81
        %p855 = pneg %p78
        %s856 = sand.u32 %s94, 1
        %s857 = scalar_lea.sflag [#allocation3], %s856
        %s858 = sand.u32 %s94, 1
        %s859 = smul.addr %s858, 192
        %s860 = scalar_lea.vmem [#allocation2], %s859
        %p861 = pneg %p107
        %p862 = pneg %p104
        %s863 = sand.u32 %s48, 1
        %s864 = scalar_lea.sflag [#allocation5], %s863
        %s865 = sand.u32 %s120, 1
        %s866 = smul.addr %s865, 3
        %s867 = scalar_lea.vmem [#allocation4], %s866
        %p868 = pneg %p133
        %p869 = pneg %p130
        %s870 = sand.u32 %s48, 1
        %s871 = scalar_lea.sflag [#allocation5], %s870
        %s872 = sand.u32 %s146, 1
        %s873 = smul.addr %s872, 64
        %s874 = scalar_lea.vmem [#allocation6], %s873
        %p875 = pneg %p159
        %p876 = pneg %p156
        %s877 = sand.u32 %s48, 1
        %s878 = scalar_lea.sflag [#allocation8], %s877
        %s879 = sand.u32 %s172, 1
        %s880 = scalar_lea.vmem [#allocation7], %s879
        %p881 = pneg %p185
        %p882 = pneg %p182
        %s883 = sand.u32 %s48, 1
        %s884 = scalar_lea.sflag [#allocation8], %s883
        %s885 = sand.u32 %s198, 1
        %s886 = scalar_lea.vmem [#allocation9], %s885
        %p887 = pneg %p211
        %p888 = pneg %p208
        %s889 = sand.u32 %s48, 1
        %s890 = scalar_lea.sflag [#allocation11], %s889
        %s891 = sand.u32 %s224, 1
        %s892 = scalar_lea.vmem [#allocation10], %s891
        %p893 = pneg %p237
        %p894 = pneg %p234
        %s895 = sand.u32 %s48, 1
        %s896 = scalar_lea.sflag [#allocation11], %s895
        %s897 = sand.u32 %s250, 1
        %s898 = smul.addr %s897, 1024
        %s899 = scalar_lea.vmem [#allocation12], %s898
        %p900 = pneg %p263
        %p901 = pneg %p260
        %s902 = sand.u32 %s48, 1
        %s903 = scalar_lea.sflag [#allocation14], %s902
        %s904 = sand.u32 %s276, 1
        %s905 = smul.addr %s904, 16
        %s906 = scalar_lea.vmem [#allocation13], %s905
        %p907 = pneg %p289
        %p908 = pneg %p286
        %s909 = sand.u32 %s48, 1
        %s910 = scalar_lea.sflag [#allocation14], %s909
        %s911 = sand.u32 %s302, 1
        %s912 = smul.addr %s911, 1024
        %s913 = scalar_lea.vmem [#allocation15], %s912
        %p914 = pneg %p315
        %p915 = pneg %p312
        %s916 = sand.u32 %s48, 1
        %s917 = scalar_lea.sflag [#allocation17], %s916
        %s918 = sand.u32 %s328, 1
        %s919 = scalar_lea.vmem [#allocation16], %s918
        %p920 = pneg %p341
        %p921 = pneg %p338
        %s922 = sand.u32 %s48, 1
        %s923 = scalar_lea.sflag [#allocation17], %s922
        %s924 = sand.u32 %s354, 1
        %s925 = scalar_lea.vmem [#allocation18], %s924
        %p926 = pneg %p367
        %p927 = pneg %p364
        %s928 = sand.u32 %s48, 1
        %s929 = scalar_lea.sflag [#allocation20], %s928
        %s930 = sand.u32 %s380, 1
        %s931 = scalar_lea.vmem [#allocation19], %s930
        %p932 = pneg %p393
        %p933 = pneg %p390
        %p934 = pneg %p414
        %p935 = pneg %p411
        %p936 = pneg %p435
        %p937 = pneg %p432
        %p938 = pneg %p461
        %p939 = pneg %p458
        %p940 = scmp.lt.s32.totalorder %s52, 1
        %s941 = scalar_select %p940, %s52, 1
        %s942 = smul.addr %s941, 4
        %s943 = scalar_lea.vmem %s15, %s942
        %p944 = scmp.lt.s32.totalorder %s52, 1
        %s945 = scalar_select %p944, %s52, 1
        %s946 = smul.addr %s945, 4
        %s947 = scalar_lea.vmem %s0, %s946
        %p948 = scmp.lt.s32.totalorder %s52, 1
        %s949 = scalar_select %p948, %s52, 1
        %s950 = smul.addr %s949, 4
        %s951 = scalar_lea.vmem %s15, %s950
        %p953 = scmp.eq.s32.totalorder %s53, 0
        // Predicated region
        $region137: #{transformer_model_forward.2} parent=79 // pred_check
          %p954 = pneg %p953
        $region138: #{transformer_model_forward.2} parent=79 // pred_check_branch
          %956 = sbr.rel (%p954) target = $region140
        $region139: #{transformer_model_forward.2} parent=79 // pred_region
          %v957 = vld [vmem:[%s947] sm:$0xf]
          %958 = vst [vmem:[%s951] sm:$0xf] %v957
        $region140: #{transformer_model_forward.2} parent=79 // pred_fallthru
          _
        %v959 = vld [vmem:[%s951] sm:$0xf]
        %v960 = vld [vmem:[%s744] sm:$0xff]
        %v961 = vld [vmem:[%s744 + $0x8] sm:$0xf]
        %v962 = vld [vmem:[%s744 + $0xc] sm:$0xff]
        %v963 = vld [vmem:[%s744 + $0x14] sm:$0xf]
        %v964 = vld [vmem:[%s744 + $0x18] sm:$0xff]
        %v965 = vld [vmem:[%s744 + $0x20] sm:$0xf]
        %v966 = vld [vmem:[%s744 + $0x24] sm:$0xff]
        %v967 = vld [vmem:[%s744 + $0x2c] sm:$0xf]
        %v968 = vld [vmem:[%s744 + $0x30] sm:$0xff]
        %v969 = vld [vmem:[%s744 + $0x38] sm:$0xf]
        %v970 = vld [vmem:[%s744 + $0x3c] sm:$0xff]
        %v971 = vld [vmem:[%s744 + $0x44] sm:$0xf]
        %v972 = vld [vmem:[%s744 + $0x48] sm:$0xff]
        %v973 = vld [vmem:[%s744 + $0x50] sm:$0xf]
        %v974 = vld [vmem:[%s744 + $0x54] sm:$0xff]
        %v975 = vld [vmem:[%s744 + $0x5c] sm:$0xf]
        %v976 = vld [vmem:[%s744 + $0x60] sm:$0xff]
        %v977 = vld [vmem:[%s744 + $0x68] sm:$0xf]
        %v978 = vld [vmem:[%s744 + $0x6c] sm:$0xff]
        %v979 = vld [vmem:[%s744 + $0x74] sm:$0xf]
        %v980 = vld [vmem:[%s744 + $0x78] sm:$0xff]
        %v981 = vld [vmem:[%s744 + $0x80] sm:$0xf]
        %v982 = vld [vmem:[%s744 + $0x84] sm:$0xff]
        %v983 = vld [vmem:[%s744 + $0x8c] sm:$0xf]
        %v984 = vld [vmem:[%s744 + $0x90] sm:$0xff]
        %v985 = vld [vmem:[%s744 + $0x98] sm:$0xf]
        %v986 = vld [vmem:[%s744 + $0x9c] sm:$0xff]
        %v987 = vld [vmem:[%s744 + $0xa4] sm:$0xf]
        %v988 = vld [vmem:[%s744 + $0xa8] sm:$0xff]
        %v989 = vld [vmem:[%s744 + $0xb0] sm:$0xf]
        %v990 = vld [vmem:[%s744 + $0xb4] sm:$0xff]
        %v991 = vld [vmem:[%s744 + $0xbc] sm:$0xf]
        %v992 = vld [vmem:[%s753] sm:$0x7]
        %v993 = vpack.c.bf16 %v959, %v959
        %v995 = vlaneseq
        %v996 = vshrl.u32 %v995, 7
        %v997 = vsub.s32 0, %v996
        %v998 = vrot.slane %v992, %v997
        %v999 = vlaneseq
        %v1000 = vshrl.u32 %v999, 7
        %v1001 = vsub.s32 1, %v1000
        %v1002 = vrot.slane %v992, %v1001
        %v1003 = vlaneseq
        %v1004 = vshrl.u32 %v1003, 7
        %v1005 = vsub.s32 2, %v1004
        %v1006 = vrot.slane %v992, %v1005
        %v1042 = vunpack.c.l.b16 %v960
        %v1043 = vunpack.c.h.b16 %v960
        %v1044 = vunpack.c.l.b16 %v961
        %v1045 = vunpack.c.l.b16 %v962
        %v1046 = vunpack.c.h.b16 %v962
        %v1047 = vunpack.c.l.b16 %v963
        %v1048 = vunpack.c.l.b16 %v964
        %v1049 = vunpack.c.h.b16 %v964
        %v1050 = vunpack.c.l.b16 %v965
        %v1051 = vunpack.c.l.b16 %v966
        %v1052 = vunpack.c.h.b16 %v966
        %v1053 = vunpack.c.l.b16 %v967
        %v1054 = vunpack.c.l.b16 %v968
        %v1055 = vunpack.c.h.b16 %v968
        %v1056 = vunpack.c.l.b16 %v969
        %v1057 = vunpack.c.l.b16 %v970
        %v1058 = vunpack.c.h.b16 %v970
        %v1059 = vunpack.c.l.b16 %v971
        %v1060 = vunpack.c.l.b16 %v972
        %v1061 = vunpack.c.h.b16 %v972
        %v1062 = vunpack.c.l.b16 %v973
        %v1063 = vunpack.c.l.b16 %v974
        %v1064 = vunpack.c.h.b16 %v974
        %v1065 = vunpack.c.l.b16 %v975
        %v1066 = vunpack.c.l.b16 %v976
        %v1067 = vunpack.c.h.b16 %v976
        %v1068 = vunpack.c.l.b16 %v977
        %v1069 = vunpack.c.l.b16 %v978
        %v1070 = vunpack.c.h.b16 %v978
        %v1071 = vunpack.c.l.b16 %v979
        %v1072 = vunpack.c.l.b16 %v980
        %v1073 = vunpack.c.h.b16 %v980
        %v1074 = vunpack.c.l.b16 %v981
        %v1075 = vunpack.c.l.b16 %v982
        %v1076 = vunpack.c.h.b16 %v982
        %v1077 = vunpack.c.l.b16 %v983
        %v1078 = vunpack.c.l.b16 %v984
        %v1079 = vunpack.c.h.b16 %v984
        %v1080 = vunpack.c.l.b16 %v985
        %v1081 = vunpack.c.l.b16 %v986
        %v1082 = vunpack.c.h.b16 %v986
        %v1083 = vunpack.c.l.b16 %v987
        %v1084 = vunpack.c.l.b16 %v988
        %v1085 = vunpack.c.h.b16 %v988
        %v1086 = vunpack.c.l.b16 %v989
        %v1087 = vunpack.c.l.b16 %v990
        %v1088 = vunpack.c.h.b16 %v990
        %v1089 = vunpack.c.l.b16 %v991
        %v1090 = vpack.c.b16 %v1045, %v1042
        %v1091 = vpack.c.b16 %v1046, %v1043
        %v1092 = vpack.c.b16 %v1047, %v1044
        %v1093 = vpack.c.b16 %v1051, %v1048
        %v1094 = vpack.c.b16 %v1052, %v1049
        %v1095 = vpack.c.b16 %v1053, %v1050
        %v1096 = vpack.c.b16 %v1057, %v1054
        %v1097 = vpack.c.b16 %v1058, %v1055
        %v1098 = vpack.c.b16 %v1059, %v1056
        %v1099 = vpack.c.b16 %v1063, %v1060
        %v1100 = vpack.c.b16 %v1064, %v1061
        %v1101 = vpack.c.b16 %v1065, %v1062
        %v1102 = vpack.c.b16 %v1069, %v1066
        %v1103 = vpack.c.b16 %v1070, %v1067
        %v1104 = vpack.c.b16 %v1071, %v1068
        %v1105 = vpack.c.b16 %v1075, %v1072
        %v1106 = vpack.c.b16 %v1076, %v1073
        %v1107 = vpack.c.b16 %v1077, %v1074
        %v1108 = vpack.c.b16 %v1081, %v1078
        %v1109 = vpack.c.b16 %v1082, %v1079
        %v1110 = vpack.c.b16 %v1083, %v1080
        %v1111 = vpack.c.b16 %v1087, %v1084
        %v1112 = vpack.c.b16 %v1088, %v1085
        %v1113 = vpack.c.b16 %v1089, %v1086
        %1138 = vmatprep.subr.bf16.mxu0 %v1091
        %1139 = vmatpush1.bf16.msra.mxu0 %v1090
        %1140 = vmatprep.subr.bf16.mxu0 %v1094
        %1141 = vmatpush1.bf16.msra.mxu0 %v1093
        %1142 = vmatprep.subr.bf16.mxu0 %v1097
        %1143 = vmatpush1.bf16.msra.mxu0 %v1096
        %1144 = vmatprep.subr.bf16.mxu0 %v1100
        %1145 = vmatpush1.bf16.msra.mxu0 %v1099
        %1146 = vmatprep.subr.bf16.mxu0 %v1103
        %1147 = vmatpush1.bf16.msra.mxu0 %v1102
        %1148 = vmatprep.subr.bf16.mxu0 %v1106
        %1149 = vmatpush1.bf16.msra.mxu0 %v1105
        %1150 = vmatprep.subr.bf16.mxu0 %v1109
        %1151 = vmatpush1.bf16.msra.mxu0 %v1108
        %1152 = vmatprep.subr.bf16.mxu0 %v1112
        %1153 = vmatpush1.bf16.msra.mxu0 %v1111
        %1154 = vmatprep.subr.bf16.mxu0 0
        %1155 = vmatpush1.bf16.msra.mxu0 0
        %1156 = vmatprep.subr.bf16.mxu0 0
        %1157 = vmatpush1.bf16.msra.mxu0 0
        %1158 = vmatprep.subr.bf16.mxu0 0
        %1159 = vmatpush1.bf16.msra.mxu0 0
        %1160 = vmatprep.subr.bf16.mxu0 0
        %1161 = vmatpush1.bf16.msra.mxu0 0
        %1162 = vmatprep.subr.bf16.mxu0 0
        %1163 = vmatpush1.bf16.msra.mxu0 0
        %1164 = vmatprep.subr.bf16.mxu0 0
        %1165 = vmatpush1.bf16.msra.mxu0 0
        %1166 = vmatprep.subr.bf16.mxu0 0
        %1167 = vmatpush1.bf16.msra.mxu0 0
        %1168 = vmatprep.subr.bf16.mxu0 0
        %1169 = vmatpush1.bf16.msra.mxu0 0
        %1170 = vmatprep.mubr.bf16.mxu0 0
        %1171 = vmatmul.mubr.bf16.gmra.mrb[0].mxu0 %v993
        %v1172 = vpop.f32.mrb[0].mxu0
        %v1173 = vadd.f32 %v998, %v1172
        %v1174 = vpop.f32.mrb[0].mxu0
        %v1175 = vadd.f32 %v1002, %v1174
        %v1176 = vpop.f32.mrb[0].mxu0
        %v1177 = vpop.f32.mrb[0].mxu0
        %1178 = vdwg.mxu0
        %1179 = vmatprep.subr.bf16.mxu0 0
        %1180 = vmatpush1.bf16.msra.mxu0 %v1092
        %1181 = vmatprep.subr.bf16.mxu0 0
        %1182 = vmatpush1.bf16.msra.mxu0 %v1095
        %1183 = vmatprep.subr.bf16.mxu0 0
        %1184 = vmatpush1.bf16.msra.mxu0 %v1098
        %1185 = vmatprep.subr.bf16.mxu0 0
        %1186 = vmatpush1.bf16.msra.mxu0 %v1101
        %1187 = vmatprep.subr.bf16.mxu0 0
        %1188 = vmatpush1.bf16.msra.mxu0 %v1104
        %1189 = vmatprep.subr.bf16.mxu0 0
        %1190 = vmatpush1.bf16.msra.mxu0 %v1107
        %1191 = vmatprep.subr.bf16.mxu0 0
        %1192 = vmatpush1.bf16.msra.mxu0 %v1110
        %1193 = vmatprep.subr.bf16.mxu0 0
        %1194 = vmatpush1.bf16.msra.mxu0 %v1113
        %1195 = vmatprep.subr.bf16.mxu0 0
        %1196 = vmatpush1.bf16.msra.mxu0 0
        %1197 = vmatprep.subr.bf16.mxu0 0
        %1198 = vmatpush1.bf16.msra.mxu0 0
        %1199 = vmatprep.subr.bf16.mxu0 0
        %1200 = vmatpush1.bf16.msra.mxu0 0
        %1201 = vmatprep.subr.bf16.mxu0 0
        %1202 = vmatpush1.bf16.msra.mxu0 0
        %1203 = vmatprep.subr.bf16.mxu0 0
        %1204 = vmatpush1.bf16.msra.mxu0 0
        %1205 = vmatprep.subr.bf16.mxu0 0
        %1206 = vmatpush1.bf16.msra.mxu0 0
        %1207 = vmatprep.subr.bf16.mxu0 0
        %1208 = vmatpush1.bf16.msra.mxu0 0
        %1209 = vmatprep.subr.bf16.mxu0 0
        %1210 = vmatpush1.bf16.msra.mxu0 0
        %1211 = vmatprep.mubr.bf16.mxu0 0
        %1212 = vmatmul.mubr.bf16.gmra.mrb[0].mxu0 %v993
        %v1213 = vpop.f32.mrb[0].mxu0
        %v1214 = vadd.f32 %v1006, %v1213
        %v1215 = vpop.f32.mrb[0].mxu0
        %v1216 = vpop.f32.mrb[0].mxu0
        %v1217 = vpop.f32.mrb[0].mxu0
        %1218 = vdwg.mxu0
        %v1219 = vmul.f32 %v1173, 0.35355338
        %v1220 = vpack.c.bf16 %v1219, %v1219
        %v1221 = vpack.c.bf16 %v1175, %v1175
        %v1222 = vpack.c.bf16 %v1214, %v1214
        %vm1223 = vcmask 64512
        %v1225 = vsel %vm1223, %v1220, 0
        %v1228 = vsel %vm1223, %v1221, 0
        %1230 = vmatprep.subr.bf16.mxu0 0
        %1231 = vmatpush1.bf16.xpose.msra.mxu0 %v1228
        %1232 = vmatprep.subr.bf16.mxu0 0
        %1233 = vmatpush1.bf16.xpose.msra.mxu0 0
        %1234 = vmatprep.subr.bf16.mxu0 0
        %1235 = vmatpush1.bf16.xpose.msra.mxu0 0
        %1236 = vmatprep.subr.bf16.mxu0 0
        %1237 = vmatpush1.bf16.xpose.msra.mxu0 0
        %1238 = vmatprep.subr.bf16.mxu0 0
        %1239 = vmatpush1.bf16.xpose.msra.mxu0 0
        %1240 = vmatprep.subr.bf16.mxu0 0
        %1241 = vmatpush1.bf16.xpose.msra.mxu0 0
        %1242 = vmatprep.subr.bf16.mxu0 0
        %1243 = vmatpush1.bf16.xpose.msra.mxu0 0
        %1244 = vmatprep.subr.bf16.mxu0 0
        %1245 = vmatpush1.bf16.xpose.msra.mxu0 0
        %1246 = vmatprep.subr.bf16.mxu0 0
        %1247 = vmatpush1.bf16.xpose.msra.mxu0 0
        %1248 = vmatprep.subr.bf16.mxu0 0
        %1249 = vmatpush1.bf16.xpose.msra.mxu0 0
        %1250 = vmatprep.subr.bf16.mxu0 0
        %1251 = vmatpush1.bf16.xpose.msra.mxu0 0
        %1252 = vmatprep.subr.bf16.mxu0 0
        %1253 = vmatpush1.bf16.xpose.msra.mxu0 0
        %1254 = vmatprep.subr.bf16.mxu0 0
        %1255 = vmatpush1.bf16.xpose.msra.mxu0 0
        %1256 = vmatprep.subr.bf16.mxu0 0
        %1257 = vmatpush1.bf16.xpose.msra.mxu0 0
        %1258 = vmatprep.subr.bf16.mxu0 0
        %1259 = vmatpush1.bf16.xpose.msra.mxu0 0
        %1260 = vmatprep.subr.bf16.mxu0 0
        %1261 = vmatpush1.bf16.xpose.msra.mxu0 0
        %1262 = vmatprep.mubr.bf16.mxu0 0
        %1263 = vmatmul.mubr.bf16.gmra.mrb[0].mxu0 %v1225
        %v1264 = vpop.f32.mrb[0].mxu0
        %v1265 = vadd.f32 0.0, %v1264
        %v1266 = vpop.f32.mrb[0].mxu0
        %v1267 = vpop.f32.mrb[0].mxu0
        %v1268 = vpop.f32.mrb[0].mxu0
        %1269 = vdwg.mxu0
        %vm1270 = vcmask 27648
        %v1271 = vsel %vm1270, %v1265, -inf
        %1272 = vmax.xlane.f32.xlu0 %v1271
        %v1273 = vpop.xlane.xlu0 %1272
        %v1274 = vsub.f32 %v1265, %v1273
        %v1275 = vmul.f32 %v1274, 1.442695
        %v1276 = vpow.pop %v1275
        %v1277 = vsel %vm1270, %v1276, 0.0
        %1278 = vadd.xlane.f32.xlu0 %v1277
        %v1279 = vpop.xlane.xlu0 %1278
        %v1280 = vrcp.pop %v1279
        %v1281 = vmul.f32 %v1276, %v1280
        %v1282 = vpack.c.bf16 %v1281, %v1281
        %vm1283 = vcmask 31744
        %v1285 = vsel %vm1283, %v1282, 0
        %vm1287 = vcmask 1041408
        %v1289 = vsel %vm1287, %v1222, 0
        %1291 = vmatprep.subr.bf16.mxu0 0
        %1292 = vmatpush1.bf16.msra.mxu0 %v1289
        %1293 = vmatprep.subr.bf16.mxu0 0
        %1294 = vmatpush1.bf16.msra.mxu0 0
        %1295 = vmatprep.subr.bf16.mxu0 0
        %1296 = vmatpush1.bf16.msra.mxu0 0
        %1297 = vmatprep.subr.bf16.mxu0 0
        %1298 = vmatpush1.bf16.msra.mxu0 0
        %1299 = vmatprep.subr.bf16.mxu0 0
        %1300 = vmatpush1.bf16.msra.mxu0 0
        %1301 = vmatprep.subr.bf16.mxu0 0
        %1302 = vmatpush1.bf16.msra.mxu0 0
        %1303 = vmatprep.subr.bf16.mxu0 0
        %1304 = vmatpush1.bf16.msra.mxu0 0
        %1305 = vmatprep.subr.bf16.mxu0 0
        %1306 = vmatpush1.bf16.msra.mxu0 0
        %1307 = vmatprep.subr.bf16.mxu0 0
        %1308 = vmatpush1.bf16.msra.mxu0 0
        %1309 = vmatprep.subr.bf16.mxu0 0
        %1310 = vmatpush1.bf16.msra.mxu0 0
        %1311 = vmatprep.subr.bf16.mxu0 0
        %1312 = vmatpush1.bf16.msra.mxu0 0
        %1313 = vmatprep.subr.bf16.mxu0 0
        %1314 = vmatpush1.bf16.msra.mxu0 0
        %1315 = vmatprep.subr.bf16.mxu0 0
        %1316 = vmatpush1.bf16.msra.mxu0 0
        %1317 = vmatprep.subr.bf16.mxu0 0
        %1318 = vmatpush1.bf16.msra.mxu0 0
        %1319 = vmatprep.subr.bf16.mxu0 0
        %1320 = vmatpush1.bf16.msra.mxu0 0
        %1321 = vmatprep.subr.bf16.mxu0 0
        %1322 = vmatpush1.bf16.msra.mxu0 0
        %1323 = vmatprep.mubr.bf16.mxu0 0
        %1324 = vmatmul.mubr.bf16.gmra.mrb[0].mxu0 %v1285
        %v1325 = vpop.f32.mrb[0].mxu0
        %v1326 = vadd.f32 0.0, %v1325
        %v1327 = vpop.f32.mrb[0].mxu0
        %v1328 = vpop.f32.mrb[0].mxu0
        %v1329 = vpop.f32.mrb[0].mxu0
        %1330 = vdwg.mxu0
        %1332 = vrot.lane.b32.xlu0 %v1220, 120
        %v1333 = vpop.permute.xlu0 %1332
        %1335 = vrot.lane.b32.xlu0 %v1221, 120
        %v1336 = vpop.permute.xlu0 %1335
        %v1338 = vsel %vm1223, %v1333, 0
        %v1341 = vsel %vm1223, %v1336, 0
        %1343 = vmatprep.subr.bf16.mxu0 0
        %1344 = vmatpush1.bf16.xpose.msra.mxu0 %v1341
        %1345 = vmatprep.subr.bf16.mxu0 0
        %1346 = vmatpush1.bf16.xpose.msra.mxu0 0
        %1347 = vmatprep.subr.bf16.mxu0 0
        %1348 = vmatpush1.bf16.xpose.msra.mxu0 0
        %1349 = vmatprep.subr.bf16.mxu0 0
        %1350 = vmatpush1.bf16.xpose.msra.mxu0 0
        %1351 = vmatprep.subr.bf16.mxu0 0
        %1352 = vmatpush1.bf16.xpose.msra.mxu0 0
        %1353 = vmatprep.subr.bf16.mxu0 0
        %1354 = vmatpush1.bf16.xpose.msra.mxu0 0
        %1355 = vmatprep.subr.bf16.mxu0 0
        %1356 = vmatpush1.bf16.xpose.msra.mxu0 0
        %1357 = vmatprep.subr.bf16.mxu0 0
        %1358 = vmatpush1.bf16.xpose.msra.mxu0 0
        %1359 = vmatprep.subr.bf16.mxu0 0
        %1360 = vmatpush1.bf16.xpose.msra.mxu0 0
        %1361 = vmatprep.subr.bf16.mxu0 0
        %1362 = vmatpush1.bf16.xpose.msra.mxu0 0
        %1363 = vmatprep.subr.bf16.mxu0 0
        %1364 = vmatpush1.bf16.xpose.msra.mxu0 0
        %1365 = vmatprep.subr.bf16.mxu0 0
        %1366 = vmatpush1.bf16.xpose.msra.mxu0 0
        %1367 = vmatprep.subr.bf16.mxu0 0
        %1368 = vmatpush1.bf16.xpose.msra.mxu0 0
        %1369 = vmatprep.subr.bf16.mxu0 0
        %1370 = vmatpush1.bf16.xpose.msra.mxu0 0
        %1371 = vmatprep.subr.bf16.mxu0 0
        %1372 = vmatpush1.bf16.xpose.msra.mxu0 0
        %1373 = vmatprep.subr.bf16.mxu0 0
        %1374 = vmatpush1.bf16.xpose.msra.mxu0 0
        %1375 = vmatprep.mubr.bf16.mxu0 0
        %1376 = vmatmul.mubr.bf16.gmra.mrb[0].mxu0 %v1338
        %v1377 = vpop.f32.mrb[0].mxu0
        %v1378 = vadd.f32 0.0, %v1377
        %v1379 = vpop.f32.mrb[0].mxu0
        %v1380 = vpop.f32.mrb[0].mxu0
        %v1381 = vpop.f32.mrb[0].mxu0
        %1382 = vdwg.mxu0
        %v1383 = vsel %vm1270, %v1378, -inf
        %1384 = vmax.xlane.f32.xlu0 %v1383
        %v1385 = vpop.xlane.xlu0 %1384
        %v1386 = vsub.f32 %v1378, %v1385
        %v1387 = vmul.f32 %v1386, 1.442695
        %v1388 = vpow.pop %v1387
        %v1389 = vsel %vm1270, %v1388, 0.0
        %1390 = vadd.xlane.f32.xlu0 %v1389
        %v1391 = vpop.xlane.xlu0 %1390
        %v1392 = vrcp.pop %v1391
        %v1393 = vmul.f32 %v1388, %v1392
        %v1394 = vpack.c.bf16 %v1393, %v1393
        %1396 = vrot.lane.b32.xlu0 %v1222, 120
        %v1397 = vpop.permute.xlu0 %1396
        %v1399 = vsel %vm1283, %v1394, 0
        %v1402 = vsel %vm1287, %v1397, 0
        %1404 = vmatprep.subr.bf16.mxu0 0
        %1405 = vmatpush1.bf16.msra.mxu0 %v1402
        %1406 = vmatprep.subr.bf16.mxu0 0
        %1407 = vmatpush1.bf16.msra.mxu0 0
        %1408 = vmatprep.subr.bf16.mxu0 0
        %1409 = vmatpush1.bf16.msra.mxu0 0
        %1410 = vmatprep.subr.bf16.mxu0 0
        %1411 = vmatpush1.bf16.msra.mxu0 0
        %1412 = vmatprep.subr.bf16.mxu0 0
        %1413 = vmatpush1.bf16.msra.mxu0 0
        %1414 = vmatprep.subr.bf16.mxu0 0
        %1415 = vmatpush1.bf16.msra.mxu0 0
        %1416 = vmatprep.subr.bf16.mxu0 0
        %1417 = vmatpush1.bf16.msra.mxu0 0
        %1418 = vmatprep.subr.bf16.mxu0 0
        %1419 = vmatpush1.bf16.msra.mxu0 0
        %1420 = vmatprep.subr.bf16.mxu0 0
        %1421 = vmatpush1.bf16.msra.mxu0 0
        %1422 = vmatprep.subr.bf16.mxu0 0
        %1423 = vmatpush1.bf16.msra.mxu0 0
        %1424 = vmatprep.subr.bf16.mxu0 0
        %1425 = vmatpush1.bf16.msra.mxu0 0
        %1426 = vmatprep.subr.bf16.mxu0 0
        %1427 = vmatpush1.bf16.msra.mxu0 0
        %1428 = vmatprep.subr.bf16.mxu0 0
        %1429 = vmatpush1.bf16.msra.mxu0 0
        %1430 = vmatprep.subr.bf16.mxu0 0
        %1431 = vmatpush1.bf16.msra.mxu0 0
        %1432 = vmatprep.subr.bf16.mxu0 0
        %1433 = vmatpush1.bf16.msra.mxu0 0
        %1434 = vmatprep.subr.bf16.mxu0 0
        %1435 = vmatpush1.bf16.msra.mxu0 0
        %1436 = vmatprep.mubr.bf16.mxu0 0
        %1437 = vmatmul.mubr.bf16.gmra.mrb[0].mxu0 %v1399
        %v1438 = vpop.f32.mrb[0].mxu0
        %v1439 = vadd.f32 0.0, %v1438
        %v1440 = vpop.f32.mrb[0].mxu0
        %v1441 = vpop.f32.mrb[0].mxu0
        %v1442 = vpop.f32.mrb[0].mxu0
        %1443 = vdwg.mxu0
        %1444 = vrot.lane.b32.xlu0 %v1220, 112
        %v1445 = vpop.permute.xlu0 %1444
        %1446 = vrot.lane.b32.xlu0 %v1221, 112
        %v1447 = vpop.permute.xlu0 %1446
        %v1449 = vsel %vm1223, %v1445, 0
        %v1452 = vsel %vm1223, %v1447, 0
        %1454 = vmatprep.subr.bf16.mxu0 0
        %1455 = vmatpush1.bf16.xpose.msra.mxu0 %v1452
        %1456 = vmatprep.subr.bf16.mxu0 0
        %1457 = vmatpush1.bf16.xpose.msra.mxu0 0
        %1458 = vmatprep.subr.bf16.mxu0 0
        %1459 = vmatpush1.bf16.xpose.msra.mxu0 0
        %1460 = vmatprep.subr.bf16.mxu0 0
        %1461 = vmatpush1.bf16.xpose.msra.mxu0 0
        %1462 = vmatprep.subr.bf16.mxu0 0
        %1463 = vmatpush1.bf16.xpose.msra.mxu0 0
        %1464 = vmatprep.subr.bf16.mxu0 0
        %1465 = vmatpush1.bf16.xpose.msra.mxu0 0
        %1466 = vmatprep.subr.bf16.mxu0 0
        %1467 = vmatpush1.bf16.xpose.msra.mxu0 0
        %1468 = vmatprep.subr.bf16.mxu0 0
        %1469 = vmatpush1.bf16.xpose.msra.mxu0 0
        %1470 = vmatprep.subr.bf16.mxu0 0
        %1471 = vmatpush1.bf16.xpose.msra.mxu0 0
        %1472 = vmatprep.subr.bf16.mxu0 0
        %1473 = vmatpush1.bf16.xpose.msra.mxu0 0
        %1474 = vmatprep.subr.bf16.mxu0 0
        %1475 = vmatpush1.bf16.xpose.msra.mxu0 0
        %1476 = vmatprep.subr.bf16.mxu0 0
        %1477 = vmatpush1.bf16.xpose.msra.mxu0 0
        %1478 = vmatprep.subr.bf16.mxu0 0
        %1479 = vmatpush1.bf16.xpose.msra.mxu0 0
        %1480 = vmatprep.subr.bf16.mxu0 0
        %1481 = vmatpush1.bf16.xpose.msra.mxu0 0
        %1482 = vmatprep.subr.bf16.mxu0 0
        %1483 = vmatpush1.bf16.xpose.msra.mxu0 0
        %1484 = vmatprep.subr.bf16.mxu0 0
        %1485 = vmatpush1.bf16.xpose.msra.mxu0 0
        %1486 = vmatprep.mubr.bf16.mxu0 0
        %1487 = vmatmul.mubr.bf16.gmra.mrb[0].mxu0 %v1449
        %v1488 = vpop.f32.mrb[0].mxu0
        %v1489 = vadd.f32 0.0, %v1488
        %v1490 = vpop.f32.mrb[0].mxu0
        %v1491 = vpop.f32.mrb[0].mxu0
        %v1492 = vpop.f32.mrb[0].mxu0
        %1493 = vdwg.mxu0
        %v1494 = vsel %vm1270, %v1489, -inf
        %1495 = vmax.xlane.f32.xlu0 %v1494
        %v1496 = vpop.xlane.xlu0 %1495
        %v1497 = vsub.f32 %v1489, %v1496
        %v1498 = vmul.f32 %v1497, 1.442695
        %v1499 = vpow.pop %v1498
        %v1500 = vsel %vm1270, %v1499, 0.0
        %1501 = vadd.xlane.f32.xlu0 %v1500
        %v1502 = vpop.xlane.xlu0 %1501
        %v1503 = vrcp.pop %v1502
        %v1504 = vmul.f32 %v1499, %v1503
        %v1505 = vpack.c.bf16 %v1504, %v1504
        %1506 = vrot.lane.b32.xlu0 %v1222, 112
        %v1507 = vpop.permute.xlu0 %1506
        %v1509 = vsel %vm1283, %v1505, 0
        %v1512 = vsel %vm1287, %v1507, 0
        %1514 = vmatprep.subr.bf16.mxu0 0
        %1515 = vmatpush1.bf16.msra.mxu0 %v1512
        %1516 = vmatprep.subr.bf16.mxu0 0
        %1517 = vmatpush1.bf16.msra.mxu0 0
        %1518 = vmatprep.subr.bf16.mxu0 0
        %1519 = vmatpush1.bf16.msra.mxu0 0
        %1520 = vmatprep.subr.bf16.mxu0 0
        %1521 = vmatpush1.bf16.msra.mxu0 0
        %1522 = vmatprep.subr.bf16.mxu0 0
        %1523 = vmatpush1.bf16.msra.mxu0 0
        %1524 = vmatprep.subr.bf16.mxu0 0
        %1525 = vmatpush1.bf16.msra.mxu0 0
        %1526 = vmatprep.subr.bf16.mxu0 0
        %1527 = vmatpush1.bf16.msra.mxu0 0
        %1528 = vmatprep.subr.bf16.mxu0 0
        %1529 = vmatpush1.bf16.msra.mxu0 0
        %1530 = vmatprep.subr.bf16.mxu0 0
        %1531 = vmatpush1.bf16.msra.mxu0 0
        %1532 = vmatprep.subr.bf16.mxu0 0
        %1533 = vmatpush1.bf16.msra.mxu0 0
        %1534 = vmatprep.subr.bf16.mxu0 0
        %1535 = vmatpush1.bf16.msra.mxu0 0
        %1536 = vmatprep.subr.bf16.mxu0 0
        %1537 = vmatpush1.bf16.msra.mxu0 0
        %1538 = vmatprep.subr.bf16.mxu0 0
        %1539 = vmatpush1.bf16.msra.mxu0 0
        %1540 = vmatprep.subr.bf16.mxu0 0
        %1541 = vmatpush1.bf16.msra.mxu0 0
        %1542 = vmatprep.subr.bf16.mxu0 0
        %1543 = vmatpush1.bf16.msra.mxu0 0
        %1544 = vmatprep.subr.bf16.mxu0 0
        %1545 = vmatpush1.bf16.msra.mxu0 0
        %1546 = vmatprep.mubr.bf16.mxu0 0
        %1547 = vmatmul.mubr.bf16.gmra.mrb[0].mxu0 %v1509
        %v1548 = vpop.f32.mrb[0].mxu0
        %v1549 = vadd.f32 0.0, %v1548
        %v1550 = vpop.f32.mrb[0].mxu0
        %v1551 = vpop.f32.mrb[0].mxu0
        %v1552 = vpop.f32.mrb[0].mxu0
        %1553 = vdwg.mxu0
        %1554 = vrot.lane.b32.xlu0 %v1220, 104
        %v1555 = vpop.permute.xlu0 %1554
        %1556 = vrot.lane.b32.xlu0 %v1221, 104
        %v1557 = vpop.permute.xlu0 %1556
        %v1559 = vsel %vm1223, %v1555, 0
        %v1562 = vsel %vm1223, %v1557, 0
        %1564 = vmatprep.subr.bf16.mxu0 0
        %1565 = vmatpush1.bf16.xpose.msra.mxu0 %v1562
        %1566 = vmatprep.subr.bf16.mxu0 0
        %1567 = vmatpush1.bf16.xpose.msra.mxu0 0
        %1568 = vmatprep.subr.bf16.mxu0 0
        %1569 = vmatpush1.bf16.xpose.msra.mxu0 0
        %1570 = vmatprep.subr.bf16.mxu0 0
        %1571 = vmatpush1.bf16.xpose.msra.mxu0 0
        %1572 = vmatprep.subr.bf16.mxu0 0
        %1573 = vmatpush1.bf16.xpose.msra.mxu0 0
        %1574 = vmatprep.subr.bf16.mxu0 0
        %1575 = vmatpush1.bf16.xpose.msra.mxu0 0
        %1576 = vmatprep.subr.bf16.mxu0 0
        %1577 = vmatpush1.bf16.xpose.msra.mxu0 0
        %1578 = vmatprep.subr.bf16.mxu0 0
        %1579 = vmatpush1.bf16.xpose.msra.mxu0 0
        %1580 = vmatprep.subr.bf16.mxu0 0
        %1581 = vmatpush1.bf16.xpose.msra.mxu0 0
        %1582 = vmatprep.subr.bf16.mxu0 0
        %1583 = vmatpush1.bf16.xpose.msra.mxu0 0
        %1584 = vmatprep.subr.bf16.mxu0 0
        %1585 = vmatpush1.bf16.xpose.msra.mxu0 0
        %1586 = vmatprep.subr.bf16.mxu0 0
        %1587 = vmatpush1.bf16.xpose.msra.mxu0 0
        %1588 = vmatprep.subr.bf16.mxu0 0
        %1589 = vmatpush1.bf16.xpose.msra.mxu0 0
        %1590 = vmatprep.subr.bf16.mxu0 0
        %1591 = vmatpush1.bf16.xpose.msra.mxu0 0
        %1592 = vmatprep.subr.bf16.mxu0 0
        %1593 = vmatpush1.bf16.xpose.msra.mxu0 0
        %1594 = vmatprep.subr.bf16.mxu0 0
        %1595 = vmatpush1.bf16.xpose.msra.mxu0 0
        %1596 = vmatprep.mubr.bf16.mxu0 0
        %1597 = vmatmul.mubr.bf16.gmra.mrb[0].mxu0 %v1559
        %v1598 = vpop.f32.mrb[0].mxu0
        %v1599 = vadd.f32 0.0, %v1598
        %v1600 = vpop.f32.mrb[0].mxu0
        %v1601 = vpop.f32.mrb[0].mxu0
        %v1602 = vpop.f32.mrb[0].mxu0
        %1603 = vdwg.mxu0
        %v1604 = vsel %vm1270, %v1599, -inf
        %1605 = vmax.xlane.f32.xlu0 %v1604
        %v1606 = vpop.xlane.xlu0 %1605
        %v1607 = vsub.f32 %v1599, %v1606
        %v1608 = vmul.f32 %v1607, 1.442695
        %v1609 = vpow.pop %v1608
        %v1610 = vsel %vm1270, %v1609, 0.0
        %1611 = vadd.xlane.f32.xlu0 %v1610
        %v1612 = vpop.xlane.xlu0 %1611
        %v1613 = vrcp.pop %v1612
        %v1614 = vmul.f32 %v1609, %v1613
        %v1615 = vpack.c.bf16 %v1614, %v1614
        %1616 = vrot.lane.b32.xlu0 %v1222, 104
        %v1617 = vpop.permute.xlu0 %1616
        %v1619 = vsel %vm1283, %v1615, 0
        %v1622 = vsel %vm1287, %v1617, 0
        %1624 = vmatprep.subr.bf16.mxu0 0
        %1625 = vmatpush1.bf16.msra.mxu0 %v1622
        %1626 = vmatprep.subr.bf16.mxu0 0
        %1627 = vmatpush1.bf16.msra.mxu0 0
        %1628 = vmatprep.subr.bf16.mxu0 0
        %1629 = vmatpush1.bf16.msra.mxu0 0
        %1630 = vmatprep.subr.bf16.mxu0 0
        %1631 = vmatpush1.bf16.msra.mxu0 0
        %1632 = vmatprep.subr.bf16.mxu0 0
        %1633 = vmatpush1.bf16.msra.mxu0 0
        %1634 = vmatprep.subr.bf16.mxu0 0
        %1635 = vmatpush1.bf16.msra.mxu0 0
        %1636 = vmatprep.subr.bf16.mxu0 0
        %1637 = vmatpush1.bf16.msra.mxu0 0
        %1638 = vmatprep.subr.bf16.mxu0 0
        %1639 = vmatpush1.bf16.msra.mxu0 0
        %1640 = vmatprep.subr.bf16.mxu0 0
        %1641 = vmatpush1.bf16.msra.mxu0 0
        %1642 = vmatprep.subr.bf16.mxu0 0
        %1643 = vmatpush1.bf16.msra.mxu0 0
        %1644 = vmatprep.subr.bf16.mxu0 0
        %1645 = vmatpush1.bf16.msra.mxu0 0
        %1646 = vmatprep.subr.bf16.mxu0 0
        %1647 = vmatpush1.bf16.msra.mxu0 0
        %1648 = vmatprep.subr.bf16.mxu0 0
        %1649 = vmatpush1.bf16.msra.mxu0 0
        %1650 = vmatprep.subr.bf16.mxu0 0
        %1651 = vmatpush1.bf16.msra.mxu0 0
        %1652 = vmatprep.subr.bf16.mxu0 0
        %1653 = vmatpush1.bf16.msra.mxu0 0
        %1654 = vmatprep.subr.bf16.mxu0 0
        %1655 = vmatpush1.bf16.msra.mxu0 0
        %1656 = vmatprep.mubr.bf16.mxu0 0
        %1657 = vmatmul.mubr.bf16.gmra.mrb[0].mxu0 %v1619
        %v1658 = vpop.f32.mrb[0].mxu0
        %v1659 = vadd.f32 0.0, %v1658
        %v1660 = vpop.f32.mrb[0].mxu0
        %v1661 = vpop.f32.mrb[0].mxu0
        %v1662 = vpop.f32.mrb[0].mxu0
        %1663 = vdwg.mxu0
        %1665 = vrot.lane.b32.xlu0 %v1439, 8
        %v1666 = vpop.permute.xlu0 %1665
        %1669 = vrot.lane.b32.xlu0 %v1549, 16
        %v1670 = vpop.permute.xlu0 %1669
        %1673 = vrot.lane.b32.xlu0 %v1659, 24
        %v1674 = vpop.permute.xlu0 %1673
        %v1676 = vsel %vm1223, %v1326, %v1666
        %vm1677 = vcmask 130048
        %v1678 = vsel %vm1677, %v1676, %v1670
        %vm1679 = vcmask 195584
        %v1680 = vsel %vm1679, %v1678, %v1674
        %vm1681 = vcmask 261120
        %v1682 = vsel %vm1681, %v1680, 0.0
        %v1683 = vld [vmem:[%s762] sm:$0xf]
        %v1684 = vld [vmem:[%s762 + $0x4] sm:$0xf]
        %v1685 = vld [vmem:[%s762 + $0x8] sm:$0xf]
        %v1686 = vld [vmem:[%s762 + $0xc] sm:$0xf]
        %v1687 = vld [vmem:[%s762 + $0x10] sm:$0xf]
        %v1688 = vld [vmem:[%s762 + $0x14] sm:$0xf]
        %v1689 = vld [vmem:[%s762 + $0x18] sm:$0xf]
        %v1690 = vld [vmem:[%s762 + $0x1c] sm:$0xf]
        %v1691 = vld [vmem:[%s762 + $0x20] sm:$0xf]
        %v1692 = vld [vmem:[%s762 + $0x24] sm:$0xf]
        %v1693 = vld [vmem:[%s762 + $0x28] sm:$0xf]
        %v1694 = vld [vmem:[%s762 + $0x2c] sm:$0xf]
        %v1695 = vld [vmem:[%s762 + $0x30] sm:$0xf]
        %v1696 = vld [vmem:[%s762 + $0x34] sm:$0xf]
        %v1697 = vld [vmem:[%s762 + $0x38] sm:$0xf]
        %v1698 = vld [vmem:[%s762 + $0x3c] sm:$0xf]
        %v1699 = vld [vmem:[%s770] sm:$0x1]
        %v1700 = vpack.c.bf16 %v1682, %v1682
        %v1702 = vlaneseq
        %v1703 = vshrl.u32 %v1702, 7
        %v1704 = vsub.s32 0, %v1703
        %v1705 = vrot.slane %v1699, %v1704
        %v1723 = vunpack.c.l.b16 %v1683
        %v1724 = vunpack.c.l.b16 %v1684
        %v1725 = vunpack.c.l.b16 %v1685
        %v1726 = vunpack.c.l.b16 %v1686
        %v1727 = vunpack.c.l.b16 %v1687
        %v1728 = vunpack.c.l.b16 %v1688
        %v1729 = vunpack.c.l.b16 %v1689
        %v1730 = vunpack.c.l.b16 %v1690
        %v1731 = vunpack.c.l.b16 %v1691
        %v1732 = vunpack.c.l.b16 %v1692
        %v1733 = vunpack.c.l.b16 %v1693
        %v1734 = vunpack.c.l.b16 %v1694
        %v1735 = vunpack.c.l.b16 %v1695
        %v1736 = vunpack.c.l.b16 %v1696
        %v1737 = vunpack.c.l.b16 %v1697
        %v1738 = vunpack.c.l.b16 %v1698
        %v1739 = vpack.c.b16 %v1724, %v1723
        %v1740 = vpack.c.b16 %v1726, %v1725
        %v1741 = vpack.c.b16 %v1728, %v1727
        %v1742 = vpack.c.b16 %v1730, %v1729
        %v1743 = vpack.c.b16 %v1732, %v1731
        %v1744 = vpack.c.b16 %v1734, %v1733
        %v1745 = vpack.c.b16 %v1736, %v1735
        %v1746 = vpack.c.b16 %v1738, %v1737
        %1755 = vmatprep.subr.bf16.mxu0 0
        %1756 = vmatpush1.bf16.msra.mxu0 %v1739
        %1757 = vmatprep.subr.bf16.mxu0 0
        %1758 = vmatpush1.bf16.msra.mxu0 %v1740
        %1759 = vmatprep.subr.bf16.mxu0 0
        %1760 = vmatpush1.bf16.msra.mxu0 %v1741
        %1761 = vmatprep.subr.bf16.mxu0 0
        %1762 = vmatpush1.bf16.msra.mxu0 %v1742
        %1763 = vmatprep.subr.bf16.mxu0 0
        %1764 = vmatpush1.bf16.msra.mxu0 %v1743
        %1765 = vmatprep.subr.bf16.mxu0 0
        %1766 = vmatpush1.bf16.msra.mxu0 %v1744
        %1767 = vmatprep.subr.bf16.mxu0 0
        %1768 = vmatpush1.bf16.msra.mxu0 %v1745
        %1769 = vmatprep.subr.bf16.mxu0 0
        %1770 = vmatpush1.bf16.msra.mxu0 %v1746
        %1771 = vmatprep.subr.bf16.mxu0 0
        %1772 = vmatpush1.bf16.msra.mxu0 0
        %1773 = vmatprep.subr.bf16.mxu0 0
        %1774 = vmatpush1.bf16.msra.mxu0 0
        %1775 = vmatprep.subr.bf16.mxu0 0
        %1776 = vmatpush1.bf16.msra.mxu0 0
        %1777 = vmatprep.subr.bf16.mxu0 0
        %1778 = vmatpush1.bf16.msra.mxu0 0
        %1779 = vmatprep.subr.bf16.mxu0 0
        %1780 = vmatpush1.bf16.msra.mxu0 0
        %1781 = vmatprep.subr.bf16.mxu0 0
        %1782 = vmatpush1.bf16.msra.mxu0 0
        %1783 = vmatprep.subr.bf16.mxu0 0
        %1784 = vmatpush1.bf16.msra.mxu0 0
        %1785 = vmatprep.subr.bf16.mxu0 0
        %1786 = vmatpush1.bf16.msra.mxu0 0
        %1787 = vmatprep.mubr.bf16.mxu0 0
        %1788 = vmatmul.mubr.bf16.gmra.mrb[0].mxu0 %v1700
        %v1789 = vpop.f32.mrb[0].mxu0
        %v1790 = vadd.f32 %v1705, %v1789
        %v1791 = vpop.f32.mrb[0].mxu0
        %v1792 = vpop.f32.mrb[0].mxu0
        %v1793 = vpop.f32.mrb[0].mxu0
        %1794 = vdwg.mxu0
        %v1795 = vadd.f32 %v959, %v1790
        %v1796 = vld [vmem:[%s778] sm:$0x1]
        %v1797 = vld [vmem:[%s786] sm:$0x1]
        %vm1798 = vcmask 1043456
        %v1799 = vsel %vm1798, %v1795, 0.0
        %1800 = vadd.xlane.f32.xlu0 %v1799
        %v1801 = vpop.xlane.xlu0 %1800
        %v1802 = vmul.f32 %v1801, 0.03125
        %v1803 = vsub.f32 %v1795, %v1802
        %v1804 = vlaneseq
        %v1805 = vand.u32 %v1804, 127
        %vm1806 = vcmp.lt.s32.totalorder %v1805, 32
        %v1807 = vsel %vm1806, %v1803, 0.0
        %v1808 = vmul.f32 %v1807, %v1807
        %v1809 = vsel %vm1798, %v1808, 0.0
        %1810 = vadd.xlane.f32.xlu0 %v1809
        %v1811 = vpop.xlane.xlu0 %1810
        %v1812 = vmul.f32 %v1811, 0.03125
        %v1813 = vadd.f32 %v1812, 1e-05
        %v1814 = vrsqrt.pop %v1813
        %v1815 = vmul.f32 %v1807, %v1814
        %v1817 = vlaneseq
        %v1818 = vshrl.u32 %v1817, 7
        %v1819 = vsub.s32 0, %v1818
        %v1820 = vrot.slane %v1796, %v1819
        %v1822 = vmul.f32 %v1815, %v1820
        %v1824 = vlaneseq
        %v1825 = vshrl.u32 %v1824, 7
        %v1826 = vsub.s32 0, %v1825
        %v1827 = vrot.slane %v1797, %v1826
        %v1829 = vadd.f32 %v1822, %v1827
        %v1830 = vld [vmem:[%s795] sm:$0xff]
        %v1831 = vld [vmem:[%s795 + $0x8] sm:$0xff]
        %v1832 = vld [vmem:[%s795 + $0x10] sm:$0xff]
        %v1833 = vld [vmem:[%s795 + $0x18] sm:$0xff]
        %v1834 = vld [vmem:[%s795 + $0x20] sm:$0xff]
        %v1835 = vld [vmem:[%s795 + $0x28] sm:$0xff]
        %v1836 = vld [vmem:[%s795 + $0x30] sm:$0xff]
        %v1837 = vld [vmem:[%s795 + $0x38] sm:$0xff]
        %v1838 = vld [vmem:[%s795 + $0x40] sm:$0xff]
        %v1839 = vld [vmem:[%s795 + $0x48] sm:$0xff]
        %v1840 = vld [vmem:[%s795 + $0x50] sm:$0xff]
        %v1841 = vld [vmem:[%s795 + $0x58] sm:$0xff]
        %v1842 = vld [vmem:[%s795 + $0x60] sm:$0xff]
        %v1843 = vld [vmem:[%s795 + $0x68] sm:$0xff]
        %v1844 = vld [vmem:[%s795 + $0x70] sm:$0xff]
        %v1845 = vld [vmem:[%s795 + $0x78] sm:$0xff]
        %v1846 = vld [vmem:[%s795 + $0x80] sm:$0xff]
        %v1847 = vld [vmem:[%s795 + $0x88] sm:$0xff]
        %v1848 = vld [vmem:[%s795 + $0x90] sm:$0xff]
        %v1849 = vld [vmem:[%s795 + $0x98] sm:$0xff]
        %v1850 = vld [vmem:[%s795 + $0xa0] sm:$0xff]
        %v1851 = vld [vmem:[%s795 + $0xa8] sm:$0xff]
        %v1852 = vld [vmem:[%s795 + $0xb0] sm:$0xff]
        %v1853 = vld [vmem:[%s795 + $0xb8] sm:$0xff]
        %v1854 = vld [vmem:[%s795 + $0xc0] sm:$0xff]
        %v1855 = vld [vmem:[%s795 + $0xc8] sm:$0xff]
        %v1856 = vld [vmem:[%s795 + $0xd0] sm:$0xff]
        %v1857 = vld [vmem:[%s795 + $0xd8] sm:$0xff]
        %v1858 = vld [vmem:[%s795 + $0xe0] sm:$0xff]
        %v1859 = vld [vmem:[%s795 + $0xe8] sm:$0xff]
        %v1860 = vld [vmem:[%s795 + $0xf0] sm:$0xff]
        %v1861 = vld [vmem:[%s795 + $0xf8] sm:$0xff]
        %v1862 = vld [vmem:[%s795 + $0x100] sm:$0xff]
        %v1863 = vld [vmem:[%s795 + $0x108] sm:$0xff]
        %v1864 = vld [vmem:[%s795 + $0x110] sm:$0xff]
        %v1865 = vld [vmem:[%s795 + $0x118] sm:$0xff]
        %v1866 = vld [vmem:[%s795 + $0x120] sm:$0xff]
        %v1867 = vld [vmem:[%s795 + $0x128] sm:$0xff]
        %v1868 = vld [vmem:[%s795 + $0x130] sm:$0xff]
        %v1869 = vld [vmem:[%s795 + $0x138] sm:$0xff]
        %v1870 = vld [vmem:[%s795 + $0x140] sm:$0xff]
        %v1871 = vld [vmem:[%s795 + $0x148] sm:$0xff]
        %v1872 = vld [vmem:[%s795 + $0x150] sm:$0xff]
        %v1873 = vld [vmem:[%s795 + $0x158] sm:$0xff]
        %v1874 = vld [vmem:[%s795 + $0x160] sm:$0xff]
        %v1875 = vld [vmem:[%s795 + $0x168] sm:$0xff]
        %v1876 = vld [vmem:[%s795 + $0x170] sm:$0xff]
        %v1877 = vld [vmem:[%s795 + $0x178] sm:$0xff]
        %v1878 = vld [vmem:[%s795 + $0x180] sm:$0xff]
        %v1879 = vld [vmem:[%s795 + $0x188] sm:$0xff]
        %v1880 = vld [vmem:[%s795 + $0x190] sm:$0xff]
        %v1881 = vld [vmem:[%s795 + $0x198] sm:$0xff]
        %v1882 = vld [vmem:[%s795 + $0x1a0] sm:$0xff]
        %v1883 = vld [vmem:[%s795 + $0x1a8] sm:$0xff]
        %v1884 = vld [vmem:[%s795 + $0x1b0] sm:$0xff]
        %v1885 = vld [vmem:[%s795 + $0x1b8] sm:$0xff]
        %v1886 = vld [vmem:[%s795 + $0x1c0] sm:$0xff]
        %v1887 = vld [vmem:[%s795 + $0x1c8] sm:$0xff]
        %v1888 = vld [vmem:[%s795 + $0x1d0] sm:$0xff]
        %v1889 = vld [vmem:[%s795 + $0x1d8] sm:$0xff]
        %v1890 = vld [vmem:[%s795 + $0x1e0] sm:$0xff]
        %v1891 = vld [vmem:[%s795 + $0x1e8] sm:$0xff]
        %v1892 = vld [vmem:[%s795 + $0x1f0] sm:$0xff]
        %v1893 = vld [vmem:[%s795 + $0x1f8] sm:$0xff]
        %v1894 = vld [vmem:[%s795 + $0x200] sm:$0xff]
        %v1895 = vld [vmem:[%s795 + $0x208] sm:$0xff]
        %v1896 = vld [vmem:[%s795 + $0x210] sm:$0xff]
        %v1897 = vld [vmem:[%s795 + $0x218] sm:$0xff]
        %v1898 = vld [vmem:[%s795 + $0x220] sm:$0xff]
        %v1899 = vld [vmem:[%s795 + $0x228] sm:$0xff]
        %v1900 = vld [vmem:[%s795 + $0x230] sm:$0xff]
        %v1901 = vld [vmem:[%s795 + $0x238] sm:$0xff]
        %v1902 = vld [vmem:[%s795 + $0x240] sm:$0xff]
        %v1903 = vld [vmem:[%s795 + $0x248] sm:$0xff]
        %v1904 = vld [vmem:[%s795 + $0x250] sm:$0xff]
        %v1905 = vld [vmem:[%s795 + $0x258] sm:$0xff]
        %v1906 = vld [vmem:[%s795 + $0x260] sm:$0xff]
        %v1907 = vld [vmem:[%s795 + $0x268] sm:$0xff]
        %v1908 = vld [vmem:[%s795 + $0x270] sm:$0xff]
        %v1909 = vld [vmem:[%s795 + $0x278] sm:$0xff]
        %v1910 = vld [vmem:[%s795 + $0x280] sm:$0xff]
        %v1911 = vld [vmem:[%s795 + $0x288] sm:$0xff]
        %v1912 = vld [vmem:[%s795 + $0x290] sm:$0xff]
        %v1913 = vld [vmem:[%s795 + $0x298] sm:$0xff]
        %v1914 = vld [vmem:[%s795 + $0x2a0] sm:$0xff]
        %v1915 = vld [vmem:[%s795 + $0x2a8] sm:$0xff]
        %v1916 = vld [vmem:[%s795 + $0x2b0] sm:$0xff]
        %v1917 = vld [vmem:[%s795 + $0x2b8] sm:$0xff]
        %v1918 = vld [vmem:[%s795 + $0x2c0] sm:$0xff]
        %v1919 = vld [vmem:[%s795 + $0x2c8] sm:$0xff]
        %v1920 = vld [vmem:[%s795 + $0x2d0] sm:$0xff]
        %v1921 = vld [vmem:[%s795 + $0x2d8] sm:$0xff]
        %v1922 = vld [vmem:[%s795 + $0x2e0] sm:$0xff]
        %v1923 = vld [vmem:[%s795 + $0x2e8] sm:$0xff]
        %v1924 = vld [vmem:[%s795 + $0x2f0] sm:$0xff]
        %v1925 = vld [vmem:[%s795 + $0x2f8] sm:$0xff]
        %v1926 = vld [vmem:[%s795 + $0x300] sm:$0xff]
        %v1927 = vld [vmem:[%s795 + $0x308] sm:$0xff]
        %v1928 = vld [vmem:[%s795 + $0x310] sm:$0xff]
        %v1929 = vld [vmem:[%s795 + $0x318] sm:$0xff]
        %v1930 = vld [vmem:[%s795 + $0x320] sm:$0xff]
        %v1931 = vld [vmem:[%s795 + $0x328] sm:$0xff]
        %v1932 = vld [vmem:[%s795 + $0x330] sm:$0xff]
        %v1933 = vld [vmem:[%s795 + $0x338] sm:$0xff]
        %v1934 = vld [vmem:[%s795 + $0x340] sm:$0xff]
        %v1935 = vld [vmem:[%s795 + $0x348] sm:$0xff]
        %v1936 = vld [vmem:[%s795 + $0x350] sm:$0xff]
        %v1937 = vld [vmem:[%s795 + $0x358] sm:$0xff]
        %v1938 = vld [vmem:[%s795 + $0x360] sm:$0xff]
        %v1939 = vld [vmem:[%s795 + $0x368] sm:$0xff]
        %v1940 = vld [vmem:[%s795 + $0x370] sm:$0xff]
        %v1941 = vld [vmem:[%s795 + $0x378] sm:$0xff]
        %v1942 = vld [vmem:[%s795 + $0x380] sm:$0xff]
        %v1943 = vld [vmem:[%s795 + $0x388] sm:$0xff]
        %v1944 = vld [vmem:[%s795 + $0x390] sm:$0xff]
        %v1945 = vld [vmem:[%s795 + $0x398] sm:$0xff]
        %v1946 = vld [vmem:[%s795 + $0x3a0] sm:$0xff]
        %v1947 = vld [vmem:[%s795 + $0x3a8] sm:$0xff]
        %v1948 = vld [vmem:[%s795 + $0x3b0] sm:$0xff]
        %v1949 = vld [vmem:[%s795 + $0x3b8] sm:$0xff]
        %v1950 = vld [vmem:[%s795 + $0x3c0] sm:$0xff]
        %v1951 = vld [vmem:[%s795 + $0x3c8] sm:$0xff]
        %v1952 = vld [vmem:[%s795 + $0x3d0] sm:$0xff]
        %v1953 = vld [vmem:[%s795 + $0x3d8] sm:$0xff]
        %v1954 = vld [vmem:[%s795 + $0x3e0] sm:$0xff]
        %v1955 = vld [vmem:[%s795 + $0x3e8] sm:$0xff]
        %v1956 = vld [vmem:[%s795 + $0x3f0] sm:$0xff]
        %v1957 = vld [vmem:[%s795 + $0x3f8] sm:$0xff]
        %v1958 = vld [vmem:[%s804] sm:$0xff]
        %v1959 = vld [vmem:[%s804 + $0x8] sm:$0xff]
        %v1960 = vpack.c.bf16 %v1829, %v1829
        %v1963 = vlaneseq
        %v1964 = vshrl.u32 %v1963, 7
        %v1965 = vsub.s32 0, %v1964
        %v1966 = vrot.slane %v1958, %v1965
        %v1967 = vlaneseq
        %v1968 = vshrl.u32 %v1967, 7
        %v1969 = vsub.s32 1, %v1968
        %v1970 = vrot.slane %v1958, %v1969
        %v1971 = vlaneseq
        %v1972 = vshrl.u32 %v1971, 7
        %v1973 = vsub.s32 2, %v1972
        %v1974 = vrot.slane %v1958, %v1973
        %v1975 = vlaneseq
        %v1976 = vshrl.u32 %v1975, 7
        %v1977 = vsub.s32 3, %v1976
        %v1978 = vrot.slane %v1958, %v1977
        %v1979 = vlaneseq
        %v1980 = vshrl.u32 %v1979, 7
        %v1981 = vsub.s32 4, %v1980
        %v1982 = vrot.slane %v1958, %v1981
        %v1983 = vlaneseq
        %v1984 = vshrl.u32 %v1983, 7
        %v1985 = vsub.s32 5, %v1984
        %v1986 = vrot.slane %v1958, %v1985
        %v1987 = vlaneseq
        %v1988 = vshrl.u32 %v1987, 7
        %v1989 = vsub.s32 6, %v1988
        %v1990 = vrot.slane %v1958, %v1989
        %v1991 = vlaneseq
        %v1992 = vshrl.u32 %v1991, 7
        %v1993 = vsub.s32 7, %v1992
        %v1994 = vrot.slane %v1958, %v1993
        %v1995 = vlaneseq
        %v1996 = vshrl.u32 %v1995, 7
        %v1997 = vsub.s32 0, %v1996
        %v1998 = vrot.slane %v1959, %v1997
        %v1999 = vlaneseq
        %v2000 = vshrl.u32 %v1999, 7
        %v2001 = vsub.s32 1, %v2000
        %v2002 = vrot.slane %v1959, %v2001
        %v2003 = vlaneseq
        %v2004 = vshrl.u32 %v2003, 7
        %v2005 = vsub.s32 2, %v2004
        %v2006 = vrot.slane %v1959, %v2005
        %v2007 = vlaneseq
        %v2008 = vshrl.u32 %v2007, 7
        %v2009 = vsub.s32 3, %v2008
        %v2010 = vrot.slane %v1959, %v2009
        %v2011 = vlaneseq
        %v2012 = vshrl.u32 %v2011, 7
        %v2013 = vsub.s32 4, %v2012
        %v2014 = vrot.slane %v1959, %v2013
        %v2015 = vlaneseq
        %v2016 = vshrl.u32 %v2015, 7
        %v2017 = vsub.s32 5, %v2016
        %v2018 = vrot.slane %v1959, %v2017
        %v2019 = vlaneseq
        %v2020 = vshrl.u32 %v2019, 7
        %v2021 = vsub.s32 6, %v2020
        %v2022 = vrot.slane %v1959, %v2021
        %v2023 = vlaneseq
        %v2024 = vshrl.u32 %v2023, 7
        %v2025 = vsub.s32 7, %v2024
        %v2026 = vrot.slane %v1959, %v2025
        %v2171 = vunpack.c.l.b16 %v1830
        %v2172 = vunpack.c.h.b16 %v1830
        %v2173 = vunpack.c.l.b16 %v1831
        %v2174 = vunpack.c.h.b16 %v1831
        %v2175 = vunpack.c.l.b16 %v1832
        %v2176 = vunpack.c.h.b16 %v1832
        %v2177 = vunpack.c.l.b16 %v1833
        %v2178 = vunpack.c.h.b16 %v1833
        %v2179 = vunpack.c.l.b16 %v1834
        %v2180 = vunpack.c.h.b16 %v1834
        %v2181 = vunpack.c.l.b16 %v1835
        %v2182 = vunpack.c.h.b16 %v1835
        %v2183 = vunpack.c.l.b16 %v1836
        %v2184 = vunpack.c.h.b16 %v1836
        %v2185 = vunpack.c.l.b16 %v1837
        %v2186 = vunpack.c.h.b16 %v1837
        %v2187 = vunpack.c.l.b16 %v1838
        %v2188 = vunpack.c.h.b16 %v1838
        %v2189 = vunpack.c.l.b16 %v1839
        %v2190 = vunpack.c.h.b16 %v1839
        %v2191 = vunpack.c.l.b16 %v1840
        %v2192 = vunpack.c.h.b16 %v1840
        %v2193 = vunpack.c.l.b16 %v1841
        %v2194 = vunpack.c.h.b16 %v1841
        %v2195 = vunpack.c.l.b16 %v1842
        %v2196 = vunpack.c.h.b16 %v1842
        %v2197 = vunpack.c.l.b16 %v1843
        %v2198 = vunpack.c.h.b16 %v1843
        %v2199 = vunpack.c.l.b16 %v1844
        %v2200 = vunpack.c.h.b16 %v1844
        %v2201 = vunpack.c.l.b16 %v1845
        %v2202 = vunpack.c.h.b16 %v1845
        %v2203 = vunpack.c.l.b16 %v1846
        %v2204 = vunpack.c.h.b16 %v1846
        %v2205 = vunpack.c.l.b16 %v1847
        %v2206 = vunpack.c.h.b16 %v1847
        %v2207 = vunpack.c.l.b16 %v1848
        %v2208 = vunpack.c.h.b16 %v1848
        %v2209 = vunpack.c.l.b16 %v1849
        %v2210 = vunpack.c.h.b16 %v1849
        %v2211 = vunpack.c.l.b16 %v1850
        %v2212 = vunpack.c.h.b16 %v1850
        %v2213 = vunpack.c.l.b16 %v1851
        %v2214 = vunpack.c.h.b16 %v1851
        %v2215 = vunpack.c.l.b16 %v1852
        %v2216 = vunpack.c.h.b16 %v1852
        %v2217 = vunpack.c.l.b16 %v1853
        %v2218 = vunpack.c.h.b16 %v1853
        %v2219 = vunpack.c.l.b16 %v1854
        %v2220 = vunpack.c.h.b16 %v1854
        %v2221 = vunpack.c.l.b16 %v1855
        %v2222 = vunpack.c.h.b16 %v1855
        %v2223 = vunpack.c.l.b16 %v1856
        %v2224 = vunpack.c.h.b16 %v1856
        %v2225 = vunpack.c.l.b16 %v1857
        %v2226 = vunpack.c.h.b16 %v1857
        %v2227 = vunpack.c.l.b16 %v1858
        %v2228 = vunpack.c.h.b16 %v1858
        %v2229 = vunpack.c.l.b16 %v1859
        %v2230 = vunpack.c.h.b16 %v1859
        %v2231 = vunpack.c.l.b16 %v1860
        %v2232 = vunpack.c.h.b16 %v1860
        %v2233 = vunpack.c.l.b16 %v1861
        %v2234 = vunpack.c.h.b16 %v1861
        %v2235 = vunpack.c.l.b16 %v1862
        %v2236 = vunpack.c.h.b16 %v1862
        %v2237 = vunpack.c.l.b16 %v1863
        %v2238 = vunpack.c.h.b16 %v1863
        %v2239 = vunpack.c.l.b16 %v1864
        %v2240 = vunpack.c.h.b16 %v1864
        %v2241 = vunpack.c.l.b16 %v1865
        %v2242 = vunpack.c.h.b16 %v1865
        %v2243 = vunpack.c.l.b16 %v1866
        %v2244 = vunpack.c.h.b16 %v1866
        %v2245 = vunpack.c.l.b16 %v1867
        %v2246 = vunpack.c.h.b16 %v1867
        %v2247 = vunpack.c.l.b16 %v1868
        %v2248 = vunpack.c.h.b16 %v1868
        %v2249 = vunpack.c.l.b16 %v1869
        %v2250 = vunpack.c.h.b16 %v1869
        %v2251 = vunpack.c.l.b16 %v1870
        %v2252 = vunpack.c.h.b16 %v1870
        %v2253 = vunpack.c.l.b16 %v1871
        %v2254 = vunpack.c.h.b16 %v1871
        %v2255 = vunpack.c.l.b16 %v1872
        %v2256 = vunpack.c.h.b16 %v1872
        %v2257 = vunpack.c.l.b16 %v1873
        %v2258 = vunpack.c.h.b16 %v1873
        %v2259 = vunpack.c.l.b16 %v1874
        %v2260 = vunpack.c.h.b16 %v1874
        %v2261 = vunpack.c.l.b16 %v1875
        %v2262 = vunpack.c.h.b16 %v1875
        %v2263 = vunpack.c.l.b16 %v1876
        %v2264 = vunpack.c.h.b16 %v1876
        %v2265 = vunpack.c.l.b16 %v1877
        %v2266 = vunpack.c.h.b16 %v1877
        %v2267 = vunpack.c.l.b16 %v1878
        %v2268 = vunpack.c.h.b16 %v1878
        %v2269 = vunpack.c.l.b16 %v1879
        %v2270 = vunpack.c.h.b16 %v1879
        %v2271 = vunpack.c.l.b16 %v1880
        %v2272 = vunpack.c.h.b16 %v1880
        %v2273 = vunpack.c.l.b16 %v1881
        %v2274 = vunpack.c.h.b16 %v1881
        %v2275 = vunpack.c.l.b16 %v1882
        %v2276 = vunpack.c.h.b16 %v1882
        %v2277 = vunpack.c.l.b16 %v1883
        %v2278 = vunpack.c.h.b16 %v1883
        %v2279 = vunpack.c.l.b16 %v1884
        %v2280 = vunpack.c.h.b16 %v1884
        %v2281 = vunpack.c.l.b16 %v1885
        %v2282 = vunpack.c.h.b16 %v1885
        %v2283 = vunpack.c.l.b16 %v1886
        %v2284 = vunpack.c.h.b16 %v1886
        %v2285 = vunpack.c.l.b16 %v1887
        %v2286 = vunpack.c.h.b16 %v1887
        %v2287 = vunpack.c.l.b16 %v1888
        %v2288 = vunpack.c.h.b16 %v1888
        %v2289 = vunpack.c.l.b16 %v1889
        %v2290 = vunpack.c.h.b16 %v1889
        %v2291 = vunpack.c.l.b16 %v1890
        %v2292 = vunpack.c.h.b16 %v1890
        %v2293 = vunpack.c.l.b16 %v1891
        %v2294 = vunpack.c.h.b16 %v1891
        %v2295 = vunpack.c.l.b16 %v1892
        %v2296 = vunpack.c.h.b16 %v1892
        %v2297 = vunpack.c.l.b16 %v1893
        %v2298 = vunpack.c.h.b16 %v1893
        %v2299 = vunpack.c.l.b16 %v1894
        %v2300 = vunpack.c.h.b16 %v1894
        %v2301 = vunpack.c.l.b16 %v1895
        %v2302 = vunpack.c.h.b16 %v1895
        %v2303 = vunpack.c.l.b16 %v1896
        %v2304 = vunpack.c.h.b16 %v1896
        %v2305 = vunpack.c.l.b16 %v1897
        %v2306 = vunpack.c.h.b16 %v1897
        %v2307 = vunpack.c.l.b16 %v1898
        %v2308 = vunpack.c.h.b16 %v1898
        %v2309 = vunpack.c.l.b16 %v1899
        %v2310 = vunpack.c.h.b16 %v1899
        %v2311 = vunpack.c.l.b16 %v1900
        %v2312 = vunpack.c.h.b16 %v1900
        %v2313 = vunpack.c.l.b16 %v1901
        %v2314 = vunpack.c.h.b16 %v1901
        %v2315 = vunpack.c.l.b16 %v1902
        %v2316 = vunpack.c.h.b16 %v1902
        %v2317 = vunpack.c.l.b16 %v1903
        %v2318 = vunpack.c.h.b16 %v1903
        %v2319 = vunpack.c.l.b16 %v1904
        %v2320 = vunpack.c.h.b16 %v1904
        %v2321 = vunpack.c.l.b16 %v1905
        %v2322 = vunpack.c.h.b16 %v1905
        %v2323 = vunpack.c.l.b16 %v1906
        %v2324 = vunpack.c.h.b16 %v1906
        %v2325 = vunpack.c.l.b16 %v1907
        %v2326 = vunpack.c.h.b16 %v1907
        %v2327 = vunpack.c.l.b16 %v1908
        %v2328 = vunpack.c.h.b16 %v1908
        %v2329 = vunpack.c.l.b16 %v1909
        %v2330 = vunpack.c.h.b16 %v1909
        %v2331 = vunpack.c.l.b16 %v1910
        %v2332 = vunpack.c.h.b16 %v1910
        %v2333 = vunpack.c.l.b16 %v1911
        %v2334 = vunpack.c.h.b16 %v1911
        %v2335 = vunpack.c.l.b16 %v1912
        %v2336 = vunpack.c.h.b16 %v1912
        %v2337 = vunpack.c.l.b16 %v1913
        %v2338 = vunpack.c.h.b16 %v1913
        %v2339 = vunpack.c.l.b16 %v1914
        %v2340 = vunpack.c.h.b16 %v1914
        %v2341 = vunpack.c.l.b16 %v1915
        %v2342 = vunpack.c.h.b16 %v1915
        %v2343 = vunpack.c.l.b16 %v1916
        %v2344 = vunpack.c.h.b16 %v1916
        %v2345 = vunpack.c.l.b16 %v1917
        %v2346 = vunpack.c.h.b16 %v1917
        %v2347 = vunpack.c.l.b16 %v1918
        %v2348 = vunpack.c.h.b16 %v1918
        %v2349 = vunpack.c.l.b16 %v1919
        %v2350 = vunpack.c.h.b16 %v1919
        %v2351 = vunpack.c.l.b16 %v1920
        %v2352 = vunpack.c.h.b16 %v1920
        %v2353 = vunpack.c.l.b16 %v1921
        %v2354 = vunpack.c.h.b16 %v1921
        %v2355 = vunpack.c.l.b16 %v1922
        %v2356 = vunpack.c.h.b16 %v1922
        %v2357 = vunpack.c.l.b16 %v1923
        %v2358 = vunpack.c.h.b16 %v1923
        %v2359 = vunpack.c.l.b16 %v1924
        %v2360 = vunpack.c.h.b16 %v1924
        %v2361 = vunpack.c.l.b16 %v1925
        %v2362 = vunpack.c.h.b16 %v1925
        %v2363 = vunpack.c.l.b16 %v1926
        %v2364 = vunpack.c.h.b16 %v1926
        %v2365 = vunpack.c.l.b16 %v1927
        %v2366 = vunpack.c.h.b16 %v1927
        %v2367 = vunpack.c.l.b16 %v1928
        %v2368 = vunpack.c.h.b16 %v1928
        %v2369 = vunpack.c.l.b16 %v1929
        %v2370 = vunpack.c.h.b16 %v1929
        %v2371 = vunpack.c.l.b16 %v1930
        %v2372 = vunpack.c.h.b16 %v1930
        %v2373 = vunpack.c.l.b16 %v1931
        %v2374 = vunpack.c.h.b16 %v1931
        %v2375 = vunpack.c.l.b16 %v1932
        %v2376 = vunpack.c.h.b16 %v1932
        %v2377 = vunpack.c.l.b16 %v1933
        %v2378 = vunpack.c.h.b16 %v1933
        %v2379 = vunpack.c.l.b16 %v1934
        %v2380 = vunpack.c.h.b16 %v1934
        %v2381 = vunpack.c.l.b16 %v1935
        %v2382 = vunpack.c.h.b16 %v1935
        %v2383 = vunpack.c.l.b16 %v1936
        %v2384 = vunpack.c.h.b16 %v1936
        %v2385 = vunpack.c.l.b16 %v1937
        %v2386 = vunpack.c.h.b16 %v1937
        %v2387 = vunpack.c.l.b16 %v1938
        %v2388 = vunpack.c.h.b16 %v1938
        %v2389 = vunpack.c.l.b16 %v1939
        %v2390 = vunpack.c.h.b16 %v1939
        %v2391 = vunpack.c.l.b16 %v1940
        %v2392 = vunpack.c.h.b16 %v1940
        %v2393 = vunpack.c.l.b16 %v1941
        %v2394 = vunpack.c.h.b16 %v1941
        %v2395 = vunpack.c.l.b16 %v1942
        %v2396 = vunpack.c.h.b16 %v1942
        %v2397 = vunpack.c.l.b16 %v1943
        %v2398 = vunpack.c.h.b16 %v1943
        %v2399 = vunpack.c.l.b16 %v1944
        %v2400 = vunpack.c.h.b16 %v1944
        %v2401 = vunpack.c.l.b16 %v1945
        %v2402 = vunpack.c.h.b16 %v1945
        %v2403 = vunpack.c.l.b16 %v1946
        %v2404 = vunpack.c.h.b16 %v1946
        %v2405 = vunpack.c.l.b16 %v1947
        %v2406 = vunpack.c.h.b16 %v1947
        %v2407 = vunpack.c.l.b16 %v1948
        %v2408 = vunpack.c.h.b16 %v1948
        %v2409 = vunpack.c.l.b16 %v1949
        %v2410 = vunpack.c.h.b16 %v1949
        %v2411 = vunpack.c.l.b16 %v1950
        %v2412 = vunpack.c.h.b16 %v1950
        %v2413 = vunpack.c.l.b16 %v1951
        %v2414 = vunpack.c.h.b16 %v1951
        %v2415 = vunpack.c.l.b16 %v1952
        %v2416 = vunpack.c.h.b16 %v1952
        %v2417 = vunpack.c.l.b16 %v1953
        %v2418 = vunpack.c.h.b16 %v1953
        %v2419 = vunpack.c.l.b16 %v1954
        %v2420 = vunpack.c.h.b16 %v1954
        %v2421 = vunpack.c.l.b16 %v1955
        %v2422 = vunpack.c.h.b16 %v1955
        %v2423 = vunpack.c.l.b16 %v1956
        %v2424 = vunpack.c.h.b16 %v1956
        %v2425 = vunpack.c.l.b16 %v1957
        %v2426 = vunpack.c.h.b16 %v1957
        %v2427 = vpack.c.b16 %v2187, %v2171
        %v2428 = vpack.c.b16 %v2188, %v2172
        %v2429 = vpack.c.b16 %v2189, %v2173
        %v2430 = vpack.c.b16 %v2190, %v2174
        %v2431 = vpack.c.b16 %v2191, %v2175
        %v2432 = vpack.c.b16 %v2192, %v2176
        %v2433 = vpack.c.b16 %v2193, %v2177
        %v2434 = vpack.c.b16 %v2194, %v2178
        %v2435 = vpack.c.b16 %v2195, %v2179
        %v2436 = vpack.c.b16 %v2196, %v2180
        %v2437 = vpack.c.b16 %v2197, %v2181
        %v2438 = vpack.c.b16 %v2198, %v2182
        %v2439 = vpack.c.b16 %v2199, %v2183
        %v2440 = vpack.c.b16 %v2200, %v2184
        %v2441 = vpack.c.b16 %v2201, %v2185
        %v2442 = vpack.c.b16 %v2202, %v2186
        %v2443 = vpack.c.b16 %v2219, %v2203
        %v2444 = vpack.c.b16 %v2220, %v2204
        %v2445 = vpack.c.b16 %v2221, %v2205
        %v2446 = vpack.c.b16 %v2222, %v2206
        %v2447 = vpack.c.b16 %v2223, %v2207
        %v2448 = vpack.c.b16 %v2224, %v2208
        %v2449 = vpack.c.b16 %v2225, %v2209
        %v2450 = vpack.c.b16 %v2226, %v2210
        %v2451 = vpack.c.b16 %v2227, %v2211
        %v2452 = vpack.c.b16 %v2228, %v2212
        %v2453 = vpack.c.b16 %v2229, %v2213
        %v2454 = vpack.c.b16 %v2230, %v2214
        %v2455 = vpack.c.b16 %v2231, %v2215
        %v2456 = vpack.c.b16 %v2232, %v2216
        %v2457 = vpack.c.b16 %v2233, %v2217
        %v2458 = vpack.c.b16 %v2234, %v2218
        %v2459 = vpack.c.b16 %v2251, %v2235
        %v2460 = vpack.c.b16 %v2252, %v2236
        %v2461 = vpack.c.b16 %v2253, %v2237
        %v2462 = vpack.c.b16 %v2254, %v2238
        %v2463 = vpack.c.b16 %v2255, %v2239
        %v2464 = vpack.c.b16 %v2256, %v2240
        %v2465 = vpack.c.b16 %v2257, %v2241
        %v2466 = vpack.c.b16 %v2258, %v2242
        %v2467 = vpack.c.b16 %v2259, %v2243
        %v2468 = vpack.c.b16 %v2260, %v2244
        %v2469 = vpack.c.b16 %v2261, %v2245
        %v2470 = vpack.c.b16 %v2262, %v2246
        %v2471 = vpack.c.b16 %v2263, %v2247
        %v2472 = vpack.c.b16 %v2264, %v2248
        %v2473 = vpack.c.b16 %v2265, %v2249
        %v2474 = vpack.c.b16 %v2266, %v2250
        %v2475 = vpack.c.b16 %v2283, %v2267
        %v2476 = vpack.c.b16 %v2284, %v2268
        %v2477 = vpack.c.b16 %v2285, %v2269
        %v2478 = vpack.c.b16 %v2286, %v2270
        %v2479 = vpack.c.b16 %v2287, %v2271
        %v2480 = vpack.c.b16 %v2288, %v2272
        %v2481 = vpack.c.b16 %v2289, %v2273
        %v2482 = vpack.c.b16 %v2290, %v2274
        %v2483 = vpack.c.b16 %v2291, %v2275
        %v2484 = vpack.c.b16 %v2292, %v2276
        %v2485 = vpack.c.b16 %v2293, %v2277
        %v2486 = vpack.c.b16 %v2294, %v2278
        %v2487 = vpack.c.b16 %v2295, %v2279
        %v2488 = vpack.c.b16 %v2296, %v2280
        %v2489 = vpack.c.b16 %v2297, %v2281
        %v2490 = vpack.c.b16 %v2298, %v2282
        %v2491 = vpack.c.b16 %v2315, %v2299
        %v2492 = vpack.c.b16 %v2316, %v2300
        %v2493 = vpack.c.b16 %v2317, %v2301
        %v2494 = vpack.c.b16 %v2318, %v2302
        %v2495 = vpack.c.b16 %v2319, %v2303
        %v2496 = vpack.c.b16 %v2320, %v2304
        %v2497 = vpack.c.b16 %v2321, %v2305
        %v2498 = vpack.c.b16 %v2322, %v2306
        %v2499 = vpack.c.b16 %v2323, %v2307
        %v2500 = vpack.c.b16 %v2324, %v2308
        %v2501 = vpack.c.b16 %v2325, %v2309
        %v2502 = vpack.c.b16 %v2326, %v2310
        %v2503 = vpack.c.b16 %v2327, %v2311
        %v2504 = vpack.c.b16 %v2328, %v2312
        %v2505 = vpack.c.b16 %v2329, %v2313
        %v2506 = vpack.c.b16 %v2330, %v2314
        %v2507 = vpack.c.b16 %v2347, %v2331
        %v2508 = vpack.c.b16 %v2348, %v2332
        %v2509 = vpack.c.b16 %v2349, %v2333
        %v2510 = vpack.c.b16 %v2350, %v2334
        %v2511 = vpack.c.b16 %v2351, %v2335
        %v2512 = vpack.c.b16 %v2352, %v2336
        %v2513 = vpack.c.b16 %v2353, %v2337
        %v2514 = vpack.c.b16 %v2354, %v2338
        %v2515 = vpack.c.b16 %v2355, %v2339
        %v2516 = vpack.c.b16 %v2356, %v2340
        %v2517 = vpack.c.b16 %v2357, %v2341
        %v2518 = vpack.c.b16 %v2358, %v2342
        %v2519 = vpack.c.b16 %v2359, %v2343
        %v2520 = vpack.c.b16 %v2360, %v2344
        %v2521 = vpack.c.b16 %v2361, %v2345
        %v2522 = vpack.c.b16 %v2362, %v2346
        %v2523 = vpack.c.b16 %v2379, %v2363
        %v2524 = vpack.c.b16 %v2380, %v2364
        %v2525 = vpack.c.b16 %v2381, %v2365
        %v2526 = vpack.c.b16 %v2382, %v2366
        %v2527 = vpack.c.b16 %v2383, %v2367
        %v2528 = vpack.c.b16 %v2384, %v2368
        %v2529 = vpack.c.b16 %v2385, %v2369
        %v2530 = vpack.c.b16 %v2386, %v2370
        %v2531 = vpack.c.b16 %v2387, %v2371
        %v2532 = vpack.c.b16 %v2388, %v2372
        %v2533 = vpack.c.b16 %v2389, %v2373
        %v2534 = vpack.c.b16 %v2390, %v2374
        %v2535 = vpack.c.b16 %v2391, %v2375
        %v2536 = vpack.c.b16 %v2392, %v2376
        %v2537 = vpack.c.b16 %v2393, %v2377
        %v2538 = vpack.c.b16 %v2394, %v2378
        %v2539 = vpack.c.b16 %v2411, %v2395
        %v2540 = vpack.c.b16 %v2412, %v2396
        %v2541 = vpack.c.b16 %v2413, %v2397
        %v2542 = vpack.c.b16 %v2414, %v2398
        %v2543 = vpack.c.b16 %v2415, %v2399
        %v2544 = vpack.c.b16 %v2416, %v2400
        %v2545 = vpack.c.b16 %v2417, %v2401
        %v2546 = vpack.c.b16 %v2418, %v2402
        %v2547 = vpack.c.b16 %v2419, %v2403
        %v2548 = vpack.c.b16 %v2420, %v2404
        %v2549 = vpack.c.b16 %v2421, %v2405
        %v2550 = vpack.c.b16 %v2422, %v2406
        %v2551 = vpack.c.b16 %v2423, %v2407
        %v2552 = vpack.c.b16 %v2424, %v2408
        %v2553 = vpack.c.b16 %v2425, %v2409
        %v2554 = vpack.c.b16 %v2426, %v2410
        %2683 = vmatprep.subr.bf16.mxu0 %v2428
        %2684 = vmatpush1.bf16.msra.mxu0 %v2427
        %2685 = vmatprep.subr.bf16.mxu0 %v2444
        %2686 = vmatpush1.bf16.msra.mxu0 %v2443
        %2687 = vmatprep.subr.bf16.mxu0 %v2460
        %2688 = vmatpush1.bf16.msra.mxu0 %v2459
        %2689 = vmatprep.subr.bf16.mxu0 %v2476
        %2690 = vmatpush1.bf16.msra.mxu0 %v2475
        %2691 = vmatprep.subr.bf16.mxu0 %v2492
        %2692 = vmatpush1.bf16.msra.mxu0 %v2491
        %2693 = vmatprep.subr.bf16.mxu0 %v2508
        %2694 = vmatpush1.bf16.msra.mxu0 %v2507
        %2695 = vmatprep.subr.bf16.mxu0 %v2524
        %2696 = vmatpush1.bf16.msra.mxu0 %v2523
        %2697 = vmatprep.subr.bf16.mxu0 %v2540
        %2698 = vmatpush1.bf16.msra.mxu0 %v2539
        %2699 = vmatprep.subr.bf16.mxu0 0
        %2700 = vmatpush1.bf16.msra.mxu0 0
        %2701 = vmatprep.subr.bf16.mxu0 0
        %2702 = vmatpush1.bf16.msra.mxu0 0
        %2703 = vmatprep.subr.bf16.mxu0 0
        %2704 = vmatpush1.bf16.msra.mxu0 0
        %2705 = vmatprep.subr.bf16.mxu0 0
        %2706 = vmatpush1.bf16.msra.mxu0 0
        %2707 = vmatprep.subr.bf16.mxu0 0
        %2708 = vmatpush1.bf16.msra.mxu0 0
        %2709 = vmatprep.subr.bf16.mxu0 0
        %2710 = vmatpush1.bf16.msra.mxu0 0
        %2711 = vmatprep.subr.bf16.mxu0 0
        %2712 = vmatpush1.bf16.msra.mxu0 0
        %2713 = vmatprep.subr.bf16.mxu0 0
        %2714 = vmatpush1.bf16.msra.mxu0 0
        %2715 = vmatprep.mubr.bf16.mxu0 0
        %2716 = vmatmul.mubr.bf16.gmra.mrb[0].mxu0 %v1960
        %v2717 = vpop.f32.mrb[0].mxu0
        %v2718 = vadd.f32 %v1966, %v2717
        %v2719 = vpop.f32.mrb[0].mxu0
        %v2720 = vadd.f32 %v1970, %v2719
        %v2721 = vpop.f32.mrb[0].mxu0
        %v2722 = vpop.f32.mrb[0].mxu0
        %2723 = vdwg.mxu0
        %2724 = vmatprep.subr.bf16.mxu0 %v2430
        %2725 = vmatpush1.bf16.msra.mxu0 %v2429
        %2726 = vmatprep.subr.bf16.mxu0 %v2446
        %2727 = vmatpush1.bf16.msra.mxu0 %v2445
        %2728 = vmatprep.subr.bf16.mxu0 %v2462
        %2729 = vmatpush1.bf16.msra.mxu0 %v2461
        %2730 = vmatprep.subr.bf16.mxu0 %v2478
        %2731 = vmatpush1.bf16.msra.mxu0 %v2477
        %2732 = vmatprep.subr.bf16.mxu0 %v2494
        %2733 = vmatpush1.bf16.msra.mxu0 %v2493
        %2734 = vmatprep.subr.bf16.mxu0 %v2510
        %2735 = vmatpush1.bf16.msra.mxu0 %v2509
        %2736 = vmatprep.subr.bf16.mxu0 %v2526
        %2737 = vmatpush1.bf16.msra.mxu0 %v2525
        %2738 = vmatprep.subr.bf16.mxu0 %v2542
        %2739 = vmatpush1.bf16.msra.mxu0 %v2541
        %2740 = vmatprep.subr.bf16.mxu0 0
        %2741 = vmatpush1.bf16.msra.mxu0 0
        %2742 = vmatprep.subr.bf16.mxu0 0
        %2743 = vmatpush1.bf16.msra.mxu0 0
        %2744 = vmatprep.subr.bf16.mxu0 0
        %2745 = vmatpush1.bf16.msra.mxu0 0
        %2746 = vmatprep.subr.bf16.mxu0 0
        %2747 = vmatpush1.bf16.msra.mxu0 0
        %2748 = vmatprep.subr.bf16.mxu0 0
        %2749 = vmatpush1.bf16.msra.mxu0 0
        %2750 = vmatprep.subr.bf16.mxu0 0
        %2751 = vmatpush1.bf16.msra.mxu0 0
        %2752 = vmatprep.subr.bf16.mxu0 0
        %2753 = vmatpush1.bf16.msra.mxu0 0
        %2754 = vmatprep.subr.bf16.mxu0 0
        %2755 = vmatpush1.bf16.msra.mxu0 0
        %2756 = vmatprep.mubr.bf16.mxu0 0
        %2757 = vmatmul.mubr.bf16.gmra.mrb[0].mxu0 %v1960
        %v2758 = vpop.f32.mrb[0].mxu0
        %v2759 = vadd.f32 %v1974, %v2758
        %v2760 = vpop.f32.mrb[0].mxu0
        %v2761 = vadd.f32 %v1978, %v2760
        %v2762 = vpop.f32.mrb[0].mxu0
        %v2763 = vpop.f32.mrb[0].mxu0
        %2764 = vdwg.mxu0
        %2765 = vmatprep.subr.bf16.mxu0 %v2432
        %2766 = vmatpush1.bf16.msra.mxu0 %v2431
        %2767 = vmatprep.subr.bf16.mxu0 %v2448
        %2768 = vmatpush1.bf16.msra.mxu0 %v2447
        %2769 = vmatprep.subr.bf16.mxu0 %v2464
        %2770 = vmatpush1.bf16.msra.mxu0 %v2463
        %2771 = vmatprep.subr.bf16.mxu0 %v2480
        %2772 = vmatpush1.bf16.msra.mxu0 %v2479
        %2773 = vmatprep.subr.bf16.mxu0 %v2496
        %2774 = vmatpush1.bf16.msra.mxu0 %v2495
        %2775 = vmatprep.subr.bf16.mxu0 %v2512
        %2776 = vmatpush1.bf16.msra.mxu0 %v2511
        %2777 = vmatprep.subr.bf16.mxu0 %v2528
        %2778 = vmatpush1.bf16.msra.mxu0 %v2527
        %2779 = vmatprep.subr.bf16.mxu0 %v2544
        %2780 = vmatpush1.bf16.msra.mxu0 %v2543
        %2781 = vmatprep.subr.bf16.mxu0 0
        %2782 = vmatpush1.bf16.msra.mxu0 0
        %2783 = vmatprep.subr.bf16.mxu0 0
        %2784 = vmatpush1.bf16.msra.mxu0 0
        %2785 = vmatprep.subr.bf16.mxu0 0
        %2786 = vmatpush1.bf16.msra.mxu0 0
        %2787 = vmatprep.subr.bf16.mxu0 0
        %2788 = vmatpush1.bf16.msra.mxu0 0
        %2789 = vmatprep.subr.bf16.mxu0 0
        %2790 = vmatpush1.bf16.msra.mxu0 0
        %2791 = vmatprep.subr.bf16.mxu0 0
        %2792 = vmatpush1.bf16.msra.mxu0 0
        %2793 = vmatprep.subr.bf16.mxu0 0
        %2794 = vmatpush1.bf16.msra.mxu0 0
        %2795 = vmatprep.subr.bf16.mxu0 0
        %2796 = vmatpush1.bf16.msra.mxu0 0
        %2797 = vmatprep.mubr.bf16.mxu0 0
        %2798 = vmatmul.mubr.bf16.gmra.mrb[0].mxu0 %v1960
        %v2799 = vpop.f32.mrb[0].mxu0
        %v2800 = vadd.f32 %v1982, %v2799
        %v2801 = vpop.f32.mrb[0].mxu0
        %v2802 = vadd.f32 %v1986, %v2801
        %v2803 = vpop.f32.mrb[0].mxu0
        %v2804 = vpop.f32.mrb[0].mxu0
        %2805 = vdwg.mxu0
        %2806 = vmatprep.subr.bf16.mxu0 %v2434
        %2807 = vmatpush1.bf16.msra.mxu0 %v2433
        %2808 = vmatprep.subr.bf16.mxu0 %v2450
        %2809 = vmatpush1.bf16.msra.mxu0 %v2449
        %2810 = vmatprep.subr.bf16.mxu0 %v2466
        %2811 = vmatpush1.bf16.msra.mxu0 %v2465
        %2812 = vmatprep.subr.bf16.mxu0 %v2482
        %2813 = vmatpush1.bf16.msra.mxu0 %v2481
        %2814 = vmatprep.subr.bf16.mxu0 %v2498
        %2815 = vmatpush1.bf16.msra.mxu0 %v2497
        %2816 = vmatprep.subr.bf16.mxu0 %v2514
        %2817 = vmatpush1.bf16.msra.mxu0 %v2513
        %2818 = vmatprep.subr.bf16.mxu0 %v2530
        %2819 = vmatpush1.bf16.msra.mxu0 %v2529
        %2820 = vmatprep.subr.bf16.mxu0 %v2546
        %2821 = vmatpush1.bf16.msra.mxu0 %v2545
        %2822 = vmatprep.subr.bf16.mxu0 0
        %2823 = vmatpush1.bf16.msra.mxu0 0
        %2824 = vmatprep.subr.bf16.mxu0 0
        %2825 = vmatpush1.bf16.msra.mxu0 0
        %2826 = vmatprep.subr.bf16.mxu0 0
        %2827 = vmatpush1.bf16.msra.mxu0 0
        %2828 = vmatprep.subr.bf16.mxu0 0
        %2829 = vmatpush1.bf16.msra.mxu0 0
        %2830 = vmatprep.subr.bf16.mxu0 0
        %2831 = vmatpush1.bf16.msra.mxu0 0
        %2832 = vmatprep.subr.bf16.mxu0 0
        %2833 = vmatpush1.bf16.msra.mxu0 0
        %2834 = vmatprep.subr.bf16.mxu0 0
        %2835 = vmatpush1.bf16.msra.mxu0 0
        %2836 = vmatprep.subr.bf16.mxu0 0
        %2837 = vmatpush1.bf16.msra.mxu0 0
        %2838 = vmatprep.mubr.bf16.mxu0 0
        %2839 = vmatmul.mubr.bf16.gmra.mrb[0].mxu0 %v1960
        %v2840 = vpop.f32.mrb[0].mxu0
        %v2841 = vadd.f32 %v1990, %v2840
        %v2842 = vpop.f32.mrb[0].mxu0
        %v2843 = vadd.f32 %v1994, %v2842
        %v2844 = vpop.f32.mrb[0].mxu0
        %v2845 = vpop.f32.mrb[0].mxu0
        %2846 = vdwg.mxu0
        %2847 = vmatprep.subr.bf16.mxu0 %v2436
        %2848 = vmatpush1.bf16.msra.mxu0 %v2435
        %2849 = vmatprep.subr.bf16.mxu0 %v2452
        %2850 = vmatpush1.bf16.msra.mxu0 %v2451
        %2851 = vmatprep.subr.bf16.mxu0 %v2468
        %2852 = vmatpush1.bf16.msra.mxu0 %v2467
        %2853 = vmatprep.subr.bf16.mxu0 %v2484
        %2854 = vmatpush1.bf16.msra.mxu0 %v2483
        %2855 = vmatprep.subr.bf16.mxu0 %v2500
        %2856 = vmatpush1.bf16.msra.mxu0 %v2499
        %2857 = vmatprep.subr.bf16.mxu0 %v2516
        %2858 = vmatpush1.bf16.msra.mxu0 %v2515
        %2859 = vmatprep.subr.bf16.mxu0 %v2532
        %2860 = vmatpush1.bf16.msra.mxu0 %v2531
        %2861 = vmatprep.subr.bf16.mxu0 %v2548
        %2862 = vmatpush1.bf16.msra.mxu0 %v2547
        %2863 = vmatprep.subr.bf16.mxu0 0
        %2864 = vmatpush1.bf16.msra.mxu0 0
        %2865 = vmatprep.subr.bf16.mxu0 0
        %2866 = vmatpush1.bf16.msra.mxu0 0
        %2867 = vmatprep.subr.bf16.mxu0 0
        %2868 = vmatpush1.bf16.msra.mxu0 0
        %2869 = vmatprep.subr.bf16.mxu0 0
        %2870 = vmatpush1.bf16.msra.mxu0 0
        %2871 = vmatprep.subr.bf16.mxu0 0
        %2872 = vmatpush1.bf16.msra.mxu0 0
        %2873 = vmatprep.subr.bf16.mxu0 0
        %2874 = vmatpush1.bf16.msra.mxu0 0
        %2875 = vmatprep.subr.bf16.mxu0 0
        %2876 = vmatpush1.bf16.msra.mxu0 0
        %2877 = vmatprep.subr.bf16.mxu0 0
        %2878 = vmatpush1.bf16.msra.mxu0 0
        %2879 = vmatprep.mubr.bf16.mxu0 0
        %2880 = vmatmul.mubr.bf16.gmra.mrb[0].mxu0 %v1960
        %v2881 = vpop.f32.mrb[0].mxu0
        %v2882 = vadd.f32 %v1998, %v2881
        %v2883 = vpop.f32.mrb[0].mxu0
        %v2884 = vadd.f32 %v2002, %v2883
        %v2885 = vpop.f32.mrb[0].mxu0
        %v2886 = vpop.f32.mrb[0].mxu0
        %2887 = vdwg.mxu0
        %2888 = vmatprep.subr.bf16.mxu0 %v2438
        %2889 = vmatpush1.bf16.msra.mxu0 %v2437
        %2890 = vmatprep.subr.bf16.mxu0 %v2454
        %2891 = vmatpush1.bf16.msra.mxu0 %v2453
        %2892 = vmatprep.subr.bf16.mxu0 %v2470
        %2893 = vmatpush1.bf16.msra.mxu0 %v2469
        %2894 = vmatprep.subr.bf16.mxu0 %v2486
        %2895 = vmatpush1.bf16.msra.mxu0 %v2485
        %2896 = vmatprep.subr.bf16.mxu0 %v2502
        %2897 = vmatpush1.bf16.msra.mxu0 %v2501
        %2898 = vmatprep.subr.bf16.mxu0 %v2518
        %2899 = vmatpush1.bf16.msra.mxu0 %v2517
        %2900 = vmatprep.subr.bf16.mxu0 %v2534
        %2901 = vmatpush1.bf16.msra.mxu0 %v2533
        %2902 = vmatprep.subr.bf16.mxu0 %v2550
        %2903 = vmatpush1.bf16.msra.mxu0 %v2549
        %2904 = vmatprep.subr.bf16.mxu0 0
        %2905 = vmatpush1.bf16.msra.mxu0 0
        %2906 = vmatprep.subr.bf16.mxu0 0
        %2907 = vmatpush1.bf16.msra.mxu0 0
        %2908 = vmatprep.subr.bf16.mxu0 0
        %2909 = vmatpush1.bf16.msra.mxu0 0
        %2910 = vmatprep.subr.bf16.mxu0 0
        %2911 = vmatpush1.bf16.msra.mxu0 0
        %2912 = vmatprep.subr.bf16.mxu0 0
        %2913 = vmatpush1.bf16.msra.mxu0 0
        %2914 = vmatprep.subr.bf16.mxu0 0
        %2915 = vmatpush1.bf16.msra.mxu0 0
        %2916 = vmatprep.subr.bf16.mxu0 0
        %2917 = vmatpush1.bf16.msra.mxu0 0
        %2918 = vmatprep.subr.bf16.mxu0 0
        %2919 = vmatpush1.bf16.msra.mxu0 0
        %2920 = vmatprep.mubr.bf16.mxu0 0
        %2921 = vmatmul.mubr.bf16.gmra.mrb[0].mxu0 %v1960
        %v2922 = vpop.f32.mrb[0].mxu0
        %v2923 = vadd.f32 %v2006, %v2922
        %v2924 = vpop.f32.mrb[0].mxu0
        %v2925 = vadd.f32 %v2010, %v2924
        %v2926 = vpop.f32.mrb[0].mxu0
        %v2927 = vpop.f32.mrb[0].mxu0
        %2928 = vdwg.mxu0
        %2929 = vmatprep.subr.bf16.mxu0 %v2440
        %2930 = vmatpush1.bf16.msra.mxu0 %v2439
        %2931 = vmatprep.subr.bf16.mxu0 %v2456
        %2932 = vmatpush1.bf16.msra.mxu0 %v2455
        %2933 = vmatprep.subr.bf16.mxu0 %v2472
        %2934 = vmatpush1.bf16.msra.mxu0 %v2471
        %2935 = vmatprep.subr.bf16.mxu0 %v2488
        %2936 = vmatpush1.bf16.msra.mxu0 %v2487
        %2937 = vmatprep.subr.bf16.mxu0 %v2504
        %2938 = vmatpush1.bf16.msra.mxu0 %v2503
        %2939 = vmatprep.subr.bf16.mxu0 %v2520
        %2940 = vmatpush1.bf16.msra.mxu0 %v2519
        %2941 = vmatprep.subr.bf16.mxu0 %v2536
        %2942 = vmatpush1.bf16.msra.mxu0 %v2535
        %2943 = vmatprep.subr.bf16.mxu0 %v2552
        %2944 = vmatpush1.bf16.msra.mxu0 %v2551
        %2945 = vmatprep.subr.bf16.mxu0 0
        %2946 = vmatpush1.bf16.msra.mxu0 0
        %2947 = vmatprep.subr.bf16.mxu0 0
        %2948 = vmatpush1.bf16.msra.mxu0 0
        %2949 = vmatprep.subr.bf16.mxu0 0
        %2950 = vmatpush1.bf16.msra.mxu0 0
        %2951 = vmatprep.subr.bf16.mxu0 0
        %2952 = vmatpush1.bf16.msra.mxu0 0
        %2953 = vmatprep.subr.bf16.mxu0 0
        %2954 = vmatpush1.bf16.msra.mxu0 0
        %2955 = vmatprep.subr.bf16.mxu0 0
        %2956 = vmatpush1.bf16.msra.mxu0 0
        %2957 = vmatprep.subr.bf16.mxu0 0
        %2958 = vmatpush1.bf16.msra.mxu0 0
        %2959 = vmatprep.subr.bf16.mxu0 0
        %2960 = vmatpush1.bf16.msra.mxu0 0
        %2961 = vmatprep.mubr.bf16.mxu0 0
        %2962 = vmatmul.mubr.bf16.gmra.mrb[0].mxu0 %v1960
        %v2963 = vpop.f32.mrb[0].mxu0
        %v2964 = vadd.f32 %v2014, %v2963
        %v2965 = vpop.f32.mrb[0].mxu0
        %v2966 = vadd.f32 %v2018, %v2965
        %v2967 = vpop.f32.mrb[0].mxu0
        %v2968 = vpop.f32.mrb[0].mxu0
        %2969 = vdwg.mxu0
        %2970 = vmatprep.subr.bf16.mxu0 %v2442
        %2971 = vmatpush1.bf16.msra.mxu0 %v2441
        %2972 = vmatprep.subr.bf16.mxu0 %v2458
        %2973 = vmatpush1.bf16.msra.mxu0 %v2457
        %2974 = vmatprep.subr.bf16.mxu0 %v2474
        %2975 = vmatpush1.bf16.msra.mxu0 %v2473
        %2976 = vmatprep.subr.bf16.mxu0 %v2490
        %2977 = vmatpush1.bf16.msra.mxu0 %v2489
        %2978 = vmatprep.subr.bf16.mxu0 %v2506
        %2979 = vmatpush1.bf16.msra.mxu0 %v2505
        %2980 = vmatprep.subr.bf16.mxu0 %v2522
        %2981 = vmatpush1.bf16.msra.mxu0 %v2521
        %2982 = vmatprep.subr.bf16.mxu0 %v2538
        %2983 = vmatpush1.bf16.msra.mxu0 %v2537
        %2984 = vmatprep.subr.bf16.mxu0 %v2554
        %2985 = vmatpush1.bf16.msra.mxu0 %v2553
        %2986 = vmatprep.subr.bf16.mxu0 0
        %2987 = vmatpush1.bf16.msra.mxu0 0
        %2988 = vmatprep.subr.bf16.mxu0 0
        %2989 = vmatpush1.bf16.msra.mxu0 0
        %2990 = vmatprep.subr.bf16.mxu0 0
        %2991 = vmatpush1.bf16.msra.mxu0 0
        %2992 = vmatprep.subr.bf16.mxu0 0
        %2993 = vmatpush1.bf16.msra.mxu0 0
        %2994 = vmatprep.subr.bf16.mxu0 0
        %2995 = vmatpush1.bf16.msra.mxu0 0
        %2996 = vmatprep.subr.bf16.mxu0 0
        %2997 = vmatpush1.bf16.msra.mxu0 0
        %2998 = vmatprep.subr.bf16.mxu0 0
        %2999 = vmatpush1.bf16.msra.mxu0 0
        %3000 = vmatprep.subr.bf16.mxu0 0
        %3001 = vmatpush1.bf16.msra.mxu0 0
        %3002 = vmatprep.mubr.bf16.mxu0 0
        %3003 = vmatmul.mubr.bf16.gmra.mrb[0].mxu0 %v1960
        %v3004 = vpop.f32.mrb[0].mxu0
        %v3005 = vadd.f32 %v2022, %v3004
        %v3006 = vpop.f32.mrb[0].mxu0
        %v3007 = vadd.f32 %v2026, %v3006
        %v3008 = vpop.f32.mrb[0].mxu0
        %v3009 = vpop.f32.mrb[0].mxu0
        %3010 = vdwg.mxu0
        %v3011 = vmax.f32 %v2718, 0.0
        %v3012 = vmax.f32 %v2720, 0.0
        %v3013 = vmax.f32 %v2759, 0.0
        %v3014 = vmax.f32 %v2761, 0.0
        %v3015 = vmax.f32 %v2800, 0.0
        %v3016 = vmax.f32 %v2802, 0.0
        %v3017 = vmax.f32 %v2841, 0.0
        %v3018 = vmax.f32 %v2843, 0.0
        %v3019 = vmax.f32 %v2882, 0.0
        %v3020 = vmax.f32 %v2884, 0.0
        %v3021 = vmax.f32 %v2923, 0.0
        %v3022 = vmax.f32 %v2925, 0.0
        %v3023 = vmax.f32 %v2964, 0.0
        %v3024 = vmax.f32 %v2966, 0.0
        %v3025 = vmax.f32 %v3005, 0.0
        %v3026 = vmax.f32 %v3007, 0.0
        %v3027 = vld [vmem:[%s813] sm:$0xf]
        %v3028 = vld [vmem:[%s813 + $0x4] sm:$0xf]
        %v3029 = vld [vmem:[%s813 + $0x8] sm:$0xf]
        %v3030 = vld [vmem:[%s813 + $0xc] sm:$0xf]
        %v3031 = vld [vmem:[%s813 + $0x10] sm:$0xf]
        %v3032 = vld [vmem:[%s813 + $0x14] sm:$0xf]
        %v3033 = vld [vmem:[%s813 + $0x18] sm:$0xf]
        %v3034 = vld [vmem:[%s813 + $0x1c] sm:$0xf]
        %v3035 = vld [vmem:[%s813 + $0x20] sm:$0xf]
        %v3036 = vld [vmem:[%s813 + $0x24] sm:$0xf]
        %v3037 = vld [vmem:[%s813 + $0x28] sm:$0xf]
        %v3038 = vld [vmem:[%s813 + $0x2c] sm:$0xf]
        %v3039 = vld [vmem:[%s813 + $0x30] sm:$0xf]
        %v3040 = vld [vmem:[%s813 + $0x34] sm:$0xf]
        %v3041 = vld [vmem:[%s813 + $0x38] sm:$0xf]
        %v3042 = vld [vmem:[%s813 + $0x3c] sm:$0xf]
        %v3043 = vld [vmem:[%s813 + $0x40] sm:$0xf]
        %v3044 = vld [vmem:[%s813 + $0x44] sm:$0xf]
        %v3045 = vld [vmem:[%s813 + $0x48] sm:$0xf]
        %v3046 = vld [vmem:[%s813 + $0x4c] sm:$0xf]
        %v3047 = vld [vmem:[%s813 + $0x50] sm:$0xf]
        %v3048 = vld [vmem:[%s813 + $0x54] sm:$0xf]
        %v3049 = vld [vmem:[%s813 + $0x58] sm:$0xf]
        %v3050 = vld [vmem:[%s813 + $0x5c] sm:$0xf]
        %v3051 = vld [vmem:[%s813 + $0x60] sm:$0xf]
        %v3052 = vld [vmem:[%s813 + $0x64] sm:$0xf]
        %v3053 = vld [vmem:[%s813 + $0x68] sm:$0xf]
        %v3054 = vld [vmem:[%s813 + $0x6c] sm:$0xf]
        %v3055 = vld [vmem:[%s813 + $0x70] sm:$0xf]
        %v3056 = vld [vmem:[%s813 + $0x74] sm:$0xf]
        %v3057 = vld [vmem:[%s813 + $0x78] sm:$0xf]
        %v3058 = vld [vmem:[%s813 + $0x7c] sm:$0xf]
        %v3059 = vld [vmem:[%s813 + $0x80] sm:$0xf]
        %v3060 = vld [vmem:[%s813 + $0x84] sm:$0xf]
        %v3061 = vld [vmem:[%s813 + $0x88] sm:$0xf]
        %v3062 = vld [vmem:[%s813 + $0x8c] sm:$0xf]
        %v3063 = vld [vmem:[%s813 + $0x90] sm:$0xf]
        %v3064 = vld [vmem:[%s813 + $0x94] sm:$0xf]
        %v3065 = vld [vmem:[%s813 + $0x98] sm:$0xf]
        %v3066 = vld [vmem:[%s813 + $0x9c] sm:$0xf]
        %v3067 = vld [vmem:[%s813 + $0xa0] sm:$0xf]
        %v3068 = vld [vmem:[%s813 + $0xa4] sm:$0xf]
        %v3069 = vld [vmem:[%s813 + $0xa8] sm:$0xf]
        %v3070 = vld [vmem:[%s813 + $0xac] sm:$0xf]
        %v3071 = vld [vmem:[%s813 + $0xb0] sm:$0xf]
        %v3072 = vld [vmem:[%s813 + $0xb4] sm:$0xf]
        %v3073 = vld [vmem:[%s813 + $0xb8] sm:$0xf]
        %v3074 = vld [vmem:[%s813 + $0xbc] sm:$0xf]
        %v3075 = vld [vmem:[%s813 + $0xc0] sm:$0xf]
        %v3076 = vld [vmem:[%s813 + $0xc4] sm:$0xf]
        %v3077 = vld [vmem:[%s813 + $0xc8] sm:$0xf]
        %v3078 = vld [vmem:[%s813 + $0xcc] sm:$0xf]
        %v3079 = vld [vmem:[%s813 + $0xd0] sm:$0xf]
        %v3080 = vld [vmem:[%s813 + $0xd4] sm:$0xf]
        %v3081 = vld [vmem:[%s813 + $0xd8] sm:$0xf]
        %v3082 = vld [vmem:[%s813 + $0xdc] sm:$0xf]
        %v3083 = vld [vmem:[%s813 + $0xe0] sm:$0xf]
        %v3084 = vld [vmem:[%s813 + $0xe4] sm:$0xf]
        %v3085 = vld [vmem:[%s813 + $0xe8] sm:$0xf]
        %v3086 = vld [vmem:[%s813 + $0xec] sm:$0xf]
        %v3087 = vld [vmem:[%s813 + $0xf0] sm:$0xf]
        %v3088 = vld [vmem:[%s813 + $0xf4] sm:$0xf]
        %v3089 = vld [vmem:[%s813 + $0xf8] sm:$0xf]
        %v3090 = vld [vmem:[%s813 + $0xfc] sm:$0xf]
        %v3091 = vld [vmem:[%s813 + $0x100] sm:$0xf]
        %v3092 = vld [vmem:[%s813 + $0x104] sm:$0xf]
        %v3093 = vld [vmem:[%s813 + $0x108] sm:$0xf]
        %v3094 = vld [vmem:[%s813 + $0x10c] sm:$0xf]
        %v3095 = vld [vmem:[%s813 + $0x110] sm:$0xf]
        %v3096 = vld [vmem:[%s813 + $0x114] sm:$0xf]
        %v3097 = vld [vmem:[%s813 + $0x118] sm:$0xf]
        %v3098 = vld [vmem:[%s813 + $0x11c] sm:$0xf]
        %v3099 = vld [vmem:[%s813 + $0x120] sm:$0xf]
        %v3100 = vld [vmem:[%s813 + $0x124] sm:$0xf]
        %v3101 = vld [vmem:[%s813 + $0x128] sm:$0xf]
        %v3102 = vld [vmem:[%s813 + $0x12c] sm:$0xf]
        %v3103 = vld [vmem:[%s813 + $0x130] sm:$0xf]
        %v3104 = vld [vmem:[%s813 + $0x134] sm:$0xf]
        %v3105 = vld [vmem:[%s813 + $0x138] sm:$0xf]
        %v3106 = vld [vmem:[%s813 + $0x13c] sm:$0xf]
        %v3107 = vld [vmem:[%s813 + $0x140] sm:$0xf]
        %v3108 = vld [vmem:[%s813 + $0x144] sm:$0xf]
        %v3109 = vld [vmem:[%s813 + $0x148] sm:$0xf]
        %v3110 = vld [vmem:[%s813 + $0x14c] sm:$0xf]
        %v3111 = vld [vmem:[%s813 + $0x150] sm:$0xf]
        %v3112 = vld [vmem:[%s813 + $0x154] sm:$0xf]
        %v3113 = vld [vmem:[%s813 + $0x158] sm:$0xf]
        %v3114 = vld [vmem:[%s813 + $0x15c] sm:$0xf]
        %v3115 = vld [vmem:[%s813 + $0x160] sm:$0xf]
        %v3116 = vld [vmem:[%s813 + $0x164] sm:$0xf]
        %v3117 = vld [vmem:[%s813 + $0x168] sm:$0xf]
        %v3118 = vld [vmem:[%s813 + $0x16c] sm:$0xf]
        %v3119 = vld [vmem:[%s813 + $0x170] sm:$0xf]
        %v3120 = vld [vmem:[%s813 + $0x174] sm:$0xf]
        %v3121 = vld [vmem:[%s813 + $0x178] sm:$0xf]
        %v3122 = vld [vmem:[%s813 + $0x17c] sm:$0xf]
        %v3123 = vld [vmem:[%s813 + $0x180] sm:$0xf]
        %v3124 = vld [vmem:[%s813 + $0x184] sm:$0xf]
        %v3125 = vld [vmem:[%s813 + $0x188] sm:$0xf]
        %v3126 = vld [vmem:[%s813 + $0x18c] sm:$0xf]
        %v3127 = vld [vmem:[%s813 + $0x190] sm:$0xf]
        %v3128 = vld [vmem:[%s813 + $0x194] sm:$0xf]
        %v3129 = vld [vmem:[%s813 + $0x198] sm:$0xf]
        %v3130 = vld [vmem:[%s813 + $0x19c] sm:$0xf]
        %v3131 = vld [vmem:[%s813 + $0x1a0] sm:$0xf]
        %v3132 = vld [vmem:[%s813 + $0x1a4] sm:$0xf]
        %v3133 = vld [vmem:[%s813 + $0x1a8] sm:$0xf]
        %v3134 = vld [vmem:[%s813 + $0x1ac] sm:$0xf]
        %v3135 = vld [vmem:[%s813 + $0x1b0] sm:$0xf]
        %v3136 = vld [vmem:[%s813 + $0x1b4] sm:$0xf]
        %v3137 = vld [vmem:[%s813 + $0x1b8] sm:$0xf]
        %v3138 = vld [vmem:[%s813 + $0x1bc] sm:$0xf]
        %v3139 = vld [vmem:[%s813 + $0x1c0] sm:$0xf]
        %v3140 = vld [vmem:[%s813 + $0x1c4] sm:$0xf]
        %v3141 = vld [vmem:[%s813 + $0x1c8] sm:$0xf]
        %v3142 = vld [vmem:[%s813 + $0x1cc] sm:$0xf]
        %v3143 = vld [vmem:[%s813 + $0x1d0] sm:$0xf]
        %v3144 = vld [vmem:[%s813 + $0x1d4] sm:$0xf]
        %v3145 = vld [vmem:[%s813 + $0x1d8] sm:$0xf]
        %v3146 = vld [vmem:[%s813 + $0x1dc] sm:$0xf]
        %v3147 = vld [vmem:[%s813 + $0x1e0] sm:$0xf]
        %v3148 = vld [vmem:[%s813 + $0x1e4] sm:$0xf]
        %v3149 = vld [vmem:[%s813 + $0x1e8] sm:$0xf]
        %v3150 = vld [vmem:[%s813 + $0x1ec] sm:$0xf]
        %v3151 = vld [vmem:[%s813 + $0x1f0] sm:$0xf]
        %v3152 = vld [vmem:[%s813 + $0x1f4] sm:$0xf]
        %v3153 = vld [vmem:[%s813 + $0x1f8] sm:$0xf]
        %v3154 = vld [vmem:[%s813 + $0x1fc] sm:$0xf]
        %v3155 = vld [vmem:[%s813 + $0x200] sm:$0xf]
        %v3156 = vld [vmem:[%s813 + $0x204] sm:$0xf]
        %v3157 = vld [vmem:[%s813 + $0x208] sm:$0xf]
        %v3158 = vld [vmem:[%s813 + $0x20c] sm:$0xf]
        %v3159 = vld [vmem:[%s813 + $0x210] sm:$0xf]
        %v3160 = vld [vmem:[%s813 + $0x214] sm:$0xf]
        %v3161 = vld [vmem:[%s813 + $0x218] sm:$0xf]
        %v3162 = vld [vmem:[%s813 + $0x21c] sm:$0xf]
        %v3163 = vld [vmem:[%s813 + $0x220] sm:$0xf]
        %v3164 = vld [vmem:[%s813 + $0x224] sm:$0xf]
        %v3165 = vld [vmem:[%s813 + $0x228] sm:$0xf]
        %v3166 = vld [vmem:[%s813 + $0x22c] sm:$0xf]
        %v3167 = vld [vmem:[%s813 + $0x230] sm:$0xf]
        %v3168 = vld [vmem:[%s813 + $0x234] sm:$0xf]
        %v3169 = vld [vmem:[%s813 + $0x238] sm:$0xf]
        %v3170 = vld [vmem:[%s813 + $0x23c] sm:$0xf]
        %v3171 = vld [vmem:[%s813 + $0x240] sm:$0xf]
        %v3172 = vld [vmem:[%s813 + $0x244] sm:$0xf]
        %v3173 = vld [vmem:[%s813 + $0x248] sm:$0xf]
        %v3174 = vld [vmem:[%s813 + $0x24c] sm:$0xf]
        %v3175 = vld [vmem:[%s813 + $0x250] sm:$0xf]
        %v3176 = vld [vmem:[%s813 + $0x254] sm:$0xf]
        %v3177 = vld [vmem:[%s813 + $0x258] sm:$0xf]
        %v3178 = vld [vmem:[%s813 + $0x25c] sm:$0xf]
        %v3179 = vld [vmem:[%s813 + $0x260] sm:$0xf]
        %v3180 = vld [vmem:[%s813 + $0x264] sm:$0xf]
        %v3181 = vld [vmem:[%s813 + $0x268] sm:$0xf]
        %v3182 = vld [vmem:[%s813 + $0x26c] sm:$0xf]
        %v3183 = vld [vmem:[%s813 + $0x270] sm:$0xf]
        %v3184 = vld [vmem:[%s813 + $0x274] sm:$0xf]
        %v3185 = vld [vmem:[%s813 + $0x278] sm:$0xf]
        %v3186 = vld [vmem:[%s813 + $0x27c] sm:$0xf]
        %v3187 = vld [vmem:[%s813 + $0x280] sm:$0xf]
        %v3188 = vld [vmem:[%s813 + $0x284] sm:$0xf]
        %v3189 = vld [vmem:[%s813 + $0x288] sm:$0xf]
        %v3190 = vld [vmem:[%s813 + $0x28c] sm:$0xf]
        %v3191 = vld [vmem:[%s813 + $0x290] sm:$0xf]
        %v3192 = vld [vmem:[%s813 + $0x294] sm:$0xf]
        %v3193 = vld [vmem:[%s813 + $0x298] sm:$0xf]
        %v3194 = vld [vmem:[%s813 + $0x29c] sm:$0xf]
        %v3195 = vld [vmem:[%s813 + $0x2a0] sm:$0xf]
        %v3196 = vld [vmem:[%s813 + $0x2a4] sm:$0xf]
        %v3197 = vld [vmem:[%s813 + $0x2a8] sm:$0xf]
        %v3198 = vld [vmem:[%s813 + $0x2ac] sm:$0xf]
        %v3199 = vld [vmem:[%s813 + $0x2b0] sm:$0xf]
        %v3200 = vld [vmem:[%s813 + $0x2b4] sm:$0xf]
        %v3201 = vld [vmem:[%s813 + $0x2b8] sm:$0xf]
        %v3202 = vld [vmem:[%s813 + $0x2bc] sm:$0xf]
        %v3203 = vld [vmem:[%s813 + $0x2c0] sm:$0xf]
        %v3204 = vld [vmem:[%s813 + $0x2c4] sm:$0xf]
        %v3205 = vld [vmem:[%s813 + $0x2c8] sm:$0xf]
        %v3206 = vld [vmem:[%s813 + $0x2cc] sm:$0xf]
        %v3207 = vld [vmem:[%s813 + $0x2d0] sm:$0xf]
        %v3208 = vld [vmem:[%s813 + $0x2d4] sm:$0xf]
        %v3209 = vld [vmem:[%s813 + $0x2d8] sm:$0xf]
        %v3210 = vld [vmem:[%s813 + $0x2dc] sm:$0xf]
        %v3211 = vld [vmem:[%s813 + $0x2e0] sm:$0xf]
        %v3212 = vld [vmem:[%s813 + $0x2e4] sm:$0xf]
        %v3213 = vld [vmem:[%s813 + $0x2e8] sm:$0xf]
        %v3214 = vld [vmem:[%s813 + $0x2ec] sm:$0xf]
        %v3215 = vld [vmem:[%s813 + $0x2f0] sm:$0xf]
        %v3216 = vld [vmem:[%s813 + $0x2f4] sm:$0xf]
        %v3217 = vld [vmem:[%s813 + $0x2f8] sm:$0xf]
        %v3218 = vld [vmem:[%s813 + $0x2fc] sm:$0xf]
        %v3219 = vld [vmem:[%s813 + $0x300] sm:$0xf]
        %v3220 = vld [vmem:[%s813 + $0x304] sm:$0xf]
        %v3221 = vld [vmem:[%s813 + $0x308] sm:$0xf]
        %v3222 = vld [vmem:[%s813 + $0x30c] sm:$0xf]
        %v3223 = vld [vmem:[%s813 + $0x310] sm:$0xf]
        %v3224 = vld [vmem:[%s813 + $0x314] sm:$0xf]
        %v3225 = vld [vmem:[%s813 + $0x318] sm:$0xf]
        %v3226 = vld [vmem:[%s813 + $0x31c] sm:$0xf]
        %v3227 = vld [vmem:[%s813 + $0x320] sm:$0xf]
        %v3228 = vld [vmem:[%s813 + $0x324] sm:$0xf]
        %v3229 = vld [vmem:[%s813 + $0x328] sm:$0xf]
        %v3230 = vld [vmem:[%s813 + $0x32c] sm:$0xf]
        %v3231 = vld [vmem:[%s813 + $0x330] sm:$0xf]
        %v3232 = vld [vmem:[%s813 + $0x334] sm:$0xf]
        %v3233 = vld [vmem:[%s813 + $0x338] sm:$0xf]
        %v3234 = vld [vmem:[%s813 + $0x33c] sm:$0xf]
        %v3235 = vld [vmem:[%s813 + $0x340] sm:$0xf]
        %v3236 = vld [vmem:[%s813 + $0x344] sm:$0xf]
        %v3237 = vld [vmem:[%s813 + $0x348] sm:$0xf]
        %v3238 = vld [vmem:[%s813 + $0x34c] sm:$0xf]
        %v3239 = vld [vmem:[%s813 + $0x350] sm:$0xf]
        %v3240 = vld [vmem:[%s813 + $0x354] sm:$0xf]
        %v3241 = vld [vmem:[%s813 + $0x358] sm:$0xf]
        %v3242 = vld [vmem:[%s813 + $0x35c] sm:$0xf]
        %v3243 = vld [vmem:[%s813 + $0x360] sm:$0xf]
        %v3244 = vld [vmem:[%s813 + $0x364] sm:$0xf]
        %v3245 = vld [vmem:[%s813 + $0x368] sm:$0xf]
        %v3246 = vld [vmem:[%s813 + $0x36c] sm:$0xf]
        %v3247 = vld [vmem:[%s813 + $0x370] sm:$0xf]
        %v3248 = vld [vmem:[%s813 + $0x374] sm:$0xf]
        %v3249 = vld [vmem:[%s813 + $0x378] sm:$0xf]
        %v3250 = vld [vmem:[%s813 + $0x37c] sm:$0xf]
        %v3251 = vld [vmem:[%s813 + $0x380] sm:$0xf]
        %v3252 = vld [vmem:[%s813 + $0x384] sm:$0xf]
        %v3253 = vld [vmem:[%s813 + $0x388] sm:$0xf]
        %v3254 = vld [vmem:[%s813 + $0x38c] sm:$0xf]
        %v3255 = vld [vmem:[%s813 + $0x390] sm:$0xf]
        %v3256 = vld [vmem:[%s813 + $0x394] sm:$0xf]
        %v3257 = vld [vmem:[%s813 + $0x398] sm:$0xf]
        %v3258 = vld [vmem:[%s813 + $0x39c] sm:$0xf]
        %v3259 = vld [vmem:[%s813 + $0x3a0] sm:$0xf]
        %v3260 = vld [vmem:[%s813 + $0x3a4] sm:$0xf]
        %v3261 = vld [vmem:[%s813 + $0x3a8] sm:$0xf]
        %v3262 = vld [vmem:[%s813 + $0x3ac] sm:$0xf]
        %v3263 = vld [vmem:[%s813 + $0x3b0] sm:$0xf]
        %v3264 = vld [vmem:[%s813 + $0x3b4] sm:$0xf]
        %v3265 = vld [vmem:[%s813 + $0x3b8] sm:$0xf]
        %v3266 = vld [vmem:[%s813 + $0x3bc] sm:$0xf]
        %v3267 = vld [vmem:[%s813 + $0x3c0] sm:$0xf]
        %v3268 = vld [vmem:[%s813 + $0x3c4] sm:$0xf]
        %v3269 = vld [vmem:[%s813 + $0x3c8] sm:$0xf]
        %v3270 = vld [vmem:[%s813 + $0x3cc] sm:$0xf]
        %v3271 = vld [vmem:[%s813 + $0x3d0] sm:$0xf]
        %v3272 = vld [vmem:[%s813 + $0x3d4] sm:$0xf]
        %v3273 = vld [vmem:[%s813 + $0x3d8] sm:$0xf]
        %v3274 = vld [vmem:[%s813 + $0x3dc] sm:$0xf]
        %v3275 = vld [vmem:[%s813 + $0x3e0] sm:$0xf]
        %v3276 = vld [vmem:[%s813 + $0x3e4] sm:$0xf]
        %v3277 = vld [vmem:[%s813 + $0x3e8] sm:$0xf]
        %v3278 = vld [vmem:[%s813 + $0x3ec] sm:$0xf]
        %v3279 = vld [vmem:[%s813 + $0x3f0] sm:$0xf]
        %v3280 = vld [vmem:[%s813 + $0x3f4] sm:$0xf]
        %v3281 = vld [vmem:[%s813 + $0x3f8] sm:$0xf]
        %v3282 = vld [vmem:[%s813 + $0x3fc] sm:$0xf]
        %v3283 = vld [vmem:[%s821] sm:$0x1]
        %v3284 = vpack.c.bf16 %v3011, %v3011
        %v3285 = vpack.c.bf16 %v3012, %v3012
        %v3286 = vpack.c.bf16 %v3013, %v3013
        %v3287 = vpack.c.bf16 %v3014, %v3014
        %v3288 = vpack.c.bf16 %v3015, %v3015
        %v3289 = vpack.c.bf16 %v3016, %v3016
        %v3290 = vpack.c.bf16 %v3017, %v3017
        %v3291 = vpack.c.bf16 %v3018, %v3018
        %v3292 = vpack.c.bf16 %v3019, %v3019
        %v3293 = vpack.c.bf16 %v3020, %v3020
        %v3294 = vpack.c.bf16 %v3021, %v3021
        %v3295 = vpack.c.bf16 %v3022, %v3022
        %v3296 = vpack.c.bf16 %v3023, %v3023
        %v3297 = vpack.c.bf16 %v3024, %v3024
        %v3298 = vpack.c.bf16 %v3025, %v3025
        %v3299 = vpack.c.bf16 %v3026, %v3026
        %v3301 = vlaneseq
        %v3302 = vshrl.u32 %v3301, 7
        %v3303 = vsub.s32 0, %v3302
        %v3304 = vrot.slane %v3283, %v3303
        %v3562 = vunpack.c.l.b16 %v3027
        %v3563 = vunpack.c.l.b16 %v3028
        %v3564 = vunpack.c.l.b16 %v3029
        %v3565 = vunpack.c.l.b16 %v3030
        %v3566 = vunpack.c.l.b16 %v3031
        %v3567 = vunpack.c.l.b16 %v3032
        %v3568 = vunpack.c.l.b16 %v3033
        %v3569 = vunpack.c.l.b16 %v3034
        %v3570 = vunpack.c.l.b16 %v3035
        %v3571 = vunpack.c.l.b16 %v3036
        %v3572 = vunpack.c.l.b16 %v3037
        %v3573 = vunpack.c.l.b16 %v3038
        %v3574 = vunpack.c.l.b16 %v3039
        %v3575 = vunpack.c.l.b16 %v3040
        %v3576 = vunpack.c.l.b16 %v3041
        %v3577 = vunpack.c.l.b16 %v3042
        %v3578 = vunpack.c.l.b16 %v3043
        %v3579 = vunpack.c.l.b16 %v3044
        %v3580 = vunpack.c.l.b16 %v3045
        %v3581 = vunpack.c.l.b16 %v3046
        %v3582 = vunpack.c.l.b16 %v3047
        %v3583 = vunpack.c.l.b16 %v3048
        %v3584 = vunpack.c.l.b16 %v3049
        %v3585 = vunpack.c.l.b16 %v3050
        %v3586 = vunpack.c.l.b16 %v3051
        %v3587 = vunpack.c.l.b16 %v3052
        %v3588 = vunpack.c.l.b16 %v3053
        %v3589 = vunpack.c.l.b16 %v3054
        %v3590 = vunpack.c.l.b16 %v3055
        %v3591 = vunpack.c.l.b16 %v3056
        %v3592 = vunpack.c.l.b16 %v3057
        %v3593 = vunpack.c.l.b16 %v3058
        %v3594 = vunpack.c.l.b16 %v3059
        %v3595 = vunpack.c.l.b16 %v3060
        %v3596 = vunpack.c.l.b16 %v3061
        %v3597 = vunpack.c.l.b16 %v3062
        %v3598 = vunpack.c.l.b16 %v3063
        %v3599 = vunpack.c.l.b16 %v3064
        %v3600 = vunpack.c.l.b16 %v3065
        %v3601 = vunpack.c.l.b16 %v3066
        %v3602 = vunpack.c.l.b16 %v3067
        %v3603 = vunpack.c.l.b16 %v3068
        %v3604 = vunpack.c.l.b16 %v3069
        %v3605 = vunpack.c.l.b16 %v3070
        %v3606 = vunpack.c.l.b16 %v3071
        %v3607 = vunpack.c.l.b16 %v3072
        %v3608 = vunpack.c.l.b16 %v3073
        %v3609 = vunpack.c.l.b16 %v3074
        %v3610 = vunpack.c.l.b16 %v3075
        %v3611 = vunpack.c.l.b16 %v3076
        %v3612 = vunpack.c.l.b16 %v3077
        %v3613 = vunpack.c.l.b16 %v3078
        %v3614 = vunpack.c.l.b16 %v3079
        %v3615 = vunpack.c.l.b16 %v3080
        %v3616 = vunpack.c.l.b16 %v3081
        %v3617 = vunpack.c.l.b16 %v3082
        %v3618 = vunpack.c.l.b16 %v3083
        %v3619 = vunpack.c.l.b16 %v3084
        %v3620 = vunpack.c.l.b16 %v3085
        %v3621 = vunpack.c.l.b16 %v3086
        %v3622 = vunpack.c.l.b16 %v3087
        %v3623 = vunpack.c.l.b16 %v3088
        %v3624 = vunpack.c.l.b16 %v3089
        %v3625 = vunpack.c.l.b16 %v3090
        %v3626 = vunpack.c.l.b16 %v3091
        %v3627 = vunpack.c.l.b16 %v3092
        %v3628 = vunpack.c.l.b16 %v3093
        %v3629 = vunpack.c.l.b16 %v3094
        %v3630 = vunpack.c.l.b16 %v3095
        %v3631 = vunpack.c.l.b16 %v3096
        %v3632 = vunpack.c.l.b16 %v3097
        %v3633 = vunpack.c.l.b16 %v3098
        %v3634 = vunpack.c.l.b16 %v3099
        %v3635 = vunpack.c.l.b16 %v3100
        %v3636 = vunpack.c.l.b16 %v3101
        %v3637 = vunpack.c.l.b16 %v3102
        %v3638 = vunpack.c.l.b16 %v3103
        %v3639 = vunpack.c.l.b16 %v3104
        %v3640 = vunpack.c.l.b16 %v3105
        %v3641 = vunpack.c.l.b16 %v3106
        %v3642 = vunpack.c.l.b16 %v3107
        %v3643 = vunpack.c.l.b16 %v3108
        %v3644 = vunpack.c.l.b16 %v3109
        %v3645 = vunpack.c.l.b16 %v3110
        %v3646 = vunpack.c.l.b16 %v3111
        %v3647 = vunpack.c.l.b16 %v3112
        %v3648 = vunpack.c.l.b16 %v3113
        %v3649 = vunpack.c.l.b16 %v3114
        %v3650 = vunpack.c.l.b16 %v3115
        %v3651 = vunpack.c.l.b16 %v3116
        %v3652 = vunpack.c.l.b16 %v3117
        %v3653 = vunpack.c.l.b16 %v3118
        %v3654 = vunpack.c.l.b16 %v3119
        %v3655 = vunpack.c.l.b16 %v3120
        %v3656 = vunpack.c.l.b16 %v3121
        %v3657 = vunpack.c.l.b16 %v3122
        %v3658 = vunpack.c.l.b16 %v3123
        %v3659 = vunpack.c.l.b16 %v3124
        %v3660 = vunpack.c.l.b16 %v3125
        %v3661 = vunpack.c.l.b16 %v3126
        %v3662 = vunpack.c.l.b16 %v3127
        %v3663 = vunpack.c.l.b16 %v3128
        %v3664 = vunpack.c.l.b16 %v3129
        %v3665 = vunpack.c.l.b16 %v3130
        %v3666 = vunpack.c.l.b16 %v3131
        %v3667 = vunpack.c.l.b16 %v3132
        %v3668 = vunpack.c.l.b16 %v3133
        %v3669 = vunpack.c.l.b16 %v3134
        %v3670 = vunpack.c.l.b16 %v3135
        %v3671 = vunpack.c.l.b16 %v3136
        %v3672 = vunpack.c.l.b16 %v3137
        %v3673 = vunpack.c.l.b16 %v3138
        %v3674 = vunpack.c.l.b16 %v3139
        %v3675 = vunpack.c.l.b16 %v3140
        %v3676 = vunpack.c.l.b16 %v3141
        %v3677 = vunpack.c.l.b16 %v3142
        %v3678 = vunpack.c.l.b16 %v3143
        %v3679 = vunpack.c.l.b16 %v3144
        %v3680 = vunpack.c.l.b16 %v3145
        %v3681 = vunpack.c.l.b16 %v3146
        %v3682 = vunpack.c.l.b16 %v3147
        %v3683 = vunpack.c.l.b16 %v3148
        %v3684 = vunpack.c.l.b16 %v3149
        %v3685 = vunpack.c.l.b16 %v3150
        %v3686 = vunpack.c.l.b16 %v3151
        %v3687 = vunpack.c.l.b16 %v3152
        %v3688 = vunpack.c.l.b16 %v3153
        %v3689 = vunpack.c.l.b16 %v3154
        %v3690 = vunpack.c.l.b16 %v3155
        %v3691 = vunpack.c.l.b16 %v3156
        %v3692 = vunpack.c.l.b16 %v3157
        %v3693 = vunpack.c.l.b16 %v3158
        %v3694 = vunpack.c.l.b16 %v3159
        %v3695 = vunpack.c.l.b16 %v3160
        %v3696 = vunpack.c.l.b16 %v3161
        %v3697 = vunpack.c.l.b16 %v3162
        %v3698 = vunpack.c.l.b16 %v3163
        %v3699 = vunpack.c.l.b16 %v3164
        %v3700 = vunpack.c.l.b16 %v3165
        %v3701 = vunpack.c.l.b16 %v3166
        %v3702 = vunpack.c.l.b16 %v3167
        %v3703 = vunpack.c.l.b16 %v3168
        %v3704 = vunpack.c.l.b16 %v3169
        %v3705 = vunpack.c.l.b16 %v3170
        %v3706 = vunpack.c.l.b16 %v3171
        %v3707 = vunpack.c.l.b16 %v3172
        %v3708 = vunpack.c.l.b16 %v3173
        %v3709 = vunpack.c.l.b16 %v3174
        %v3710 = vunpack.c.l.b16 %v3175
        %v3711 = vunpack.c.l.b16 %v3176
        %v3712 = vunpack.c.l.b16 %v3177
        %v3713 = vunpack.c.l.b16 %v3178
        %v3714 = vunpack.c.l.b16 %v3179
        %v3715 = vunpack.c.l.b16 %v3180
        %v3716 = vunpack.c.l.b16 %v3181
        %v3717 = vunpack.c.l.b16 %v3182
        %v3718 = vunpack.c.l.b16 %v3183
        %v3719 = vunpack.c.l.b16 %v3184
        %v3720 = vunpack.c.l.b16 %v3185
        %v3721 = vunpack.c.l.b16 %v3186
        %v3722 = vunpack.c.l.b16 %v3187
        %v3723 = vunpack.c.l.b16 %v3188
        %v3724 = vunpack.c.l.b16 %v3189
        %v3725 = vunpack.c.l.b16 %v3190
        %v3726 = vunpack.c.l.b16 %v3191
        %v3727 = vunpack.c.l.b16 %v3192
        %v3728 = vunpack.c.l.b16 %v3193
        %v3729 = vunpack.c.l.b16 %v3194
        %v3730 = vunpack.c.l.b16 %v3195
        %v3731 = vunpack.c.l.b16 %v3196
        %v3732 = vunpack.c.l.b16 %v3197
        %v3733 = vunpack.c.l.b16 %v3198
        %v3734 = vunpack.c.l.b16 %v3199
        %v3735 = vunpack.c.l.b16 %v3200
        %v3736 = vunpack.c.l.b16 %v3201
        %v3737 = vunpack.c.l.b16 %v3202
        %v3738 = vunpack.c.l.b16 %v3203
        %v3739 = vunpack.c.l.b16 %v3204
        %v3740 = vunpack.c.l.b16 %v3205
        %v3741 = vunpack.c.l.b16 %v3206
        %v3742 = vunpack.c.l.b16 %v3207
        %v3743 = vunpack.c.l.b16 %v3208
        %v3744 = vunpack.c.l.b16 %v3209
        %v3745 = vunpack.c.l.b16 %v3210
        %v3746 = vunpack.c.l.b16 %v3211
        %v3747 = vunpack.c.l.b16 %v3212
        %v3748 = vunpack.c.l.b16 %v3213
        %v3749 = vunpack.c.l.b16 %v3214
        %v3750 = vunpack.c.l.b16 %v3215
        %v3751 = vunpack.c.l.b16 %v3216
        %v3752 = vunpack.c.l.b16 %v3217
        %v3753 = vunpack.c.l.b16 %v3218
        %v3754 = vunpack.c.l.b16 %v3219
        %v3755 = vunpack.c.l.b16 %v3220
        %v3756 = vunpack.c.l.b16 %v3221
        %v3757 = vunpack.c.l.b16 %v3222
        %v3758 = vunpack.c.l.b16 %v3223
        %v3759 = vunpack.c.l.b16 %v3224
        %v3760 = vunpack.c.l.b16 %v3225
        %v3761 = vunpack.c.l.b16 %v3226
        %v3762 = vunpack.c.l.b16 %v3227
        %v3763 = vunpack.c.l.b16 %v3228
        %v3764 = vunpack.c.l.b16 %v3229
        %v3765 = vunpack.c.l.b16 %v3230
        %v3766 = vunpack.c.l.b16 %v3231
        %v3767 = vunpack.c.l.b16 %v3232
        %v3768 = vunpack.c.l.b16 %v3233
        %v3769 = vunpack.c.l.b16 %v3234
        %v3770 = vunpack.c.l.b16 %v3235
        %v3771 = vunpack.c.l.b16 %v3236
        %v3772 = vunpack.c.l.b16 %v3237
        %v3773 = vunpack.c.l.b16 %v3238
        %v3774 = vunpack.c.l.b16 %v3239
        %v3775 = vunpack.c.l.b16 %v3240
        %v3776 = vunpack.c.l.b16 %v3241
        %v3777 = vunpack.c.l.b16 %v3242
        %v3778 = vunpack.c.l.b16 %v3243
        %v3779 = vunpack.c.l.b16 %v3244
        %v3780 = vunpack.c.l.b16 %v3245
        %v3781 = vunpack.c.l.b16 %v3246
        %v3782 = vunpack.c.l.b16 %v3247
        %v3783 = vunpack.c.l.b16 %v3248
        %v3784 = vunpack.c.l.b16 %v3249
        %v3785 = vunpack.c.l.b16 %v3250
        %v3786 = vunpack.c.l.b16 %v3251
        %v3787 = vunpack.c.l.b16 %v3252
        %v3788 = vunpack.c.l.b16 %v3253
        %v3789 = vunpack.c.l.b16 %v3254
        %v3790 = vunpack.c.l.b16 %v3255
        %v3791 = vunpack.c.l.b16 %v3256
        %v3792 = vunpack.c.l.b16 %v3257
        %v3793 = vunpack.c.l.b16 %v3258
        %v3794 = vunpack.c.l.b16 %v3259
        %v3795 = vunpack.c.l.b16 %v3260
        %v3796 = vunpack.c.l.b16 %v3261
        %v3797 = vunpack.c.l.b16 %v3262
        %v3798 = vunpack.c.l.b16 %v3263
        %v3799 = vunpack.c.l.b16 %v3264
        %v3800 = vunpack.c.l.b16 %v3265
        %v3801 = vunpack.c.l.b16 %v3266
        %v3802 = vunpack.c.l.b16 %v3267
        %v3803 = vunpack.c.l.b16 %v3268
        %v3804 = vunpack.c.l.b16 %v3269
        %v3805 = vunpack.c.l.b16 %v3270
        %v3806 = vunpack.c.l.b16 %v3271
        %v3807 = vunpack.c.l.b16 %v3272
        %v3808 = vunpack.c.l.b16 %v3273
        %v3809 = vunpack.c.l.b16 %v3274
        %v3810 = vunpack.c.l.b16 %v3275
        %v3811 = vunpack.c.l.b16 %v3276
        %v3812 = vunpack.c.l.b16 %v3277
        %v3813 = vunpack.c.l.b16 %v3278
        %v3814 = vunpack.c.l.b16 %v3279
        %v3815 = vunpack.c.l.b16 %v3280
        %v3816 = vunpack.c.l.b16 %v3281
        %v3817 = vunpack.c.l.b16 %v3282
        %v3818 = vpack.c.b16 %v3563, %v3562
        %v3819 = vpack.c.b16 %v3565, %v3564
        %v3820 = vpack.c.b16 %v3567, %v3566
        %v3821 = vpack.c.b16 %v3569, %v3568
        %v3822 = vpack.c.b16 %v3571, %v3570
        %v3823 = vpack.c.b16 %v3573, %v3572
        %v3824 = vpack.c.b16 %v3575, %v3574
        %v3825 = vpack.c.b16 %v3577, %v3576
        %v3826 = vpack.c.b16 %v3579, %v3578
        %v3827 = vpack.c.b16 %v3581, %v3580
        %v3828 = vpack.c.b16 %v3583, %v3582
        %v3829 = vpack.c.b16 %v3585, %v3584
        %v3830 = vpack.c.b16 %v3587, %v3586
        %v3831 = vpack.c.b16 %v3589, %v3588
        %v3832 = vpack.c.b16 %v3591, %v3590
        %v3833 = vpack.c.b16 %v3593, %v3592
        %v3834 = vpack.c.b16 %v3595, %v3594
        %v3835 = vpack.c.b16 %v3597, %v3596
        %v3836 = vpack.c.b16 %v3599, %v3598
        %v3837 = vpack.c.b16 %v3601, %v3600
        %v3838 = vpack.c.b16 %v3603, %v3602
        %v3839 = vpack.c.b16 %v3605, %v3604
        %v3840 = vpack.c.b16 %v3607, %v3606
        %v3841 = vpack.c.b16 %v3609, %v3608
        %v3842 = vpack.c.b16 %v3611, %v3610
        %v3843 = vpack.c.b16 %v3613, %v3612
        %v3844 = vpack.c.b16 %v3615, %v3614
        %v3845 = vpack.c.b16 %v3617, %v3616
        %v3846 = vpack.c.b16 %v3619, %v3618
        %v3847 = vpack.c.b16 %v3621, %v3620
        %v3848 = vpack.c.b16 %v3623, %v3622
        %v3849 = vpack.c.b16 %v3625, %v3624
        %v3850 = vpack.c.b16 %v3627, %v3626
        %v3851 = vpack.c.b16 %v3629, %v3628
        %v3852 = vpack.c.b16 %v3631, %v3630
        %v3853 = vpack.c.b16 %v3633, %v3632
        %v3854 = vpack.c.b16 %v3635, %v3634
        %v3855 = vpack.c.b16 %v3637, %v3636
        %v3856 = vpack.c.b16 %v3639, %v3638
        %v3857 = vpack.c.b16 %v3641, %v3640
        %v3858 = vpack.c.b16 %v3643, %v3642
        %v3859 = vpack.c.b16 %v3645, %v3644
        %v3860 = vpack.c.b16 %v3647, %v3646
        %v3861 = vpack.c.b16 %v3649, %v3648
        %v3862 = vpack.c.b16 %v3651, %v3650
        %v3863 = vpack.c.b16 %v3653, %v3652
        %v3864 = vpack.c.b16 %v3655, %v3654
        %v3865 = vpack.c.b16 %v3657, %v3656
        %v3866 = vpack.c.b16 %v3659, %v3658
        %v3867 = vpack.c.b16 %v3661, %v3660
        %v3868 = vpack.c.b16 %v3663, %v3662
        %v3869 = vpack.c.b16 %v3665, %v3664
        %v3870 = vpack.c.b16 %v3667, %v3666
        %v3871 = vpack.c.b16 %v3669, %v3668
        %v3872 = vpack.c.b16 %v3671, %v3670
        %v3873 = vpack.c.b16 %v3673, %v3672
        %v3874 = vpack.c.b16 %v3675, %v3674
        %v3875 = vpack.c.b16 %v3677, %v3676
        %v3876 = vpack.c.b16 %v3679, %v3678
        %v3877 = vpack.c.b16 %v3681, %v3680
        %v3878 = vpack.c.b16 %v3683, %v3682
        %v3879 = vpack.c.b16 %v3685, %v3684
        %v3880 = vpack.c.b16 %v3687, %v3686
        %v3881 = vpack.c.b16 %v3689, %v3688
        %v3882 = vpack.c.b16 %v3691, %v3690
        %v3883 = vpack.c.b16 %v3693, %v3692
        %v3884 = vpack.c.b16 %v3695, %v3694
        %v3885 = vpack.c.b16 %v3697, %v3696
        %v3886 = vpack.c.b16 %v3699, %v3698
        %v3887 = vpack.c.b16 %v3701, %v3700
        %v3888 = vpack.c.b16 %v3703, %v3702
        %v3889 = vpack.c.b16 %v3705, %v3704
        %v3890 = vpack.c.b16 %v3707, %v3706
        %v3891 = vpack.c.b16 %v3709, %v3708
        %v3892 = vpack.c.b16 %v3711, %v3710
        %v3893 = vpack.c.b16 %v3713, %v3712
        %v3894 = vpack.c.b16 %v3715, %v3714
        %v3895 = vpack.c.b16 %v3717, %v3716
        %v3896 = vpack.c.b16 %v3719, %v3718
        %v3897 = vpack.c.b16 %v3721, %v3720
        %v3898 = vpack.c.b16 %v3723, %v3722
        %v3899 = vpack.c.b16 %v3725, %v3724
        %v3900 = vpack.c.b16 %v3727, %v3726
        %v3901 = vpack.c.b16 %v3729, %v3728
        %v3902 = vpack.c.b16 %v3731, %v3730
        %v3903 = vpack.c.b16 %v3733, %v3732
        %v3904 = vpack.c.b16 %v3735, %v3734
        %v3905 = vpack.c.b16 %v3737, %v3736
        %v3906 = vpack.c.b16 %v3739, %v3738
        %v3907 = vpack.c.b16 %v3741, %v3740
        %v3908 = vpack.c.b16 %v3743, %v3742
        %v3909 = vpack.c.b16 %v3745, %v3744
        %v3910 = vpack.c.b16 %v3747, %v3746
        %v3911 = vpack.c.b16 %v3749, %v3748
        %v3912 = vpack.c.b16 %v3751, %v3750
        %v3913 = vpack.c.b16 %v3753, %v3752
        %v3914 = vpack.c.b16 %v3755, %v3754
        %v3915 = vpack.c.b16 %v3757, %v3756
        %v3916 = vpack.c.b16 %v3759, %v3758
        %v3917 = vpack.c.b16 %v3761, %v3760
        %v3918 = vpack.c.b16 %v3763, %v3762
        %v3919 = vpack.c.b16 %v3765, %v3764
        %v3920 = vpack.c.b16 %v3767, %v3766
        %v3921 = vpack.c.b16 %v3769, %v3768
        %v3922 = vpack.c.b16 %v3771, %v3770
        %v3923 = vpack.c.b16 %v3773, %v3772
        %v3924 = vpack.c.b16 %v3775, %v3774
        %v3925 = vpack.c.b16 %v3777, %v3776
        %v3926 = vpack.c.b16 %v3779, %v3778
        %v3927 = vpack.c.b16 %v3781, %v3780
        %v3928 = vpack.c.b16 %v3783, %v3782
        %v3929 = vpack.c.b16 %v3785, %v3784
        %v3930 = vpack.c.b16 %v3787, %v3786
        %v3931 = vpack.c.b16 %v3789, %v3788
        %v3932 = vpack.c.b16 %v3791, %v3790
        %v3933 = vpack.c.b16 %v3793, %v3792
        %v3934 = vpack.c.b16 %v3795, %v3794
        %v3935 = vpack.c.b16 %v3797, %v3796
        %v3936 = vpack.c.b16 %v3799, %v3798
        %v3937 = vpack.c.b16 %v3801, %v3800
        %v3938 = vpack.c.b16 %v3803, %v3802
        %v3939 = vpack.c.b16 %v3805, %v3804
        %v3940 = vpack.c.b16 %v3807, %v3806
        %v3941 = vpack.c.b16 %v3809, %v3808
        %v3942 = vpack.c.b16 %v3811, %v3810
        %v3943 = vpack.c.b16 %v3813, %v3812
        %v3944 = vpack.c.b16 %v3815, %v3814
        %v3945 = vpack.c.b16 %v3817, %v3816
        %4074 = vmatprep.subr.bf16.mxu0 0
        %4075 = vmatpush1.bf16.msra.mxu0 %v3818
        %4076 = vmatprep.subr.bf16.mxu0 0
        %4077 = vmatpush1.bf16.msra.mxu0 %v3819
        %4078 = vmatprep.subr.bf16.mxu0 0
        %4079 = vmatpush1.bf16.msra.mxu0 %v3820
        %4080 = vmatprep.subr.bf16.mxu0 0
        %4081 = vmatpush1.bf16.msra.mxu0 %v3821
        %4082 = vmatprep.subr.bf16.mxu0 0
        %4083 = vmatpush1.bf16.msra.mxu0 %v3822
        %4084 = vmatprep.subr.bf16.mxu0 0
        %4085 = vmatpush1.bf16.msra.mxu0 %v3823
        %4086 = vmatprep.subr.bf16.mxu0 0
        %4087 = vmatpush1.bf16.msra.mxu0 %v3824
        %4088 = vmatprep.subr.bf16.mxu0 0
        %4089 = vmatpush1.bf16.msra.mxu0 %v3825
        %4090 = vmatprep.subr.bf16.mxu0 0
        %4091 = vmatpush1.bf16.msra.mxu0 %v3826
        %4092 = vmatprep.subr.bf16.mxu0 0
        %4093 = vmatpush1.bf16.msra.mxu0 %v3827
        %4094 = vmatprep.subr.bf16.mxu0 0
        %4095 = vmatpush1.bf16.msra.mxu0 %v3828
        %4096 = vmatprep.subr.bf16.mxu0 0
        %4097 = vmatpush1.bf16.msra.mxu0 %v3829
        %4098 = vmatprep.subr.bf16.mxu0 0
        %4099 = vmatpush1.bf16.msra.mxu0 %v3830
        %4100 = vmatprep.subr.bf16.mxu0 0
        %4101 = vmatpush1.bf16.msra.mxu0 %v3831
        %4102 = vmatprep.subr.bf16.mxu0 0
        %4103 = vmatpush1.bf16.msra.mxu0 %v3832
        %4104 = vmatprep.subr.bf16.mxu0 0
        %4105 = vmatpush1.bf16.msra.mxu0 %v3833
        %4106 = vmatprep.mubr.bf16.mxu0 %v3285
        %4107 = vmatmul.mubr.bf16.gmra.mrb[0].mxu0 %v3284
        %v4108 = vpop.f32.mrb[0].mxu0
        %v4109 = vadd.f32 %v3304, %v4108
        %v4110 = vpop.f32.mrb[0].mxu0
        %v4111 = vpop.f32.mrb[0].mxu0
        %v4112 = vpop.f32.mrb[0].mxu0
        %4113 = vdwg.mxu0
        %4114 = vmatprep.subr.bf16.mxu0 0
        %4115 = vmatpush1.bf16.msra.mxu0 %v3834
        %4116 = vmatprep.subr.bf16.mxu0 0
        %4117 = vmatpush1.bf16.msra.mxu0 %v3835
        %4118 = vmatprep.subr.bf16.mxu0 0
        %4119 = vmatpush1.bf16.msra.mxu0 %v3836
        %4120 = vmatprep.subr.bf16.mxu0 0
        %4121 = vmatpush1.bf16.msra.mxu0 %v3837
        %4122 = vmatprep.subr.bf16.mxu0 0
        %4123 = vmatpush1.bf16.msra.mxu0 %v3838
        %4124 = vmatprep.subr.bf16.mxu0 0
        %4125 = vmatpush1.bf16.msra.mxu0 %v3839
        %4126 = vmatprep.subr.bf16.mxu0 0
        %4127 = vmatpush1.bf16.msra.mxu0 %v3840
        %4128 = vmatprep.subr.bf16.mxu0 0
        %4129 = vmatpush1.bf16.msra.mxu0 %v3841
        %4130 = vmatprep.subr.bf16.mxu0 0
        %4131 = vmatpush1.bf16.msra.mxu0 %v3842
        %4132 = vmatprep.subr.bf16.mxu0 0
        %4133 = vmatpush1.bf16.msra.mxu0 %v3843
        %4134 = vmatprep.subr.bf16.mxu0 0
        %4135 = vmatpush1.bf16.msra.mxu0 %v3844
        %4136 = vmatprep.subr.bf16.mxu0 0
        %4137 = vmatpush1.bf16.msra.mxu0 %v3845
        %4138 = vmatprep.subr.bf16.mxu0 0
        %4139 = vmatpush1.bf16.msra.mxu0 %v3846
        %4140 = vmatprep.subr.bf16.mxu0 0
        %4141 = vmatpush1.bf16.msra.mxu0 %v3847
        %4142 = vmatprep.subr.bf16.mxu0 0
        %4143 = vmatpush1.bf16.msra.mxu0 %v3848
        %4144 = vmatprep.subr.bf16.mxu0 0
        %4145 = vmatpush1.bf16.msra.mxu0 %v3849
        %4146 = vmatprep.mubr.bf16.mxu0 %v3287
        %4147 = vmatmul.mubr.bf16.gmra.mrb[0].mxu0 %v3286
        %v4148 = vpop.f32.mrb[0].mxu0
        %v4149 = vadd.f32 %v4109, %v4148
        %v4150 = vpop.f32.mrb[0].mxu0
        %v4151 = vpop.f32.mrb[0].mxu0
        %v4152 = vpop.f32.mrb[0].mxu0
        %4153 = vdwg.mxu0
        %4154 = vmatprep.subr.bf16.mxu0 0
        %4155 = vmatpush1.bf16.msra.mxu0 %v3850
        %4156 = vmatprep.subr.bf16.mxu0 0
        %4157 = vmatpush1.bf16.msra.mxu0 %v3851
        %4158 = vmatprep.subr.bf16.mxu0 0
        %4159 = vmatpush1.bf16.msra.mxu0 %v3852
        %4160 = vmatprep.subr.bf16.mxu0 0
        %4161 = vmatpush1.bf16.msra.mxu0 %v3853
        %4162 = vmatprep.subr.bf16.mxu0 0
        %4163 = vmatpush1.bf16.msra.mxu0 %v3854
        %4164 = vmatprep.subr.bf16.mxu0 0
        %4165 = vmatpush1.bf16.msra.mxu0 %v3855
        %4166 = vmatprep.subr.bf16.mxu0 0
        %4167 = vmatpush1.bf16.msra.mxu0 %v3856
        %4168 = vmatprep.subr.bf16.mxu0 0
        %4169 = vmatpush1.bf16.msra.mxu0 %v3857
        %4170 = vmatprep.subr.bf16.mxu0 0
        %4171 = vmatpush1.bf16.msra.mxu0 %v3858
        %4172 = vmatprep.subr.bf16.mxu0 0
        %4173 = vmatpush1.bf16.msra.mxu0 %v3859
        %4174 = vmatprep.subr.bf16.mxu0 0
        %4175 = vmatpush1.bf16.msra.mxu0 %v3860
        %4176 = vmatprep.subr.bf16.mxu0 0
        %4177 = vmatpush1.bf16.msra.mxu0 %v3861
        %4178 = vmatprep.subr.bf16.mxu0 0
        %4179 = vmatpush1.bf16.msra.mxu0 %v3862
        %4180 = vmatprep.subr.bf16.mxu0 0
        %4181 = vmatpush1.bf16.msra.mxu0 %v3863
        %4182 = vmatprep.subr.bf16.mxu0 0
        %4183 = vmatpush1.bf16.msra.mxu0 %v3864
        %4184 = vmatprep.subr.bf16.mxu0 0
        %4185 = vmatpush1.bf16.msra.mxu0 %v3865
        %4186 = vmatprep.mubr.bf16.mxu0 %v3289
        %4187 = vmatmul.mubr.bf16.gmra.mrb[0].mxu0 %v3288
        %v4188 = vpop.f32.mrb[0].mxu0
        %v4189 = vadd.f32 %v4149, %v4188
        %v4190 = vpop.f32.mrb[0].mxu0
        %v4191 = vpop.f32.mrb[0].mxu0
        %v4192 = vpop.f32.mrb[0].mxu0
        %4193 = vdwg.mxu0
        %4194 = vmatprep.subr.bf16.mxu0 0
        %4195 = vmatpush1.bf16.msra.mxu0 %v3866
        %4196 = vmatprep.subr.bf16.mxu0 0
        %4197 = vmatpush1.bf16.msra.mxu0 %v3867
        %4198 = vmatprep.subr.bf16.mxu0 0
        %4199 = vmatpush1.bf16.msra.mxu0 %v3868
        %4200 = vmatprep.subr.bf16.mxu0 0
        %4201 = vmatpush1.bf16.msra.mxu0 %v3869
        %4202 = vmatprep.subr.bf16.mxu0 0
        %4203 = vmatpush1.bf16.msra.mxu0 %v3870
        %4204 = vmatprep.subr.bf16.mxu0 0
        %4205 = vmatpush1.bf16.msra.mxu0 %v3871
        %4206 = vmatprep.subr.bf16.mxu0 0
        %4207 = vmatpush1.bf16.msra.mxu0 %v3872
        %4208 = vmatprep.subr.bf16.mxu0 0
        %4209 = vmatpush1.bf16.msra.mxu0 %v3873
        %4210 = vmatprep.subr.bf16.mxu0 0
        %4211 = vmatpush1.bf16.msra.mxu0 %v3874
        %4212 = vmatprep.subr.bf16.mxu0 0
        %4213 = vmatpush1.bf16.msra.mxu0 %v3875
        %4214 = vmatprep.subr.bf16.mxu0 0
        %4215 = vmatpush1.bf16.msra.mxu0 %v3876
        %4216 = vmatprep.subr.bf16.mxu0 0
        %4217 = vmatpush1.bf16.msra.mxu0 %v3877
        %4218 = vmatprep.subr.bf16.mxu0 0
        %4219 = vmatpush1.bf16.msra.mxu0 %v3878
        %4220 = vmatprep.subr.bf16.mxu0 0
        %4221 = vmatpush1.bf16.msra.mxu0 %v3879
        %4222 = vmatprep.subr.bf16.mxu0 0
        %4223 = vmatpush1.bf16.msra.mxu0 %v3880
        %4224 = vmatprep.subr.bf16.mxu0 0
        %4225 = vmatpush1.bf16.msra.mxu0 %v3881
        %4226 = vmatprep.mubr.bf16.mxu0 %v3291
        %4227 = vmatmul.mubr.bf16.gmra.mrb[0].mxu0 %v3290
        %v4228 = vpop.f32.mrb[0].mxu0
        %v4229 = vadd.f32 %v4189, %v4228
        %v4230 = vpop.f32.mrb[0].mxu0
        %v4231 = vpop.f32.mrb[0].mxu0
        %v4232 = vpop.f32.mrb[0].mxu0
        %4233 = vdwg.mxu0
        %4234 = vmatprep.subr.bf16.mxu0 0
        %4235 = vmatpush1.bf16.msra.mxu0 %v3882
        %4236 = vmatprep.subr.bf16.mxu0 0
        %4237 = vmatpush1.bf16.msra.mxu0 %v3883
        %4238 = vmatprep.subr.bf16.mxu0 0
        %4239 = vmatpush1.bf16.msra.mxu0 %v3884
        %4240 = vmatprep.subr.bf16.mxu0 0
        %4241 = vmatpush1.bf16.msra.mxu0 %v3885
        %4242 = vmatprep.subr.bf16.mxu0 0
        %4243 = vmatpush1.bf16.msra.mxu0 %v3886
        %4244 = vmatprep.subr.bf16.mxu0 0
        %4245 = vmatpush1.bf16.msra.mxu0 %v3887
        %4246 = vmatprep.subr.bf16.mxu0 0
        %4247 = vmatpush1.bf16.msra.mxu0 %v3888
        %4248 = vmatprep.subr.bf16.mxu0 0
        %4249 = vmatpush1.bf16.msra.mxu0 %v3889
        %4250 = vmatprep.subr.bf16.mxu0 0
        %4251 = vmatpush1.bf16.msra.mxu0 %v3890
        %4252 = vmatprep.subr.bf16.mxu0 0
        %4253 = vmatpush1.bf16.msra.mxu0 %v3891
        %4254 = vmatprep.subr.bf16.mxu0 0
        %4255 = vmatpush1.bf16.msra.mxu0 %v3892
        %4256 = vmatprep.subr.bf16.mxu0 0
        %4257 = vmatpush1.bf16.msra.mxu0 %v3893
        %4258 = vmatprep.subr.bf16.mxu0 0
        %4259 = vmatpush1.bf16.msra.mxu0 %v3894
        %4260 = vmatprep.subr.bf16.mxu0 0
        %4261 = vmatpush1.bf16.msra.mxu0 %v3895
        %4262 = vmatprep.subr.bf16.mxu0 0
        %4263 = vmatpush1.bf16.msra.mxu0 %v3896
        %4264 = vmatprep.subr.bf16.mxu0 0
        %4265 = vmatpush1.bf16.msra.mxu0 %v3897
        %4266 = vmatprep.mubr.bf16.mxu0 %v3293
        %4267 = vmatmul.mubr.bf16.gmra.mrb[0].mxu0 %v3292
        %v4268 = vpop.f32.mrb[0].mxu0
        %v4269 = vadd.f32 %v4229, %v4268
        %v4270 = vpop.f32.mrb[0].mxu0
        %v4271 = vpop.f32.mrb[0].mxu0
        %v4272 = vpop.f32.mrb[0].mxu0
        %4273 = vdwg.mxu0
        %4274 = vmatprep.subr.bf16.mxu0 0
        %4275 = vmatpush1.bf16.msra.mxu0 %v3898
        %4276 = vmatprep.subr.bf16.mxu0 0
        %4277 = vmatpush1.bf16.msra.mxu0 %v3899
        %4278 = vmatprep.subr.bf16.mxu0 0
        %4279 = vmatpush1.bf16.msra.mxu0 %v3900
        %4280 = vmatprep.subr.bf16.mxu0 0
        %4281 = vmatpush1.bf16.msra.mxu0 %v3901
        %4282 = vmatprep.subr.bf16.mxu0 0
        %4283 = vmatpush1.bf16.msra.mxu0 %v3902
        %4284 = vmatprep.subr.bf16.mxu0 0
        %4285 = vmatpush1.bf16.msra.mxu0 %v3903
        %4286 = vmatprep.subr.bf16.mxu0 0
        %4287 = vmatpush1.bf16.msra.mxu0 %v3904
        %4288 = vmatprep.subr.bf16.mxu0 0
        %4289 = vmatpush1.bf16.msra.mxu0 %v3905
        %4290 = vmatprep.subr.bf16.mxu0 0
        %4291 = vmatpush1.bf16.msra.mxu0 %v3906
        %4292 = vmatprep.subr.bf16.mxu0 0
        %4293 = vmatpush1.bf16.msra.mxu0 %v3907
        %4294 = vmatprep.subr.bf16.mxu0 0
        %4295 = vmatpush1.bf16.msra.mxu0 %v3908
        %4296 = vmatprep.subr.bf16.mxu0 0
        %4297 = vmatpush1.bf16.msra.mxu0 %v3909
        %4298 = vmatprep.subr.bf16.mxu0 0
        %4299 = vmatpush1.bf16.msra.mxu0 %v3910
        %4300 = vmatprep.subr.bf16.mxu0 0
        %4301 = vmatpush1.bf16.msra.mxu0 %v3911
        %4302 = vmatprep.subr.bf16.mxu0 0
        %4303 = vmatpush1.bf16.msra.mxu0 %v3912
        %4304 = vmatprep.subr.bf16.mxu0 0
        %4305 = vmatpush1.bf16.msra.mxu0 %v3913
        %4306 = vmatprep.mubr.bf16.mxu0 %v3295
        %4307 = vmatmul.mubr.bf16.gmra.mrb[0].mxu0 %v3294
        %v4308 = vpop.f32.mrb[0].mxu0
        %v4309 = vadd.f32 %v4269, %v4308
        %v4310 = vpop.f32.mrb[0].mxu0
        %v4311 = vpop.f32.mrb[0].mxu0
        %v4312 = vpop.f32.mrb[0].mxu0
        %4313 = vdwg.mxu0
        %4314 = vmatprep.subr.bf16.mxu0 0
        %4315 = vmatpush1.bf16.msra.mxu0 %v3914
        %4316 = vmatprep.subr.bf16.mxu0 0
        %4317 = vmatpush1.bf16.msra.mxu0 %v3915
        %4318 = vmatprep.subr.bf16.mxu0 0
        %4319 = vmatpush1.bf16.msra.mxu0 %v3916
        %4320 = vmatprep.subr.bf16.mxu0 0
        %4321 = vmatpush1.bf16.msra.mxu0 %v3917
        %4322 = vmatprep.subr.bf16.mxu0 0
        %4323 = vmatpush1.bf16.msra.mxu0 %v3918
        %4324 = vmatprep.subr.bf16.mxu0 0
        %4325 = vmatpush1.bf16.msra.mxu0 %v3919
        %4326 = vmatprep.subr.bf16.mxu0 0
        %4327 = vmatpush1.bf16.msra.mxu0 %v3920
        %4328 = vmatprep.subr.bf16.mxu0 0
        %4329 = vmatpush1.bf16.msra.mxu0 %v3921
        %4330 = vmatprep.subr.bf16.mxu0 0
        %4331 = vmatpush1.bf16.msra.mxu0 %v3922
        %4332 = vmatprep.subr.bf16.mxu0 0
        %4333 = vmatpush1.bf16.msra.mxu0 %v3923
        %4334 = vmatprep.subr.bf16.mxu0 0
        %4335 = vmatpush1.bf16.msra.mxu0 %v3924
        %4336 = vmatprep.subr.bf16.mxu0 0
        %4337 = vmatpush1.bf16.msra.mxu0 %v3925
        %4338 = vmatprep.subr.bf16.mxu0 0
        %4339 = vmatpush1.bf16.msra.mxu0 %v3926
        %4340 = vmatprep.subr.bf16.mxu0 0
        %4341 = vmatpush1.bf16.msra.mxu0 %v3927
        %4342 = vmatprep.subr.bf16.mxu0 0
        %4343 = vmatpush1.bf16.msra.mxu0 %v3928
        %4344 = vmatprep.subr.bf16.mxu0 0
        %4345 = vmatpush1.bf16.msra.mxu0 %v3929
        %4346 = vmatprep.mubr.bf16.mxu0 %v3297
        %4347 = vmatmul.mubr.bf16.gmra.mrb[0].mxu0 %v3296
        %v4348 = vpop.f32.mrb[0].mxu0
        %v4349 = vadd.f32 %v4309, %v4348
        %v4350 = vpop.f32.mrb[0].mxu0
        %v4351 = vpop.f32.mrb[0].mxu0
        %v4352 = vpop.f32.mrb[0].mxu0
        %4353 = vdwg.mxu0
        %4354 = vmatprep.subr.bf16.mxu0 0
        %4355 = vmatpush1.bf16.msra.mxu0 %v3930
        %4356 = vmatprep.subr.bf16.mxu0 0
        %4357 = vmatpush1.bf16.msra.mxu0 %v3931
        %4358 = vmatprep.subr.bf16.mxu0 0
        %4359 = vmatpush1.bf16.msra.mxu0 %v3932
        %4360 = vmatprep.subr.bf16.mxu0 0
        %4361 = vmatpush1.bf16.msra.mxu0 %v3933
        %4362 = vmatprep.subr.bf16.mxu0 0
        %4363 = vmatpush1.bf16.msra.mxu0 %v3934
        %4364 = vmatprep.subr.bf16.mxu0 0
        %4365 = vmatpush1.bf16.msra.mxu0 %v3935
        %4366 = vmatprep.subr.bf16.mxu0 0
        %4367 = vmatpush1.bf16.msra.mxu0 %v3936
        %4368 = vmatprep.subr.bf16.mxu0 0
        %4369 = vmatpush1.bf16.msra.mxu0 %v3937
        %4370 = vmatprep.subr.bf16.mxu0 0
        %4371 = vmatpush1.bf16.msra.mxu0 %v3938
        %4372 = vmatprep.subr.bf16.mxu0 0
        %4373 = vmatpush1.bf16.msra.mxu0 %v3939
        %4374 = vmatprep.subr.bf16.mxu0 0
        %4375 = vmatpush1.bf16.msra.mxu0 %v3940
        %4376 = vmatprep.subr.bf16.mxu0 0
        %4377 = vmatpush1.bf16.msra.mxu0 %v3941
        %4378 = vmatprep.subr.bf16.mxu0 0
        %4379 = vmatpush1.bf16.msra.mxu0 %v3942
        %4380 = vmatprep.subr.bf16.mxu0 0
        %4381 = vmatpush1.bf16.msra.mxu0 %v3943
        %4382 = vmatprep.subr.bf16.mxu0 0
        %4383 = vmatpush1.bf16.msra.mxu0 %v3944
        %4384 = vmatprep.subr.bf16.mxu0 0
        %4385 = vmatpush1.bf16.msra.mxu0 %v3945
        %4386 = vmatprep.mubr.bf16.mxu0 %v3299
        %4387 = vmatmul.mubr.bf16.gmra.mrb[0].mxu0 %v3298
        %v4388 = vpop.f32.mrb[0].mxu0
        %v4389 = vadd.f32 %v4349, %v4388
        %v4390 = vpop.f32.mrb[0].mxu0
        %v4391 = vpop.f32.mrb[0].mxu0
        %v4392 = vpop.f32.mrb[0].mxu0
        %4393 = vdwg.mxu0
        %v4394 = vadd.f32 %v1829, %v4389
        %v4395 = vld [vmem:[%s829] sm:$0x1]
        %v4396 = vld [vmem:[%s837] sm:$0x1]
        %v4397 = vsel %vm1798, %v4394, 0.0
        %4398 = vadd.xlane.f32.xlu0 %v4397
        %v4399 = vpop.xlane.xlu0 %4398
        %v4400 = vmul.f32 %v4399, 0.03125
        %v4401 = vsub.f32 %v4394, %v4400
        %v4402 = vsel %vm1806, %v4401, 0.0
        %v4403 = vmul.f32 %v4402, %v4402
        %v4404 = vsel %vm1798, %v4403, 0.0
        %4405 = vadd.xlane.f32.xlu0 %v4404
        %v4406 = vpop.xlane.xlu0 %4405
        %v4407 = vmul.f32 %v4406, 0.03125
        %v4408 = vadd.f32 %v4407, 1e-05
        %v4409 = vrsqrt.pop %v4408
        %v4410 = vmul.f32 %v4402, %v4409
        %v4412 = vlaneseq
        %v4413 = vshrl.u32 %v4412, 7
        %v4414 = vsub.s32 0, %v4413
        %v4415 = vrot.slane %v4395, %v4414
        %v4417 = vmul.f32 %v4410, %v4415
        %v4419 = vlaneseq
        %v4420 = vshrl.u32 %v4419, 7
        %v4421 = vsub.s32 0, %v4420
        %v4422 = vrot.slane %v4396, %v4421
        %v4424 = vadd.f32 %v4417, %v4422
        %p4425 = scmp.eq.s32.totalorder %s53, 5
        %p4426 = scmp.ne.s32.totalorder %s53, 5
        // Predicated region
        $region141: #{transformer_model_forward.2} parent=79 // pred_check
          %p4427 = pneg %p4426
        $region142: #{transformer_model_forward.2} parent=79 // pred_check_branch
          %4429 = sbr.rel (%p4427) target = $region144
        $region143: #{transformer_model_forward.2} parent=79 // pred_region
          %4430 = vst [vmem:[%s951] sm:$0xf] %v4424
        $region144: #{transformer_model_forward.2} parent=79 // pred_fallthru
          _
        // Predicated region
        $region145: #{transformer_model_forward.2} parent=79 // pred_check
          %p4431 = pneg %p4425
        $region146: #{transformer_model_forward.2} parent=79 // pred_check_branch
          %4433 = sbr.rel (%p4431) target = $region148
        $region147: #{transformer_model_forward.2} parent=79 // pred_region
          %v4434 = vld [vmem:[#allocation21] sm:$0x1]
          %v4435 = vld [vmem:[#allocation22] sm:$0x1]
          %v4436 = vsel %vm1798, %v4424, 0.0
          %4437 = vadd.xlane.f32.xlu0 %v4436
          %v4438 = vpop.xlane.xlu0 %4437
          %v4439 = vmul.f32 %v4438, 0.03125
          %v4440 = vsub.f32 %v4424, %v4439
          %v4441 = vsel %vm1806, %v4440, 0.0
          %v4442 = vmul.f32 %v4441, %v4441
          %v4443 = vsel %vm1798, %v4442, 0.0
          %4444 = vadd.xlane.f32.xlu0 %v4443
          %v4445 = vpop.xlane.xlu0 %4444
          %v4446 = vmul.f32 %v4445, 0.03125
          %v4447 = vadd.f32 %v4446, 1e-05
          %v4448 = vrsqrt.pop %v4447
          %v4449 = vmul.f32 %v4441, %v4448
          %v4451 = vlaneseq
          %v4452 = vshrl.u32 %v4451, 7
          %v4453 = vsub.s32 0, %v4452
          %v4454 = vrot.slane %v4434, %v4453
          %v4456 = vmul.f32 %v4449, %v4454
          %v4458 = vlaneseq
          %v4459 = vshrl.u32 %v4458, 7
          %v4460 = vsub.s32 0, %v4459
          %v4461 = vrot.slane %v4435, %v4460
          %v4463 = vadd.f32 %v4456, %v4461
          %4464 = vst [vmem:[%s951] sm:$0xf] %v4463
        $region148: #{transformer_model_forward.2} parent=79 // pred_fallthru
          _
        %p4465 = scmp.lt.s32.totalorder %s52, 1
        %s4466 = scalar_select %p4465, %s52, 1
        %s4467 = smul.addr %s4466, 4
        %s4468 = scalar_lea.vmem %s15, %s4467
        // Predicated region
        $region149: #{transformer_model_forward.2} parent=79 // pred_check
          %p4469 = pneg %p458
        $region150: #{transformer_model_forward.2} parent=79 // pred_check_branch
          %4471 = sbr.rel (%p4469) target = $region152
        $region151: #{transformer_model_forward.2} parent=79 // pred_region
          _
        $region152: #{transformer_model_forward.2} parent=79 // pred_fallthru
          _
      $region80: #{transformer_model_forward.2} parent=5 // pred_fallthru
        _
      %p4472 = scmp.le.s32.totalorder 2, %s43
      // Predicated region
      $region153: #{transformer_model_forward.2} parent=5 // pred_check
        %p4473 = pneg %p4472
      $region154: #{transformer_model_forward.2} parent=5 // pred_check_branch
        %4475 = sbr.rel (%p4473) target = $region156
      $region155: #{transformer_model_forward.2} parent=5 // pred_region
        %s4476 = ssub.s32 %s43, 2
        // Predicated region
        $region157: #{transformer_model_forward.2} parent=155 // pred_check
          %p4477 = pneg %p464
        $region158: #{transformer_model_forward.2} parent=155 // pred_check_branch
          %4479 = sbr.rel (%p4477) target = $region160
        $region159: #{transformer_model_forward.2} parent=155 // pred_region
          %p4480 = scmp.lt.s32.totalorder %s54, 1
          %s4481 = scalar_select %p4480, %s54, 1
          %s4482 = smul.addr %s4481, 4
          %s4483 = scalar_lea.vmem %s15, %s4482
        $region160: #{transformer_model_forward.2} parent=155 // pred_fallthru
          _
      $region156: #{transformer_model_forward.2} parent=5 // pred_fallthru
        _
    $region6: #{transformer_model_forward.2} parent=1 // loop_footer
      %s47 = sadd.s32 1, %s43
    $region7: #{transformer_model_forward.2} parent=1 // loop_footer_branch
      %42 = sbr.rel target = $region3
    $region8: #{transformer_model_forward.2} parent=1 // loop_exit
      _
    %4484 = vsyncpa [#allocation3], 1
    %s4485 = scalar_lea.sflag [#allocation3], 1
    %4486 = vsyncpa %s4485, 1
    %4487 = vsyncpa [#allocation5], 1
    %s4488 = scalar_lea.sflag [#allocation5], 1
    %4489 = vsyncpa %s4488, 1
    %4490 = vsyncpa [#allocation8], 1
    %s4491 = scalar_lea.sflag [#allocation8], 1
    %4492 = vsyncpa %s4491, 1
    %4493 = vsyncpa [#allocation11], 1
    %s4494 = scalar_lea.sflag [#allocation11], 1
    %4495 = vsyncpa %s4494, 1
    %4496 = vsyncpa [#allocation14], 1
    %s4497 = scalar_lea.sflag [#allocation14], 1
    %4498 = vsyncpa %s4497, 1
    %4499 = vsyncpa [#allocation17], 1
    %s4500 = scalar_lea.sflag [#allocation17], 1
    %4501 = vsyncpa %s4500, 1
    %4502 = vsyncpa [#allocation20], 1
    %s4503 = scalar_lea.sflag [#allocation20], 1
    %4504 = vsyncpa %s4503, 1
    %4505 = vsyncpa [#allocation23], 1

// kernel: transformer_model_forward.3
$region0: #{transformer_model_forward.3}
  #allocation0 [shape = 'u32[]', space=smem, size = 0x4, offset = 0x4, fixed_abs, tag = 'smem constant byte address 0x4 - core index']
  #allocation1 [shape = 'u32[144,128]{1,0:T(1,128)}', space=vmem, size = 0x12000, scoped, tag = 'internal scratch']
  %s0 = inlined_call_operand.vmem [shape: f32[2,1,128], index: 0, kind: input, shape index: {}]
  %s1 = inlined_call_operand.vmem [shape: f32[2,4,128], index: 1, kind: input, shape index: {}]
  %s2 = inlined_call_operand.vmem [shape: bf16[6,128,128], index: 2, kind: input, shape index: {}]
  %s3 = inlined_call_operand.vmem [shape: f32[6,1,128], index: 3, kind: input, shape index: {}]
  %s4 = inlined_call_operand.vmem [shape: bf16[6,128,128], index: 4, kind: input, shape index: {}]
  %s5 = inlined_call_operand.vmem [shape: f32[6,1,128], index: 5, kind: input, shape index: {}]
  %s6 = inlined_call_operand.vmem [shape: f32[6,1,128], index: 6, kind: input, shape index: {}]
  %s7 = inlined_call_operand.vmem [shape: f32[6,1,128], index: 7, kind: input, shape index: {}]
  %s8 = inlined_call_operand.hbm [shape: bf16[6,128,128], index: 8, kind: input, shape index: {}]
  %s9 = inlined_call_operand.vmem [shape: f32[6,1,128], index: 9, kind: input, shape index: {}]
  %s10 = inlined_call_operand.vmem [shape: bf16[6,128,256], index: 10, kind: input, shape index: {}]
  %s11 = inlined_call_operand.vmem [shape: f32[6,1,256], index: 11, kind: input, shape index: {}]
  %s12 = inlined_call_operand.hbm [shape: bf16[6,128,128], index: 12, kind: input, shape index: {}]
  %s13 = inlined_call_operand.vmem [shape: f32[6,1,128], index: 13, kind: input, shape index: {}]
  %s14 = inlined_call_operand.vmem [shape: f32[6,1,128], index: 14, kind: input, shape index: {}]
  %s15 = inlined_call_operand.vmem [shape: f32[6,1,128], index: 15, kind: input, shape index: {}]
  %s16 = inlined_call_operand.vmem [shape: bf16[6,128,2048], index: 16, kind: input, shape index: {}]
  %s17 = inlined_call_operand.vmem [shape: f32[6,1,2048], index: 17, kind: input, shape index: {}]
  %s18 = inlined_call_operand.vmem [shape: bf16[6,2048,128], index: 18, kind: input, shape index: {}]
  %s19 = inlined_call_operand.vmem [shape: f32[6,1,128], index: 19, kind: input, shape index: {}]
  %s20 = inlined_call_operand.vmem [shape: f32[6,1,128], index: 20, kind: input, shape index: {}]
  %s21 = inlined_call_operand.vmem [shape: f32[6,1,128], index: 21, kind: input, shape index: {}]
  %s22 = inlined_call_operand.vmem [shape: f32[1,128], index: 22, kind: input, shape index: {}]
  %s23 = inlined_call_operand.vmem [shape: f32[1,128], index: 23, kind: input, shape index: {}]
  %s24 = inlined_call_operand.hbm [shape: f32[2,1,128], index: 24, kind: output, shape index: {}]
  %s25 = sld [smem:[#allocation0]]
  $region149: #{transformer_model_forward.3} parent=0
    _
  %s27 = ssub.s32 1, %s25
  %s28 = scalar_select 0, %s27, %s25
  $region1: #{transformer_model_forward.3} parent=0
    #allocation2 [shape = 'u8[65536]{0}', space=vmem, size = 0x10000, scoped, tag = 'input window, operand 8']
    #allocation3 [shape = 's32[2]{0}', space=sflag, size = 0x8, scoped, tag = 'scoped memory for transformer_model_forward.3']
    #allocation4 [shape = 's32[2]{0}', space=sflag, size = 0x8, scoped, tag = 'scoped memory for transformer_model_forward.3']
    #allocation5 [shape = 'u8[65536]{0}', space=vmem, size = 0x10000, scoped, tag = 'input window, operand 12']
    #allocation6 [shape = 's32[2]{0}', space=sflag, size = 0x8, scoped, tag = 'scoped memory for transformer_model_forward.3']
    #allocation7 [shape = 'u8[1024]{0}', space=vmem, size = 0x400, scoped, tag = 'output window, operand 0, single buffered']
    %29 = vsyncpa [#allocation3], 0
    %s30 = scalar_lea.sflag [#allocation3], 1
    %31 = vsyncpa %s30, 0
    %32 = vsyncpa [#allocation6], 0
    %s33 = scalar_lea.sflag [#allocation6], 1
    %34 = vsyncpa %s33, 0
    %35 = vsyncpa [#allocation4], 0
    loop: start=0, step=1, limit=8
    $region2: #{transformer_model_forward.3} parent=1 // loop_pre_header
      _
    $region3: #{transformer_model_forward.3} parent=1 // loop_header
      %s37 = sphi 0, %s41
      %p38 = scmp.ge.s32.totalorder %s37, 8
      %s44 = sphi 0, %s56
      %s45 = sphi 0, %s52
      %s46 = sphi 0, %s44
      %s47 = sphi 0, %s45
      %s48 = sphi 0, %s46
      %s49 = sphi 0, %s47
      %s59 = sphi 0, %s61
      %s62 = sphi 0, %s59
      %s63 = sphi 0, %s62
      %s79 = sphi 0, %s63
      %s85 = sphi 0, %s87
      %s88 = sphi 0, %s85
      %s89 = sphi 0, %s88
      %s105 = sphi 0, %s89
      %s111 = sphi 0, %s113
      %s114 = sphi 0, %s111
      %s115 = sphi 0, %s114
      %s131 = sphi 0, %s115
      %s137 = sphi 0, %s139
      %s140 = sphi 0, %s137
      %s141 = sphi 0, %s140
      %s157 = sphi 0, %s141
      %s163 = sphi 0, %s165
      %s166 = sphi 0, %s163
      %s167 = sphi 0, %s166
      %s183 = sphi 0, %s167
      %s189 = sphi 0, %s191
      %s192 = sphi 0, %s189
      %s193 = sphi 0, %s192
      %s209 = sphi 0, %s193
      %s215 = sphi 0, %s217
      %s218 = sphi 0, %s215
      %s219 = sphi 0, %s218
      %s235 = sphi 0, %s219
      %s241 = sphi 0, %s243
      %s244 = sphi 0, %s241
      %s245 = sphi 0, %s244
      %s261 = sphi 0, %s245
      %s267 = sphi 0, %s269
      %s270 = sphi 0, %s267
      %s271 = sphi 0, %s270
      %s287 = sphi 0, %s271
      %s293 = sphi 0, %s295
      %s296 = sphi 0, %s293
      %s297 = sphi 0, %s296
      %s313 = sphi 0, %s297
      %s319 = sphi 0, %s321
      %s322 = sphi 0, %s319
      %s323 = sphi 0, %s322
      %s339 = sphi 0, %s323
      %s345 = sphi 0, %s347
      %s348 = sphi 0, %s345
      %s349 = sphi 0, %s348
      %s365 = sphi 0, %s349
      %s371 = sphi 0, %s373
      %s374 = sphi 0, %s371
      %s375 = sphi 0, %s374
      %s391 = sphi 0, %s375
      %s397 = sphi 0, %s399
      %s400 = sphi 0, %s397
      %s401 = sphi 0, %s400
      %s417 = sphi 0, %s401
      %s423 = sphi 0, %s425
      %s426 = sphi 0, %s423
      %s427 = sphi 0, %s426
      %s443 = sphi 0, %s427
      %s449 = sphi 0, %s451
      %s452 = sphi 0, %s449
      %s453 = sphi 0, %s452
      %s469 = sphi 0, %s453
      %s475 = sphi 0, %s477
      %s478 = sphi 0, %s475
      %s479 = sphi 0, %s478
      %s495 = sphi 0, %s479
      %s501 = sphi 0, %s503
      %s504 = sphi 0, %s501
      %s505 = sphi 0, %s504
      %s521 = sphi 0, %s505
      %s527 = sphi 0, %s529
      %s530 = sphi 0, %s527
      %s531 = sphi 0, %s530
      %s547 = sphi 0, %s531
      %s553 = sphi 0, %s555
      %s556 = sphi 0, %s553
      %s557 = sphi 0, %s556
      %s573 = sphi 0, %s557
      %s579 = sphi 0, %s581
      %s582 = sphi 0, %s579
      %s583 = sphi 0, %s582
      %s599 = sphi 0, %s583
      %s605 = sphi 0, %s607
      %s608 = sphi 0, %s605
      %s609 = sphi 0, %s608
      %s625 = sphi 0, %s609
      %s629 = sphi 0, %s629
      %s631 = sphi 0, %s629
      %s632 = sphi 0, %s631
      %s646 = sphi 0, %s632
      %s650 = sphi 0, %s650
      %s652 = sphi 0, %s650
      %s653 = sphi 0, %s652
      %s667 = sphi 0, %s653
      %s673 = sphi 0, %s675
      %s676 = sphi 0, %s673
      %s677 = sphi 0, %s676
      %s693 = sphi 0, %s677
    $region4: #{transformer_model_forward.3} parent=1 // loop_header_branch
      %40 = sbr.rel (%p38) target = $region8
    $region5: #{transformer_model_forward.3} parent=1 // loop_body
      %s42 = ssub.s32 %s37, 1
      %s43 = ssub.s32 %s37, 2
      %s50 = sadd.s32 1, %s45
      %p51 = scmp.ge.s32.totalorder %s50, 6
      %s52 = scalar_select %p51, 0, %s50
      %s53 = sadd.s32 1, %s44
      %s54 = scalar_select %p51, %s53, %s44
      %p55 = scmp.ge.s32.totalorder %s54, 1
      %s56 = scalar_select %p55, 0, %s54
      %s57 = ssub.s32 %s44, %s56
      %p58 = scmp.eq.s32.totalorder %s57, 0
      %s60 = sadd.s32 %s59, 1
      %s61 = scalar_select %p58, %s59, %s60
      %p64 = pneg %p58
      %p65 = scmp.eq.s32.totalorder %s37, 5
      %p66 = por %p64, %p65
      %p67 = scmp.ne.s32.totalorder %s59, %s62
      %p68 = scmp.eq.s32.totalorder %s37, 0
      %p69 = por %p67, %p68
      %p70 = scmp.ne.s32.totalorder %s59, %s62
      %p71 = scmp.eq.s32.totalorder %s42, 5
      %p72 = por %p70, %p71
      %p73 = scmp.ne.s32.totalorder %s62, %s63
      %p74 = scmp.eq.s32.totalorder %s42, 0
      %p75 = por %p73, %p74
      %p76 = scmp.ne.s32.totalorder %s62, %s63
      %p77 = scmp.eq.s32.totalorder %s43, 5
      %p78 = por %p76, %p77
      %p80 = scmp.ne.s32.totalorder %s63, %s79
      %p81 = scmp.eq.s32.totalorder %s43, 0
      %p82 = por %p80, %p81
      %s83 = ssub.s32 %s44, %s56
      %p84 = scmp.eq.s32.totalorder %s83, 0
      %s86 = sadd.s32 %s85, 1
      %s87 = scalar_select %p84, %s85, %s86
      %p90 = pneg %p84
      %p91 = scmp.eq.s32.totalorder %s37, 5
      %p92 = por %p90, %p91
      %p93 = scmp.ne.s32.totalorder %s85, %s88
      %p94 = scmp.eq.s32.totalorder %s37, 0
      %p95 = por %p93, %p94
      %p96 = scmp.ne.s32.totalorder %s85, %s88
      %p97 = scmp.eq.s32.totalorder %s42, 5
      %p98 = por %p96, %p97
      %p99 = scmp.ne.s32.totalorder %s88, %s89
      %p100 = scmp.eq.s32.totalorder %s42, 0
      %p101 = por %p99, %p100
      %p102 = scmp.ne.s32.totalorder %s88, %s89
      %p103 = scmp.eq.s32.totalorder %s43, 5
      %p104 = por %p102, %p103
      %p106 = scmp.ne.s32.totalorder %s89, %s105
      %p107 = scmp.eq.s32.totalorder %s43, 0
      %p108 = por %p106, %p107
      %s109 = ssub.s32 %s45, %s52
      %p110 = scmp.eq.s32.totalorder %s109, 0
      %s112 = sadd.s32 %s111, 1
      %s113 = scalar_select %p110, %s111, %s112
      %p116 = pneg %p110
      %p117 = scmp.eq.s32.totalorder %s37, 5
      %p118 = por %p116, %p117
      %p119 = scmp.ne.s32.totalorder %s111, %s114
      %p120 = scmp.eq.s32.totalorder %s37, 0
      %p121 = por %p119, %p120
      %p122 = scmp.ne.s32.totalorder %s111, %s114
      %p123 = scmp.eq.s32.totalorder %s42, 5
      %p124 = por %p122, %p123
      %p125 = scmp.ne.s32.totalorder %s114, %s115
      %p126 = scmp.eq.s32.totalorder %s42, 0
      %p127 = por %p125, %p126
      %p128 = scmp.ne.s32.totalorder %s114, %s115
      %p129 = scmp.eq.s32.totalorder %s43, 5
      %p130 = por %p128, %p129
      %p132 = scmp.ne.s32.totalorder %s115, %s131
      %p133 = scmp.eq.s32.totalorder %s43, 0
      %p134 = por %p132, %p133
      %s135 = ssub.s32 %s45, %s52
      %p136 = scmp.eq.s32.totalorder %s135, 0
      %s138 = sadd.s32 %s137, 1
      %s139 = scalar_select %p136, %s137, %s138
      %p142 = pneg %p136
      %p143 = scmp.eq.s32.totalorder %s37, 5
      %p144 = por %p142, %p143
      %p145 = scmp.ne.s32.totalorder %s137, %s140
      %p146 = scmp.eq.s32.totalorder %s37, 0
      %p147 = por %p145, %p146
      %p148 = scmp.ne.s32.totalorder %s137, %s140
      %p149 = scmp.eq.s32.totalorder %s42, 5
      %p150 = por %p148, %p149
      %p151 = scmp.ne.s32.totalorder %s140, %s141
      %p152 = scmp.eq.s32.totalorder %s42, 0
      %p153 = por %p151, %p152
      %p154 = scmp.ne.s32.totalorder %s140, %s141
      %p155 = scmp.eq.s32.totalorder %s43, 5
      %p156 = por %p154, %p155
      %p158 = scmp.ne.s32.totalorder %s141, %s157
      %p159 = scmp.eq.s32.totalorder %s43, 0
      %p160 = por %p158, %p159
      %s161 = ssub.s32 %s45, %s52
      %p162 = scmp.eq.s32.totalorder %s161, 0
      %s164 = sadd.s32 %s163, 1
      %s165 = scalar_select %p162, %s163, %s164
      %p168 = pneg %p162
      %p169 = scmp.eq.s32.totalorder %s37, 5
      %p170 = por %p168, %p169
      %p171 = scmp.ne.s32.totalorder %s163, %s166
      %p172 = scmp.eq.s32.totalorder %s37, 0
      %p173 = por %p171, %p172
      %p174 = scmp.ne.s32.totalorder %s163, %s166
      %p175 = scmp.eq.s32.totalorder %s42, 5
      %p176 = por %p174, %p175
      %p177 = scmp.ne.s32.totalorder %s166, %s167
      %p178 = scmp.eq.s32.totalorder %s42, 0
      %p179 = por %p177, %p178
      %p180 = scmp.ne.s32.totalorder %s166, %s167
      %p181 = scmp.eq.s32.totalorder %s43, 5
      %p182 = por %p180, %p181
      %p184 = scmp.ne.s32.totalorder %s167, %s183
      %p185 = scmp.eq.s32.totalorder %s43, 0
      %p186 = por %p184, %p185
      %s187 = ssub.s32 %s45, %s52
      %p188 = scmp.eq.s32.totalorder %s187, 0
      %s190 = sadd.s32 %s189, 1
      %s191 = scalar_select %p188, %s189, %s190
      %p194 = pneg %p188
      %p195 = scmp.eq.s32.totalorder %s37, 5
      %p196 = por %p194, %p195
      %p197 = scmp.ne.s32.totalorder %s189, %s192
      %p198 = scmp.eq.s32.totalorder %s37, 0
      %p199 = por %p197, %p198
      %p200 = scmp.ne.s32.totalorder %s189, %s192
      %p201 = scmp.eq.s32.totalorder %s42, 5
      %p202 = por %p200, %p201
      %p203 = scmp.ne.s32.totalorder %s192, %s193
      %p204 = scmp.eq.s32.totalorder %s42, 0
      %p205 = por %p203, %p204
      %p206 = scmp.ne.s32.totalorder %s192, %s193
      %p207 = scmp.eq.s32.totalorder %s43, 5
      %p208 = por %p206, %p207
      %p210 = scmp.ne.s32.totalorder %s193, %s209
      %p211 = scmp.eq.s32.totalorder %s43, 0
      %p212 = por %p210, %p211
      %s213 = ssub.s32 %s45, %s52
      %p214 = scmp.eq.s32.totalorder %s213, 0
      %s216 = sadd.s32 %s215, 1
      %s217 = scalar_select %p214, %s215, %s216
      %p220 = pneg %p214
      %p221 = scmp.eq.s32.totalorder %s37, 5
      %p222 = por %p220, %p221
      %p223 = scmp.ne.s32.totalorder %s215, %s218
      %p224 = scmp.eq.s32.totalorder %s37, 0
      %p225 = por %p223, %p224
      %p226 = scmp.ne.s32.totalorder %s215, %s218
      %p227 = scmp.eq.s32.totalorder %s42, 5
      %p228 = por %p226, %p227
      %p229 = scmp.ne.s32.totalorder %s218, %s219
      %p230 = scmp.eq.s32.totalorder %s42, 0
      %p231 = por %p229, %p230
      %p232 = scmp.ne.s32.totalorder %s218, %s219
      %p233 = scmp.eq.s32.totalorder %s43, 5
      %p234 = por %p232, %p233
      %p236 = scmp.ne.s32.totalorder %s219, %s235
      %p237 = scmp.eq.s32.totalorder %s43, 0
      %p238 = por %p236, %p237
      %s239 = ssub.s32 %s45, %s52
      %p240 = scmp.eq.s32.totalorder %s239, 0
      %s242 = sadd.s32 %s241, 1
      %s243 = scalar_select %p240, %s241, %s242
      %p246 = pneg %p240
      %p247 = scmp.eq.s32.totalorder %s37, 5
      %p248 = por %p246, %p247
      %p249 = scmp.ne.s32.totalorder %s241, %s244
      %p250 = scmp.eq.s32.totalorder %s37, 0
      %p251 = por %p249, %p250
      %p252 = scmp.ne.s32.totalorder %s241, %s244
      %p253 = scmp.eq.s32.totalorder %s42, 5
      %p254 = por %p252, %p253
      %p255 = scmp.ne.s32.totalorder %s244, %s245
      %p256 = scmp.eq.s32.totalorder %s42, 0
      %p257 = por %p255, %p256
      %p258 = scmp.ne.s32.totalorder %s244, %s245
      %p259 = scmp.eq.s32.totalorder %s43, 5
      %p260 = por %p258, %p259
      %p262 = scmp.ne.s32.totalorder %s245, %s261
      %p263 = scmp.eq.s32.totalorder %s43, 0
      %p264 = por %p262, %p263
      %s265 = ssub.s32 %s45, %s52
      %p266 = scmp.eq.s32.totalorder %s265, 0
      %s268 = sadd.s32 %s267, 1
      %s269 = scalar_select %p266, %s267, %s268
      %p272 = pneg %p266
      %p273 = scmp.eq.s32.totalorder %s37, 5
      %p274 = por %p272, %p273
      %p275 = scmp.ne.s32.totalorder %s267, %s270
      %p276 = scmp.eq.s32.totalorder %s37, 0
      %p277 = por %p275, %p276
      %p278 = scmp.ne.s32.totalorder %s267, %s270
      %p279 = scmp.eq.s32.totalorder %s42, 5
      %p280 = por %p278, %p279
      %p281 = scmp.ne.s32.totalorder %s270, %s271
      %p282 = scmp.eq.s32.totalorder %s42, 0
      %p283 = por %p281, %p282
      %p284 = scmp.ne.s32.totalorder %s270, %s271
      %p285 = scmp.eq.s32.totalorder %s43, 5
      %p286 = por %p284, %p285
      %p288 = scmp.ne.s32.totalorder %s271, %s287
      %p289 = scmp.eq.s32.totalorder %s43, 0
      %p290 = por %p288, %p289
      %s291 = ssub.s32 %s45, %s52
      %p292 = scmp.eq.s32.totalorder %s291, 0
      %s294 = sadd.s32 %s293, 1
      %s295 = scalar_select %p292, %s293, %s294
      %p298 = pneg %p292
      %p299 = scmp.eq.s32.totalorder %s37, 5
      %p300 = por %p298, %p299
      %p301 = scmp.ne.s32.totalorder %s293, %s296
      %p302 = scmp.eq.s32.totalorder %s37, 0
      %p303 = por %p301, %p302
      %p304 = scmp.ne.s32.totalorder %s293, %s296
      %p305 = scmp.eq.s32.totalorder %s42, 5
      %p306 = por %p304, %p305
      %p307 = scmp.ne.s32.totalorder %s296, %s297
      %p308 = scmp.eq.s32.totalorder %s42, 0
      %p309 = por %p307, %p308
      %p310 = scmp.ne.s32.totalorder %s296, %s297
      %p311 = scmp.eq.s32.totalorder %s43, 5
      %p312 = por %p310, %p311
      %p314 = scmp.ne.s32.totalorder %s297, %s313
      %p315 = scmp.eq.s32.totalorder %s43, 0
      %p316 = por %p314, %p315
      %s317 = ssub.s32 %s45, %s52
      %p318 = scmp.eq.s32.totalorder %s317, 0
      %s320 = sadd.s32 %s319, 1
      %s321 = scalar_select %p318, %s319, %s320
      %p324 = pneg %p318
      %p325 = scmp.eq.s32.totalorder %s37, 5
      %p326 = por %p324, %p325
      %p327 = scmp.ne.s32.totalorder %s319, %s322
      %p328 = scmp.eq.s32.totalorder %s37, 0
      %p329 = por %p327, %p328
      %p330 = scmp.ne.s32.totalorder %s319, %s322
      %p331 = scmp.eq.s32.totalorder %s42, 5
      %p332 = por %p330, %p331
      %p333 = scmp.ne.s32.totalorder %s322, %s323
      %p334 = scmp.eq.s32.totalorder %s42, 0
      %p335 = por %p333, %p334
      %p336 = scmp.ne.s32.totalorder %s322, %s323
      %p337 = scmp.eq.s32.totalorder %s43, 5
      %p338 = por %p336, %p337
      %p340 = scmp.ne.s32.totalorder %s323, %s339
      %p341 = scmp.eq.s32.totalorder %s43, 0
      %p342 = por %p340, %p341
      %s343 = ssub.s32 %s45, %s52
      %p344 = scmp.eq.s32.totalorder %s343, 0
      %s346 = sadd.s32 %s345, 1
      %s347 = scalar_select %p344, %s345, %s346
      %p350 = pneg %p344
      %p351 = scmp.eq.s32.totalorder %s37, 5
      %p352 = por %p350, %p351
      %p353 = scmp.ne.s32.totalorder %s345, %s348
      %p354 = scmp.eq.s32.totalorder %s37, 0
      %p355 = por %p353, %p354
      %p356 = scmp.ne.s32.totalorder %s345, %s348
      %p357 = scmp.eq.s32.totalorder %s42, 5
      %p358 = por %p356, %p357
      %p359 = scmp.ne.s32.totalorder %s348, %s349
      %p360 = scmp.eq.s32.totalorder %s42, 0
      %p361 = por %p359, %p360
      %p362 = scmp.ne.s32.totalorder %s348, %s349
      %p363 = scmp.eq.s32.totalorder %s43, 5
      %p364 = por %p362, %p363
      %p366 = scmp.ne.s32.totalorder %s349, %s365
      %p367 = scmp.eq.s32.totalorder %s43, 0
      %p368 = por %p366, %p367
      %s369 = ssub.s32 %s45, %s52
      %p370 = scmp.eq.s32.totalorder %s369, 0
      %s372 = sadd.s32 %s371, 1
      %s373 = scalar_select %p370, %s371, %s372
      %p376 = pneg %p370
      %p377 = scmp.eq.s32.totalorder %s37, 5
      %p378 = por %p376, %p377
      %p379 = scmp.ne.s32.totalorder %s371, %s374
      %p380 = scmp.eq.s32.totalorder %s37, 0
      %p381 = por %p379, %p380
      %p382 = scmp.ne.s32.totalorder %s371, %s374
      %p383 = scmp.eq.s32.totalorder %s42, 5
      %p384 = por %p382, %p383
      %p385 = scmp.ne.s32.totalorder %s374, %s375
      %p386 = scmp.eq.s32.totalorder %s42, 0
      %p387 = por %p385, %p386
      %p388 = scmp.ne.s32.totalorder %s374, %s375
      %p389 = scmp.eq.s32.totalorder %s43, 5
      %p390 = por %p388, %p389
      %p392 = scmp.ne.s32.totalorder %s375, %s391
      %p393 = scmp.eq.s32.totalorder %s43, 0
      %p394 = por %p392, %p393
      %s395 = ssub.s32 %s45, %s52
      %p396 = scmp.eq.s32.totalorder %s395, 0
      %s398 = sadd.s32 %s397, 1
      %s399 = scalar_select %p396, %s397, %s398
      %p402 = pneg %p396
      %p403 = scmp.eq.s32.totalorder %s37, 5
      %p404 = por %p402, %p403
      %p405 = scmp.ne.s32.totalorder %s397, %s400
      %p406 = scmp.eq.s32.totalorder %s37, 0
      %p407 = por %p405, %p406
      %p408 = scmp.ne.s32.totalorder %s397, %s400
      %p409 = scmp.eq.s32.totalorder %s42, 5
      %p410 = por %p408, %p409
      %p411 = scmp.ne.s32.totalorder %s400, %s401
      %p412 = scmp.eq.s32.totalorder %s42, 0
      %p413 = por %p411, %p412
      %p414 = scmp.ne.s32.totalorder %s400, %s401
      %p415 = scmp.eq.s32.totalorder %s43, 5
      %p416 = por %p414, %p415
      %p418 = scmp.ne.s32.totalorder %s401, %s417
      %p419 = scmp.eq.s32.totalorder %s43, 0
      %p420 = por %p418, %p419
      %s421 = ssub.s32 %s45, %s52
      %p422 = scmp.eq.s32.totalorder %s421, 0
      %s424 = sadd.s32 %s423, 1
      %s425 = scalar_select %p422, %s423, %s424
      %p428 = pneg %p422
      %p429 = scmp.eq.s32.totalorder %s37, 5
      %p430 = por %p428, %p429
      %p431 = scmp.ne.s32.totalorder %s423, %s426
      %p432 = scmp.eq.s32.totalorder %s37, 0
      %p433 = por %p431, %p432
      %p434 = scmp.ne.s32.totalorder %s423, %s426
      %p435 = scmp.eq.s32.totalorder %s42, 5
      %p436 = por %p434, %p435
      %p437 = scmp.ne.s32.totalorder %s426, %s427
      %p438 = scmp.eq.s32.totalorder %s42, 0
      %p439 = por %p437, %p438
      %p440 = scmp.ne.s32.totalorder %s426, %s427
      %p441 = scmp.eq.s32.totalorder %s43, 5
      %p442 = por %p440, %p441
      %p444 = scmp.ne.s32.totalorder %s427, %s443
      %p445 = scmp.eq.s32.totalorder %s43, 0
      %p446 = por %p444, %p445
      %s447 = ssub.s32 %s45, %s52
      %p448 = scmp.eq.s32.totalorder %s447, 0
      %s450 = sadd.s32 %s449, 1
      %s451 = scalar_select %p448, %s449, %s450
      %p454 = pneg %p448
      %p455 = scmp.eq.s32.totalorder %s37, 5
      %p456 = por %p454, %p455
      %p457 = scmp.ne.s32.totalorder %s449, %s452
      %p458 = scmp.eq.s32.totalorder %s37, 0
      %p459 = por %p457, %p458
      %p460 = scmp.ne.s32.totalorder %s449, %s452
      %p461 = scmp.eq.s32.totalorder %s42, 5
      %p462 = por %p460, %p461
      %p463 = scmp.ne.s32.totalorder %s452, %s453
      %p464 = scmp.eq.s32.totalorder %s42, 0
      %p465 = por %p463, %p464
      %p466 = scmp.ne.s32.totalorder %s452, %s453
      %p467 = scmp.eq.s32.totalorder %s43, 5
      %p468 = por %p466, %p467
      %p470 = scmp.ne.s32.totalorder %s453, %s469
      %p471 = scmp.eq.s32.totalorder %s43, 0
      %p472 = por %p470, %p471
      %s473 = ssub.s32 %s45, %s52
      %p474 = scmp.eq.s32.totalorder %s473, 0
      %s476 = sadd.s32 %s475, 1
      %s477 = scalar_select %p474, %s475, %s476
      %p480 = pneg %p474
      %p481 = scmp.eq.s32.totalorder %s37, 5
      %p482 = por %p480, %p481
      %p483 = scmp.ne.s32.totalorder %s475, %s478
      %p484 = scmp.eq.s32.totalorder %s37, 0
      %p485 = por %p483, %p484
      %p486 = scmp.ne.s32.totalorder %s475, %s478
      %p487 = scmp.eq.s32.totalorder %s42, 5
      %p488 = por %p486, %p487
      %p489 = scmp.ne.s32.totalorder %s478, %s479
      %p490 = scmp.eq.s32.totalorder %s42, 0
      %p491 = por %p489, %p490
      %p492 = scmp.ne.s32.totalorder %s478, %s479
      %p493 = scmp.eq.s32.totalorder %s43, 5
      %p494 = por %p492, %p493
      %p496 = scmp.ne.s32.totalorder %s479, %s495
      %p497 = scmp.eq.s32.totalorder %s43, 0
      %p498 = por %p496, %p497
      %s499 = ssub.s32 %s45, %s52
      %p500 = scmp.eq.s32.totalorder %s499, 0
      %s502 = sadd.s32 %s501, 1
      %s503 = scalar_select %p500, %s501, %s502
      %p506 = pneg %p500
      %p507 = scmp.eq.s32.totalorder %s37, 5
      %p508 = por %p506, %p507
      %p509 = scmp.ne.s32.totalorder %s501, %s504
      %p510 = scmp.eq.s32.totalorder %s37, 0
      %p511 = por %p509, %p510
      %p512 = scmp.ne.s32.totalorder %s501, %s504
      %p513 = scmp.eq.s32.totalorder %s42, 5
      %p514 = por %p512, %p513
      %p515 = scmp.ne.s32.totalorder %s504, %s505
      %p516 = scmp.eq.s32.totalorder %s42, 0
      %p517 = por %p515, %p516
      %p518 = scmp.ne.s32.totalorder %s504, %s505
      %p519 = scmp.eq.s32.totalorder %s43, 5
      %p520 = por %p518, %p519
      %p522 = scmp.ne.s32.totalorder %s505, %s521
      %p523 = scmp.eq.s32.totalorder %s43, 0
      %p524 = por %p522, %p523
      %s525 = ssub.s32 %s45, %s52
      %p526 = scmp.eq.s32.totalorder %s525, 0
      %s528 = sadd.s32 %s527, 1
      %s529 = scalar_select %p526, %s527, %s528
      %p532 = pneg %p526
      %p533 = scmp.eq.s32.totalorder %s37, 5
      %p534 = por %p532, %p533
      %p535 = scmp.ne.s32.totalorder %s527, %s530
      %p536 = scmp.eq.s32.totalorder %s37, 0
      %p537 = por %p535, %p536
      %p538 = scmp.ne.s32.totalorder %s527, %s530
      %p539 = scmp.eq.s32.totalorder %s42, 5
      %p540 = por %p538, %p539
      %p541 = scmp.ne.s32.totalorder %s530, %s531
      %p542 = scmp.eq.s32.totalorder %s42, 0
      %p543 = por %p541, %p542
      %p544 = scmp.ne.s32.totalorder %s530, %s531
      %p545 = scmp.eq.s32.totalorder %s43, 5
      %p546 = por %p544, %p545
      %p548 = scmp.ne.s32.totalorder %s531, %s547
      %p549 = scmp.eq.s32.totalorder %s43, 0
      %p550 = por %p548, %p549
      %s551 = ssub.s32 %s45, %s52
      %p552 = scmp.eq.s32.totalorder %s551, 0
      %s554 = sadd.s32 %s553, 1
      %s555 = scalar_select %p552, %s553, %s554
      %p558 = pneg %p552
      %p559 = scmp.eq.s32.totalorder %s37, 5
      %p560 = por %p558, %p559
      %p561 = scmp.ne.s32.totalorder %s553, %s556
      %p562 = scmp.eq.s32.totalorder %s37, 0
      %p563 = por %p561, %p562
      %p564 = scmp.ne.s32.totalorder %s553, %s556
      %p565 = scmp.eq.s32.totalorder %s42, 5
      %p566 = por %p564, %p565
      %p567 = scmp.ne.s32.totalorder %s556, %s557
      %p568 = scmp.eq.s32.totalorder %s42, 0
      %p569 = por %p567, %p568
      %p570 = scmp.ne.s32.totalorder %s556, %s557
      %p571 = scmp.eq.s32.totalorder %s43, 5
      %p572 = por %p570, %p571
      %p574 = scmp.ne.s32.totalorder %s557, %s573
      %p575 = scmp.eq.s32.totalorder %s43, 0
      %p576 = por %p574, %p575
      %s577 = ssub.s32 %s45, %s52
      %p578 = scmp.eq.s32.totalorder %s577, 0
      %s580 = sadd.s32 %s579, 1
      %s581 = scalar_select %p578, %s579, %s580
      %p584 = pneg %p578
      %p585 = scmp.eq.s32.totalorder %s37, 5
      %p586 = por %p584, %p585
      %p587 = scmp.ne.s32.totalorder %s579, %s582
      %p588 = scmp.eq.s32.totalorder %s37, 0
      %p589 = por %p587, %p588
      %p590 = scmp.ne.s32.totalorder %s579, %s582
      %p591 = scmp.eq.s32.totalorder %s42, 5
      %p592 = por %p590, %p591
      %p593 = scmp.ne.s32.totalorder %s582, %s583
      %p594 = scmp.eq.s32.totalorder %s42, 0
      %p595 = por %p593, %p594
      %p596 = scmp.ne.s32.totalorder %s582, %s583
      %p597 = scmp.eq.s32.totalorder %s43, 5
      %p598 = por %p596, %p597
      %p600 = scmp.ne.s32.totalorder %s583, %s599
      %p601 = scmp.eq.s32.totalorder %s43, 0
      %p602 = por %p600, %p601
      %s603 = ssub.s32 %s45, %s52
      %p604 = scmp.eq.s32.totalorder %s603, 0
      %s606 = sadd.s32 %s605, 1
      %s607 = scalar_select %p604, %s605, %s606
      %p610 = pneg %p604
      %p611 = scmp.eq.s32.totalorder %s37, 5
      %p612 = por %p610, %p611
      %p613 = scmp.ne.s32.totalorder %s605, %s608
      %p614 = scmp.eq.s32.totalorder %s37, 0
      %p615 = por %p613, %p614
      %p616 = scmp.ne.s32.totalorder %s605, %s608
      %p617 = scmp.eq.s32.totalorder %s42, 5
      %p618 = por %p616, %p617
      %p619 = scmp.ne.s32.totalorder %s608, %s609
      %p620 = scmp.eq.s32.totalorder %s42, 0
      %p621 = por %p619, %p620
      %p622 = scmp.ne.s32.totalorder %s608, %s609
      %p623 = scmp.eq.s32.totalorder %s43, 5
      %p624 = por %p622, %p623
      %p626 = scmp.ne.s32.totalorder %s609, %s625
      %p627 = scmp.eq.s32.totalorder %s43, 0
      %p628 = por %p626, %p627
      %s630 = sadd.s32 %s629, 1
      %p633 = scmp.eq.s32.totalorder %s37, 5
      %p634 = scmp.ne.s32.totalorder %s629, %s631
      %p635 = scmp.eq.s32.totalorder %s37, 0
      %p636 = por %p634, %p635
      %p637 = scmp.ne.s32.totalorder %s629, %s631
      %p638 = scmp.eq.s32.totalorder %s42, 5
      %p639 = por %p637, %p638
      %p640 = scmp.ne.s32.totalorder %s631, %s632
      %p641 = scmp.eq.s32.totalorder %s42, 0
      %p642 = por %p640, %p641
      %p643 = scmp.ne.s32.totalorder %s631, %s632
      %p644 = scmp.eq.s32.totalorder %s43, 5
      %p645 = por %p643, %p644
      %p647 = scmp.ne.s32.totalorder %s632, %s646
      %p648 = scmp.eq.s32.totalorder %s43, 0
      %p649 = por %p647, %p648
      %s651 = sadd.s32 %s650, 1
      %p654 = scmp.eq.s32.totalorder %s37, 5
      %p655 = scmp.ne.s32.totalorder %s650, %s652
      %p656 = scmp.eq.s32.totalorder %s37, 0
      %p657 = por %p655, %p656
      %p658 = scmp.ne.s32.totalorder %s650, %s652
      %p659 = scmp.eq.s32.totalorder %s42, 5
      %p660 = por %p658, %p659
      %p661 = scmp.ne.s32.totalorder %s652, %s653
      %p662 = scmp.eq.s32.totalorder %s42, 0
      %p663 = por %p661, %p662
      %p664 = scmp.ne.s32.totalorder %s652, %s653
      %p665 = scmp.eq.s32.totalorder %s43, 5
      %p666 = por %p664, %p665
      %p668 = scmp.ne.s32.totalorder %s653, %s667
      %p669 = scmp.eq.s32.totalorder %s43, 0
      %p670 = por %p668, %p669
      %s671 = ssub.s32 %s44, %s56
      %p672 = scmp.eq.s32.totalorder %s671, 0
      %s674 = sadd.s32 %s673, 1
      %s675 = scalar_select %p672, %s673, %s674
      %p678 = pneg %p672
      %p679 = scmp.eq.s32.totalorder %s37, 5
      %p680 = por %p678, %p679
      %p681 = scmp.ne.s32.totalorder %s673, %s676
      %p682 = scmp.eq.s32.totalorder %s37, 0
      %p683 = por %p681, %p682
      %p684 = scmp.ne.s32.totalorder %s673, %s676
      %p685 = scmp.eq.s32.totalorder %s42, 5
      %p686 = por %p684, %p685
      %p687 = scmp.ne.s32.totalorder %s676, %s677
      %p688 = scmp.eq.s32.totalorder %s42, 0
      %p689 = por %p687, %p688
      %p690 = scmp.ne.s32.totalorder %s676, %s677
      %p691 = scmp.eq.s32.totalorder %s43, 5
      %p692 = por %p690, %p691
      %p694 = scmp.ne.s32.totalorder %s677, %s693
      %p695 = scmp.eq.s32.totalorder %s43, 0
      %p696 = por %p694, %p695
      %p697 = scmp.le.s32.totalorder 1, %s37
      %p698 = scmp.lt.s32.totalorder %s37, 7
      %p699 = pnand %p697, %p698
      %p700 = pneg %p699
      // Predicated region
      $region9: #{transformer_model_forward.3} parent=5 // pred_check
        _
      $region10: #{transformer_model_forward.3} parent=5 // pred_check_branch
        %702 = sbr.rel (%p699) target = $region12
      $region11: #{transformer_model_forward.3} parent=5 // pred_region
        %s703 = ssub.s32 %s37, 1
        // Predicated region
        $region13: #{transformer_model_forward.3} parent=11 // pred_check
          %p704 = pneg %p75
        $region14: #{transformer_model_forward.3} parent=11 // pred_check_branch
          %706 = sbr.rel (%p704) target = $region16
        $region15: #{transformer_model_forward.3} parent=11 // pred_region
          %s707 = smul.u32 2, %s46
          %p708 = scmp.lt.s32.totalorder %s707, 1
          %s709 = scalar_select %p708, %s707, 1
          %s710 = scalar_lea.vmem %s0, %s709
          %s711 = smul.u32 2, %s46
        $region16: #{transformer_model_forward.3} parent=11 // pred_fallthru
          _
        // Predicated region
        $region17: #{transformer_model_forward.3} parent=11 // pred_check
          %p712 = pneg %p101
        $region18: #{transformer_model_forward.3} parent=11 // pred_check_branch
          %714 = sbr.rel (%p712) target = $region20
        $region19: #{transformer_model_forward.3} parent=11 // pred_region
          %s715 = smul.u32 2, %s46
          %p716 = scmp.lt.s32.totalorder %s715, 1
          %s717 = scalar_select %p716, %s715, 1
          %s718 = smul.addr %s717, 4
          %s719 = scalar_lea.vmem %s1, %s718
          %s720 = smul.u32 2, %s46
        $region20: #{transformer_model_forward.3} parent=11 // pred_fallthru
          _
        // Predicated region
        $region21: #{transformer_model_forward.3} parent=11 // pred_check
          %p721 = pneg %p642
        $region22: #{transformer_model_forward.3} parent=11 // pred_check_branch
          %723 = sbr.rel (%p721) target = $region24
        $region23: #{transformer_model_forward.3} parent=11 // pred_region
          _
        $region24: #{transformer_model_forward.3} parent=11 // pred_fallthru
          _
        // Predicated region
        $region25: #{transformer_model_forward.3} parent=11 // pred_check
          %p724 = pneg %p663
        $region26: #{transformer_model_forward.3} parent=11 // pred_check_branch
          %726 = sbr.rel (%p724) target = $region28
        $region27: #{transformer_model_forward.3} parent=11 // pred_region
          _
        $region28: #{transformer_model_forward.3} parent=11 // pred_fallthru
          _
      $region12: #{transformer_model_forward.3} parent=5 // pred_fallthru
        _
      %p727 = scmp.lt.s32.totalorder %s37, 6
      // Predicated region
      $region29: #{transformer_model_forward.3} parent=5 // pred_check
        %p728 = pneg %p727
      $region30: #{transformer_model_forward.3} parent=5 // pred_check_branch
        %730 = sbr.rel (%p728) target = $region32
      $region31: #{transformer_model_forward.3} parent=5 // pred_region
        // Predicated region
        $region33: #{transformer_model_forward.3} parent=31 // pred_check
          %p731 = pneg %p121
        $region34: #{transformer_model_forward.3} parent=31 // pred_check_branch
          %733 = sbr.rel (%p731) target = $region36
        $region35: #{transformer_model_forward.3} parent=31 // pred_region
          %p734 = scmp.lt.s32.totalorder %s45, 5
          %s735 = scalar_select %p734, %s45, 5
          %s736 = smul.addr %s735, 16
          %s737 = smul.addr %s736, 4
          %s738 = scalar_lea.vmem %s2, %s737
        $region36: #{transformer_model_forward.3} parent=31 // pred_fallthru
          _
        // Predicated region
        $region37: #{transformer_model_forward.3} parent=31 // pred_check
          %p739 = pneg %p147
        $region38: #{transformer_model_forward.3} parent=31 // pred_check_branch
          %741 = sbr.rel (%p739) target = $region40
        $region39: #{transformer_model_forward.3} parent=31 // pred_region
          %p742 = scmp.lt.s32.totalorder %s45, 5
          %s743 = scalar_select %p742, %s45, 5
          %s744 = scalar_lea.vmem %s3, %s743
        $region40: #{transformer_model_forward.3} parent=31 // pred_fallthru
          _
        // Predicated region
        $region41: #{transformer_model_forward.3} parent=31 // pred_check
          %p745 = pneg %p173
        $region42: #{transformer_model_forward.3} parent=31 // pred_check_branch
          %747 = sbr.rel (%p745) target = $region44
        $region43: #{transformer_model_forward.3} parent=31 // pred_region
          %p748 = scmp.lt.s32.totalorder %s45, 5
          %s749 = scalar_select %p748, %s45, 5
          %s750 = smul.addr %s749, 16
          %s751 = smul.addr %s750, 4
          %s752 = scalar_lea.vmem %s4, %s751
        $region44: #{transformer_model_forward.3} parent=31 // pred_fallthru
          _
        // Predicated region
        $region45: #{transformer_model_forward.3} parent=31 // pred_check
          %p753 = pneg %p199
        $region46: #{transformer_model_forward.3} parent=31 // pred_check_branch
          %755 = sbr.rel (%p753) target = $region48
        $region47: #{transformer_model_forward.3} parent=31 // pred_region
          %p756 = scmp.lt.s32.totalorder %s45, 5
          %s757 = scalar_select %p756, %s45, 5
          %s758 = scalar_lea.vmem %s5, %s757
        $region48: #{transformer_model_forward.3} parent=31 // pred_fallthru
          _
        // Predicated region
        $region49: #{transformer_model_forward.3} parent=31 // pred_check
          %p759 = pneg %p225
        $region50: #{transformer_model_forward.3} parent=31 // pred_check_branch
          %761 = sbr.rel (%p759) target = $region52
        $region51: #{transformer_model_forward.3} parent=31 // pred_region
          %p762 = scmp.lt.s32.totalorder %s45, 5
          %s763 = scalar_select %p762, %s45, 5
          %s764 = scalar_lea.vmem %s6, %s763
        $region52: #{transformer_model_forward.3} parent=31 // pred_fallthru
          _
        // Predicated region
        $region53: #{transformer_model_forward.3} parent=31 // pred_check
          %p765 = pneg %p251
        $region54: #{transformer_model_forward.3} parent=31 // pred_check_branch
          %767 = sbr.rel (%p765) target = $region56
        $region55: #{transformer_model_forward.3} parent=31 // pred_region
          %p768 = scmp.lt.s32.totalorder %s45, 5
          %s769 = scalar_select %p768, %s45, 5
          %s770 = scalar_lea.vmem %s7, %s769
        $region56: #{transformer_model_forward.3} parent=31 // pred_fallthru
          _
        // Predicated region
        $region57: #{transformer_model_forward.3} parent=31 // pred_check
          %p771 = pneg %p277
        $region58: #{transformer_model_forward.3} parent=31 // pred_check_branch
          %773 = sbr.rel (%p771) target = $region60
        $region59: #{transformer_model_forward.3} parent=31 // pred_region
          %s774 = sand.u32 %s267, 1
          %s775 = scalar_lea.sflag [#allocation3], %s774
          %s776 = sand.u32 %s267, 1
          %s777 = smul.addr %s776, 64
          %s778 = scalar_lea.vmem [#allocation2], %s777
          %s780 = ssub.s32 1024, 1024
          %781 = vsyncadd %s775, %s780
          %s782 = smul.addr %s45, 16
          %s783 = smul.addr %s782, 64
          %s784 = scalar_lea.hbm %s8, %s783
          %s785 = sshll.u32 %s778, 4
          %s786 = int_to_ptr.vmem [resolvable:$true] %s785
          %791 = dma.hbm_to_vmem [thread:$0]  %s784, 1024, %s786, %s775, 64, 64, 4
        $region60: #{transformer_model_forward.3} parent=31 // pred_fallthru
          _
        // Predicated region
        $region61: #{transformer_model_forward.3} parent=31 // pred_check
          %p792 = pneg %p303
        $region62: #{transformer_model_forward.3} parent=31 // pred_check_branch
          %794 = sbr.rel (%p792) target = $region64
        $region63: #{transformer_model_forward.3} parent=31 // pred_region
          %p795 = scmp.lt.s32.totalorder %s45, 5
          %s796 = scalar_select %p795, %s45, 5
          %s797 = scalar_lea.vmem %s9, %s796
        $region64: #{transformer_model_forward.3} parent=31 // pred_fallthru
          _
        // Predicated region
        $region65: #{transformer_model_forward.3} parent=31 // pred_check
          %p798 = pneg %p329
        $region66: #{transformer_model_forward.3} parent=31 // pred_check_branch
          %800 = sbr.rel (%p798) target = $region68
        $region67: #{transformer_model_forward.3} parent=31 // pred_region
          %p801 = scmp.lt.s32.totalorder %s45, 5
          %s802 = scalar_select %p801, %s45, 5
          %s803 = smul.addr %s802, 32
          %s804 = smul.addr %s803, 4
          %s805 = scalar_lea.vmem %s10, %s804
        $region68: #{transformer_model_forward.3} parent=31 // pred_fallthru
          _
        // Predicated region
        $region69: #{transformer_model_forward.3} parent=31 // pred_check
          %p806 = pneg %p355
        $region70: #{transformer_model_forward.3} parent=31 // pred_check_branch
          %808 = sbr.rel (%p806) target = $region72
        $region71: #{transformer_model_forward.3} parent=31 // pred_region
          %p809 = scmp.lt.s32.totalorder %s45, 5
          %s810 = scalar_select %p809, %s45, 5
          %s811 = smul.addr %s810, 2
          %s812 = scalar_lea.vmem %s11, %s811
        $region72: #{transformer_model_forward.3} parent=31 // pred_fallthru
          _
        // Predicated region
        $region73: #{transformer_model_forward.3} parent=31 // pred_check
          %p813 = pneg %p381
        $region74: #{transformer_model_forward.3} parent=31 // pred_check_branch
          %815 = sbr.rel (%p813) target = $region76
        $region75: #{transformer_model_forward.3} parent=31 // pred_region
          %s816 = sand.u32 %s371, 1
          %s817 = scalar_lea.sflag [#allocation6], %s816
          %s818 = sand.u32 %s371, 1
          %s819 = smul.addr %s818, 64
          %s820 = scalar_lea.vmem [#allocation5], %s819
          %s822 = ssub.s32 1024, 1024
          %823 = vsyncadd %s817, %s822
          %s824 = smul.addr %s45, 16
          %s825 = smul.addr %s824, 64
          %s826 = scalar_lea.hbm %s12, %s825
          %s827 = sshll.u32 %s820, 4
          %s828 = int_to_ptr.vmem [resolvable:$true] %s827
          %833 = dma.hbm_to_vmem [thread:$0]  %s826, 1024, %s828, %s817, 64, 64, 4
        $region76: #{transformer_model_forward.3} parent=31 // pred_fallthru
          _
        // Predicated region
        $region77: #{transformer_model_forward.3} parent=31 // pred_check
          %p834 = pneg %p407
        $region78: #{transformer_model_forward.3} parent=31 // pred_check_branch
          %836 = sbr.rel (%p834) target = $region80
        $region79: #{transformer_model_forward.3} parent=31 // pred_region
          %p837 = scmp.lt.s32.totalorder %s45, 5
          %s838 = scalar_select %p837, %s45, 5
          %s839 = scalar_lea.vmem %s13, %s838
        $region80: #{transformer_model_forward.3} parent=31 // pred_fallthru
          _
        // Predicated region
        $region81: #{transformer_model_forward.3} parent=31 // pred_check
          %p840 = pneg %p433
        $region82: #{transformer_model_forward.3} parent=31 // pred_check_branch
          %842 = sbr.rel (%p840) target = $region84
        $region83: #{transformer_model_forward.3} parent=31 // pred_region
          %p843 = scmp.lt.s32.totalorder %s45, 5
          %s844 = scalar_select %p843, %s45, 5
          %s845 = scalar_lea.vmem %s14, %s844
        $region84: #{transformer_model_forward.3} parent=31 // pred_fallthru
          _
        // Predicated region
        $region85: #{transformer_model_forward.3} parent=31 // pred_check
          %p846 = pneg %p459
        $region86: #{transformer_model_forward.3} parent=31 // pred_check_branch
          %848 = sbr.rel (%p846) target = $region88
        $region87: #{transformer_model_forward.3} parent=31 // pred_region
          %p849 = scmp.lt.s32.totalorder %s45, 5
          %s850 = scalar_select %p849, %s45, 5
          %s851 = scalar_lea.vmem %s15, %s850
        $region88: #{transformer_model_forward.3} parent=31 // pred_fallthru
          _
        // Predicated region
        $region89: #{transformer_model_forward.3} parent=31 // pred_check
          %p852 = pneg %p485
        $region90: #{transformer_model_forward.3} parent=31 // pred_check_branch
          %854 = sbr.rel (%p852) target = $region92
        $region91: #{transformer_model_forward.3} parent=31 // pred_region
          %p855 = scmp.lt.s32.totalorder %s45, 5
          %s856 = scalar_select %p855, %s45, 5
          %s857 = smul.addr %s856, 256
          %s858 = smul.addr %s857, 4
          %s859 = scalar_lea.vmem %s16, %s858
        $region92: #{transformer_model_forward.3} parent=31 // pred_fallthru
          _
        // Predicated region
        $region93: #{transformer_model_forward.3} parent=31 // pred_check
          %p860 = pneg %p511
        $region94: #{transformer_model_forward.3} parent=31 // pred_check_branch
          %862 = sbr.rel (%p860) target = $region96
        $region95: #{transformer_model_forward.3} parent=31 // pred_region
          %p863 = scmp.lt.s32.totalorder %s45, 5
          %s864 = scalar_select %p863, %s45, 5
          %s865 = smul.addr %s864, 16
          %s866 = scalar_lea.vmem %s17, %s865
        $region96: #{transformer_model_forward.3} parent=31 // pred_fallthru
          _
        // Predicated region
        $region97: #{transformer_model_forward.3} parent=31 // pred_check
          %p867 = pneg %p537
        $region98: #{transformer_model_forward.3} parent=31 // pred_check_branch
          %869 = sbr.rel (%p867) target = $region100
        $region99: #{transformer_model_forward.3} parent=31 // pred_region
          %p870 = scmp.lt.s32.totalorder %s45, 5
          %s871 = scalar_select %p870, %s45, 5
          %s872 = smul.addr %s871, 256
          %s873 = smul.addr %s872, 4
          %s874 = scalar_lea.vmem %s18, %s873
        $region100: #{transformer_model_forward.3} parent=31 // pred_fallthru
          _
        // Predicated region
        $region101: #{transformer_model_forward.3} parent=31 // pred_check
          %p875 = pneg %p563
        $region102: #{transformer_model_forward.3} parent=31 // pred_check_branch
          %877 = sbr.rel (%p875) target = $region104
        $region103: #{transformer_model_forward.3} parent=31 // pred_region
          %p878 = scmp.lt.s32.totalorder %s45, 5
          %s879 = scalar_select %p878, %s45, 5
          %s880 = scalar_lea.vmem %s19, %s879
        $region104: #{transformer_model_forward.3} parent=31 // pred_fallthru
          _
        // Predicated region
        $region105: #{transformer_model_forward.3} parent=31 // pred_check
          %p881 = pneg %p589
        $region106: #{transformer_model_forward.3} parent=31 // pred_check_branch
          %883 = sbr.rel (%p881) target = $region108
        $region107: #{transformer_model_forward.3} parent=31 // pred_region
          %p884 = scmp.lt.s32.totalorder %s45, 5
          %s885 = scalar_select %p884, %s45, 5
          %s886 = scalar_lea.vmem %s20, %s885
        $region108: #{transformer_model_forward.3} parent=31 // pred_fallthru
          _
        // Predicated region
        $region109: #{transformer_model_forward.3} parent=31 // pred_check
          %p887 = pneg %p615
        $region110: #{transformer_model_forward.3} parent=31 // pred_check_branch
          %889 = sbr.rel (%p887) target = $region112
        $region111: #{transformer_model_forward.3} parent=31 // pred_region
          %p890 = scmp.lt.s32.totalorder %s45, 5
          %s891 = scalar_select %p890, %s45, 5
          %s892 = scalar_lea.vmem %s21, %s891
        $region112: #{transformer_model_forward.3} parent=31 // pred_fallthru
          _
      $region32: #{transformer_model_forward.3} parent=5 // pred_fallthru
        _
      %p893 = scmp.le.s32.totalorder 1, %s37
      %p894 = scmp.lt.s32.totalorder %s37, 7
      %p895 = pnand %p893, %p894
      %p896 = pneg %p895
      // Predicated region
      $region113: #{transformer_model_forward.3} parent=5 // pred_check
        _
      $region114: #{transformer_model_forward.3} parent=5 // pred_check_branch
        %898 = sbr.rel (%p895) target = $region116
      $region115: #{transformer_model_forward.3} parent=5 // pred_region
        %s899 = ssub.s32 %s37, 1
        %s900 = sand.u32 %s270, 1
        %s901 = scalar_lea.sflag [#allocation3], %s900
        %s902 = sand.u32 %s270, 1
        %s903 = smul.addr %s902, 64
        %s904 = scalar_lea.vmem [#allocation2], %s903
        // Predicated region
        $region117: #{transformer_model_forward.3} parent=115 // pred_check
          %p905 = pneg %p283
        $region118: #{transformer_model_forward.3} parent=115 // pred_check_branch
          %907 = sbr.rel (%p905) target = $region120
        $region119: #{transformer_model_forward.3} parent=115 // pred_region
          %908 = dma.done %s901, 1024
        $region120: #{transformer_model_forward.3} parent=115 // pred_fallthru
          _
        %s909 = sand.u32 %s374, 1
        %s910 = scalar_lea.sflag [#allocation6], %s909
        %s911 = sand.u32 %s374, 1
        %s912 = smul.addr %s911, 64
        %s913 = scalar_lea.vmem [#allocation5], %s912
        // Predicated region
        $region121: #{transformer_model_forward.3} parent=115 // pred_check
          %p914 = pneg %p387
        $region122: #{transformer_model_forward.3} parent=115 // pred_check_branch
          %916 = sbr.rel (%p914) target = $region124
        $region123: #{transformer_model_forward.3} parent=115 // pred_region
          %917 = dma.done %s910, 1024
        $region124: #{transformer_model_forward.3} parent=115 // pred_fallthru
          _
        %s918 = smul.u32 2, %s46
        %p919 = scmp.lt.s32.totalorder %s918, 1
        %s920 = scalar_select %p919, %s918, 1
        %s921 = scalar_lea.vmem %s0, %s920
        %p922 = pneg %p75
        %p923 = pneg %p72
        %s924 = smul.u32 2, %s46
        %p925 = scmp.lt.s32.totalorder %s924, 1
        %s926 = scalar_select %p925, %s924, 1
        %s927 = smul.addr %s926, 4
        %s928 = scalar_lea.vmem %s1, %s927
        %p929 = pneg %p101
        %p930 = pneg %p98
        %p931 = scmp.lt.s32.totalorder %s47, 5
        %s932 = scalar_select %p931, %s47, 5
        %s933 = smul.addr %s932, 16
        %s934 = smul.addr %s933, 4
        %s935 = scalar_lea.vmem %s2, %s934
        %p936 = pneg %p127
        %p937 = pneg %p124
        %p938 = scmp.lt.s32.totalorder %s47, 5
        %s939 = scalar_select %p938, %s47, 5
        %s940 = scalar_lea.vmem %s3, %s939
        %p941 = pneg %p153
        %p942 = pneg %p150
        %p943 = scmp.lt.s32.totalorder %s47, 5
        %s944 = scalar_select %p943, %s47, 5
        %s945 = smul.addr %s944, 16
        %s946 = smul.addr %s945, 4
        %s947 = scalar_lea.vmem %s4, %s946
        %p948 = pneg %p179
        %p949 = pneg %p176
        %p950 = scmp.lt.s32.totalorder %s47, 5
        %s951 = scalar_select %p950, %s47, 5
        %s952 = scalar_lea.vmem %s5, %s951
        %p953 = pneg %p205
        %p954 = pneg %p202
        %p955 = scmp.lt.s32.totalorder %s47, 5
        %s956 = scalar_select %p955, %s47, 5
        %s957 = scalar_lea.vmem %s6, %s956
        %p958 = pneg %p231
        %p959 = pneg %p228
        %p960 = scmp.lt.s32.totalorder %s47, 5
        %s961 = scalar_select %p960, %s47, 5
        %s962 = scalar_lea.vmem %s7, %s961
        %p963 = pneg %p257
        %p964 = pneg %p254
        %s965 = sand.u32 %s270, 1
        %s966 = scalar_lea.sflag [#allocation3], %s965
        %s967 = sand.u32 %s270, 1
        %s968 = smul.addr %s967, 64
        %s969 = scalar_lea.vmem [#allocation2], %s968
        %p970 = pneg %p283
        %p971 = pneg %p280
        %p972 = scmp.lt.s32.totalorder %s47, 5
        %s973 = scalar_select %p972, %s47, 5
        %s974 = scalar_lea.vmem %s9, %s973
        %p975 = pneg %p309
        %p976 = pneg %p306
        %p977 = scmp.lt.s32.totalorder %s47, 5
        %s978 = scalar_select %p977, %s47, 5
        %s979 = smul.addr %s978, 32
        %s980 = smul.addr %s979, 4
        %s981 = scalar_lea.vmem %s10, %s980
        %p982 = pneg %p335
        %p983 = pneg %p332
        %p984 = scmp.lt.s32.totalorder %s47, 5
        %s985 = scalar_select %p984, %s47, 5
        %s986 = smul.addr %s985, 2
        %s987 = scalar_lea.vmem %s11, %s986
        %p988 = pneg %p361
        %p989 = pneg %p358
        %s990 = sand.u32 %s374, 1
        %s991 = scalar_lea.sflag [#allocation6], %s990
        %s992 = sand.u32 %s374, 1
        %s993 = smul.addr %s992, 64
        %s994 = scalar_lea.vmem [#allocation5], %s993
        %p995 = pneg %p387
        %p996 = pneg %p384
        %p997 = scmp.lt.s32.totalorder %s47, 5
        %s998 = scalar_select %p997, %s47, 5
        %s999 = scalar_lea.vmem %s13, %s998
        %p1000 = pneg %p413
        %p1001 = pneg %p410
        %p1002 = scmp.lt.s32.totalorder %s47, 5
        %s1003 = scalar_select %p1002, %s47, 5
        %s1004 = scalar_lea.vmem %s14, %s1003
        %p1005 = pneg %p439
        %p1006 = pneg %p436
        %p1007 = scmp.lt.s32.totalorder %s47, 5
        %s1008 = scalar_select %p1007, %s47, 5
        %s1009 = scalar_lea.vmem %s15, %s1008
        %p1010 = pneg %p465
        %p1011 = pneg %p462
        %p1012 = scmp.lt.s32.totalorder %s47, 5
        %s1013 = scalar_select %p1012, %s47, 5
        %s1014 = smul.addr %s1013, 256
        %s1015 = smul.addr %s1014, 4
        %s1016 = scalar_lea.vmem %s16, %s1015
        %p1017 = pneg %p491
        %p1018 = pneg %p488
        %p1019 = scmp.lt.s32.totalorder %s47, 5
        %s1020 = scalar_select %p1019, %s47, 5
        %s1021 = smul.addr %s1020, 16
        %s1022 = scalar_lea.vmem %s17, %s1021
        %p1023 = pneg %p517
        %p1024 = pneg %p514
        %p1025 = scmp.lt.s32.totalorder %s47, 5
        %s1026 = scalar_select %p1025, %s47, 5
        %s1027 = smul.addr %s1026, 256
        %s1028 = smul.addr %s1027, 4
        %s1029 = scalar_lea.vmem %s18, %s1028
        %p1030 = pneg %p543
        %p1031 = pneg %p540
        %p1032 = scmp.lt.s32.totalorder %s47, 5
        %s1033 = scalar_select %p1032, %s47, 5
        %s1034 = scalar_lea.vmem %s19, %s1033
        %p1035 = pneg %p569
        %p1036 = pneg %p566
        %p1037 = scmp.lt.s32.totalorder %s47, 5
        %s1038 = scalar_select %p1037, %s47, 5
        %s1039 = scalar_lea.vmem %s20, %s1038
        %p1040 = pneg %p595
        %p1041 = pneg %p592
        %p1042 = scmp.lt.s32.totalorder %s47, 5
        %s1043 = scalar_select %p1042, %s47, 5
        %s1044 = scalar_lea.vmem %s21, %s1043
        %p1045 = pneg %p621
        %p1046 = pneg %p618
        %p1047 = pneg %p642
        %p1048 = pneg %p639
        %p1049 = pneg %p663
        %p1050 = pneg %p660
        %p1051 = pneg %p689
        %p1052 = pneg %p686
        %s1053 = smul.u32 2, %s46
        %p1054 = scmp.lt.s32.totalorder %s1053, 1
        %s1055 = scalar_select %p1054, %s1053, 1
        %s1056 = scalar_lea.vmem %s0, %s1055
        %s1057 = smul.u32 2, %s46
        %s1058 = smul.u32 2, %s46
        %p1059 = scmp.lt.s32.totalorder %s1058, 1
        %s1060 = scalar_select %p1059, %s1058, 1
        %s1061 = smul.addr %s1060, 4
        %s1062 = scalar_lea.vmem %s1, %s1061
        %s1063 = smul.u32 2, %s46
        %p1064 = scmp.lt.s32.totalorder %s47, 5
        %s1065 = scalar_select %p1064, %s47, 5
        %s1066 = smul.addr %s1065, 16
        %s1067 = smul.addr %s1066, 4
        %s1068 = scalar_lea.vmem %s2, %s1067
        %p1069 = scmp.lt.s32.totalorder %s47, 5
        %s1070 = scalar_select %p1069, %s47, 5
        %s1071 = scalar_lea.vmem %s3, %s1070
        %p1072 = scmp.lt.s32.totalorder %s47, 5
        %s1073 = scalar_select %p1072, %s47, 5
        %s1074 = smul.addr %s1073, 16
        %s1075 = smul.addr %s1074, 4
        %s1076 = scalar_lea.vmem %s4, %s1075
        %p1077 = scmp.lt.s32.totalorder %s47, 5
        %s1078 = scalar_select %p1077, %s47, 5
        %s1079 = scalar_lea.vmem %s5, %s1078
        %p1080 = scmp.lt.s32.totalorder %s47, 5
        %s1081 = scalar_select %p1080, %s47, 5
        %s1082 = scalar_lea.vmem %s6, %s1081
        %p1083 = scmp.lt.s32.totalorder %s47, 5
        %s1084 = scalar_select %p1083, %s47, 5
        %s1085 = scalar_lea.vmem %s7, %s1084
        %p1086 = scmp.lt.s32.totalorder %s47, 5
        %s1087 = scalar_select %p1086, %s47, 5
        %s1088 = scalar_lea.vmem %s9, %s1087
        %p1089 = scmp.lt.s32.totalorder %s47, 5
        %s1090 = scalar_select %p1089, %s47, 5
        %s1091 = smul.addr %s1090, 32
        %s1092 = smul.addr %s1091, 4
        %s1093 = scalar_lea.vmem %s10, %s1092
        %p1094 = scmp.lt.s32.totalorder %s47, 5
        %s1095 = scalar_select %p1094, %s47, 5
        %s1096 = smul.addr %s1095, 2
        %s1097 = scalar_lea.vmem %s11, %s1096
        %p1098 = scmp.lt.s32.totalorder %s47, 5
        %s1099 = scalar_select %p1098, %s47, 5
        %s1100 = scalar_lea.vmem %s13, %s1099
        %p1101 = scmp.lt.s32.totalorder %s47, 5
        %s1102 = scalar_select %p1101, %s47, 5
        %s1103 = scalar_lea.vmem %s14, %s1102
        %p1104 = scmp.lt.s32.totalorder %s47, 5
        %s1105 = scalar_select %p1104, %s47, 5
        %s1106 = scalar_lea.vmem %s15, %s1105
        %p1107 = scmp.lt.s32.totalorder %s47, 5
        %s1108 = scalar_select %p1107, %s47, 5
        %s1109 = smul.addr %s1108, 256
        %s1110 = smul.addr %s1109, 4
        %s1111 = scalar_lea.vmem %s16, %s1110
        %p1112 = scmp.lt.s32.totalorder %s47, 5
        %s1113 = scalar_select %p1112, %s47, 5
        %s1114 = smul.addr %s1113, 16
        %s1115 = scalar_lea.vmem %s17, %s1114
        %p1116 = scmp.lt.s32.totalorder %s47, 5
        %s1117 = scalar_select %p1116, %s47, 5
        %s1118 = smul.addr %s1117, 256
        %s1119 = smul.addr %s1118, 4
        %s1120 = scalar_lea.vmem %s18, %s1119
        %p1121 = scmp.lt.s32.totalorder %s47, 5
        %s1122 = scalar_select %p1121, %s47, 5
        %s1123 = scalar_lea.vmem %s19, %s1122
        %p1124 = scmp.lt.s32.totalorder %s47, 5
        %s1125 = scalar_select %p1124, %s47, 5
        %s1126 = scalar_lea.vmem %s20, %s1125
        %p1127 = scmp.lt.s32.totalorder %s47, 5
        %s1128 = scalar_select %p1127, %s47, 5
        %s1129 = scalar_lea.vmem %s21, %s1128
        %s1130 = smul.u32 2, %s46
        %p1132 = scmp.eq.s32.totalorder %s47, 0
        // Predicated region
        $region125: #{transformer_model_forward.3} parent=115 // pred_check
          %p1133 = pneg %p1132
        $region126: #{transformer_model_forward.3} parent=115 // pred_check_branch
          %1135 = sbr.rel (%p1133) target = $region128
        $region127: #{transformer_model_forward.3} parent=115 // pred_region
          %v1136 = vld [vmem:[%s1056] sm:$0x1]
          %v1137 = vld [vmem:[%s1056 + $0x1] sm:$0x1]
          %1138 = vst [vmem:[#allocation7] sm:$0x1] %v1136
          %1139 = vst [vmem:[#allocation7 + $0x1] sm:$0x1] %v1137
        $region128: #{transformer_model_forward.3} parent=115 // pred_fallthru
          _
        %v1140 = vld [vmem:[#allocation7] sm:$0x1]
        %v1141 = vld [vmem:[#allocation7 + $0x1] sm:$0x1]
        %v1142 = vld [vmem:[%s1062] sm:$0xf]
        %v1143 = vld [vmem:[%s1062 + $0x4] sm:$0xf]
        %v1144 = vld [vmem:[%s1068] sm:$0xf]
        %v1145 = vld [vmem:[%s1068 + $0x4] sm:$0xf]
        %v1146 = vld [vmem:[%s1068 + $0x8] sm:$0xf]
        %v1147 = vld [vmem:[%s1068 + $0xc] sm:$0xf]
        %v1148 = vld [vmem:[%s1068 + $0x10] sm:$0xf]
        %v1149 = vld [vmem:[%s1068 + $0x14] sm:$0xf]
        %v1150 = vld [vmem:[%s1068 + $0x18] sm:$0xf]
        %v1151 = vld [vmem:[%s1068 + $0x1c] sm:$0xf]
        %v1152 = vld [vmem:[%s1068 + $0x20] sm:$0xf]
        %v1153 = vld [vmem:[%s1068 + $0x24] sm:$0xf]
        %v1154 = vld [vmem:[%s1068 + $0x28] sm:$0xf]
        %v1155 = vld [vmem:[%s1068 + $0x2c] sm:$0xf]
        %v1156 = vld [vmem:[%s1068 + $0x30] sm:$0xf]
        %v1157 = vld [vmem:[%s1068 + $0x34] sm:$0xf]
        %v1158 = vld [vmem:[%s1068 + $0x38] sm:$0xf]
        %v1159 = vld [vmem:[%s1068 + $0x3c] sm:$0xf]
        %v1160 = vld [vmem:[%s1071] sm:$0x1]
        %v1161 = vpack.c.bf16 %v1140, %v1140
        %v1162 = vpack.c.bf16 %v1141, %v1141
        %v1164 = vlaneseq
        %v1165 = vshrl.u32 %v1164, 7
        %v1166 = vsub.s32 0, %v1165
        %v1167 = vrot.slane %v1160, %v1166
        %v1171 = vunpack.c.l.b16 %v1161
        %v1172 = vunpack.c.l.b16 %v1162
        %v1173 = vrot.slane %v1172, 7
        %vm1174 = vcmask 1041409
        %v1175 = vsel %vm1174, %v1173, %v1171
        %v1176 = vpack.c.b16 %v1175, %v1175
        %v1194 = vunpack.c.l.b16 %v1144
        %v1195 = vunpack.c.l.b16 %v1145
        %v1196 = vunpack.c.l.b16 %v1146
        %v1197 = vunpack.c.l.b16 %v1147
        %v1198 = vunpack.c.l.b16 %v1148
        %v1199 = vunpack.c.l.b16 %v1149
        %v1200 = vunpack.c.l.b16 %v1150
        %v1201 = vunpack.c.l.b16 %v1151
        %v1202 = vunpack.c.l.b16 %v1152
        %v1203 = vunpack.c.l.b16 %v1153
        %v1204 = vunpack.c.l.b16 %v1154
        %v1205 = vunpack.c.l.b16 %v1155
        %v1206 = vunpack.c.l.b16 %v1156
        %v1207 = vunpack.c.l.b16 %v1157
        %v1208 = vunpack.c.l.b16 %v1158
        %v1209 = vunpack.c.l.b16 %v1159
        %v1210 = vpack.c.b16 %v1195, %v1194
        %v1211 = vpack.c.b16 %v1197, %v1196
        %v1212 = vpack.c.b16 %v1199, %v1198
        %v1213 = vpack.c.b16 %v1201, %v1200
        %v1214 = vpack.c.b16 %v1203, %v1202
        %v1215 = vpack.c.b16 %v1205, %v1204
        %v1216 = vpack.c.b16 %v1207, %v1206
        %v1217 = vpack.c.b16 %v1209, %v1208
        %1226 = vmatprep.subr.bf16.mxu0 0
        %1227 = vmatpush1.bf16.msra.mxu0 %v1210
        %1228 = vmatprep.subr.bf16.mxu0 0
        %1229 = vmatpush1.bf16.msra.mxu0 %v1211
        %1230 = vmatprep.subr.bf16.mxu0 0
        %1231 = vmatpush1.bf16.msra.mxu0 %v1212
        %1232 = vmatprep.subr.bf16.mxu0 0
        %1233 = vmatpush1.bf16.msra.mxu0 %v1213
        %1234 = vmatprep.subr.bf16.mxu0 0
        %1235 = vmatpush1.bf16.msra.mxu0 %v1214
        %1236 = vmatprep.subr.bf16.mxu0 0
        %1237 = vmatpush1.bf16.msra.mxu0 %v1215
        %1238 = vmatprep.subr.bf16.mxu0 0
        %1239 = vmatpush1.bf16.msra.mxu0 %v1216
        %1240 = vmatprep.subr.bf16.mxu0 0
        %1241 = vmatpush1.bf16.msra.mxu0 %v1217
        %1242 = vmatprep.subr.bf16.mxu0 0
        %1243 = vmatpush1.bf16.msra.mxu0 0
        %1244 = vmatprep.subr.bf16.mxu0 0
        %1245 = vmatpush1.bf16.msra.mxu0 0
        %1246 = vmatprep.subr.bf16.mxu0 0
        %1247 = vmatpush1.bf16.msra.mxu0 0
        %1248 = vmatprep.subr.bf16.mxu0 0
        %1249 = vmatpush1.bf16.msra.mxu0 0
        %1250 = vmatprep.subr.bf16.mxu0 0
        %1251 = vmatpush1.bf16.msra.mxu0 0
        %1252 = vmatprep.subr.bf16.mxu0 0
        %1253 = vmatpush1.bf16.msra.mxu0 0
        %1254 = vmatprep.subr.bf16.mxu0 0
        %1255 = vmatpush1.bf16.msra.mxu0 0
        %1256 = vmatprep.subr.bf16.mxu0 0
        %1257 = vmatpush1.bf16.msra.mxu0 0
        %1258 = vmatprep.mubr.bf16.mxu0 0
        %1259 = vmatmul.mubr.bf16.gmra.mrb[0].mxu0 %v1176
        %v1260 = vpop.f32.mrb[0].mxu0
        %v1261 = vadd.f32 %v1167, %v1260
        %v1262 = vpop.f32.mrb[0].mxu0
        %v1263 = vpop.f32.mrb[0].mxu0
        %v1264 = vpop.f32.mrb[0].mxu0
        %1265 = vdwg.mxu0
        %v1266 = vld [vmem:[%s1076] sm:$0xf]
        %v1267 = vld [vmem:[%s1076 + $0x4] sm:$0xf]
        %v1268 = vld [vmem:[%s1076 + $0x8] sm:$0xf]
        %v1269 = vld [vmem:[%s1076 + $0xc] sm:$0xf]
        %v1270 = vld [vmem:[%s1076 + $0x10] sm:$0xf]
        %v1271 = vld [vmem:[%s1076 + $0x14] sm:$0xf]
        %v1272 = vld [vmem:[%s1076 + $0x18] sm:$0xf]
        %v1273 = vld [vmem:[%s1076 + $0x1c] sm:$0xf]
        %v1274 = vld [vmem:[%s1076 + $0x20] sm:$0xf]
        %v1275 = vld [vmem:[%s1076 + $0x24] sm:$0xf]
        %v1276 = vld [vmem:[%s1076 + $0x28] sm:$0xf]
        %v1277 = vld [vmem:[%s1076 + $0x2c] sm:$0xf]
        %v1278 = vld [vmem:[%s1076 + $0x30] sm:$0xf]
        %v1279 = vld [vmem:[%s1076 + $0x34] sm:$0xf]
        %v1280 = vld [vmem:[%s1076 + $0x38] sm:$0xf]
        %v1281 = vld [vmem:[%s1076 + $0x3c] sm:$0xf]
        %v1282 = vld [vmem:[%s1079] sm:$0x1]
        %v1283 = vpack.c.bf16 %v1261, %v1261
        %v1285 = vlaneseq
        %v1286 = vshrl.u32 %v1285, 7
        %v1287 = vsub.s32 0, %v1286
        %v1288 = vrot.slane %v1282, %v1287
        %v1306 = vunpack.c.l.b16 %v1266
        %v1307 = vunpack.c.l.b16 %v1267
        %v1308 = vunpack.c.l.b16 %v1268
        %v1309 = vunpack.c.l.b16 %v1269
        %v1310 = vunpack.c.l.b16 %v1270
        %v1311 = vunpack.c.l.b16 %v1271
        %v1312 = vunpack.c.l.b16 %v1272
        %v1313 = vunpack.c.l.b16 %v1273
        %v1314 = vunpack.c.l.b16 %v1274
        %v1315 = vunpack.c.l.b16 %v1275
        %v1316 = vunpack.c.l.b16 %v1276
        %v1317 = vunpack.c.l.b16 %v1277
        %v1318 = vunpack.c.l.b16 %v1278
        %v1319 = vunpack.c.l.b16 %v1279
        %v1320 = vunpack.c.l.b16 %v1280
        %v1321 = vunpack.c.l.b16 %v1281
        %v1322 = vpack.c.b16 %v1307, %v1306
        %v1323 = vpack.c.b16 %v1309, %v1308
        %v1324 = vpack.c.b16 %v1311, %v1310
        %v1325 = vpack.c.b16 %v1313, %v1312
        %v1326 = vpack.c.b16 %v1315, %v1314
        %v1327 = vpack.c.b16 %v1317, %v1316
        %v1328 = vpack.c.b16 %v1319, %v1318
        %v1329 = vpack.c.b16 %v1321, %v1320
        %1338 = vmatprep.subr.bf16.mxu0 0
        %1339 = vmatpush1.bf16.msra.mxu0 %v1322
        %1340 = vmatprep.subr.bf16.mxu0 0
        %1341 = vmatpush1.bf16.msra.mxu0 %v1323
        %1342 = vmatprep.subr.bf16.mxu0 0
        %1343 = vmatpush1.bf16.msra.mxu0 %v1324
        %1344 = vmatprep.subr.bf16.mxu0 0
        %1345 = vmatpush1.bf16.msra.mxu0 %v1325
        %1346 = vmatprep.subr.bf16.mxu0 0
        %1347 = vmatpush1.bf16.msra.mxu0 %v1326
        %1348 = vmatprep.subr.bf16.mxu0 0
        %1349 = vmatpush1.bf16.msra.mxu0 %v1327
        %1350 = vmatprep.subr.bf16.mxu0 0
        %1351 = vmatpush1.bf16.msra.mxu0 %v1328
        %1352 = vmatprep.subr.bf16.mxu0 0
        %1353 = vmatpush1.bf16.msra.mxu0 %v1329
        %1354 = vmatprep.subr.bf16.mxu0 0
        %1355 = vmatpush1.bf16.msra.mxu0 0
        %1356 = vmatprep.subr.bf16.mxu0 0
        %1357 = vmatpush1.bf16.msra.mxu0 0
        %1358 = vmatprep.subr.bf16.mxu0 0
        %1359 = vmatpush1.bf16.msra.mxu0 0
        %1360 = vmatprep.subr.bf16.mxu0 0
        %1361 = vmatpush1.bf16.msra.mxu0 0
        %1362 = vmatprep.subr.bf16.mxu0 0
        %1363 = vmatpush1.bf16.msra.mxu0 0
        %1364 = vmatprep.subr.bf16.mxu0 0
        %1365 = vmatpush1.bf16.msra.mxu0 0
        %1366 = vmatprep.subr.bf16.mxu0 0
        %1367 = vmatpush1.bf16.msra.mxu0 0
        %1368 = vmatprep.subr.bf16.mxu0 0
        %1369 = vmatpush1.bf16.msra.mxu0 0
        %1370 = vmatprep.mubr.bf16.mxu0 0
        %1371 = vmatmul.mubr.bf16.gmra.mrb[0].mxu0 %v1283
        %v1372 = vpop.f32.mrb[0].mxu0
        %v1373 = vadd.f32 %v1288, %v1372
        %v1374 = vpop.f32.mrb[0].mxu0
        %v1375 = vpop.f32.mrb[0].mxu0
        %v1376 = vpop.f32.mrb[0].mxu0
        %1377 = vdwg.mxu0
        %v1380 = vunpack.c.l.s4 1966171168
        %v1381 = vunpack.c.0.s8 %v1380
        %v1382 = vlaneseq
        %v1383 = vshrl.u32 %v1382, 7
        %v1384 = vsub.s32 %v1381, %v1383
        %v1385 = vrot.slane %v1373, %v1384
        %v1386 = vcombine.high %v1385, %v1385
        %v1388 = vunpack.c.l.s4 1966171168
        %v1389 = vunpack.c.0.s8 %v1388
        %v1390 = vlaneseq
        %v1391 = vshrl.u32 %v1390, 7
        %v1392 = vsub.s32 %v1389, %v1391
        %v1393 = vrot.slane %v1385, %v1392
        %v1395 = vunpack.c.l.s4 1966171168
        %v1396 = vunpack.c.0.s8 %v1395
        %v1397 = vlaneseq
        %v1398 = vshrl.u32 %v1397, 7
        %v1399 = vsub.s32 %v1396, %v1398
        %v1400 = vrot.slane %v1386, %v1399
        %v1403 = vadd.f32 %v1140, %v1393
        %v1404 = vadd.f32 %v1141, %v1400
        %v1405 = vld [vmem:[%s1082] sm:$0x1]
        %v1406 = vld [vmem:[%s1085] sm:$0x1]
        %v1409 = vcombine.low %v1403, %v1404
        %v1411 = vunpack.c.l.s4 1966171168
        %v1412 = vunpack.c.0.s8 %v1411
        %v1413 = vlaneseq
        %v1414 = vshrl.u32 %v1413, 7
        %v1415 = vsub.s32 %v1412, %v1414
        %v1416 = vrot.slane %v1409, %v1415
        %v1418 = vunpack.c.l.s4 1966171168
        %v1419 = vunpack.c.0.s8 %v1418
        %v1420 = vlaneseq
        %v1421 = vshrl.u32 %v1420, 7
        %v1422 = vsub.s32 %v1419, %v1421
        %v1423 = vrot.slane %v1416, %v1422
        %vm1425 = vcmask 1041408
        %v1426 = vsel %vm1425, %v1423, 0.0
        %1427 = vadd.xlane.f32.xlu0 %v1426
        %v1428 = vpop.xlane.xlu0 %1427
        %v1429 = vmul.f32 %v1428, 0.03125
        %v1431 = vlaneseq
        %v1432 = vshrl.u32 %v1431, 7
        %v1433 = vsub.s32 0, %v1432
        %v1434 = vrot.slane %v1429, %v1433
        %v1435 = vlaneseq
        %v1436 = vshrl.u32 %v1435, 7
        %v1437 = vsub.s32 1, %v1436
        %v1438 = vrot.slane %v1429, %v1437
        %v1441 = vsub.f32 %v1403, %v1434
        %v1442 = vsub.f32 %v1404, %v1438
        %v1443 = vlaneseq
        %v1444 = vand.u32 %v1443, 127
        %vm1445 = vcmp.lt.s32.totalorder %v1444, 32
        %v1448 = vcombine.low %v1441, %v1442
        %v1450 = vunpack.c.l.s4 1966171168
        %v1451 = vunpack.c.0.s8 %v1450
        %v1452 = vlaneseq
        %v1453 = vshrl.u32 %v1452, 7
        %v1454 = vsub.s32 %v1451, %v1453
        %v1455 = vrot.slane %v1448, %v1454
        %v1457 = vunpack.c.l.s4 1966171168
        %v1458 = vunpack.c.0.s8 %v1457
        %v1459 = vlaneseq
        %v1460 = vshrl.u32 %v1459, 7
        %v1461 = vsub.s32 %v1458, %v1460
        %v1462 = vrot.slane %v1455, %v1461
        %v1464 = vsel %vm1445, %v1462, 0.0
        %v1465 = vmul.f32 %v1464, %v1464
        %v1466 = vsel %vm1425, %v1465, 0.0
        %1467 = vadd.xlane.f32.xlu0 %v1466
        %v1468 = vpop.xlane.xlu0 %1467
        %v1469 = vmul.f32 %v1468, 0.03125
        %v1470 = vadd.f32 %v1469, 1e-05
        %v1471 = vrsqrt.pop %v1470
        %v1472 = vmul.f32 %v1464, %v1471
        %v1474 = vlaneseq
        %v1475 = vshrl.u32 %v1474, 7
        %v1476 = vsub.s32 0, %v1475
        %v1477 = vrot.slane %v1405, %v1476
        %v1479 = vmul.f32 %v1472, %v1477
        %v1481 = vlaneseq
        %v1482 = vshrl.u32 %v1481, 7
        %v1483 = vsub.s32 0, %v1482
        %v1484 = vrot.slane %v1406, %v1483
        %v1486 = vadd.f32 %v1479, %v1484
        %v1487 = vld [vmem:[%s904] sm:$0xf]
        %v1488 = vld [vmem:[%s904 + $0x4] sm:$0xf]
        %v1489 = vld [vmem:[%s904 + $0x8] sm:$0xf]
        %v1490 = vld [vmem:[%s904 + $0xc] sm:$0xf]
        %v1491 = vld [vmem:[%s904 + $0x10] sm:$0xf]
        %v1492 = vld [vmem:[%s904 + $0x14] sm:$0xf]
        %v1493 = vld [vmem:[%s904 + $0x18] sm:$0xf]
        %v1494 = vld [vmem:[%s904 + $0x1c] sm:$0xf]
        %v1495 = vld [vmem:[%s904 + $0x20] sm:$0xf]
        %v1496 = vld [vmem:[%s904 + $0x24] sm:$0xf]
        %v1497 = vld [vmem:[%s904 + $0x28] sm:$0xf]
        %v1498 = vld [vmem:[%s904 + $0x2c] sm:$0xf]
        %v1499 = vld [vmem:[%s904 + $0x30] sm:$0xf]
        %v1500 = vld [vmem:[%s904 + $0x34] sm:$0xf]
        %v1501 = vld [vmem:[%s904 + $0x38] sm:$0xf]
        %v1502 = vld [vmem:[%s904 + $0x3c] sm:$0xf]
        %v1503 = vld [vmem:[%s1088] sm:$0x1]
        %v1504 = vpack.c.bf16 %v1486, %v1486
        %v1506 = vlaneseq
        %v1507 = vshrl.u32 %v1506, 7
        %v1508 = vsub.s32 0, %v1507
        %v1509 = vrot.slane %v1503, %v1508
        %v1527 = vunpack.c.l.b16 %v1487
        %v1528 = vunpack.c.l.b16 %v1488
        %v1529 = vunpack.c.l.b16 %v1489
        %v1530 = vunpack.c.l.b16 %v1490
        %v1531 = vunpack.c.l.b16 %v1491
        %v1532 = vunpack.c.l.b16 %v1492
        %v1533 = vunpack.c.l.b16 %v1493
        %v1534 = vunpack.c.l.b16 %v1494
        %v1535 = vunpack.c.l.b16 %v1495
        %v1536 = vunpack.c.l.b16 %v1496
        %v1537 = vunpack.c.l.b16 %v1497
        %v1538 = vunpack.c.l.b16 %v1498
        %v1539 = vunpack.c.l.b16 %v1499
        %v1540 = vunpack.c.l.b16 %v1500
        %v1541 = vunpack.c.l.b16 %v1501
        %v1542 = vunpack.c.l.b16 %v1502
        %v1543 = vpack.c.b16 %v1528, %v1527
        %v1544 = vpack.c.b16 %v1530, %v1529
        %v1545 = vpack.c.b16 %v1532, %v1531
        %v1546 = vpack.c.b16 %v1534, %v1533
        %v1547 = vpack.c.b16 %v1536, %v1535
        %v1548 = vpack.c.b16 %v1538, %v1537
        %v1549 = vpack.c.b16 %v1540, %v1539
        %v1550 = vpack.c.b16 %v1542, %v1541
        %1559 = vmatprep.subr.bf16.mxu0 0
        %1560 = vmatpush1.bf16.msra.mxu0 %v1543
        %1561 = vmatprep.subr.bf16.mxu0 0
        %1562 = vmatpush1.bf16.msra.mxu0 %v1544
        %1563 = vmatprep.subr.bf16.mxu0 0
        %1564 = vmatpush1.bf16.msra.mxu0 %v1545
        %1565 = vmatprep.subr.bf16.mxu0 0
        %1566 = vmatpush1.bf16.msra.mxu0 %v1546
        %1567 = vmatprep.subr.bf16.mxu0 0
        %1568 = vmatpush1.bf16.msra.mxu0 %v1547
        %1569 = vmatprep.subr.bf16.mxu0 0
        %1570 = vmatpush1.bf16.msra.mxu0 %v1548
        %1571 = vmatprep.subr.bf16.mxu0 0
        %1572 = vmatpush1.bf16.msra.mxu0 %v1549
        %1573 = vmatprep.subr.bf16.mxu0 0
        %1574 = vmatpush1.bf16.msra.mxu0 %v1550
        %1575 = vmatprep.subr.bf16.mxu0 0
        %1576 = vmatpush1.bf16.msra.mxu0 0
        %1577 = vmatprep.subr.bf16.mxu0 0
        %1578 = vmatpush1.bf16.msra.mxu0 0
        %1579 = vmatprep.subr.bf16.mxu0 0
        %1580 = vmatpush1.bf16.msra.mxu0 0
        %1581 = vmatprep.subr.bf16.mxu0 0
        %1582 = vmatpush1.bf16.msra.mxu0 0
        %1583 = vmatprep.subr.bf16.mxu0 0
        %1584 = vmatpush1.bf16.msra.mxu0 0
        %1585 = vmatprep.subr.bf16.mxu0 0
        %1586 = vmatpush1.bf16.msra.mxu0 0
        %1587 = vmatprep.subr.bf16.mxu0 0
        %1588 = vmatpush1.bf16.msra.mxu0 0
        %1589 = vmatprep.subr.bf16.mxu0 0
        %1590 = vmatpush1.bf16.msra.mxu0 0
        %1591 = vmatprep.mubr.bf16.mxu0 0
        %1592 = vmatmul.mubr.bf16.gmra.mrb[0].mxu0 %v1504
        %v1593 = vpop.f32.mrb[0].mxu0
        %v1594 = vadd.f32 %v1509, %v1593
        %v1595 = vpop.f32.mrb[0].mxu0
        %v1596 = vpop.f32.mrb[0].mxu0
        %v1597 = vpop.f32.mrb[0].mxu0
        %1598 = vdwg.mxu0
        %v1601 = vunpack.c.l.s4 1966171168
        %v1602 = vunpack.c.0.s8 %v1601
        %v1603 = vlaneseq
        %v1604 = vshrl.u32 %v1603, 7
        %v1605 = vsub.s32 %v1602, %v1604
        %v1606 = vrot.slane %v1594, %v1605
        %v1607 = vcombine.high %v1606, %v1606
        %v1609 = vunpack.c.l.s4 1966171168
        %v1610 = vunpack.c.0.s8 %v1609
        %v1611 = vlaneseq
        %v1612 = vshrl.u32 %v1611, 7
        %v1613 = vsub.s32 %v1610, %v1612
        %v1614 = vrot.slane %v1606, %v1613
        %v1616 = vunpack.c.l.s4 1966171168
        %v1617 = vunpack.c.0.s8 %v1616
        %v1618 = vlaneseq
        %v1619 = vshrl.u32 %v1618, 7
        %v1620 = vsub.s32 %v1617, %v1619
        %v1621 = vrot.slane %v1607, %v1620
        %v1624 = vld [vmem:[%s1093] sm:$0xff]
        %v1625 = vld [vmem:[%s1093 + $0x8] sm:$0xff]
        %v1626 = vld [vmem:[%s1093 + $0x10] sm:$0xff]
        %v1627 = vld [vmem:[%s1093 + $0x18] sm:$0xff]
        %v1628 = vld [vmem:[%s1093 + $0x20] sm:$0xff]
        %v1629 = vld [vmem:[%s1093 + $0x28] sm:$0xff]
        %v1630 = vld [vmem:[%s1093 + $0x30] sm:$0xff]
        %v1631 = vld [vmem:[%s1093 + $0x38] sm:$0xff]
        %v1632 = vld [vmem:[%s1093 + $0x40] sm:$0xff]
        %v1633 = vld [vmem:[%s1093 + $0x48] sm:$0xff]
        %v1634 = vld [vmem:[%s1093 + $0x50] sm:$0xff]
        %v1635 = vld [vmem:[%s1093 + $0x58] sm:$0xff]
        %v1636 = vld [vmem:[%s1093 + $0x60] sm:$0xff]
        %v1637 = vld [vmem:[%s1093 + $0x68] sm:$0xff]
        %v1638 = vld [vmem:[%s1093 + $0x70] sm:$0xff]
        %v1639 = vld [vmem:[%s1093 + $0x78] sm:$0xff]
        %v1640 = vld [vmem:[%s1097] sm:$0x3]
        %v1643 = vcombine.low %v1142, %v1143
        %v1645 = vpack.c.bf16 %v1643, %v1643
        %v1647 = vlaneseq
        %v1648 = vshrl.u32 %v1647, 7
        %v1649 = vsub.s32 0, %v1648
        %v1650 = vrot.slane %v1640, %v1649
        %v1651 = vlaneseq
        %v1652 = vshrl.u32 %v1651, 7
        %v1653 = vsub.s32 1, %v1652
        %v1654 = vrot.slane %v1640, %v1653
        %v1673 = vunpack.c.l.b16 %v1624
        %v1674 = vunpack.c.h.b16 %v1624
        %v1675 = vunpack.c.l.b16 %v1625
        %v1676 = vunpack.c.h.b16 %v1625
        %v1677 = vunpack.c.l.b16 %v1626
        %v1678 = vunpack.c.h.b16 %v1626
        %v1679 = vunpack.c.l.b16 %v1627
        %v1680 = vunpack.c.h.b16 %v1627
        %v1681 = vunpack.c.l.b16 %v1628
        %v1682 = vunpack.c.h.b16 %v1628
        %v1683 = vunpack.c.l.b16 %v1629
        %v1684 = vunpack.c.h.b16 %v1629
        %v1685 = vunpack.c.l.b16 %v1630
        %v1686 = vunpack.c.h.b16 %v1630
        %v1687 = vunpack.c.l.b16 %v1631
        %v1688 = vunpack.c.h.b16 %v1631
        %v1689 = vunpack.c.l.b16 %v1632
        %v1690 = vunpack.c.h.b16 %v1632
        %v1691 = vunpack.c.l.b16 %v1633
        %v1692 = vunpack.c.h.b16 %v1633
        %v1693 = vunpack.c.l.b16 %v1634
        %v1694 = vunpack.c.h.b16 %v1634
        %v1695 = vunpack.c.l.b16 %v1635
        %v1696 = vunpack.c.h.b16 %v1635
        %v1697 = vunpack.c.l.b16 %v1636
        %v1698 = vunpack.c.h.b16 %v1636
        %v1699 = vunpack.c.l.b16 %v1637
        %v1700 = vunpack.c.h.b16 %v1637
        %v1701 = vunpack.c.l.b16 %v1638
        %v1702 = vunpack.c.h.b16 %v1638
        %v1703 = vunpack.c.l.b16 %v1639
        %v1704 = vunpack.c.h.b16 %v1639
        %v1705 = vpack.c.b16 %v1675, %v1673
        %v1706 = vpack.c.b16 %v1676, %v1674
        %v1707 = vpack.c.b16 %v1679, %v1677
        %v1708 = vpack.c.b16 %v1680, %v1678
        %v1709 = vpack.c.b16 %v1683, %v1681
        %v1710 = vpack.c.b16 %v1684, %v1682
        %v1711 = vpack.c.b16 %v1687, %v1685
        %v1712 = vpack.c.b16 %v1688, %v1686
        %v1713 = vpack.c.b16 %v1691, %v1689
        %v1714 = vpack.c.b16 %v1692, %v1690
        %v1715 = vpack.c.b16 %v1695, %v1693
        %v1716 = vpack.c.b16 %v1696, %v1694
        %v1717 = vpack.c.b16 %v1699, %v1697
        %v1718 = vpack.c.b16 %v1700, %v1698
        %v1719 = vpack.c.b16 %v1703, %v1701
        %v1720 = vpack.c.b16 %v1704, %v1702
        %1737 = vmatprep.subr.bf16.mxu0 %v1706
        %1738 = vmatpush1.bf16.msra.mxu0 %v1705
        %1739 = vmatprep.subr.bf16.mxu0 %v1708
        %1740 = vmatpush1.bf16.msra.mxu0 %v1707
        %1741 = vmatprep.subr.bf16.mxu0 %v1710
        %1742 = vmatpush1.bf16.msra.mxu0 %v1709
        %1743 = vmatprep.subr.bf16.mxu0 %v1712
        %1744 = vmatpush1.bf16.msra.mxu0 %v1711
        %1745 = vmatprep.subr.bf16.mxu0 %v1714
        %1746 = vmatpush1.bf16.msra.mxu0 %v1713
        %1747 = vmatprep.subr.bf16.mxu0 %v1716
        %1748 = vmatpush1.bf16.msra.mxu0 %v1715
        %1749 = vmatprep.subr.bf16.mxu0 %v1718
        %1750 = vmatpush1.bf16.msra.mxu0 %v1717
        %1751 = vmatprep.subr.bf16.mxu0 %v1720
        %1752 = vmatpush1.bf16.msra.mxu0 %v1719
        %1753 = vmatprep.subr.bf16.mxu0 0
        %1754 = vmatpush1.bf16.msra.mxu0 0
        %1755 = vmatprep.subr.bf16.mxu0 0
        %1756 = vmatpush1.bf16.msra.mxu0 0
        %1757 = vmatprep.subr.bf16.mxu0 0
        %1758 = vmatpush1.bf16.msra.mxu0 0
        %1759 = vmatprep.subr.bf16.mxu0 0
        %1760 = vmatpush1.bf16.msra.mxu0 0
        %1761 = vmatprep.subr.bf16.mxu0 0
        %1762 = vmatpush1.bf16.msra.mxu0 0
        %1763 = vmatprep.subr.bf16.mxu0 0
        %1764 = vmatpush1.bf16.msra.mxu0 0
        %1765 = vmatprep.subr.bf16.mxu0 0
        %1766 = vmatpush1.bf16.msra.mxu0 0
        %1767 = vmatprep.subr.bf16.mxu0 0
        %1768 = vmatpush1.bf16.msra.mxu0 0
        %1769 = vmatprep.mubr.bf16.mxu0 0
        %1770 = vmatmul.mubr.bf16.gmra.mrb[0].mxu0 %v1645
        %v1771 = vpop.f32.mrb[0].mxu0
        %v1772 = vadd.f32 %v1650, %v1771
        %v1773 = vpop.f32.mrb[0].mxu0
        %v1774 = vadd.f32 %v1654, %v1773
        %v1775 = vpop.f32.mrb[0].mxu0
        %v1776 = vpop.f32.mrb[0].mxu0
        %1777 = vdwg.mxu0
        %v1779 = vcombine.high %v1772, %v1772
        %v1782 = vcombine.high %v1774, %v1774
        %v1784 = vmul.f32 %v1614, 0.35355338
        %v1785 = vmul.f32 %v1621, 0.35355338
        %v1786 = vpack.c.bf16 %v1784, %v1784
        %v1787 = vpack.c.bf16 %v1785, %v1785
        %v1788 = vpack.c.bf16 %v1772, %v1772
        %v1789 = vpack.c.bf16 %v1779, %v1779
        %v1790 = vpack.c.bf16 %v1774, %v1774
        %v1791 = vpack.c.bf16 %v1782, %v1782
        %vm1792 = vcmask 64512
        %v1794 = vsel %vm1792, %v1786, 0
        %v1797 = vsel %vm1792, %v1788, 0
        %1799 = vmatprep.subr.bf16.mxu0 0
        %1800 = vmatpush1.bf16.xpose.msra.mxu0 %v1797
        %1801 = vmatprep.subr.bf16.mxu0 0
        %1802 = vmatpush1.bf16.xpose.msra.mxu0 0
        %1803 = vmatprep.subr.bf16.mxu0 0
        %1804 = vmatpush1.bf16.xpose.msra.mxu0 0
        %1805 = vmatprep.subr.bf16.mxu0 0
        %1806 = vmatpush1.bf16.xpose.msra.mxu0 0
        %1807 = vmatprep.subr.bf16.mxu0 0
        %1808 = vmatpush1.bf16.xpose.msra.mxu0 0
        %1809 = vmatprep.subr.bf16.mxu0 0
        %1810 = vmatpush1.bf16.xpose.msra.mxu0 0
        %1811 = vmatprep.subr.bf16.mxu0 0
        %1812 = vmatpush1.bf16.xpose.msra.mxu0 0
        %1813 = vmatprep.subr.bf16.mxu0 0
        %1814 = vmatpush1.bf16.xpose.msra.mxu0 0
        %1815 = vmatprep.subr.bf16.mxu0 0
        %1816 = vmatpush1.bf16.xpose.msra.mxu0 0
        %1817 = vmatprep.subr.bf16.mxu0 0
        %1818 = vmatpush1.bf16.xpose.msra.mxu0 0
        %1819 = vmatprep.subr.bf16.mxu0 0
        %1820 = vmatpush1.bf16.xpose.msra.mxu0 0
        %1821 = vmatprep.subr.bf16.mxu0 0
        %1822 = vmatpush1.bf16.xpose.msra.mxu0 0
        %1823 = vmatprep.subr.bf16.mxu0 0
        %1824 = vmatpush1.bf16.xpose.msra.mxu0 0
        %1825 = vmatprep.subr.bf16.mxu0 0
        %1826 = vmatpush1.bf16.xpose.msra.mxu0 0
        %1827 = vmatprep.subr.bf16.mxu0 0
        %1828 = vmatpush1.bf16.xpose.msra.mxu0 0
        %1829 = vmatprep.subr.bf16.mxu0 0
        %1830 = vmatpush1.bf16.xpose.msra.mxu0 0
        %1831 = vmatprep.mubr.bf16.mxu0 0
        %1832 = vmatmul.mubr.bf16.gmra.mrb[0].mxu0 %v1794
        %v1833 = vpop.f32.mrb[0].mxu0
        %v1834 = vadd.f32 0.0, %v1833
        %v1835 = vpop.f32.mrb[0].mxu0
        %v1836 = vpop.f32.mrb[0].mxu0
        %v1837 = vpop.f32.mrb[0].mxu0
        %1838 = vdwg.mxu0
        %v1840 = vsel %vm1792, %v1787, 0
        %v1843 = vsel %vm1792, %v1789, 0
        %1845 = vmatprep.subr.bf16.mxu0 0
        %1846 = vmatpush1.bf16.xpose.msra.mxu0 %v1843
        %1847 = vmatprep.subr.bf16.mxu0 0
        %1848 = vmatpush1.bf16.xpose.msra.mxu0 0
        %1849 = vmatprep.subr.bf16.mxu0 0
        %1850 = vmatpush1.bf16.xpose.msra.mxu0 0
        %1851 = vmatprep.subr.bf16.mxu0 0
        %1852 = vmatpush1.bf16.xpose.msra.mxu0 0
        %1853 = vmatprep.subr.bf16.mxu0 0
        %1854 = vmatpush1.bf16.xpose.msra.mxu0 0
        %1855 = vmatprep.subr.bf16.mxu0 0
        %1856 = vmatpush1.bf16.xpose.msra.mxu0 0
        %1857 = vmatprep.subr.bf16.mxu0 0
        %1858 = vmatpush1.bf16.xpose.msra.mxu0 0
        %1859 = vmatprep.subr.bf16.mxu0 0
        %1860 = vmatpush1.bf16.xpose.msra.mxu0 0
        %1861 = vmatprep.subr.bf16.mxu0 0
        %1862 = vmatpush1.bf16.xpose.msra.mxu0 0
        %1863 = vmatprep.subr.bf16.mxu0 0
        %1864 = vmatpush1.bf16.xpose.msra.mxu0 0
        %1865 = vmatprep.subr.bf16.mxu0 0
        %1866 = vmatpush1.bf16.xpose.msra.mxu0 0
        %1867 = vmatprep.subr.bf16.mxu0 0
        %1868 = vmatpush1.bf16.xpose.msra.mxu0 0
        %1869 = vmatprep.subr.bf16.mxu0 0
        %1870 = vmatpush1.bf16.xpose.msra.mxu0 0
        %1871 = vmatprep.subr.bf16.mxu0 0
        %1872 = vmatpush1.bf16.xpose.msra.mxu0 0
        %1873 = vmatprep.subr.bf16.mxu0 0
        %1874 = vmatpush1.bf16.xpose.msra.mxu0 0
        %1875 = vmatprep.subr.bf16.mxu0 0
        %1876 = vmatpush1.bf16.xpose.msra.mxu0 0
        %1877 = vmatprep.mubr.bf16.mxu0 0
        %1878 = vmatmul.mubr.bf16.gmra.mrb[0].mxu0 %v1840
        %v1879 = vpop.f32.mrb[0].mxu0
        %v1880 = vadd.f32 0.0, %v1879
        %v1881 = vpop.f32.mrb[0].mxu0
        %v1882 = vpop.f32.mrb[0].mxu0
        %v1883 = vpop.f32.mrb[0].mxu0
        %1884 = vdwg.mxu0
        %vm1885 = vcmask 24576
        %v1886 = vsel %vm1885, %v1834, -inf
        %1887 = vmax.xlane.f32.xlu0 %v1886
        %v1888 = vpop.xlane.xlu0 %1887
        %v1889 = vsel %vm1885, %v1880, -inf
        %1890 = vmax.xlane.f32.xlu0 %v1889
        %v1891 = vpop.xlane.xlu0 %1890
        %v1892 = vsub.f32 %v1834, %v1888
        %v1893 = vsub.f32 %v1880, %v1891
        %v1894 = vmul.f32 %v1892, 1.442695
        %v1895 = vpow.pop %v1894
        %v1896 = vmul.f32 %v1893, 1.442695
        %v1897 = vpow.pop %v1896
        %v1898 = vsel %vm1885, %v1895, 0.0
        %1899 = vadd.xlane.f32.xlu0 %v1898
        %v1900 = vpop.xlane.xlu0 %1899
        %v1901 = vsel %vm1885, %v1897, 0.0
        %1902 = vadd.xlane.f32.xlu0 %v1901
        %v1903 = vpop.xlane.xlu0 %1902
        %v1904 = vrcp.pop %v1900
        %v1905 = vmul.f32 %v1895, %v1904
        %v1906 = vrcp.pop %v1903
        %v1907 = vmul.f32 %v1897, %v1906
        %v1908 = vpack.c.bf16 %v1905, %v1905
        %v1909 = vpack.c.bf16 %v1907, %v1907
        %vm1910 = vcmask 31744
        %v1912 = vsel %vm1910, %v1908, 0
        %v1915 = vsel %vm1425, %v1790, 0
        %1917 = vmatprep.subr.bf16.mxu0 0
        %1918 = vmatpush1.bf16.msra.mxu0 %v1915
        %1919 = vmatprep.subr.bf16.mxu0 0
        %1920 = vmatpush1.bf16.msra.mxu0 0
        %1921 = vmatprep.subr.bf16.mxu0 0
        %1922 = vmatpush1.bf16.msra.mxu0 0
        %1923 = vmatprep.subr.bf16.mxu0 0
        %1924 = vmatpush1.bf16.msra.mxu0 0
        %1925 = vmatprep.subr.bf16.mxu0 0
        %1926 = vmatpush1.bf16.msra.mxu0 0
        %1927 = vmatprep.subr.bf16.mxu0 0
        %1928 = vmatpush1.bf16.msra.mxu0 0
        %1929 = vmatprep.subr.bf16.mxu0 0
        %1930 = vmatpush1.bf16.msra.mxu0 0
        %1931 = vmatprep.subr.bf16.mxu0 0
        %1932 = vmatpush1.bf16.msra.mxu0 0
        %1933 = vmatprep.subr.bf16.mxu0 0
        %1934 = vmatpush1.bf16.msra.mxu0 0
        %1935 = vmatprep.subr.bf16.mxu0 0
        %1936 = vmatpush1.bf16.msra.mxu0 0
        %1937 = vmatprep.subr.bf16.mxu0 0
        %1938 = vmatpush1.bf16.msra.mxu0 0
        %1939 = vmatprep.subr.bf16.mxu0 0
        %1940 = vmatpush1.bf16.msra.mxu0 0
        %1941 = vmatprep.subr.bf16.mxu0 0
        %1942 = vmatpush1.bf16.msra.mxu0 0
        %1943 = vmatprep.subr.bf16.mxu0 0
        %1944 = vmatpush1.bf16.msra.mxu0 0
        %1945 = vmatprep.subr.bf16.mxu0 0
        %1946 = vmatpush1.bf16.msra.mxu0 0
        %1947 = vmatprep.subr.bf16.mxu0 0
        %1948 = vmatpush1.bf16.msra.mxu0 0
        %1949 = vmatprep.mubr.bf16.mxu0 0
        %1950 = vmatmul.mubr.bf16.gmra.mrb[0].mxu0 %v1912
        %v1951 = vpop.f32.mrb[0].mxu0
        %v1952 = vadd.f32 0.0, %v1951
        %v1953 = vpop.f32.mrb[0].mxu0
        %v1954 = vpop.f32.mrb[0].mxu0
        %v1955 = vpop.f32.mrb[0].mxu0
        %1956 = vdwg.mxu0
        %v1958 = vsel %vm1910, %v1909, 0
        %v1961 = vsel %vm1425, %v1791, 0
        %1963 = vmatprep.subr.bf16.mxu0 0
        %1964 = vmatpush1.bf16.msra.mxu0 %v1961
        %1965 = vmatprep.subr.bf16.mxu0 0
        %1966 = vmatpush1.bf16.msra.mxu0 0
        %1967 = vmatprep.subr.bf16.mxu0 0
        %1968 = vmatpush1.bf16.msra.mxu0 0
        %1969 = vmatprep.subr.bf16.mxu0 0
        %1970 = vmatpush1.bf16.msra.mxu0 0
        %1971 = vmatprep.subr.bf16.mxu0 0
        %1972 = vmatpush1.bf16.msra.mxu0 0
        %1973 = vmatprep.subr.bf16.mxu0 0
        %1974 = vmatpush1.bf16.msra.mxu0 0
        %1975 = vmatprep.subr.bf16.mxu0 0
        %1976 = vmatpush1.bf16.msra.mxu0 0
        %1977 = vmatprep.subr.bf16.mxu0 0
        %1978 = vmatpush1.bf16.msra.mxu0 0
        %1979 = vmatprep.subr.bf16.mxu0 0
        %1980 = vmatpush1.bf16.msra.mxu0 0
        %1981 = vmatprep.subr.bf16.mxu0 0
        %1982 = vmatpush1.bf16.msra.mxu0 0
        %1983 = vmatprep.subr.bf16.mxu0 0
        %1984 = vmatpush1.bf16.msra.mxu0 0
        %1985 = vmatprep.subr.bf16.mxu0 0
        %1986 = vmatpush1.bf16.msra.mxu0 0
        %1987 = vmatprep.subr.bf16.mxu0 0
        %1988 = vmatpush1.bf16.msra.mxu0 0
        %1989 = vmatprep.subr.bf16.mxu0 0
        %1990 = vmatpush1.bf16.msra.mxu0 0
        %1991 = vmatprep.subr.bf16.mxu0 0
        %1992 = vmatpush1.bf16.msra.mxu0 0
        %1993 = vmatprep.subr.bf16.mxu0 0
        %1994 = vmatpush1.bf16.msra.mxu0 0
        %1995 = vmatprep.mubr.bf16.mxu0 0
        %1996 = vmatmul.mubr.bf16.gmra.mrb[0].mxu0 %v1958
        %v1997 = vpop.f32.mrb[0].mxu0
        %v1998 = vadd.f32 0.0, %v1997
        %v1999 = vpop.f32.mrb[0].mxu0
        %v2000 = vpop.f32.mrb[0].mxu0
        %v2001 = vpop.f32.mrb[0].mxu0
        %2002 = vdwg.mxu0
        %2004 = vrot.lane.b32.xlu0 %v1786, 120
        %v2005 = vpop.permute.xlu0 %2004
        %2007 = vrot.lane.b32.xlu0 %v1788, 120
        %v2008 = vpop.permute.xlu0 %2007
        %v2010 = vsel %vm1792, %v2005, 0
        %v2013 = vsel %vm1792, %v2008, 0
        %2015 = vmatprep.subr.bf16.mxu0 0
        %2016 = vmatpush1.bf16.xpose.msra.mxu0 %v2013
        %2017 = vmatprep.subr.bf16.mxu0 0
        %2018 = vmatpush1.bf16.xpose.msra.mxu0 0
        %2019 = vmatprep.subr.bf16.mxu0 0
        %2020 = vmatpush1.bf16.xpose.msra.mxu0 0
        %2021 = vmatprep.subr.bf16.mxu0 0
        %2022 = vmatpush1.bf16.xpose.msra.mxu0 0
        %2023 = vmatprep.subr.bf16.mxu0 0
        %2024 = vmatpush1.bf16.xpose.msra.mxu0 0
        %2025 = vmatprep.subr.bf16.mxu0 0
        %2026 = vmatpush1.bf16.xpose.msra.mxu0 0
        %2027 = vmatprep.subr.bf16.mxu0 0
        %2028 = vmatpush1.bf16.xpose.msra.mxu0 0
        %2029 = vmatprep.subr.bf16.mxu0 0
        %2030 = vmatpush1.bf16.xpose.msra.mxu0 0
        %2031 = vmatprep.subr.bf16.mxu0 0
        %2032 = vmatpush1.bf16.xpose.msra.mxu0 0
        %2033 = vmatprep.subr.bf16.mxu0 0
        %2034 = vmatpush1.bf16.xpose.msra.mxu0 0
        %2035 = vmatprep.subr.bf16.mxu0 0
        %2036 = vmatpush1.bf16.xpose.msra.mxu0 0
        %2037 = vmatprep.subr.bf16.mxu0 0
        %2038 = vmatpush1.bf16.xpose.msra.mxu0 0
        %2039 = vmatprep.subr.bf16.mxu0 0
        %2040 = vmatpush1.bf16.xpose.msra.mxu0 0
        %2041 = vmatprep.subr.bf16.mxu0 0
        %2042 = vmatpush1.bf16.xpose.msra.mxu0 0
        %2043 = vmatprep.subr.bf16.mxu0 0
        %2044 = vmatpush1.bf16.xpose.msra.mxu0 0
        %2045 = vmatprep.subr.bf16.mxu0 0
        %2046 = vmatpush1.bf16.xpose.msra.mxu0 0
        %2047 = vmatprep.mubr.bf16.mxu0 0
        %2048 = vmatmul.mubr.bf16.gmra.mrb[0].mxu0 %v2010
        %v2049 = vpop.f32.mrb[0].mxu0
        %v2050 = vadd.f32 0.0, %v2049
        %v2051 = vpop.f32.mrb[0].mxu0
        %v2052 = vpop.f32.mrb[0].mxu0
        %v2053 = vpop.f32.mrb[0].mxu0
        %2054 = vdwg.mxu0
        %2056 = vrot.lane.b32.xlu0 %v1787, 120
        %v2057 = vpop.permute.xlu0 %2056
        %2059 = vrot.lane.b32.xlu0 %v1789, 120
        %v2060 = vpop.permute.xlu0 %2059
        %v2062 = vsel %vm1792, %v2057, 0
        %v2065 = vsel %vm1792, %v2060, 0
        %2067 = vmatprep.subr.bf16.mxu0 0
        %2068 = vmatpush1.bf16.xpose.msra.mxu0 %v2065
        %2069 = vmatprep.subr.bf16.mxu0 0
        %2070 = vmatpush1.bf16.xpose.msra.mxu0 0
        %2071 = vmatprep.subr.bf16.mxu0 0
        %2072 = vmatpush1.bf16.xpose.msra.mxu0 0
        %2073 = vmatprep.subr.bf16.mxu0 0
        %2074 = vmatpush1.bf16.xpose.msra.mxu0 0
        %2075 = vmatprep.subr.bf16.mxu0 0
        %2076 = vmatpush1.bf16.xpose.msra.mxu0 0
        %2077 = vmatprep.subr.bf16.mxu0 0
        %2078 = vmatpush1.bf16.xpose.msra.mxu0 0
        %2079 = vmatprep.subr.bf16.mxu0 0
        %2080 = vmatpush1.bf16.xpose.msra.mxu0 0
        %2081 = vmatprep.subr.bf16.mxu0 0
        %2082 = vmatpush1.bf16.xpose.msra.mxu0 0
        %2083 = vmatprep.subr.bf16.mxu0 0
        %2084 = vmatpush1.bf16.xpose.msra.mxu0 0
        %2085 = vmatprep.subr.bf16.mxu0 0
        %2086 = vmatpush1.bf16.xpose.msra.mxu0 0
        %2087 = vmatprep.subr.bf16.mxu0 0
        %2088 = vmatpush1.bf16.xpose.msra.mxu0 0
        %2089 = vmatprep.subr.bf16.mxu0 0
        %2090 = vmatpush1.bf16.xpose.msra.mxu0 0
        %2091 = vmatprep.subr.bf16.mxu0 0
        %2092 = vmatpush1.bf16.xpose.msra.mxu0 0
        %2093 = vmatprep.subr.bf16.mxu0 0
        %2094 = vmatpush1.bf16.xpose.msra.mxu0 0
        %2095 = vmatprep.subr.bf16.mxu0 0
        %2096 = vmatpush1.bf16.xpose.msra.mxu0 0
        %2097 = vmatprep.subr.bf16.mxu0 0
        %2098 = vmatpush1.bf16.xpose.msra.mxu0 0
        %2099 = vmatprep.mubr.bf16.mxu0 0
        %2100 = vmatmul.mubr.bf16.gmra.mrb[0].mxu0 %v2062
        %v2101 = vpop.f32.mrb[0].mxu0
        %v2102 = vadd.f32 0.0, %v2101
        %v2103 = vpop.f32.mrb[0].mxu0
        %v2104 = vpop.f32.mrb[0].mxu0
        %v2105 = vpop.f32.mrb[0].mxu0
        %2106 = vdwg.mxu0
        %v2107 = vsel %vm1885, %v2050, -inf
        %2108 = vmax.xlane.f32.xlu0 %v2107
        %v2109 = vpop.xlane.xlu0 %2108
        %v2110 = vsel %vm1885, %v2102, -inf
        %2111 = vmax.xlane.f32.xlu0 %v2110
        %v2112 = vpop.xlane.xlu0 %2111
        %v2113 = vsub.f32 %v2050, %v2109
        %v2114 = vsub.f32 %v2102, %v2112
        %v2115 = vmul.f32 %v2113, 1.442695
        %v2116 = vpow.pop %v2115
        %v2117 = vmul.f32 %v2114, 1.442695
        %v2118 = vpow.pop %v2117
        %v2119 = vsel %vm1885, %v2116, 0.0
        %2120 = vadd.xlane.f32.xlu0 %v2119
        %v2121 = vpop.xlane.xlu0 %2120
        %v2122 = vsel %vm1885, %v2118, 0.0
        %2123 = vadd.xlane.f32.xlu0 %v2122
        %v2124 = vpop.xlane.xlu0 %2123
        %v2125 = vrcp.pop %v2121
        %v2126 = vmul.f32 %v2116, %v2125
        %v2127 = vrcp.pop %v2124
        %v2128 = vmul.f32 %v2118, %v2127
        %v2129 = vpack.c.bf16 %v2126, %v2126
        %v2130 = vpack.c.bf16 %v2128, %v2128
        %2132 = vrot.lane.b32.xlu0 %v1790, 120
        %v2133 = vpop.permute.xlu0 %2132
        %v2135 = vsel %vm1910, %v2129, 0
        %v2138 = vsel %vm1425, %v2133, 0
        %2140 = vmatprep.subr.bf16.mxu0 0
        %2141 = vmatpush1.bf16.msra.mxu0 %v2138
        %2142 = vmatprep.subr.bf16.mxu0 0
        %2143 = vmatpush1.bf16.msra.mxu0 0
        %2144 = vmatprep.subr.bf16.mxu0 0
        %2145 = vmatpush1.bf16.msra.mxu0 0
        %2146 = vmatprep.subr.bf16.mxu0 0
        %2147 = vmatpush1.bf16.msra.mxu0 0
        %2148 = vmatprep.subr.bf16.mxu0 0
        %2149 = vmatpush1.bf16.msra.mxu0 0
        %2150 = vmatprep.subr.bf16.mxu0 0
        %2151 = vmatpush1.bf16.msra.mxu0 0
        %2152 = vmatprep.subr.bf16.mxu0 0
        %2153 = vmatpush1.bf16.msra.mxu0 0
        %2154 = vmatprep.subr.bf16.mxu0 0
        %2155 = vmatpush1.bf16.msra.mxu0 0
        %2156 = vmatprep.subr.bf16.mxu0 0
        %2157 = vmatpush1.bf16.msra.mxu0 0
        %2158 = vmatprep.subr.bf16.mxu0 0
        %2159 = vmatpush1.bf16.msra.mxu0 0
        %2160 = vmatprep.subr.bf16.mxu0 0
        %2161 = vmatpush1.bf16.msra.mxu0 0
        %2162 = vmatprep.subr.bf16.mxu0 0
        %2163 = vmatpush1.bf16.msra.mxu0 0
        %2164 = vmatprep.subr.bf16.mxu0 0
        %2165 = vmatpush1.bf16.msra.mxu0 0
        %2166 = vmatprep.subr.bf16.mxu0 0
        %2167 = vmatpush1.bf16.msra.mxu0 0
        %2168 = vmatprep.subr.bf16.mxu0 0
        %2169 = vmatpush1.bf16.msra.mxu0 0
        %2170 = vmatprep.subr.bf16.mxu0 0
        %2171 = vmatpush1.bf16.msra.mxu0 0
        %2172 = vmatprep.mubr.bf16.mxu0 0
        %2173 = vmatmul.mubr.bf16.gmra.mrb[0].mxu0 %v2135
        %v2174 = vpop.f32.mrb[0].mxu0
        %v2175 = vadd.f32 0.0, %v2174
        %v2176 = vpop.f32.mrb[0].mxu0
        %v2177 = vpop.f32.mrb[0].mxu0
        %v2178 = vpop.f32.mrb[0].mxu0
        %2179 = vdwg.mxu0
        %2181 = vrot.lane.b32.xlu0 %v1791, 120
        %v2182 = vpop.permute.xlu0 %2181
        %v2184 = vsel %vm1910, %v2130, 0
        %v2187 = vsel %vm1425, %v2182, 0
        %2189 = vmatprep.subr.bf16.mxu0 0
        %2190 = vmatpush1.bf16.msra.mxu0 %v2187
        %2191 = vmatprep.subr.bf16.mxu0 0
        %2192 = vmatpush1.bf16.msra.mxu0 0
        %2193 = vmatprep.subr.bf16.mxu0 0
        %2194 = vmatpush1.bf16.msra.mxu0 0
        %2195 = vmatprep.subr.bf16.mxu0 0
        %2196 = vmatpush1.bf16.msra.mxu0 0
        %2197 = vmatprep.subr.bf16.mxu0 0
        %2198 = vmatpush1.bf16.msra.mxu0 0
        %2199 = vmatprep.subr.bf16.mxu0 0
        %2200 = vmatpush1.bf16.msra.mxu0 0
        %2201 = vmatprep.subr.bf16.mxu0 0
        %2202 = vmatpush1.bf16.msra.mxu0 0
        %2203 = vmatprep.subr.bf16.mxu0 0
        %2204 = vmatpush1.bf16.msra.mxu0 0
        %2205 = vmatprep.subr.bf16.mxu0 0
        %2206 = vmatpush1.bf16.msra.mxu0 0
        %2207 = vmatprep.subr.bf16.mxu0 0
        %2208 = vmatpush1.bf16.msra.mxu0 0
        %2209 = vmatprep.subr.bf16.mxu0 0
        %2210 = vmatpush1.bf16.msra.mxu0 0
        %2211 = vmatprep.subr.bf16.mxu0 0
        %2212 = vmatpush1.bf16.msra.mxu0 0
        %2213 = vmatprep.subr.bf16.mxu0 0
        %2214 = vmatpush1.bf16.msra.mxu0 0
        %2215 = vmatprep.subr.bf16.mxu0 0
        %2216 = vmatpush1.bf16.msra.mxu0 0
        %2217 = vmatprep.subr.bf16.mxu0 0
        %2218 = vmatpush1.bf16.msra.mxu0 0
        %2219 = vmatprep.subr.bf16.mxu0 0
        %2220 = vmatpush1.bf16.msra.mxu0 0
        %2221 = vmatprep.mubr.bf16.mxu0 0
        %2222 = vmatmul.mubr.bf16.gmra.mrb[0].mxu0 %v2184
        %v2223 = vpop.f32.mrb[0].mxu0
        %v2224 = vadd.f32 0.0, %v2223
        %v2225 = vpop.f32.mrb[0].mxu0
        %v2226 = vpop.f32.mrb[0].mxu0
        %v2227 = vpop.f32.mrb[0].mxu0
        %2228 = vdwg.mxu0
        %2229 = vrot.lane.b32.xlu0 %v1786, 112
        %v2230 = vpop.permute.xlu0 %2229
        %2231 = vrot.lane.b32.xlu0 %v1788, 112
        %v2232 = vpop.permute.xlu0 %2231
        %v2234 = vsel %vm1792, %v2230, 0
        %v2237 = vsel %vm1792, %v2232, 0
        %2239 = vmatprep.subr.bf16.mxu0 0
        %2240 = vmatpush1.bf16.xpose.msra.mxu0 %v2237
        %2241 = vmatprep.subr.bf16.mxu0 0
        %2242 = vmatpush1.bf16.xpose.msra.mxu0 0
        %2243 = vmatprep.subr.bf16.mxu0 0
        %2244 = vmatpush1.bf16.xpose.msra.mxu0 0
        %2245 = vmatprep.subr.bf16.mxu0 0
        %2246 = vmatpush1.bf16.xpose.msra.mxu0 0
        %2247 = vmatprep.subr.bf16.mxu0 0
        %2248 = vmatpush1.bf16.xpose.msra.mxu0 0
        %2249 = vmatprep.subr.bf16.mxu0 0
        %2250 = vmatpush1.bf16.xpose.msra.mxu0 0
        %2251 = vmatprep.subr.bf16.mxu0 0
        %2252 = vmatpush1.bf16.xpose.msra.mxu0 0
        %2253 = vmatprep.subr.bf16.mxu0 0
        %2254 = vmatpush1.bf16.xpose.msra.mxu0 0
        %2255 = vmatprep.subr.bf16.mxu0 0
        %2256 = vmatpush1.bf16.xpose.msra.mxu0 0
        %2257 = vmatprep.subr.bf16.mxu0 0
        %2258 = vmatpush1.bf16.xpose.msra.mxu0 0
        %2259 = vmatprep.subr.bf16.mxu0 0
        %2260 = vmatpush1.bf16.xpose.msra.mxu0 0
        %2261 = vmatprep.subr.bf16.mxu0 0
        %2262 = vmatpush1.bf16.xpose.msra.mxu0 0
        %2263 = vmatprep.subr.bf16.mxu0 0
        %2264 = vmatpush1.bf16.xpose.msra.mxu0 0
        %2265 = vmatprep.subr.bf16.mxu0 0
        %2266 = vmatpush1.bf16.xpose.msra.mxu0 0
        %2267 = vmatprep.subr.bf16.mxu0 0
        %2268 = vmatpush1.bf16.xpose.msra.mxu0 0
        %2269 = vmatprep.subr.bf16.mxu0 0
        %2270 = vmatpush1.bf16.xpose.msra.mxu0 0
        %2271 = vmatprep.mubr.bf16.mxu0 0
        %2272 = vmatmul.mubr.bf16.gmra.mrb[0].mxu0 %v2234
        %v2273 = vpop.f32.mrb[0].mxu0
        %v2274 = vadd.f32 0.0, %v2273
        %v2275 = vpop.f32.mrb[0].mxu0
        %v2276 = vpop.f32.mrb[0].mxu0
        %v2277 = vpop.f32.mrb[0].mxu0
        %2278 = vdwg.mxu0
        %2279 = vrot.lane.b32.xlu0 %v1787, 112
        %v2280 = vpop.permute.xlu0 %2279
        %2281 = vrot.lane.b32.xlu0 %v1789, 112
        %v2282 = vpop.permute.xlu0 %2281
        %v2284 = vsel %vm1792, %v2280, 0
        %v2287 = vsel %vm1792, %v2282, 0
        %2289 = vmatprep.subr.bf16.mxu0 0
        %2290 = vmatpush1.bf16.xpose.msra.mxu0 %v2287
        %2291 = vmatprep.subr.bf16.mxu0 0
        %2292 = vmatpush1.bf16.xpose.msra.mxu0 0
        %2293 = vmatprep.subr.bf16.mxu0 0
        %2294 = vmatpush1.bf16.xpose.msra.mxu0 0
        %2295 = vmatprep.subr.bf16.mxu0 0
        %2296 = vmatpush1.bf16.xpose.msra.mxu0 0
        %2297 = vmatprep.subr.bf16.mxu0 0
        %2298 = vmatpush1.bf16.xpose.msra.mxu0 0
        %2299 = vmatprep.subr.bf16.mxu0 0
        %2300 = vmatpush1.bf16.xpose.msra.mxu0 0
        %2301 = vmatprep.subr.bf16.mxu0 0
        %2302 = vmatpush1.bf16.xpose.msra.mxu0 0
        %2303 = vmatprep.subr.bf16.mxu0 0
        %2304 = vmatpush1.bf16.xpose.msra.mxu0 0
        %2305 = vmatprep.subr.bf16.mxu0 0
        %2306 = vmatpush1.bf16.xpose.msra.mxu0 0
        %2307 = vmatprep.subr.bf16.mxu0 0
        %2308 = vmatpush1.bf16.xpose.msra.mxu0 0
        %2309 = vmatprep.subr.bf16.mxu0 0
        %2310 = vmatpush1.bf16.xpose.msra.mxu0 0
        %2311 = vmatprep.subr.bf16.mxu0 0
        %2312 = vmatpush1.bf16.xpose.msra.mxu0 0
        %2313 = vmatprep.subr.bf16.mxu0 0
        %2314 = vmatpush1.bf16.xpose.msra.mxu0 0
        %2315 = vmatprep.subr.bf16.mxu0 0
        %2316 = vmatpush1.bf16.xpose.msra.mxu0 0
        %2317 = vmatprep.subr.bf16.mxu0 0
        %2318 = vmatpush1.bf16.xpose.msra.mxu0 0
        %2319 = vmatprep.subr.bf16.mxu0 0
        %2320 = vmatpush1.bf16.xpose.msra.mxu0 0
        %2321 = vmatprep.mubr.bf16.mxu0 0
        %2322 = vmatmul.mubr.bf16.gmra.mrb[0].mxu0 %v2284
        %v2323 = vpop.f32.mrb[0].mxu0
        %v2324 = vadd.f32 0.0, %v2323
        %v2325 = vpop.f32.mrb[0].mxu0
        %v2326 = vpop.f32.mrb[0].mxu0
        %v2327 = vpop.f32.mrb[0].mxu0
        %2328 = vdwg.mxu0
        %v2329 = vsel %vm1885, %v2274, -inf
        %2330 = vmax.xlane.f32.xlu0 %v2329
        %v2331 = vpop.xlane.xlu0 %2330
        %v2332 = vsel %vm1885, %v2324, -inf
        %2333 = vmax.xlane.f32.xlu0 %v2332
        %v2334 = vpop.xlane.xlu0 %2333
        %v2335 = vsub.f32 %v2274, %v2331
        %v2336 = vsub.f32 %v2324, %v2334
        %v2337 = vmul.f32 %v2335, 1.442695
        %v2338 = vpow.pop %v2337
        %v2339 = vmul.f32 %v2336, 1.442695
        %v2340 = vpow.pop %v2339
        %v2341 = vsel %vm1885, %v2338, 0.0
        %2342 = vadd.xlane.f32.xlu0 %v2341
        %v2343 = vpop.xlane.xlu0 %2342
        %v2344 = vsel %vm1885, %v2340, 0.0
        %2345 = vadd.xlane.f32.xlu0 %v2344
        %v2346 = vpop.xlane.xlu0 %2345
        %v2347 = vrcp.pop %v2343
        %v2348 = vmul.f32 %v2338, %v2347
        %v2349 = vrcp.pop %v2346
        %v2350 = vmul.f32 %v2340, %v2349
        %v2351 = vpack.c.bf16 %v2348, %v2348
        %v2352 = vpack.c.bf16 %v2350, %v2350
        %2353 = vrot.lane.b32.xlu0 %v1790, 112
        %v2354 = vpop.permute.xlu0 %2353
        %v2356 = vsel %vm1910, %v2351, 0
        %v2359 = vsel %vm1425, %v2354, 0
        %2361 = vmatprep.subr.bf16.mxu0 0
        %2362 = vmatpush1.bf16.msra.mxu0 %v2359
        %2363 = vmatprep.subr.bf16.mxu0 0
        %2364 = vmatpush1.bf16.msra.mxu0 0
        %2365 = vmatprep.subr.bf16.mxu0 0
        %2366 = vmatpush1.bf16.msra.mxu0 0
        %2367 = vmatprep.subr.bf16.mxu0 0
        %2368 = vmatpush1.bf16.msra.mxu0 0
        %2369 = vmatprep.subr.bf16.mxu0 0
        %2370 = vmatpush1.bf16.msra.mxu0 0
        %2371 = vmatprep.subr.bf16.mxu0 0
        %2372 = vmatpush1.bf16.msra.mxu0 0
        %2373 = vmatprep.subr.bf16.mxu0 0
        %2374 = vmatpush1.bf16.msra.mxu0 0
        %2375 = vmatprep.subr.bf16.mxu0 0
        %2376 = vmatpush1.bf16.msra.mxu0 0
        %2377 = vmatprep.subr.bf16.mxu0 0
        %2378 = vmatpush1.bf16.msra.mxu0 0
        %2379 = vmatprep.subr.bf16.mxu0 0
        %2380 = vmatpush1.bf16.msra.mxu0 0
        %2381 = vmatprep.subr.bf16.mxu0 0
        %2382 = vmatpush1.bf16.msra.mxu0 0
        %2383 = vmatprep.subr.bf16.mxu0 0
        %2384 = vmatpush1.bf16.msra.mxu0 0
        %2385 = vmatprep.subr.bf16.mxu0 0
        %2386 = vmatpush1.bf16.msra.mxu0 0
        %2387 = vmatprep.subr.bf16.mxu0 0
        %2388 = vmatpush1.bf16.msra.mxu0 0
        %2389 = vmatprep.subr.bf16.mxu0 0
        %2390 = vmatpush1.bf16.msra.mxu0 0
        %2391 = vmatprep.subr.bf16.mxu0 0
        %2392 = vmatpush1.bf16.msra.mxu0 0
        %2393 = vmatprep.mubr.bf16.mxu0 0
        %2394 = vmatmul.mubr.bf16.gmra.mrb[0].mxu0 %v2356
        %v2395 = vpop.f32.mrb[0].mxu0
        %v2396 = vadd.f32 0.0, %v2395
        %v2397 = vpop.f32.mrb[0].mxu0
        %v2398 = vpop.f32.mrb[0].mxu0
        %v2399 = vpop.f32.mrb[0].mxu0
        %2400 = vdwg.mxu0
        %2401 = vrot.lane.b32.xlu0 %v1791, 112
        %v2402 = vpop.permute.xlu0 %2401
        %v2404 = vsel %vm1910, %v2352, 0
        %v2407 = vsel %vm1425, %v2402, 0
        %2409 = vmatprep.subr.bf16.mxu0 0
        %2410 = vmatpush1.bf16.msra.mxu0 %v2407
        %2411 = vmatprep.subr.bf16.mxu0 0
        %2412 = vmatpush1.bf16.msra.mxu0 0
        %2413 = vmatprep.subr.bf16.mxu0 0
        %2414 = vmatpush1.bf16.msra.mxu0 0
        %2415 = vmatprep.subr.bf16.mxu0 0
        %2416 = vmatpush1.bf16.msra.mxu0 0
        %2417 = vmatprep.subr.bf16.mxu0 0
        %2418 = vmatpush1.bf16.msra.mxu0 0
        %2419 = vmatprep.subr.bf16.mxu0 0
        %2420 = vmatpush1.bf16.msra.mxu0 0
        %2421 = vmatprep.subr.bf16.mxu0 0
        %2422 = vmatpush1.bf16.msra.mxu0 0
        %2423 = vmatprep.subr.bf16.mxu0 0
        %2424 = vmatpush1.bf16.msra.mxu0 0
        %2425 = vmatprep.subr.bf16.mxu0 0
        %2426 = vmatpush1.bf16.msra.mxu0 0
        %2427 = vmatprep.subr.bf16.mxu0 0
        %2428 = vmatpush1.bf16.msra.mxu0 0
        %2429 = vmatprep.subr.bf16.mxu0 0
        %2430 = vmatpush1.bf16.msra.mxu0 0
        %2431 = vmatprep.subr.bf16.mxu0 0
        %2432 = vmatpush1.bf16.msra.mxu0 0
        %2433 = vmatprep.subr.bf16.mxu0 0
        %2434 = vmatpush1.bf16.msra.mxu0 0
        %2435 = vmatprep.subr.bf16.mxu0 0
        %2436 = vmatpush1.bf16.msra.mxu0 0
        %2437 = vmatprep.subr.bf16.mxu0 0
        %2438 = vmatpush1.bf16.msra.mxu0 0
        %2439 = vmatprep.subr.bf16.mxu0 0
        %2440 = vmatpush1.bf16.msra.mxu0 0
        %2441 = vmatprep.mubr.bf16.mxu0 0
        %2442 = vmatmul.mubr.bf16.gmra.mrb[0].mxu0 %v2404
        %v2443 = vpop.f32.mrb[0].mxu0
        %v2444 = vadd.f32 0.0, %v2443
        %v2445 = vpop.f32.mrb[0].mxu0
        %v2446 = vpop.f32.mrb[0].mxu0
        %v2447 = vpop.f32.mrb[0].mxu0
        %2448 = vdwg.mxu0
        %2449 = vrot.lane.b32.xlu0 %v1786, 104
        %v2450 = vpop.permute.xlu0 %2449
        %2451 = vrot.lane.b32.xlu0 %v1788, 104
        %v2452 = vpop.permute.xlu0 %2451
        %v2454 = vsel %vm1792, %v2450, 0
        %v2457 = vsel %vm1792, %v2452, 0
        %2459 = vmatprep.subr.bf16.mxu0 0
        %2460 = vmatpush1.bf16.xpose.msra.mxu0 %v2457
        %2461 = vmatprep.subr.bf16.mxu0 0
        %2462 = vmatpush1.bf16.xpose.msra.mxu0 0
        %2463 = vmatprep.subr.bf16.mxu0 0
        %2464 = vmatpush1.bf16.xpose.msra.mxu0 0
        %2465 = vmatprep.subr.bf16.mxu0 0
        %2466 = vmatpush1.bf16.xpose.msra.mxu0 0
        %2467 = vmatprep.subr.bf16.mxu0 0
        %2468 = vmatpush1.bf16.xpose.msra.mxu0 0
        %2469 = vmatprep.subr.bf16.mxu0 0
        %2470 = vmatpush1.bf16.xpose.msra.mxu0 0
        %2471 = vmatprep.subr.bf16.mxu0 0
        %2472 = vmatpush1.bf16.xpose.msra.mxu0 0
        %2473 = vmatprep.subr.bf16.mxu0 0
        %2474 = vmatpush1.bf16.xpose.msra.mxu0 0
        %2475 = vmatprep.subr.bf16.mxu0 0
        %2476 = vmatpush1.bf16.xpose.msra.mxu0 0
        %2477 = vmatprep.subr.bf16.mxu0 0
        %2478 = vmatpush1.bf16.xpose.msra.mxu0 0
        %2479 = vmatprep.subr.bf16.mxu0 0
        %2480 = vmatpush1.bf16.xpose.msra.mxu0 0
        %2481 = vmatprep.subr.bf16.mxu0 0
        %2482 = vmatpush1.bf16.xpose.msra.mxu0 0
        %2483 = vmatprep.subr.bf16.mxu0 0
        %2484 = vmatpush1.bf16.xpose.msra.mxu0 0
        %2485 = vmatprep.subr.bf16.mxu0 0
        %2486 = vmatpush1.bf16.xpose.msra.mxu0 0
        %2487 = vmatprep.subr.bf16.mxu0 0
        %2488 = vmatpush1.bf16.xpose.msra.mxu0 0
        %2489 = vmatprep.subr.bf16.mxu0 0
        %2490 = vmatpush1.bf16.xpose.msra.mxu0 0
        %2491 = vmatprep.mubr.bf16.mxu0 0
        %2492 = vmatmul.mubr.bf16.gmra.mrb[0].mxu0 %v2454
        %v2493 = vpop.f32.mrb[0].mxu0
        %v2494 = vadd.f32 0.0, %v2493
        %v2495 = vpop.f32.mrb[0].mxu0
        %v2496 = vpop.f32.mrb[0].mxu0
        %v2497 = vpop.f32.mrb[0].mxu0
        %2498 = vdwg.mxu0
        %2499 = vrot.lane.b32.xlu0 %v1787, 104
        %v2500 = vpop.permute.xlu0 %2499
        %2501 = vrot.lane.b32.xlu0 %v1789, 104
        %v2502 = vpop.permute.xlu0 %2501
        %v2504 = vsel %vm1792, %v2500, 0
        %v2507 = vsel %vm1792, %v2502, 0
        %2509 = vmatprep.subr.bf16.mxu0 0
        %2510 = vmatpush1.bf16.xpose.msra.mxu0 %v2507
        %2511 = vmatprep.subr.bf16.mxu0 0
        %2512 = vmatpush1.bf16.xpose.msra.mxu0 0
        %2513 = vmatprep.subr.bf16.mxu0 0
        %2514 = vmatpush1.bf16.xpose.msra.mxu0 0
        %2515 = vmatprep.subr.bf16.mxu0 0
        %2516 = vmatpush1.bf16.xpose.msra.mxu0 0
        %2517 = vmatprep.subr.bf16.mxu0 0
        %2518 = vmatpush1.bf16.xpose.msra.mxu0 0
        %2519 = vmatprep.subr.bf16.mxu0 0
        %2520 = vmatpush1.bf16.xpose.msra.mxu0 0
        %2521 = vmatprep.subr.bf16.mxu0 0
        %2522 = vmatpush1.bf16.xpose.msra.mxu0 0
        %2523 = vmatprep.subr.bf16.mxu0 0
        %2524 = vmatpush1.bf16.xpose.msra.mxu0 0
        %2525 = vmatprep.subr.bf16.mxu0 0
        %2526 = vmatpush1.bf16.xpose.msra.mxu0 0
        %2527 = vmatprep.subr.bf16.mxu0 0
        %2528 = vmatpush1.bf16.xpose.msra.mxu0 0
        %2529 = vmatprep.subr.bf16.mxu0 0
        %2530 = vmatpush1.bf16.xpose.msra.mxu0 0
        %2531 = vmatprep.subr.bf16.mxu0 0
        %2532 = vmatpush1.bf16.xpose.msra.mxu0 0
        %2533 = vmatprep.subr.bf16.mxu0 0
        %2534 = vmatpush1.bf16.xpose.msra.mxu0 0
        %2535 = vmatprep.subr.bf16.mxu0 0
        %2536 = vmatpush1.bf16.xpose.msra.mxu0 0
        %2537 = vmatprep.subr.bf16.mxu0 0
        %2538 = vmatpush1.bf16.xpose.msra.mxu0 0
        %2539 = vmatprep.subr.bf16.mxu0 0
        %2540 = vmatpush1.bf16.xpose.msra.mxu0 0
        %2541 = vmatprep.mubr.bf16.mxu0 0
        %2542 = vmatmul.mubr.bf16.gmra.mrb[0].mxu0 %v2504
        %v2543 = vpop.f32.mrb[0].mxu0
        %v2544 = vadd.f32 0.0, %v2543
        %v2545 = vpop.f32.mrb[0].mxu0
        %v2546 = vpop.f32.mrb[0].mxu0
        %v2547 = vpop.f32.mrb[0].mxu0
        %2548 = vdwg.mxu0
        %v2549 = vsel %vm1885, %v2494, -inf
        %2550 = vmax.xlane.f32.xlu0 %v2549
        %v2551 = vpop.xlane.xlu0 %2550
        %v2552 = vsel %vm1885, %v2544, -inf
        %2553 = vmax.xlane.f32.xlu0 %v2552
        %v2554 = vpop.xlane.xlu0 %2553
        %v2555 = vsub.f32 %v2494, %v2551
        %v2556 = vsub.f32 %v2544, %v2554
        %v2557 = vmul.f32 %v2555, 1.442695
        %v2558 = vpow.pop %v2557
        %v2559 = vmul.f32 %v2556, 1.442695
        %v2560 = vpow.pop %v2559
        %v2561 = vsel %vm1885, %v2558, 0.0
        %2562 = vadd.xlane.f32.xlu0 %v2561
        %v2563 = vpop.xlane.xlu0 %2562
        %v2564 = vsel %vm1885, %v2560, 0.0
        %2565 = vadd.xlane.f32.xlu0 %v2564
        %v2566 = vpop.xlane.xlu0 %2565
        %v2567 = vrcp.pop %v2563
        %v2568 = vmul.f32 %v2558, %v2567
        %v2569 = vrcp.pop %v2566
        %v2570 = vmul.f32 %v2560, %v2569
        %v2571 = vpack.c.bf16 %v2568, %v2568
        %v2572 = vpack.c.bf16 %v2570, %v2570
        %2573 = vrot.lane.b32.xlu0 %v1790, 104
        %v2574 = vpop.permute.xlu0 %2573
        %v2576 = vsel %vm1910, %v2571, 0
        %v2579 = vsel %vm1425, %v2574, 0
        %2581 = vmatprep.subr.bf16.mxu0 0
        %2582 = vmatpush1.bf16.msra.mxu0 %v2579
        %2583 = vmatprep.subr.bf16.mxu0 0
        %2584 = vmatpush1.bf16.msra.mxu0 0
        %2585 = vmatprep.subr.bf16.mxu0 0
        %2586 = vmatpush1.bf16.msra.mxu0 0
        %2587 = vmatprep.subr.bf16.mxu0 0
        %2588 = vmatpush1.bf16.msra.mxu0 0
        %2589 = vmatprep.subr.bf16.mxu0 0
        %2590 = vmatpush1.bf16.msra.mxu0 0
        %2591 = vmatprep.subr.bf16.mxu0 0
        %2592 = vmatpush1.bf16.msra.mxu0 0
        %2593 = vmatprep.subr.bf16.mxu0 0
        %2594 = vmatpush1.bf16.msra.mxu0 0
        %2595 = vmatprep.subr.bf16.mxu0 0
        %2596 = vmatpush1.bf16.msra.mxu0 0
        %2597 = vmatprep.subr.bf16.mxu0 0
        %2598 = vmatpush1.bf16.msra.mxu0 0
        %2599 = vmatprep.subr.bf16.mxu0 0
        %2600 = vmatpush1.bf16.msra.mxu0 0
        %2601 = vmatprep.subr.bf16.mxu0 0
        %2602 = vmatpush1.bf16.msra.mxu0 0
        %2603 = vmatprep.subr.bf16.mxu0 0
        %2604 = vmatpush1.bf16.msra.mxu0 0
        %2605 = vmatprep.subr.bf16.mxu0 0
        %2606 = vmatpush1.bf16.msra.mxu0 0
        %2607 = vmatprep.subr.bf16.mxu0 0
        %2608 = vmatpush1.bf16.msra.mxu0 0
        %2609 = vmatprep.subr.bf16.mxu0 0
        %2610 = vmatpush1.bf16.msra.mxu0 0
        %2611 = vmatprep.subr.bf16.mxu0 0
        %2612 = vmatpush1.bf16.msra.mxu0 0
        %2613 = vmatprep.mubr.bf16.mxu0 0
        %2614 = vmatmul.mubr.bf16.gmra.mrb[0].mxu0 %v2576
        %v2615 = vpop.f32.mrb[0].mxu0
        %v2616 = vadd.f32 0.0, %v2615
        %v2617 = vpop.f32.mrb[0].mxu0
        %v2618 = vpop.f32.mrb[0].mxu0
        %v2619 = vpop.f32.mrb[0].mxu0
        %2620 = vdwg.mxu0
        %2621 = vrot.lane.b32.xlu0 %v1791, 104
        %v2622 = vpop.permute.xlu0 %2621
        %v2624 = vsel %vm1910, %v2572, 0
        %v2627 = vsel %vm1425, %v2622, 0
        %2629 = vmatprep.subr.bf16.mxu0 0
        %2630 = vmatpush1.bf16.msra.mxu0 %v2627
        %2631 = vmatprep.subr.bf16.mxu0 0
        %2632 = vmatpush1.bf16.msra.mxu0 0
        %2633 = vmatprep.subr.bf16.mxu0 0
        %2634 = vmatpush1.bf16.msra.mxu0 0
        %2635 = vmatprep.subr.bf16.mxu0 0
        %2636 = vmatpush1.bf16.msra.mxu0 0
        %2637 = vmatprep.subr.bf16.mxu0 0
        %2638 = vmatpush1.bf16.msra.mxu0 0
        %2639 = vmatprep.subr.bf16.mxu0 0
        %2640 = vmatpush1.bf16.msra.mxu0 0
        %2641 = vmatprep.subr.bf16.mxu0 0
        %2642 = vmatpush1.bf16.msra.mxu0 0
        %2643 = vmatprep.subr.bf16.mxu0 0
        %2644 = vmatpush1.bf16.msra.mxu0 0
        %2645 = vmatprep.subr.bf16.mxu0 0
        %2646 = vmatpush1.bf16.msra.mxu0 0
        %2647 = vmatprep.subr.bf16.mxu0 0
        %2648 = vmatpush1.bf16.msra.mxu0 0
        %2649 = vmatprep.subr.bf16.mxu0 0
        %2650 = vmatpush1.bf16.msra.mxu0 0
        %2651 = vmatprep.subr.bf16.mxu0 0
        %2652 = vmatpush1.bf16.msra.mxu0 0
        %2653 = vmatprep.subr.bf16.mxu0 0
        %2654 = vmatpush1.bf16.msra.mxu0 0
        %2655 = vmatprep.subr.bf16.mxu0 0
        %2656 = vmatpush1.bf16.msra.mxu0 0
        %2657 = vmatprep.subr.bf16.mxu0 0
        %2658 = vmatpush1.bf16.msra.mxu0 0
        %2659 = vmatprep.subr.bf16.mxu0 0
        %2660 = vmatpush1.bf16.msra.mxu0 0
        %2661 = vmatprep.mubr.bf16.mxu0 0
        %2662 = vmatmul.mubr.bf16.gmra.mrb[0].mxu0 %v2624
        %v2663 = vpop.f32.mrb[0].mxu0
        %v2664 = vadd.f32 0.0, %v2663
        %v2665 = vpop.f32.mrb[0].mxu0
        %v2666 = vpop.f32.mrb[0].mxu0
        %v2667 = vpop.f32.mrb[0].mxu0
        %2668 = vdwg.mxu0
        %2671 = vrot.lane.b32.xlu0 %v2175, 8
        %v2672 = vpop.permute.xlu0 %2671
        %2673 = vrot.lane.b32.xlu0 %v2224, 8
        %v2674 = vpop.permute.xlu0 %2673
        %2679 = vrot.lane.b32.xlu0 %v2396, 16
        %v2680 = vpop.permute.xlu0 %2679
        %2681 = vrot.lane.b32.xlu0 %v2444, 16
        %v2682 = vpop.permute.xlu0 %2681
        %2687 = vrot.lane.b32.xlu0 %v2616, 24
        %v2688 = vpop.permute.xlu0 %2687
        %2689 = vrot.lane.b32.xlu0 %v2664, 24
        %v2690 = vpop.permute.xlu0 %2689
        %v2693 = vsel %vm1792, %v1952, %v2672
        %v2694 = vsel %vm1792, %v1998, %v2674
        %vm2695 = vcmask 130048
        %v2696 = vsel %vm2695, %v2693, %v2680
        %v2697 = vsel %vm2695, %v2694, %v2682
        %vm2698 = vcmask 195584
        %v2699 = vsel %vm2698, %v2696, %v2688
        %v2700 = vsel %vm2698, %v2697, %v2690
        %vm2701 = vcmask 261120
        %v2702 = vsel %vm2701, %v2699, 0.0
        %v2703 = vsel %vm2701, %v2700, 0.0
        %v2704 = vld [vmem:[%s913] sm:$0xf]
        %v2705 = vld [vmem:[%s913 + $0x4] sm:$0xf]
        %v2706 = vld [vmem:[%s913 + $0x8] sm:$0xf]
        %v2707 = vld [vmem:[%s913 + $0xc] sm:$0xf]
        %v2708 = vld [vmem:[%s913 + $0x10] sm:$0xf]
        %v2709 = vld [vmem:[%s913 + $0x14] sm:$0xf]
        %v2710 = vld [vmem:[%s913 + $0x18] sm:$0xf]
        %v2711 = vld [vmem:[%s913 + $0x1c] sm:$0xf]
        %v2712 = vld [vmem:[%s913 + $0x20] sm:$0xf]
        %v2713 = vld [vmem:[%s913 + $0x24] sm:$0xf]
        %v2714 = vld [vmem:[%s913 + $0x28] sm:$0xf]
        %v2715 = vld [vmem:[%s913 + $0x2c] sm:$0xf]
        %v2716 = vld [vmem:[%s913 + $0x30] sm:$0xf]
        %v2717 = vld [vmem:[%s913 + $0x34] sm:$0xf]
        %v2718 = vld [vmem:[%s913 + $0x38] sm:$0xf]
        %v2719 = vld [vmem:[%s913 + $0x3c] sm:$0xf]
        %v2720 = vld [vmem:[%s1100] sm:$0x1]
        %v2721 = vpack.c.bf16 %v2702, %v2702
        %v2722 = vpack.c.bf16 %v2703, %v2703
        %v2724 = vlaneseq
        %v2725 = vshrl.u32 %v2724, 7
        %v2726 = vsub.s32 0, %v2725
        %v2727 = vrot.slane %v2720, %v2726
        %v2731 = vunpack.c.l.b16 %v2721
        %v2732 = vunpack.c.l.b16 %v2722
        %v2733 = vrot.slane %v2732, 7
        %v2734 = vsel %vm1174, %v2733, %v2731
        %v2735 = vpack.c.b16 %v2734, %v2734
        %v2753 = vunpack.c.l.b16 %v2704
        %v2754 = vunpack.c.l.b16 %v2705
        %v2755 = vunpack.c.l.b16 %v2706
        %v2756 = vunpack.c.l.b16 %v2707
        %v2757 = vunpack.c.l.b16 %v2708
        %v2758 = vunpack.c.l.b16 %v2709
        %v2759 = vunpack.c.l.b16 %v2710
        %v2760 = vunpack.c.l.b16 %v2711
        %v2761 = vunpack.c.l.b16 %v2712
        %v2762 = vunpack.c.l.b16 %v2713
        %v2763 = vunpack.c.l.b16 %v2714
        %v2764 = vunpack.c.l.b16 %v2715
        %v2765 = vunpack.c.l.b16 %v2716
        %v2766 = vunpack.c.l.b16 %v2717
        %v2767 = vunpack.c.l.b16 %v2718
        %v2768 = vunpack.c.l.b16 %v2719
        %v2769 = vpack.c.b16 %v2754, %v2753
        %v2770 = vpack.c.b16 %v2756, %v2755
        %v2771 = vpack.c.b16 %v2758, %v2757
        %v2772 = vpack.c.b16 %v2760, %v2759
        %v2773 = vpack.c.b16 %v2762, %v2761
        %v2774 = vpack.c.b16 %v2764, %v2763
        %v2775 = vpack.c.b16 %v2766, %v2765
        %v2776 = vpack.c.b16 %v2768, %v2767
        %2785 = vmatprep.subr.bf16.mxu0 0
        %2786 = vmatpush1.bf16.msra.mxu0 %v2769
        %2787 = vmatprep.subr.bf16.mxu0 0
        %2788 = vmatpush1.bf16.msra.mxu0 %v2770
        %2789 = vmatprep.subr.bf16.mxu0 0
        %2790 = vmatpush1.bf16.msra.mxu0 %v2771
        %2791 = vmatprep.subr.bf16.mxu0 0
        %2792 = vmatpush1.bf16.msra.mxu0 %v2772
        %2793 = vmatprep.subr.bf16.mxu0 0
        %2794 = vmatpush1.bf16.msra.mxu0 %v2773
        %2795 = vmatprep.subr.bf16.mxu0 0
        %2796 = vmatpush1.bf16.msra.mxu0 %v2774
        %2797 = vmatprep.subr.bf16.mxu0 0
        %2798 = vmatpush1.bf16.msra.mxu0 %v2775
        %2799 = vmatprep.subr.bf16.mxu0 0
        %2800 = vmatpush1.bf16.msra.mxu0 %v2776
        %2801 = vmatprep.subr.bf16.mxu0 0
        %2802 = vmatpush1.bf16.msra.mxu0 0
        %2803 = vmatprep.subr.bf16.mxu0 0
        %2804 = vmatpush1.bf16.msra.mxu0 0
        %2805 = vmatprep.subr.bf16.mxu0 0
        %2806 = vmatpush1.bf16.msra.mxu0 0
        %2807 = vmatprep.subr.bf16.mxu0 0
        %2808 = vmatpush1.bf16.msra.mxu0 0
        %2809 = vmatprep.subr.bf16.mxu0 0
        %2810 = vmatpush1.bf16.msra.mxu0 0
        %2811 = vmatprep.subr.bf16.mxu0 0
        %2812 = vmatpush1.bf16.msra.mxu0 0
        %2813 = vmatprep.subr.bf16.mxu0 0
        %2814 = vmatpush1.bf16.msra.mxu0 0
        %2815 = vmatprep.subr.bf16.mxu0 0
        %2816 = vmatpush1.bf16.msra.mxu0 0
        %2817 = vmatprep.mubr.bf16.mxu0 0
        %2818 = vmatmul.mubr.bf16.gmra.mrb[0].mxu0 %v2735
        %v2819 = vpop.f32.mrb[0].mxu0
        %v2820 = vadd.f32 %v2727, %v2819
        %v2821 = vpop.f32.mrb[0].mxu0
        %v2822 = vpop.f32.mrb[0].mxu0
        %v2823 = vpop.f32.mrb[0].mxu0
        %2824 = vdwg.mxu0
        %v2825 = vadd.f32 %v1486, %v2820
        %v2826 = vld [vmem:[%s1103] sm:$0x1]
        %v2827 = vld [vmem:[%s1106] sm:$0x1]
        %v2828 = vsel %vm1425, %v2825, 0.0
        %2829 = vadd.xlane.f32.xlu0 %v2828
        %v2830 = vpop.xlane.xlu0 %2829
        %v2831 = vmul.f32 %v2830, 0.03125
        %v2832 = vsub.f32 %v2825, %v2831
        %v2833 = vsel %vm1445, %v2832, 0.0
        %v2834 = vmul.f32 %v2833, %v2833
        %v2835 = vsel %vm1425, %v2834, 0.0
        %2836 = vadd.xlane.f32.xlu0 %v2835
        %v2837 = vpop.xlane.xlu0 %2836
        %v2838 = vmul.f32 %v2837, 0.03125
        %v2839 = vadd.f32 %v2838, 1e-05
        %v2840 = vrsqrt.pop %v2839
        %v2841 = vmul.f32 %v2833, %v2840
        %v2843 = vlaneseq
        %v2844 = vshrl.u32 %v2843, 7
        %v2845 = vsub.s32 0, %v2844
        %v2846 = vrot.slane %v2826, %v2845
        %v2848 = vmul.f32 %v2841, %v2846
        %v2850 = vlaneseq
        %v2851 = vshrl.u32 %v2850, 7
        %v2852 = vsub.s32 0, %v2851
        %v2853 = vrot.slane %v2827, %v2852
        %v2855 = vadd.f32 %v2848, %v2853
        %v2856 = vld [vmem:[%s1111] sm:$0xff]
        %v2857 = vld [vmem:[%s1111 + $0x8] sm:$0xff]
        %v2858 = vld [vmem:[%s1111 + $0x10] sm:$0xff]
        %v2859 = vld [vmem:[%s1111 + $0x18] sm:$0xff]
        %v2860 = vld [vmem:[%s1111 + $0x20] sm:$0xff]
        %v2861 = vld [vmem:[%s1111 + $0x28] sm:$0xff]
        %v2862 = vld [vmem:[%s1111 + $0x30] sm:$0xff]
        %v2863 = vld [vmem:[%s1111 + $0x38] sm:$0xff]
        %v2864 = vld [vmem:[%s1111 + $0x40] sm:$0xff]
        %v2865 = vld [vmem:[%s1111 + $0x48] sm:$0xff]
        %v2866 = vld [vmem:[%s1111 + $0x50] sm:$0xff]
        %v2867 = vld [vmem:[%s1111 + $0x58] sm:$0xff]
        %v2868 = vld [vmem:[%s1111 + $0x60] sm:$0xff]
        %v2869 = vld [vmem:[%s1111 + $0x68] sm:$0xff]
        %v2870 = vld [vmem:[%s1111 + $0x70] sm:$0xff]
        %v2871 = vld [vmem:[%s1111 + $0x78] sm:$0xff]
        %v2872 = vld [vmem:[%s1111 + $0x80] sm:$0xff]
        %v2873 = vld [vmem:[%s1111 + $0x88] sm:$0xff]
        %v2874 = vld [vmem:[%s1111 + $0x90] sm:$0xff]
        %v2875 = vld [vmem:[%s1111 + $0x98] sm:$0xff]
        %v2876 = vld [vmem:[%s1111 + $0xa0] sm:$0xff]
        %v2877 = vld [vmem:[%s1111 + $0xa8] sm:$0xff]
        %v2878 = vld [vmem:[%s1111 + $0xb0] sm:$0xff]
        %v2879 = vld [vmem:[%s1111 + $0xb8] sm:$0xff]
        %v2880 = vld [vmem:[%s1111 + $0xc0] sm:$0xff]
        %v2881 = vld [vmem:[%s1111 + $0xc8] sm:$0xff]
        %v2882 = vld [vmem:[%s1111 + $0xd0] sm:$0xff]
        %v2883 = vld [vmem:[%s1111 + $0xd8] sm:$0xff]
        %v2884 = vld [vmem:[%s1111 + $0xe0] sm:$0xff]
        %v2885 = vld [vmem:[%s1111 + $0xe8] sm:$0xff]
        %v2886 = vld [vmem:[%s1111 + $0xf0] sm:$0xff]
        %v2887 = vld [vmem:[%s1111 + $0xf8] sm:$0xff]
        %v2888 = vld [vmem:[%s1111 + $0x100] sm:$0xff]
        %v2889 = vld [vmem:[%s1111 + $0x108] sm:$0xff]
        %v2890 = vld [vmem:[%s1111 + $0x110] sm:$0xff]
        %v2891 = vld [vmem:[%s1111 + $0x118] sm:$0xff]
        %v2892 = vld [vmem:[%s1111 + $0x120] sm:$0xff]
        %v2893 = vld [vmem:[%s1111 + $0x128] sm:$0xff]
        %v2894 = vld [vmem:[%s1111 + $0x130] sm:$0xff]
        %v2895 = vld [vmem:[%s1111 + $0x138] sm:$0xff]
        %v2896 = vld [vmem:[%s1111 + $0x140] sm:$0xff]
        %v2897 = vld [vmem:[%s1111 + $0x148] sm:$0xff]
        %v2898 = vld [vmem:[%s1111 + $0x150] sm:$0xff]
        %v2899 = vld [vmem:[%s1111 + $0x158] sm:$0xff]
        %v2900 = vld [vmem:[%s1111 + $0x160] sm:$0xff]
        %v2901 = vld [vmem:[%s1111 + $0x168] sm:$0xff]
        %v2902 = vld [vmem:[%s1111 + $0x170] sm:$0xff]
        %v2903 = vld [vmem:[%s1111 + $0x178] sm:$0xff]
        %v2904 = vld [vmem:[%s1111 + $0x180] sm:$0xff]
        %v2905 = vld [vmem:[%s1111 + $0x188] sm:$0xff]
        %v2906 = vld [vmem:[%s1111 + $0x190] sm:$0xff]
        %v2907 = vld [vmem:[%s1111 + $0x198] sm:$0xff]
        %v2908 = vld [vmem:[%s1111 + $0x1a0] sm:$0xff]
        %v2909 = vld [vmem:[%s1111 + $0x1a8] sm:$0xff]
        %v2910 = vld [vmem:[%s1111 + $0x1b0] sm:$0xff]
        %v2911 = vld [vmem:[%s1111 + $0x1b8] sm:$0xff]
        %v2912 = vld [vmem:[%s1111 + $0x1c0] sm:$0xff]
        %v2913 = vld [vmem:[%s1111 + $0x1c8] sm:$0xff]
        %v2914 = vld [vmem:[%s1111 + $0x1d0] sm:$0xff]
        %v2915 = vld [vmem:[%s1111 + $0x1d8] sm:$0xff]
        %v2916 = vld [vmem:[%s1111 + $0x1e0] sm:$0xff]
        %v2917 = vld [vmem:[%s1111 + $0x1e8] sm:$0xff]
        %v2918 = vld [vmem:[%s1111 + $0x1f0] sm:$0xff]
        %v2919 = vld [vmem:[%s1111 + $0x1f8] sm:$0xff]
        %v2920 = vld [vmem:[%s1111 + $0x200] sm:$0xff]
        %v2921 = vld [vmem:[%s1111 + $0x208] sm:$0xff]
        %v2922 = vld [vmem:[%s1111 + $0x210] sm:$0xff]
        %v2923 = vld [vmem:[%s1111 + $0x218] sm:$0xff]
        %v2924 = vld [vmem:[%s1111 + $0x220] sm:$0xff]
        %v2925 = vld [vmem:[%s1111 + $0x228] sm:$0xff]
        %v2926 = vld [vmem:[%s1111 + $0x230] sm:$0xff]
        %v2927 = vld [vmem:[%s1111 + $0x238] sm:$0xff]
        %v2928 = vld [vmem:[%s1111 + $0x240] sm:$0xff]
        %v2929 = vld [vmem:[%s1111 + $0x248] sm:$0xff]
        %v2930 = vld [vmem:[%s1111 + $0x250] sm:$0xff]
        %v2931 = vld [vmem:[%s1111 + $0x258] sm:$0xff]
        %v2932 = vld [vmem:[%s1111 + $0x260] sm:$0xff]
        %v2933 = vld [vmem:[%s1111 + $0x268] sm:$0xff]
        %v2934 = vld [vmem:[%s1111 + $0x270] sm:$0xff]
        %v2935 = vld [vmem:[%s1111 + $0x278] sm:$0xff]
        %v2936 = vld [vmem:[%s1111 + $0x280] sm:$0xff]
        %v2937 = vld [vmem:[%s1111 + $0x288] sm:$0xff]
        %v2938 = vld [vmem:[%s1111 + $0x290] sm:$0xff]
        %v2939 = vld [vmem:[%s1111 + $0x298] sm:$0xff]
        %v2940 = vld [vmem:[%s1111 + $0x2a0] sm:$0xff]
        %v2941 = vld [vmem:[%s1111 + $0x2a8] sm:$0xff]
        %v2942 = vld [vmem:[%s1111 + $0x2b0] sm:$0xff]
        %v2943 = vld [vmem:[%s1111 + $0x2b8] sm:$0xff]
        %v2944 = vld [vmem:[%s1111 + $0x2c0] sm:$0xff]
        %v2945 = vld [vmem:[%s1111 + $0x2c8] sm:$0xff]
        %v2946 = vld [vmem:[%s1111 + $0x2d0] sm:$0xff]
        %v2947 = vld [vmem:[%s1111 + $0x2d8] sm:$0xff]
        %v2948 = vld [vmem:[%s1111 + $0x2e0] sm:$0xff]
        %v2949 = vld [vmem:[%s1111 + $0x2e8] sm:$0xff]
        %v2950 = vld [vmem:[%s1111 + $0x2f0] sm:$0xff]
        %v2951 = vld [vmem:[%s1111 + $0x2f8] sm:$0xff]
        %v2952 = vld [vmem:[%s1111 + $0x300] sm:$0xff]
        %v2953 = vld [vmem:[%s1111 + $0x308] sm:$0xff]
        %v2954 = vld [vmem:[%s1111 + $0x310] sm:$0xff]
        %v2955 = vld [vmem:[%s1111 + $0x318] sm:$0xff]
        %v2956 = vld [vmem:[%s1111 + $0x320] sm:$0xff]
        %v2957 = vld [vmem:[%s1111 + $0x328] sm:$0xff]
        %v2958 = vld [vmem:[%s1111 + $0x330] sm:$0xff]
        %v2959 = vld [vmem:[%s1111 + $0x338] sm:$0xff]
        %v2960 = vld [vmem:[%s1111 + $0x340] sm:$0xff]
        %v2961 = vld [vmem:[%s1111 + $0x348] sm:$0xff]
        %v2962 = vld [vmem:[%s1111 + $0x350] sm:$0xff]
        %v2963 = vld [vmem:[%s1111 + $0x358] sm:$0xff]
        %v2964 = vld [vmem:[%s1111 + $0x360] sm:$0xff]
        %v2965 = vld [vmem:[%s1111 + $0x368] sm:$0xff]
        %v2966 = vld [vmem:[%s1111 + $0x370] sm:$0xff]
        %v2967 = vld [vmem:[%s1111 + $0x378] sm:$0xff]
        %v2968 = vld [vmem:[%s1111 + $0x380] sm:$0xff]
        %v2969 = vld [vmem:[%s1111 + $0x388] sm:$0xff]
        %v2970 = vld [vmem:[%s1111 + $0x390] sm:$0xff]
        %v2971 = vld [vmem:[%s1111 + $0x398] sm:$0xff]
        %v2972 = vld [vmem:[%s1111 + $0x3a0] sm:$0xff]
        %v2973 = vld [vmem:[%s1111 + $0x3a8] sm:$0xff]
        %v2974 = vld [vmem:[%s1111 + $0x3b0] sm:$0xff]
        %v2975 = vld [vmem:[%s1111 + $0x3b8] sm:$0xff]
        %v2976 = vld [vmem:[%s1111 + $0x3c0] sm:$0xff]
        %v2977 = vld [vmem:[%s1111 + $0x3c8] sm:$0xff]
        %v2978 = vld [vmem:[%s1111 + $0x3d0] sm:$0xff]
        %v2979 = vld [vmem:[%s1111 + $0x3d8] sm:$0xff]
        %v2980 = vld [vmem:[%s1111 + $0x3e0] sm:$0xff]
        %v2981 = vld [vmem:[%s1111 + $0x3e8] sm:$0xff]
        %v2982 = vld [vmem:[%s1111 + $0x3f0] sm:$0xff]
        %v2983 = vld [vmem:[%s1111 + $0x3f8] sm:$0xff]
        %v2984 = vld [vmem:[%s1115] sm:$0xff]
        %v2985 = vld [vmem:[%s1115 + $0x8] sm:$0xff]
        %v2986 = vpack.c.bf16 %v2855, %v2855
        %v2989 = vlaneseq
        %v2990 = vshrl.u32 %v2989, 7
        %v2991 = vsub.s32 0, %v2990
        %v2992 = vrot.slane %v2984, %v2991
        %v2993 = vlaneseq
        %v2994 = vshrl.u32 %v2993, 7
        %v2995 = vsub.s32 1, %v2994
        %v2996 = vrot.slane %v2984, %v2995
        %v2997 = vlaneseq
        %v2998 = vshrl.u32 %v2997, 7
        %v2999 = vsub.s32 2, %v2998
        %v3000 = vrot.slane %v2984, %v2999
        %v3001 = vlaneseq
        %v3002 = vshrl.u32 %v3001, 7
        %v3003 = vsub.s32 3, %v3002
        %v3004 = vrot.slane %v2984, %v3003
        %v3005 = vlaneseq
        %v3006 = vshrl.u32 %v3005, 7
        %v3007 = vsub.s32 4, %v3006
        %v3008 = vrot.slane %v2984, %v3007
        %v3009 = vlaneseq
        %v3010 = vshrl.u32 %v3009, 7
        %v3011 = vsub.s32 5, %v3010
        %v3012 = vrot.slane %v2984, %v3011
        %v3013 = vlaneseq
        %v3014 = vshrl.u32 %v3013, 7
        %v3015 = vsub.s32 6, %v3014
        %v3016 = vrot.slane %v2984, %v3015
        %v3017 = vlaneseq
        %v3018 = vshrl.u32 %v3017, 7
        %v3019 = vsub.s32 7, %v3018
        %v3020 = vrot.slane %v2984, %v3019
        %v3021 = vlaneseq
        %v3022 = vshrl.u32 %v3021, 7
        %v3023 = vsub.s32 0, %v3022
        %v3024 = vrot.slane %v2985, %v3023
        %v3025 = vlaneseq
        %v3026 = vshrl.u32 %v3025, 7
        %v3027 = vsub.s32 1, %v3026
        %v3028 = vrot.slane %v2985, %v3027
        %v3029 = vlaneseq
        %v3030 = vshrl.u32 %v3029, 7
        %v3031 = vsub.s32 2, %v3030
        %v3032 = vrot.slane %v2985, %v3031
        %v3033 = vlaneseq
        %v3034 = vshrl.u32 %v3033, 7
        %v3035 = vsub.s32 3, %v3034
        %v3036 = vrot.slane %v2985, %v3035
        %v3037 = vlaneseq
        %v3038 = vshrl.u32 %v3037, 7
        %v3039 = vsub.s32 4, %v3038
        %v3040 = vrot.slane %v2985, %v3039
        %v3041 = vlaneseq
        %v3042 = vshrl.u32 %v3041, 7
        %v3043 = vsub.s32 5, %v3042
        %v3044 = vrot.slane %v2985, %v3043
        %v3045 = vlaneseq
        %v3046 = vshrl.u32 %v3045, 7
        %v3047 = vsub.s32 6, %v3046
        %v3048 = vrot.slane %v2985, %v3047
        %v3049 = vlaneseq
        %v3050 = vshrl.u32 %v3049, 7
        %v3051 = vsub.s32 7, %v3050
        %v3052 = vrot.slane %v2985, %v3051
        %v3197 = vunpack.c.l.b16 %v2856
        %v3198 = vunpack.c.h.b16 %v2856
        %v3199 = vunpack.c.l.b16 %v2857
        %v3200 = vunpack.c.h.b16 %v2857
        %v3201 = vunpack.c.l.b16 %v2858
        %v3202 = vunpack.c.h.b16 %v2858
        %v3203 = vunpack.c.l.b16 %v2859
        %v3204 = vunpack.c.h.b16 %v2859
        %v3205 = vunpack.c.l.b16 %v2860
        %v3206 = vunpack.c.h.b16 %v2860
        %v3207 = vunpack.c.l.b16 %v2861
        %v3208 = vunpack.c.h.b16 %v2861
        %v3209 = vunpack.c.l.b16 %v2862
        %v3210 = vunpack.c.h.b16 %v2862
        %v3211 = vunpack.c.l.b16 %v2863
        %v3212 = vunpack.c.h.b16 %v2863
        %v3213 = vunpack.c.l.b16 %v2864
        %v3214 = vunpack.c.h.b16 %v2864
        %v3215 = vunpack.c.l.b16 %v2865
        %v3216 = vunpack.c.h.b16 %v2865
        %v3217 = vunpack.c.l.b16 %v2866
        %v3218 = vunpack.c.h.b16 %v2866
        %v3219 = vunpack.c.l.b16 %v2867
        %v3220 = vunpack.c.h.b16 %v2867
        %v3221 = vunpack.c.l.b16 %v2868
        %v3222 = vunpack.c.h.b16 %v2868
        %v3223 = vunpack.c.l.b16 %v2869
        %v3224 = vunpack.c.h.b16 %v2869
        %v3225 = vunpack.c.l.b16 %v2870
        %v3226 = vunpack.c.h.b16 %v2870
        %v3227 = vunpack.c.l.b16 %v2871
        %v3228 = vunpack.c.h.b16 %v2871
        %v3229 = vunpack.c.l.b16 %v2872
        %v3230 = vunpack.c.h.b16 %v2872
        %v3231 = vunpack.c.l.b16 %v2873
        %v3232 = vunpack.c.h.b16 %v2873
        %v3233 = vunpack.c.l.b16 %v2874
        %v3234 = vunpack.c.h.b16 %v2874
        %v3235 = vunpack.c.l.b16 %v2875
        %v3236 = vunpack.c.h.b16 %v2875
        %v3237 = vunpack.c.l.b16 %v2876
        %v3238 = vunpack.c.h.b16 %v2876
        %v3239 = vunpack.c.l.b16 %v2877
        %v3240 = vunpack.c.h.b16 %v2877
        %v3241 = vunpack.c.l.b16 %v2878
        %v3242 = vunpack.c.h.b16 %v2878
        %v3243 = vunpack.c.l.b16 %v2879
        %v3244 = vunpack.c.h.b16 %v2879
        %v3245 = vunpack.c.l.b16 %v2880
        %v3246 = vunpack.c.h.b16 %v2880
        %v3247 = vunpack.c.l.b16 %v2881
        %v3248 = vunpack.c.h.b16 %v2881
        %v3249 = vunpack.c.l.b16 %v2882
        %v3250 = vunpack.c.h.b16 %v2882
        %v3251 = vunpack.c.l.b16 %v2883
        %v3252 = vunpack.c.h.b16 %v2883
        %v3253 = vunpack.c.l.b16 %v2884
        %v3254 = vunpack.c.h.b16 %v2884
        %v3255 = vunpack.c.l.b16 %v2885
        %v3256 = vunpack.c.h.b16 %v2885
        %v3257 = vunpack.c.l.b16 %v2886
        %v3258 = vunpack.c.h.b16 %v2886
        %v3259 = vunpack.c.l.b16 %v2887
        %v3260 = vunpack.c.h.b16 %v2887
        %v3261 = vunpack.c.l.b16 %v2888
        %v3262 = vunpack.c.h.b16 %v2888
        %v3263 = vunpack.c.l.b16 %v2889
        %v3264 = vunpack.c.h.b16 %v2889
        %v3265 = vunpack.c.l.b16 %v2890
        %v3266 = vunpack.c.h.b16 %v2890
        %v3267 = vunpack.c.l.b16 %v2891
        %v3268 = vunpack.c.h.b16 %v2891
        %v3269 = vunpack.c.l.b16 %v2892
        %v3270 = vunpack.c.h.b16 %v2892
        %v3271 = vunpack.c.l.b16 %v2893
        %v3272 = vunpack.c.h.b16 %v2893
        %v3273 = vunpack.c.l.b16 %v2894
        %v3274 = vunpack.c.h.b16 %v2894
        %v3275 = vunpack.c.l.b16 %v2895
        %v3276 = vunpack.c.h.b16 %v2895
        %v3277 = vunpack.c.l.b16 %v2896
        %v3278 = vunpack.c.h.b16 %v2896
        %v3279 = vunpack.c.l.b16 %v2897
        %v3280 = vunpack.c.h.b16 %v2897
        %v3281 = vunpack.c.l.b16 %v2898
        %v3282 = vunpack.c.h.b16 %v2898
        %v3283 = vunpack.c.l.b16 %v2899
        %v3284 = vunpack.c.h.b16 %v2899
        %v3285 = vunpack.c.l.b16 %v2900
        %v3286 = vunpack.c.h.b16 %v2900
        %v3287 = vunpack.c.l.b16 %v2901
        %v3288 = vunpack.c.h.b16 %v2901
        %v3289 = vunpack.c.l.b16 %v2902
        %v3290 = vunpack.c.h.b16 %v2902
        %v3291 = vunpack.c.l.b16 %v2903
        %v3292 = vunpack.c.h.b16 %v2903
        %v3293 = vunpack.c.l.b16 %v2904
        %v3294 = vunpack.c.h.b16 %v2904
        %v3295 = vunpack.c.l.b16 %v2905
        %v3296 = vunpack.c.h.b16 %v2905
        %v3297 = vunpack.c.l.b16 %v2906
        %v3298 = vunpack.c.h.b16 %v2906
        %v3299 = vunpack.c.l.b16 %v2907
        %v3300 = vunpack.c.h.b16 %v2907
        %v3301 = vunpack.c.l.b16 %v2908
        %v3302 = vunpack.c.h.b16 %v2908
        %v3303 = vunpack.c.l.b16 %v2909
        %v3304 = vunpack.c.h.b16 %v2909
        %v3305 = vunpack.c.l.b16 %v2910
        %v3306 = vunpack.c.h.b16 %v2910
        %v3307 = vunpack.c.l.b16 %v2911
        %v3308 = vunpack.c.h.b16 %v2911
        %v3309 = vunpack.c.l.b16 %v2912
        %v3310 = vunpack.c.h.b16 %v2912
        %v3311 = vunpack.c.l.b16 %v2913
        %v3312 = vunpack.c.h.b16 %v2913
        %v3313 = vunpack.c.l.b16 %v2914
        %v3314 = vunpack.c.h.b16 %v2914
        %v3315 = vunpack.c.l.b16 %v2915
        %v3316 = vunpack.c.h.b16 %v2915
        %v3317 = vunpack.c.l.b16 %v2916
        %v3318 = vunpack.c.h.b16 %v2916
        %v3319 = vunpack.c.l.b16 %v2917
        %v3320 = vunpack.c.h.b16 %v2917
        %v3321 = vunpack.c.l.b16 %v2918
        %v3322 = vunpack.c.h.b16 %v2918
        %v3323 = vunpack.c.l.b16 %v2919
        %v3324 = vunpack.c.h.b16 %v2919
        %v3325 = vunpack.c.l.b16 %v2920
        %v3326 = vunpack.c.h.b16 %v2920
        %v3327 = vunpack.c.l.b16 %v2921
        %v3328 = vunpack.c.h.b16 %v2921
        %v3329 = vunpack.c.l.b16 %v2922
        %v3330 = vunpack.c.h.b16 %v2922
        %v3331 = vunpack.c.l.b16 %v2923
        %v3332 = vunpack.c.h.b16 %v2923
        %v3333 = vunpack.c.l.b16 %v2924
        %v3334 = vunpack.c.h.b16 %v2924
        %v3335 = vunpack.c.l.b16 %v2925
        %v3336 = vunpack.c.h.b16 %v2925
        %v3337 = vunpack.c.l.b16 %v2926
        %v3338 = vunpack.c.h.b16 %v2926
        %v3339 = vunpack.c.l.b16 %v2927
        %v3340 = vunpack.c.h.b16 %v2927
        %v3341 = vunpack.c.l.b16 %v2928
        %v3342 = vunpack.c.h.b16 %v2928
        %v3343 = vunpack.c.l.b16 %v2929
        %v3344 = vunpack.c.h.b16 %v2929
        %v3345 = vunpack.c.l.b16 %v2930
        %v3346 = vunpack.c.h.b16 %v2930
        %v3347 = vunpack.c.l.b16 %v2931
        %v3348 = vunpack.c.h.b16 %v2931
        %v3349 = vunpack.c.l.b16 %v2932
        %v3350 = vunpack.c.h.b16 %v2932
        %v3351 = vunpack.c.l.b16 %v2933
        %v3352 = vunpack.c.h.b16 %v2933
        %v3353 = vunpack.c.l.b16 %v2934
        %v3354 = vunpack.c.h.b16 %v2934
        %v3355 = vunpack.c.l.b16 %v2935
        %v3356 = vunpack.c.h.b16 %v2935
        %v3357 = vunpack.c.l.b16 %v2936
        %v3358 = vunpack.c.h.b16 %v2936
        %v3359 = vunpack.c.l.b16 %v2937
        %v3360 = vunpack.c.h.b16 %v2937
        %v3361 = vunpack.c.l.b16 %v2938
        %v3362 = vunpack.c.h.b16 %v2938
        %v3363 = vunpack.c.l.b16 %v2939
        %v3364 = vunpack.c.h.b16 %v2939
        %v3365 = vunpack.c.l.b16 %v2940
        %v3366 = vunpack.c.h.b16 %v2940
        %v3367 = vunpack.c.l.b16 %v2941
        %v3368 = vunpack.c.h.b16 %v2941
        %v3369 = vunpack.c.l.b16 %v2942
        %v3370 = vunpack.c.h.b16 %v2942
        %v3371 = vunpack.c.l.b16 %v2943
        %v3372 = vunpack.c.h.b16 %v2943
        %v3373 = vunpack.c.l.b16 %v2944
        %v3374 = vunpack.c.h.b16 %v2944
        %v3375 = vunpack.c.l.b16 %v2945
        %v3376 = vunpack.c.h.b16 %v2945
        %v3377 = vunpack.c.l.b16 %v2946
        %v3378 = vunpack.c.h.b16 %v2946
        %v3379 = vunpack.c.l.b16 %v2947
        %v3380 = vunpack.c.h.b16 %v2947
        %v3381 = vunpack.c.l.b16 %v2948
        %v3382 = vunpack.c.h.b16 %v2948
        %v3383 = vunpack.c.l.b16 %v2949
        %v3384 = vunpack.c.h.b16 %v2949
        %v3385 = vunpack.c.l.b16 %v2950
        %v3386 = vunpack.c.h.b16 %v2950
        %v3387 = vunpack.c.l.b16 %v2951
        %v3388 = vunpack.c.h.b16 %v2951
        %v3389 = vunpack.c.l.b16 %v2952
        %v3390 = vunpack.c.h.b16 %v2952
        %v3391 = vunpack.c.l.b16 %v2953
        %v3392 = vunpack.c.h.b16 %v2953
        %v3393 = vunpack.c.l.b16 %v2954
        %v3394 = vunpack.c.h.b16 %v2954
        %v3395 = vunpack.c.l.b16 %v2955
        %v3396 = vunpack.c.h.b16 %v2955
        %v3397 = vunpack.c.l.b16 %v2956
        %v3398 = vunpack.c.h.b16 %v2956
        %v3399 = vunpack.c.l.b16 %v2957
        %v3400 = vunpack.c.h.b16 %v2957
        %v3401 = vunpack.c.l.b16 %v2958
        %v3402 = vunpack.c.h.b16 %v2958
        %v3403 = vunpack.c.l.b16 %v2959
        %v3404 = vunpack.c.h.b16 %v2959
        %v3405 = vunpack.c.l.b16 %v2960
        %v3406 = vunpack.c.h.b16 %v2960
        %v3407 = vunpack.c.l.b16 %v2961
        %v3408 = vunpack.c.h.b16 %v2961
        %v3409 = vunpack.c.l.b16 %v2962
        %v3410 = vunpack.c.h.b16 %v2962
        %v3411 = vunpack.c.l.b16 %v2963
        %v3412 = vunpack.c.h.b16 %v2963
        %v3413 = vunpack.c.l.b16 %v2964
        %v3414 = vunpack.c.h.b16 %v2964
        %v3415 = vunpack.c.l.b16 %v2965
        %v3416 = vunpack.c.h.b16 %v2965
        %v3417 = vunpack.c.l.b16 %v2966
        %v3418 = vunpack.c.h.b16 %v2966
        %v3419 = vunpack.c.l.b16 %v2967
        %v3420 = vunpack.c.h.b16 %v2967
        %v3421 = vunpack.c.l.b16 %v2968
        %v3422 = vunpack.c.h.b16 %v2968
        %v3423 = vunpack.c.l.b16 %v2969
        %v3424 = vunpack.c.h.b16 %v2969
        %v3425 = vunpack.c.l.b16 %v2970
        %v3426 = vunpack.c.h.b16 %v2970
        %v3427 = vunpack.c.l.b16 %v2971
        %v3428 = vunpack.c.h.b16 %v2971
        %v3429 = vunpack.c.l.b16 %v2972
        %v3430 = vunpack.c.h.b16 %v2972
        %v3431 = vunpack.c.l.b16 %v2973
        %v3432 = vunpack.c.h.b16 %v2973
        %v3433 = vunpack.c.l.b16 %v2974
        %v3434 = vunpack.c.h.b16 %v2974
        %v3435 = vunpack.c.l.b16 %v2975
        %v3436 = vunpack.c.h.b16 %v2975
        %v3437 = vunpack.c.l.b16 %v2976
        %v3438 = vunpack.c.h.b16 %v2976
        %v3439 = vunpack.c.l.b16 %v2977
        %v3440 = vunpack.c.h.b16 %v2977
        %v3441 = vunpack.c.l.b16 %v2978
        %v3442 = vunpack.c.h.b16 %v2978
        %v3443 = vunpack.c.l.b16 %v2979
        %v3444 = vunpack.c.h.b16 %v2979
        %v3445 = vunpack.c.l.b16 %v2980
        %v3446 = vunpack.c.h.b16 %v2980
        %v3447 = vunpack.c.l.b16 %v2981
        %v3448 = vunpack.c.h.b16 %v2981
        %v3449 = vunpack.c.l.b16 %v2982
        %v3450 = vunpack.c.h.b16 %v2982
        %v3451 = vunpack.c.l.b16 %v2983
        %v3452 = vunpack.c.h.b16 %v2983
        %v3453 = vpack.c.b16 %v3213, %v3197
        %v3454 = vpack.c.b16 %v3214, %v3198
        %v3455 = vpack.c.b16 %v3215, %v3199
        %v3456 = vpack.c.b16 %v3216, %v3200
        %v3457 = vpack.c.b16 %v3217, %v3201
        %v3458 = vpack.c.b16 %v3218, %v3202
        %v3459 = vpack.c.b16 %v3219, %v3203
        %v3460 = vpack.c.b16 %v3220, %v3204
        %v3461 = vpack.c.b16 %v3221, %v3205
        %v3462 = vpack.c.b16 %v3222, %v3206
        %v3463 = vpack.c.b16 %v3223, %v3207
        %v3464 = vpack.c.b16 %v3224, %v3208
        %v3465 = vpack.c.b16 %v3225, %v3209
        %v3466 = vpack.c.b16 %v3226, %v3210
        %v3467 = vpack.c.b16 %v3227, %v3211
        %v3468 = vpack.c.b16 %v3228, %v3212
        %v3469 = vpack.c.b16 %v3245, %v3229
        %v3470 = vpack.c.b16 %v3246, %v3230
        %v3471 = vpack.c.b16 %v3247, %v3231
        %v3472 = vpack.c.b16 %v3248, %v3232
        %v3473 = vpack.c.b16 %v3249, %v3233
        %v3474 = vpack.c.b16 %v3250, %v3234
        %v3475 = vpack.c.b16 %v3251, %v3235
        %v3476 = vpack.c.b16 %v3252, %v3236
        %v3477 = vpack.c.b16 %v3253, %v3237
        %v3478 = vpack.c.b16 %v3254, %v3238
        %v3479 = vpack.c.b16 %v3255, %v3239
        %v3480 = vpack.c.b16 %v3256, %v3240
        %v3481 = vpack.c.b16 %v3257, %v3241
        %v3482 = vpack.c.b16 %v3258, %v3242
        %v3483 = vpack.c.b16 %v3259, %v3243
        %v3484 = vpack.c.b16 %v3260, %v3244
        %v3485 = vpack.c.b16 %v3277, %v3261
        %v3486 = vpack.c.b16 %v3278, %v3262
        %v3487 = vpack.c.b16 %v3279, %v3263
        %v3488 = vpack.c.b16 %v3280, %v3264
        %v3489 = vpack.c.b16 %v3281, %v3265
        %v3490 = vpack.c.b16 %v3282, %v3266
        %v3491 = vpack.c.b16 %v3283, %v3267
        %v3492 = vpack.c.b16 %v3284, %v3268
        %v3493 = vpack.c.b16 %v3285, %v3269
        %v3494 = vpack.c.b16 %v3286, %v3270
        %v3495 = vpack.c.b16 %v3287, %v3271
        %v3496 = vpack.c.b16 %v3288, %v3272
        %v3497 = vpack.c.b16 %v3289, %v3273
        %v3498 = vpack.c.b16 %v3290, %v3274
        %v3499 = vpack.c.b16 %v3291, %v3275
        %v3500 = vpack.c.b16 %v3292, %v3276
        %v3501 = vpack.c.b16 %v3309, %v3293
        %v3502 = vpack.c.b16 %v3310, %v3294
        %v3503 = vpack.c.b16 %v3311, %v3295
        %v3504 = vpack.c.b16 %v3312, %v3296
        %v3505 = vpack.c.b16 %v3313, %v3297
        %v3506 = vpack.c.b16 %v3314, %v3298
        %v3507 = vpack.c.b16 %v3315, %v3299
        %v3508 = vpack.c.b16 %v3316, %v3300
        %v3509 = vpack.c.b16 %v3317, %v3301
        %v3510 = vpack.c.b16 %v3318, %v3302
        %v3511 = vpack.c.b16 %v3319, %v3303
        %v3512 = vpack.c.b16 %v3320, %v3304
        %v3513 = vpack.c.b16 %v3321, %v3305
        %v3514 = vpack.c.b16 %v3322, %v3306
        %v3515 = vpack.c.b16 %v3323, %v3307
        %v3516 = vpack.c.b16 %v3324, %v3308
        %v3517 = vpack.c.b16 %v3341, %v3325
        %v3518 = vpack.c.b16 %v3342, %v3326
        %v3519 = vpack.c.b16 %v3343, %v3327
        %v3520 = vpack.c.b16 %v3344, %v3328
        %v3521 = vpack.c.b16 %v3345, %v3329
        %v3522 = vpack.c.b16 %v3346, %v3330
        %v3523 = vpack.c.b16 %v3347, %v3331
        %v3524 = vpack.c.b16 %v3348, %v3332
        %v3525 = vpack.c.b16 %v3349, %v3333
        %v3526 = vpack.c.b16 %v3350, %v3334
        %v3527 = vpack.c.b16 %v3351, %v3335
        %v3528 = vpack.c.b16 %v3352, %v3336
        %v3529 = vpack.c.b16 %v3353, %v3337
        %v3530 = vpack.c.b16 %v3354, %v3338
        %v3531 = vpack.c.b16 %v3355, %v3339
        %v3532 = vpack.c.b16 %v3356, %v3340
        %v3533 = vpack.c.b16 %v3373, %v3357
        %v3534 = vpack.c.b16 %v3374, %v3358
        %v3535 = vpack.c.b16 %v3375, %v3359
        %v3536 = vpack.c.b16 %v3376, %v3360
        %v3537 = vpack.c.b16 %v3377, %v3361
        %v3538 = vpack.c.b16 %v3378, %v3362
        %v3539 = vpack.c.b16 %v3379, %v3363
        %v3540 = vpack.c.b16 %v3380, %v3364
        %v3541 = vpack.c.b16 %v3381, %v3365
        %v3542 = vpack.c.b16 %v3382, %v3366
        %v3543 = vpack.c.b16 %v3383, %v3367
        %v3544 = vpack.c.b16 %v3384, %v3368
        %v3545 = vpack.c.b16 %v3385, %v3369
        %v3546 = vpack.c.b16 %v3386, %v3370
        %v3547 = vpack.c.b16 %v3387, %v3371
        %v3548 = vpack.c.b16 %v3388, %v3372
        %v3549 = vpack.c.b16 %v3405, %v3389
        %v3550 = vpack.c.b16 %v3406, %v3390
        %v3551 = vpack.c.b16 %v3407, %v3391
        %v3552 = vpack.c.b16 %v3408, %v3392
        %v3553 = vpack.c.b16 %v3409, %v3393
        %v3554 = vpack.c.b16 %v3410, %v3394
        %v3555 = vpack.c.b16 %v3411, %v3395
        %v3556 = vpack.c.b16 %v3412, %v3396
        %v3557 = vpack.c.b16 %v3413, %v3397
        %v3558 = vpack.c.b16 %v3414, %v3398
        %v3559 = vpack.c.b16 %v3415, %v3399
        %v3560 = vpack.c.b16 %v3416, %v3400
        %v3561 = vpack.c.b16 %v3417, %v3401
        %v3562 = vpack.c.b16 %v3418, %v3402
        %v3563 = vpack.c.b16 %v3419, %v3403
        %v3564 = vpack.c.b16 %v3420, %v3404
        %v3565 = vpack.c.b16 %v3437, %v3421
        %v3566 = vpack.c.b16 %v3438, %v3422
        %v3567 = vpack.c.b16 %v3439, %v3423
        %v3568 = vpack.c.b16 %v3440, %v3424
        %v3569 = vpack.c.b16 %v3441, %v3425
        %v3570 = vpack.c.b16 %v3442, %v3426
        %v3571 = vpack.c.b16 %v3443, %v3427
        %v3572 = vpack.c.b16 %v3444, %v3428
        %v3573 = vpack.c.b16 %v3445, %v3429
        %v3574 = vpack.c.b16 %v3446, %v3430
        %v3575 = vpack.c.b16 %v3447, %v3431
        %v3576 = vpack.c.b16 %v3448, %v3432
        %v3577 = vpack.c.b16 %v3449, %v3433
        %v3578 = vpack.c.b16 %v3450, %v3434
        %v3579 = vpack.c.b16 %v3451, %v3435
        %v3580 = vpack.c.b16 %v3452, %v3436
        %3709 = vmatprep.subr.bf16.mxu0 %v3454
        %3710 = vmatpush1.bf16.msra.mxu0 %v3453
        %3711 = vmatprep.subr.bf16.mxu0 %v3470
        %3712 = vmatpush1.bf16.msra.mxu0 %v3469
        %3713 = vmatprep.subr.bf16.mxu0 %v3486
        %3714 = vmatpush1.bf16.msra.mxu0 %v3485
        %3715 = vmatprep.subr.bf16.mxu0 %v3502
        %3716 = vmatpush1.bf16.msra.mxu0 %v3501
        %3717 = vmatprep.subr.bf16.mxu0 %v3518
        %3718 = vmatpush1.bf16.msra.mxu0 %v3517
        %3719 = vmatprep.subr.bf16.mxu0 %v3534
        %3720 = vmatpush1.bf16.msra.mxu0 %v3533
        %3721 = vmatprep.subr.bf16.mxu0 %v3550
        %3722 = vmatpush1.bf16.msra.mxu0 %v3549
        %3723 = vmatprep.subr.bf16.mxu0 %v3566
        %3724 = vmatpush1.bf16.msra.mxu0 %v3565
        %3725 = vmatprep.subr.bf16.mxu0 0
        %3726 = vmatpush1.bf16.msra.mxu0 0
        %3727 = vmatprep.subr.bf16.mxu0 0
        %3728 = vmatpush1.bf16.msra.mxu0 0
        %3729 = vmatprep.subr.bf16.mxu0 0
        %3730 = vmatpush1.bf16.msra.mxu0 0
        %3731 = vmatprep.subr.bf16.mxu0 0
        %3732 = vmatpush1.bf16.msra.mxu0 0
        %3733 = vmatprep.subr.bf16.mxu0 0
        %3734 = vmatpush1.bf16.msra.mxu0 0
        %3735 = vmatprep.subr.bf16.mxu0 0
        %3736 = vmatpush1.bf16.msra.mxu0 0
        %3737 = vmatprep.subr.bf16.mxu0 0
        %3738 = vmatpush1.bf16.msra.mxu0 0
        %3739 = vmatprep.subr.bf16.mxu0 0
        %3740 = vmatpush1.bf16.msra.mxu0 0
        %3741 = vmatprep.mubr.bf16.mxu0 0
        %3742 = vmatmul.mubr.bf16.gmra.mrb[0].mxu0 %v2986
        %v3743 = vpop.f32.mrb[0].mxu0
        %v3744 = vadd.f32 %v2992, %v3743
        %v3745 = vpop.f32.mrb[0].mxu0
        %v3746 = vadd.f32 %v2996, %v3745
        %v3747 = vpop.f32.mrb[0].mxu0
        %v3748 = vpop.f32.mrb[0].mxu0
        %3749 = vdwg.mxu0
        %3750 = vmatprep.subr.bf16.mxu0 %v3456
        %3751 = vmatpush1.bf16.msra.mxu0 %v3455
        %3752 = vmatprep.subr.bf16.mxu0 %v3472
        %3753 = vmatpush1.bf16.msra.mxu0 %v3471
        %3754 = vmatprep.subr.bf16.mxu0 %v3488
        %3755 = vmatpush1.bf16.msra.mxu0 %v3487
        %3756 = vmatprep.subr.bf16.mxu0 %v3504
        %3757 = vmatpush1.bf16.msra.mxu0 %v3503
        %3758 = vmatprep.subr.bf16.mxu0 %v3520
        %3759 = vmatpush1.bf16.msra.mxu0 %v3519
        %3760 = vmatprep.subr.bf16.mxu0 %v3536
        %3761 = vmatpush1.bf16.msra.mxu0 %v3535
        %3762 = vmatprep.subr.bf16.mxu0 %v3552
        %3763 = vmatpush1.bf16.msra.mxu0 %v3551
        %3764 = vmatprep.subr.bf16.mxu0 %v3568
        %3765 = vmatpush1.bf16.msra.mxu0 %v3567
        %3766 = vmatprep.subr.bf16.mxu0 0
        %3767 = vmatpush1.bf16.msra.mxu0 0
        %3768 = vmatprep.subr.bf16.mxu0 0
        %3769 = vmatpush1.bf16.msra.mxu0 0
        %3770 = vmatprep.subr.bf16.mxu0 0
        %3771 = vmatpush1.bf16.msra.mxu0 0
        %3772 = vmatprep.subr.bf16.mxu0 0
        %3773 = vmatpush1.bf16.msra.mxu0 0
        %3774 = vmatprep.subr.bf16.mxu0 0
        %3775 = vmatpush1.bf16.msra.mxu0 0
        %3776 = vmatprep.subr.bf16.mxu0 0
        %3777 = vmatpush1.bf16.msra.mxu0 0
        %3778 = vmatprep.subr.bf16.mxu0 0
        %3779 = vmatpush1.bf16.msra.mxu0 0
        %3780 = vmatprep.subr.bf16.mxu0 0
        %3781 = vmatpush1.bf16.msra.mxu0 0
        %3782 = vmatprep.mubr.bf16.mxu0 0
        %3783 = vmatmul.mubr.bf16.gmra.mrb[0].mxu0 %v2986
        %v3784 = vpop.f32.mrb[0].mxu0
        %v3785 = vadd.f32 %v3000, %v3784
        %v3786 = vpop.f32.mrb[0].mxu0
        %v3787 = vadd.f32 %v3004, %v3786
        %v3788 = vpop.f32.mrb[0].mxu0
        %v3789 = vpop.f32.mrb[0].mxu0
        %3790 = vdwg.mxu0
        %3791 = vmatprep.subr.bf16.mxu0 %v3458
        %3792 = vmatpush1.bf16.msra.mxu0 %v3457
        %3793 = vmatprep.subr.bf16.mxu0 %v3474
        %3794 = vmatpush1.bf16.msra.mxu0 %v3473
        %3795 = vmatprep.subr.bf16.mxu0 %v3490
        %3796 = vmatpush1.bf16.msra.mxu0 %v3489
        %3797 = vmatprep.subr.bf16.mxu0 %v3506
        %3798 = vmatpush1.bf16.msra.mxu0 %v3505
        %3799 = vmatprep.subr.bf16.mxu0 %v3522
        %3800 = vmatpush1.bf16.msra.mxu0 %v3521
        %3801 = vmatprep.subr.bf16.mxu0 %v3538
        %3802 = vmatpush1.bf16.msra.mxu0 %v3537
        %3803 = vmatprep.subr.bf16.mxu0 %v3554
        %3804 = vmatpush1.bf16.msra.mxu0 %v3553
        %3805 = vmatprep.subr.bf16.mxu0 %v3570
        %3806 = vmatpush1.bf16.msra.mxu0 %v3569
        %3807 = vmatprep.subr.bf16.mxu0 0
        %3808 = vmatpush1.bf16.msra.mxu0 0
        %3809 = vmatprep.subr.bf16.mxu0 0
        %3810 = vmatpush1.bf16.msra.mxu0 0
        %3811 = vmatprep.subr.bf16.mxu0 0
        %3812 = vmatpush1.bf16.msra.mxu0 0
        %3813 = vmatprep.subr.bf16.mxu0 0
        %3814 = vmatpush1.bf16.msra.mxu0 0
        %3815 = vmatprep.subr.bf16.mxu0 0
        %3816 = vmatpush1.bf16.msra.mxu0 0
        %3817 = vmatprep.subr.bf16.mxu0 0
        %3818 = vmatpush1.bf16.msra.mxu0 0
        %3819 = vmatprep.subr.bf16.mxu0 0
        %3820 = vmatpush1.bf16.msra.mxu0 0
        %3821 = vmatprep.subr.bf16.mxu0 0
        %3822 = vmatpush1.bf16.msra.mxu0 0
        %3823 = vmatprep.mubr.bf16.mxu0 0
        %3824 = vmatmul.mubr.bf16.gmra.mrb[0].mxu0 %v2986
        %v3825 = vpop.f32.mrb[0].mxu0
        %v3826 = vadd.f32 %v3008, %v3825
        %v3827 = vpop.f32.mrb[0].mxu0
        %v3828 = vadd.f32 %v3012, %v3827
        %v3829 = vpop.f32.mrb[0].mxu0
        %v3830 = vpop.f32.mrb[0].mxu0
        %3831 = vdwg.mxu0
        %3832 = vmatprep.subr.bf16.mxu0 %v3460
        %3833 = vmatpush1.bf16.msra.mxu0 %v3459
        %3834 = vmatprep.subr.bf16.mxu0 %v3476
        %3835 = vmatpush1.bf16.msra.mxu0 %v3475
        %3836 = vmatprep.subr.bf16.mxu0 %v3492
        %3837 = vmatpush1.bf16.msra.mxu0 %v3491
        %3838 = vmatprep.subr.bf16.mxu0 %v3508
        %3839 = vmatpush1.bf16.msra.mxu0 %v3507
        %3840 = vmatprep.subr.bf16.mxu0 %v3524
        %3841 = vmatpush1.bf16.msra.mxu0 %v3523
        %3842 = vmatprep.subr.bf16.mxu0 %v3540
        %3843 = vmatpush1.bf16.msra.mxu0 %v3539
        %3844 = vmatprep.subr.bf16.mxu0 %v3556
        %3845 = vmatpush1.bf16.msra.mxu0 %v3555
        %3846 = vmatprep.subr.bf16.mxu0 %v3572
        %3847 = vmatpush1.bf16.msra.mxu0 %v3571
        %3848 = vmatprep.subr.bf16.mxu0 0
        %3849 = vmatpush1.bf16.msra.mxu0 0
        %3850 = vmatprep.subr.bf16.mxu0 0
        %3851 = vmatpush1.bf16.msra.mxu0 0
        %3852 = vmatprep.subr.bf16.mxu0 0
        %3853 = vmatpush1.bf16.msra.mxu0 0
        %3854 = vmatprep.subr.bf16.mxu0 0
        %3855 = vmatpush1.bf16.msra.mxu0 0
        %3856 = vmatprep.subr.bf16.mxu0 0
        %3857 = vmatpush1.bf16.msra.mxu0 0
        %3858 = vmatprep.subr.bf16.mxu0 0
        %3859 = vmatpush1.bf16.msra.mxu0 0
        %3860 = vmatprep.subr.bf16.mxu0 0
        %3861 = vmatpush1.bf16.msra.mxu0 0
        %3862 = vmatprep.subr.bf16.mxu0 0
        %3863 = vmatpush1.bf16.msra.mxu0 0
        %3864 = vmatprep.mubr.bf16.mxu0 0
        %3865 = vmatmul.mubr.bf16.gmra.mrb[0].mxu0 %v2986
        %v3866 = vpop.f32.mrb[0].mxu0
        %v3867 = vadd.f32 %v3016, %v3866
        %v3868 = vpop.f32.mrb[0].mxu0
        %v3869 = vadd.f32 %v3020, %v3868
        %v3870 = vpop.f32.mrb[0].mxu0
        %v3871 = vpop.f32.mrb[0].mxu0
        %3872 = vdwg.mxu0
        %3873 = vmatprep.subr.bf16.mxu0 %v3462
        %3874 = vmatpush1.bf16.msra.mxu0 %v3461
        %3875 = vmatprep.subr.bf16.mxu0 %v3478
        %3876 = vmatpush1.bf16.msra.mxu0 %v3477
        %3877 = vmatprep.subr.bf16.mxu0 %v3494
        %3878 = vmatpush1.bf16.msra.mxu0 %v3493
        %3879 = vmatprep.subr.bf16.mxu0 %v3510
        %3880 = vmatpush1.bf16.msra.mxu0 %v3509
        %3881 = vmatprep.subr.bf16.mxu0 %v3526
        %3882 = vmatpush1.bf16.msra.mxu0 %v3525
        %3883 = vmatprep.subr.bf16.mxu0 %v3542
        %3884 = vmatpush1.bf16.msra.mxu0 %v3541
        %3885 = vmatprep.subr.bf16.mxu0 %v3558
        %3886 = vmatpush1.bf16.msra.mxu0 %v3557
        %3887 = vmatprep.subr.bf16.mxu0 %v3574
        %3888 = vmatpush1.bf16.msra.mxu0 %v3573
        %3889 = vmatprep.subr.bf16.mxu0 0
        %3890 = vmatpush1.bf16.msra.mxu0 0
        %3891 = vmatprep.subr.bf16.mxu0 0
        %3892 = vmatpush1.bf16.msra.mxu0 0
        %3893 = vmatprep.subr.bf16.mxu0 0
        %3894 = vmatpush1.bf16.msra.mxu0 0
        %3895 = vmatprep.subr.bf16.mxu0 0
        %3896 = vmatpush1.bf16.msra.mxu0 0
        %3897 = vmatprep.subr.bf16.mxu0 0
        %3898 = vmatpush1.bf16.msra.mxu0 0
        %3899 = vmatprep.subr.bf16.mxu0 0
        %3900 = vmatpush1.bf16.msra.mxu0 0
        %3901 = vmatprep.subr.bf16.mxu0 0
        %3902 = vmatpush1.bf16.msra.mxu0 0
        %3903 = vmatprep.subr.bf16.mxu0 0
        %3904 = vmatpush1.bf16.msra.mxu0 0
        %3905 = vmatprep.mubr.bf16.mxu0 0
        %3906 = vmatmul.mubr.bf16.gmra.mrb[0].mxu0 %v2986
        %v3907 = vpop.f32.mrb[0].mxu0
        %v3908 = vadd.f32 %v3024, %v3907
        %v3909 = vpop.f32.mrb[0].mxu0
        %v3910 = vadd.f32 %v3028, %v3909
        %v3911 = vpop.f32.mrb[0].mxu0
        %v3912 = vpop.f32.mrb[0].mxu0
        %3913 = vdwg.mxu0
        %3914 = vmatprep.subr.bf16.mxu0 %v3464
        %3915 = vmatpush1.bf16.msra.mxu0 %v3463
        %3916 = vmatprep.subr.bf16.mxu0 %v3480
        %3917 = vmatpush1.bf16.msra.mxu0 %v3479
        %3918 = vmatprep.subr.bf16.mxu0 %v3496
        %3919 = vmatpush1.bf16.msra.mxu0 %v3495
        %3920 = vmatprep.subr.bf16.mxu0 %v3512
        %3921 = vmatpush1.bf16.msra.mxu0 %v3511
        %3922 = vmatprep.subr.bf16.mxu0 %v3528
        %3923 = vmatpush1.bf16.msra.mxu0 %v3527
        %3924 = vmatprep.subr.bf16.mxu0 %v3544
        %3925 = vmatpush1.bf16.msra.mxu0 %v3543
        %3926 = vmatprep.subr.bf16.mxu0 %v3560
        %3927 = vmatpush1.bf16.msra.mxu0 %v3559
        %3928 = vmatprep.subr.bf16.mxu0 %v3576
        %3929 = vmatpush1.bf16.msra.mxu0 %v3575
        %3930 = vmatprep.subr.bf16.mxu0 0
        %3931 = vmatpush1.bf16.msra.mxu0 0
        %3932 = vmatprep.subr.bf16.mxu0 0
        %3933 = vmatpush1.bf16.msra.mxu0 0
        %3934 = vmatprep.subr.bf16.mxu0 0
        %3935 = vmatpush1.bf16.msra.mxu0 0
        %3936 = vmatprep.subr.bf16.mxu0 0
        %3937 = vmatpush1.bf16.msra.mxu0 0
        %3938 = vmatprep.subr.bf16.mxu0 0
        %3939 = vmatpush1.bf16.msra.mxu0 0
        %3940 = vmatprep.subr.bf16.mxu0 0
        %3941 = vmatpush1.bf16.msra.mxu0 0
        %3942 = vmatprep.subr.bf16.mxu0 0
        %3943 = vmatpush1.bf16.msra.mxu0 0
        %3944 = vmatprep.subr.bf16.mxu0 0
        %3945 = vmatpush1.bf16.msra.mxu0 0
        %3946 = vmatprep.mubr.bf16.mxu0 0
        %3947 = vmatmul.mubr.bf16.gmra.mrb[0].mxu0 %v2986
        %v3948 = vpop.f32.mrb[0].mxu0
        %v3949 = vadd.f32 %v3032, %v3948
        %v3950 = vpop.f32.mrb[0].mxu0
        %v3951 = vadd.f32 %v3036, %v3950
        %v3952 = vpop.f32.mrb[0].mxu0
        %v3953 = vpop.f32.mrb[0].mxu0
        %3954 = vdwg.mxu0
        %3955 = vmatprep.subr.bf16.mxu0 %v3466
        %3956 = vmatpush1.bf16.msra.mxu0 %v3465
        %3957 = vmatprep.subr.bf16.mxu0 %v3482
        %3958 = vmatpush1.bf16.msra.mxu0 %v3481
        %3959 = vmatprep.subr.bf16.mxu0 %v3498
        %3960 = vmatpush1.bf16.msra.mxu0 %v3497
        %3961 = vmatprep.subr.bf16.mxu0 %v3514
        %3962 = vmatpush1.bf16.msra.mxu0 %v3513
        %3963 = vmatprep.subr.bf16.mxu0 %v3530
        %3964 = vmatpush1.bf16.msra.mxu0 %v3529
        %3965 = vmatprep.subr.bf16.mxu0 %v3546
        %3966 = vmatpush1.bf16.msra.mxu0 %v3545
        %3967 = vmatprep.subr.bf16.mxu0 %v3562
        %3968 = vmatpush1.bf16.msra.mxu0 %v3561
        %3969 = vmatprep.subr.bf16.mxu0 %v3578
        %3970 = vmatpush1.bf16.msra.mxu0 %v3577
        %3971 = vmatprep.subr.bf16.mxu0 0
        %3972 = vmatpush1.bf16.msra.mxu0 0
        %3973 = vmatprep.subr.bf16.mxu0 0
        %3974 = vmatpush1.bf16.msra.mxu0 0
        %3975 = vmatprep.subr.bf16.mxu0 0
        %3976 = vmatpush1.bf16.msra.mxu0 0
        %3977 = vmatprep.subr.bf16.mxu0 0
        %3978 = vmatpush1.bf16.msra.mxu0 0
        %3979 = vmatprep.subr.bf16.mxu0 0
        %3980 = vmatpush1.bf16.msra.mxu0 0
        %3981 = vmatprep.subr.bf16.mxu0 0
        %3982 = vmatpush1.bf16.msra.mxu0 0
        %3983 = vmatprep.subr.bf16.mxu0 0
        %3984 = vmatpush1.bf16.msra.mxu0 0
        %3985 = vmatprep.subr.bf16.mxu0 0
        %3986 = vmatpush1.bf16.msra.mxu0 0
        %3987 = vmatprep.mubr.bf16.mxu0 0
        %3988 = vmatmul.mubr.bf16.gmra.mrb[0].mxu0 %v2986
        %v3989 = vpop.f32.mrb[0].mxu0
        %v3990 = vadd.f32 %v3040, %v3989
        %v3991 = vpop.f32.mrb[0].mxu0
        %v3992 = vadd.f32 %v3044, %v3991
        %v3993 = vpop.f32.mrb[0].mxu0
        %v3994 = vpop.f32.mrb[0].mxu0
        %3995 = vdwg.mxu0
        %3996 = vmatprep.subr.bf16.mxu0 %v3468
        %3997 = vmatpush1.bf16.msra.mxu0 %v3467
        %3998 = vmatprep.subr.bf16.mxu0 %v3484
        %3999 = vmatpush1.bf16.msra.mxu0 %v3483
        %4000 = vmatprep.subr.bf16.mxu0 %v3500
        %4001 = vmatpush1.bf16.msra.mxu0 %v3499
        %4002 = vmatprep.subr.bf16.mxu0 %v3516
        %4003 = vmatpush1.bf16.msra.mxu0 %v3515
        %4004 = vmatprep.subr.bf16.mxu0 %v3532
        %4005 = vmatpush1.bf16.msra.mxu0 %v3531
        %4006 = vmatprep.subr.bf16.mxu0 %v3548
        %4007 = vmatpush1.bf16.msra.mxu0 %v3547
        %4008 = vmatprep.subr.bf16.mxu0 %v3564
        %4009 = vmatpush1.bf16.msra.mxu0 %v3563
        %4010 = vmatprep.subr.bf16.mxu0 %v3580
        %4011 = vmatpush1.bf16.msra.mxu0 %v3579
        %4012 = vmatprep.subr.bf16.mxu0 0
        %4013 = vmatpush1.bf16.msra.mxu0 0
        %4014 = vmatprep.subr.bf16.mxu0 0
        %4015 = vmatpush1.bf16.msra.mxu0 0
        %4016 = vmatprep.subr.bf16.mxu0 0
        %4017 = vmatpush1.bf16.msra.mxu0 0
        %4018 = vmatprep.subr.bf16.mxu0 0
        %4019 = vmatpush1.bf16.msra.mxu0 0
        %4020 = vmatprep.subr.bf16.mxu0 0
        %4021 = vmatpush1.bf16.msra.mxu0 0
        %4022 = vmatprep.subr.bf16.mxu0 0
        %4023 = vmatpush1.bf16.msra.mxu0 0
        %4024 = vmatprep.subr.bf16.mxu0 0
        %4025 = vmatpush1.bf16.msra.mxu0 0
        %4026 = vmatprep.subr.bf16.mxu0 0
        %4027 = vmatpush1.bf16.msra.mxu0 0
        %4028 = vmatprep.mubr.bf16.mxu0 0
        %4029 = vmatmul.mubr.bf16.gmra.mrb[0].mxu0 %v2986
        %v4030 = vpop.f32.mrb[0].mxu0
        %v4031 = vadd.f32 %v3048, %v4030
        %v4032 = vpop.f32.mrb[0].mxu0
        %v4033 = vadd.f32 %v3052, %v4032
        %v4034 = vpop.f32.mrb[0].mxu0
        %v4035 = vpop.f32.mrb[0].mxu0
        %4036 = vdwg.mxu0
        %v4037 = vmax.f32 %v3744, 0.0
        %v4038 = vmax.f32 %v3746, 0.0
        %v4039 = vmax.f32 %v3785, 0.0
        %v4040 = vmax.f32 %v3787, 0.0
        %v4041 = vmax.f32 %v3826, 0.0
        %v4042 = vmax.f32 %v3828, 0.0
        %v4043 = vmax.f32 %v3867, 0.0
        %v4044 = vmax.f32 %v3869, 0.0
        %v4045 = vmax.f32 %v3908, 0.0
        %v4046 = vmax.f32 %v3910, 0.0
        %v4047 = vmax.f32 %v3949, 0.0
        %v4048 = vmax.f32 %v3951, 0.0
        %v4049 = vmax.f32 %v3990, 0.0
        %v4050 = vmax.f32 %v3992, 0.0
        %v4051 = vmax.f32 %v4031, 0.0
        %v4052 = vmax.f32 %v4033, 0.0
        %v4053 = vld [vmem:[%s1120] sm:$0xf]
        %v4054 = vld [vmem:[%s1120 + $0x4] sm:$0xf]
        %v4055 = vld [vmem:[%s1120 + $0x8] sm:$0xf]
        %v4056 = vld [vmem:[%s1120 + $0xc] sm:$0xf]
        %v4057 = vld [vmem:[%s1120 + $0x10] sm:$0xf]
        %v4058 = vld [vmem:[%s1120 + $0x14] sm:$0xf]
        %v4059 = vld [vmem:[%s1120 + $0x18] sm:$0xf]
        %v4060 = vld [vmem:[%s1120 + $0x1c] sm:$0xf]
        %v4061 = vld [vmem:[%s1120 + $0x20] sm:$0xf]
        %v4062 = vld [vmem:[%s1120 + $0x24] sm:$0xf]
        %v4063 = vld [vmem:[%s1120 + $0x28] sm:$0xf]
        %v4064 = vld [vmem:[%s1120 + $0x2c] sm:$0xf]
        %v4065 = vld [vmem:[%s1120 + $0x30] sm:$0xf]
        %v4066 = vld [vmem:[%s1120 + $0x34] sm:$0xf]
        %v4067 = vld [vmem:[%s1120 + $0x38] sm:$0xf]
        %v4068 = vld [vmem:[%s1120 + $0x3c] sm:$0xf]
        %v4069 = vld [vmem:[%s1120 + $0x40] sm:$0xf]
        %v4070 = vld [vmem:[%s1120 + $0x44] sm:$0xf]
        %v4071 = vld [vmem:[%s1120 + $0x48] sm:$0xf]
        %v4072 = vld [vmem:[%s1120 + $0x4c] sm:$0xf]
        %v4073 = vld [vmem:[%s1120 + $0x50] sm:$0xf]
        %v4074 = vld [vmem:[%s1120 + $0x54] sm:$0xf]
        %v4075 = vld [vmem:[%s1120 + $0x58] sm:$0xf]
        %v4076 = vld [vmem:[%s1120 + $0x5c] sm:$0xf]
        %v4077 = vld [vmem:[%s1120 + $0x60] sm:$0xf]
        %v4078 = vld [vmem:[%s1120 + $0x64] sm:$0xf]
        %v4079 = vld [vmem:[%s1120 + $0x68] sm:$0xf]
        %v4080 = vld [vmem:[%s1120 + $0x6c] sm:$0xf]
        %v4081 = vld [vmem:[%s1120 + $0x70] sm:$0xf]
        %v4082 = vld [vmem:[%s1120 + $0x74] sm:$0xf]
        %v4083 = vld [vmem:[%s1120 + $0x78] sm:$0xf]
        %v4084 = vld [vmem:[%s1120 + $0x7c] sm:$0xf]
        %v4085 = vld [vmem:[%s1120 + $0x80] sm:$0xf]
        %v4086 = vld [vmem:[%s1120 + $0x84] sm:$0xf]
        %v4087 = vld [vmem:[%s1120 + $0x88] sm:$0xf]
        %v4088 = vld [vmem:[%s1120 + $0x8c] sm:$0xf]
        %v4089 = vld [vmem:[%s1120 + $0x90] sm:$0xf]
        %v4090 = vld [vmem:[%s1120 + $0x94] sm:$0xf]
        %v4091 = vld [vmem:[%s1120 + $0x98] sm:$0xf]
        %v4092 = vld [vmem:[%s1120 + $0x9c] sm:$0xf]
        %v4093 = vld [vmem:[%s1120 + $0xa0] sm:$0xf]
        %v4094 = vld [vmem:[%s1120 + $0xa4] sm:$0xf]
        %v4095 = vld [vmem:[%s1120 + $0xa8] sm:$0xf]
        %v4096 = vld [vmem:[%s1120 + $0xac] sm:$0xf]
        %v4097 = vld [vmem:[%s1120 + $0xb0] sm:$0xf]
        %v4098 = vld [vmem:[%s1120 + $0xb4] sm:$0xf]
        %v4099 = vld [vmem:[%s1120 + $0xb8] sm:$0xf]
        %v4100 = vld [vmem:[%s1120 + $0xbc] sm:$0xf]
        %v4101 = vld [vmem:[%s1120 + $0xc0] sm:$0xf]
        %v4102 = vld [vmem:[%s1120 + $0xc4] sm:$0xf]
        %v4103 = vld [vmem:[%s1120 + $0xc8] sm:$0xf]
        %v4104 = vld [vmem:[%s1120 + $0xcc] sm:$0xf]
        %v4105 = vld [vmem:[%s1120 + $0xd0] sm:$0xf]
        %v4106 = vld [vmem:[%s1120 + $0xd4] sm:$0xf]
        %v4107 = vld [vmem:[%s1120 + $0xd8] sm:$0xf]
        %v4108 = vld [vmem:[%s1120 + $0xdc] sm:$0xf]
        %v4109 = vld [vmem:[%s1120 + $0xe0] sm:$0xf]
        %v4110 = vld [vmem:[%s1120 + $0xe4] sm:$0xf]
        %v4111 = vld [vmem:[%s1120 + $0xe8] sm:$0xf]
        %v4112 = vld [vmem:[%s1120 + $0xec] sm:$0xf]
        %v4113 = vld [vmem:[%s1120 + $0xf0] sm:$0xf]
        %v4114 = vld [vmem:[%s1120 + $0xf4] sm:$0xf]
        %v4115 = vld [vmem:[%s1120 + $0xf8] sm:$0xf]
        %v4116 = vld [vmem:[%s1120 + $0xfc] sm:$0xf]
        %v4117 = vld [vmem:[%s1120 + $0x100] sm:$0xf]
        %v4118 = vld [vmem:[%s1120 + $0x104] sm:$0xf]
        %v4119 = vld [vmem:[%s1120 + $0x108] sm:$0xf]
        %v4120 = vld [vmem:[%s1120 + $0x10c] sm:$0xf]
        %v4121 = vld [vmem:[%s1120 + $0x110] sm:$0xf]
        %v4122 = vld [vmem:[%s1120 + $0x114] sm:$0xf]
        %v4123 = vld [vmem:[%s1120 + $0x118] sm:$0xf]
        %v4124 = vld [vmem:[%s1120 + $0x11c] sm:$0xf]
        %v4125 = vld [vmem:[%s1120 + $0x120] sm:$0xf]
        %v4126 = vld [vmem:[%s1120 + $0x124] sm:$0xf]
        %v4127 = vld [vmem:[%s1120 + $0x128] sm:$0xf]
        %v4128 = vld [vmem:[%s1120 + $0x12c] sm:$0xf]
        %v4129 = vld [vmem:[%s1120 + $0x130] sm:$0xf]
        %v4130 = vld [vmem:[%s1120 + $0x134] sm:$0xf]
        %v4131 = vld [vmem:[%s1120 + $0x138] sm:$0xf]
        %v4132 = vld [vmem:[%s1120 + $0x13c] sm:$0xf]
        %v4133 = vld [vmem:[%s1120 + $0x140] sm:$0xf]
        %v4134 = vld [vmem:[%s1120 + $0x144] sm:$0xf]
        %v4135 = vld [vmem:[%s1120 + $0x148] sm:$0xf]
        %v4136 = vld [vmem:[%s1120 + $0x14c] sm:$0xf]
        %v4137 = vld [vmem:[%s1120 + $0x150] sm:$0xf]
        %v4138 = vld [vmem:[%s1120 + $0x154] sm:$0xf]
        %v4139 = vld [vmem:[%s1120 + $0x158] sm:$0xf]
        %v4140 = vld [vmem:[%s1120 + $0x15c] sm:$0xf]
        %v4141 = vld [vmem:[%s1120 + $0x160] sm:$0xf]
        %v4142 = vld [vmem:[%s1120 + $0x164] sm:$0xf]
        %v4143 = vld [vmem:[%s1120 + $0x168] sm:$0xf]
        %v4144 = vld [vmem:[%s1120 + $0x16c] sm:$0xf]
        %v4145 = vld [vmem:[%s1120 + $0x170] sm:$0xf]
        %v4146 = vld [vmem:[%s1120 + $0x174] sm:$0xf]
        %v4147 = vld [vmem:[%s1120 + $0x178] sm:$0xf]
        %v4148 = vld [vmem:[%s1120 + $0x17c] sm:$0xf]
        %v4149 = vld [vmem:[%s1120 + $0x180] sm:$0xf]
        %v4150 = vld [vmem:[%s1120 + $0x184] sm:$0xf]
        %v4151 = vld [vmem:[%s1120 + $0x188] sm:$0xf]
        %v4152 = vld [vmem:[%s1120 + $0x18c] sm:$0xf]
        %v4153 = vld [vmem:[%s1120 + $0x190] sm:$0xf]
        %v4154 = vld [vmem:[%s1120 + $0x194] sm:$0xf]
        %v4155 = vld [vmem:[%s1120 + $0x198] sm:$0xf]
        %v4156 = vld [vmem:[%s1120 + $0x19c] sm:$0xf]
        %v4157 = vld [vmem:[%s1120 + $0x1a0] sm:$0xf]
        %v4158 = vld [vmem:[%s1120 + $0x1a4] sm:$0xf]
        %v4159 = vld [vmem:[%s1120 + $0x1a8] sm:$0xf]
        %v4160 = vld [vmem:[%s1120 + $0x1ac] sm:$0xf]
        %v4161 = vld [vmem:[%s1120 + $0x1b0] sm:$0xf]
        %v4162 = vld [vmem:[%s1120 + $0x1b4] sm:$0xf]
        %v4163 = vld [vmem:[%s1120 + $0x1b8] sm:$0xf]
        %v4164 = vld [vmem:[%s1120 + $0x1bc] sm:$0xf]
        %v4165 = vld [vmem:[%s1120 + $0x1c0] sm:$0xf]
        %v4166 = vld [vmem:[%s1120 + $0x1c4] sm:$0xf]
        %v4167 = vld [vmem:[%s1120 + $0x1c8] sm:$0xf]
        %v4168 = vld [vmem:[%s1120 + $0x1cc] sm:$0xf]
        %v4169 = vld [vmem:[%s1120 + $0x1d0] sm:$0xf]
        %v4170 = vld [vmem:[%s1120 + $0x1d4] sm:$0xf]
        %v4171 = vld [vmem:[%s1120 + $0x1d8] sm:$0xf]
        %v4172 = vld [vmem:[%s1120 + $0x1dc] sm:$0xf]
        %v4173 = vld [vmem:[%s1120 + $0x1e0] sm:$0xf]
        %v4174 = vld [vmem:[%s1120 + $0x1e4] sm:$0xf]
        %v4175 = vld [vmem:[%s1120 + $0x1e8] sm:$0xf]
        %v4176 = vld [vmem:[%s1120 + $0x1ec] sm:$0xf]
        %v4177 = vld [vmem:[%s1120 + $0x1f0] sm:$0xf]
        %v4178 = vld [vmem:[%s1120 + $0x1f4] sm:$0xf]
        %v4179 = vld [vmem:[%s1120 + $0x1f8] sm:$0xf]
        %v4180 = vld [vmem:[%s1120 + $0x1fc] sm:$0xf]
        %v4181 = vld [vmem:[%s1120 + $0x200] sm:$0xf]
        %v4182 = vld [vmem:[%s1120 + $0x204] sm:$0xf]
        %v4183 = vld [vmem:[%s1120 + $0x208] sm:$0xf]
        %v4184 = vld [vmem:[%s1120 + $0x20c] sm:$0xf]
        %v4185 = vld [vmem:[%s1120 + $0x210] sm:$0xf]
        %v4186 = vld [vmem:[%s1120 + $0x214] sm:$0xf]
        %v4187 = vld [vmem:[%s1120 + $0x218] sm:$0xf]
        %v4188 = vld [vmem:[%s1120 + $0x21c] sm:$0xf]
        %v4189 = vld [vmem:[%s1120 + $0x220] sm:$0xf]
        %v4190 = vld [vmem:[%s1120 + $0x224] sm:$0xf]
        %v4191 = vld [vmem:[%s1120 + $0x228] sm:$0xf]
        %v4192 = vld [vmem:[%s1120 + $0x22c] sm:$0xf]
        %v4193 = vld [vmem:[%s1120 + $0x230] sm:$0xf]
        %v4194 = vld [vmem:[%s1120 + $0x234] sm:$0xf]
        %v4195 = vld [vmem:[%s1120 + $0x238] sm:$0xf]
        %v4196 = vld [vmem:[%s1120 + $0x23c] sm:$0xf]
        %v4197 = vld [vmem:[%s1120 + $0x240] sm:$0xf]
        %v4198 = vld [vmem:[%s1120 + $0x244] sm:$0xf]
        %v4199 = vld [vmem:[%s1120 + $0x248] sm:$0xf]
        %v4200 = vld [vmem:[%s1120 + $0x24c] sm:$0xf]
        %v4201 = vld [vmem:[%s1120 + $0x250] sm:$0xf]
        %v4202 = vld [vmem:[%s1120 + $0x254] sm:$0xf]
        %v4203 = vld [vmem:[%s1120 + $0x258] sm:$0xf]
        %v4204 = vld [vmem:[%s1120 + $0x25c] sm:$0xf]
        %v4205 = vld [vmem:[%s1120 + $0x260] sm:$0xf]
        %v4206 = vld [vmem:[%s1120 + $0x264] sm:$0xf]
        %v4207 = vld [vmem:[%s1120 + $0x268] sm:$0xf]
        %v4208 = vld [vmem:[%s1120 + $0x26c] sm:$0xf]
        %v4209 = vld [vmem:[%s1120 + $0x270] sm:$0xf]
        %v4210 = vld [vmem:[%s1120 + $0x274] sm:$0xf]
        %v4211 = vld [vmem:[%s1120 + $0x278] sm:$0xf]
        %v4212 = vld [vmem:[%s1120 + $0x27c] sm:$0xf]
        %v4213 = vld [vmem:[%s1120 + $0x280] sm:$0xf]
        %v4214 = vld [vmem:[%s1120 + $0x284] sm:$0xf]
        %v4215 = vld [vmem:[%s1120 + $0x288] sm:$0xf]
        %v4216 = vld [vmem:[%s1120 + $0x28c] sm:$0xf]
        %v4217 = vld [vmem:[%s1120 + $0x290] sm:$0xf]
        %v4218 = vld [vmem:[%s1120 + $0x294] sm:$0xf]
        %v4219 = vld [vmem:[%s1120 + $0x298] sm:$0xf]
        %v4220 = vld [vmem:[%s1120 + $0x29c] sm:$0xf]
        %v4221 = vld [vmem:[%s1120 + $0x2a0] sm:$0xf]
        %v4222 = vld [vmem:[%s1120 + $0x2a4] sm:$0xf]
        %v4223 = vld [vmem:[%s1120 + $0x2a8] sm:$0xf]
        %v4224 = vld [vmem:[%s1120 + $0x2ac] sm:$0xf]
        %v4225 = vld [vmem:[%s1120 + $0x2b0] sm:$0xf]
        %v4226 = vld [vmem:[%s1120 + $0x2b4] sm:$0xf]
        %v4227 = vld [vmem:[%s1120 + $0x2b8] sm:$0xf]
        %v4228 = vld [vmem:[%s1120 + $0x2bc] sm:$0xf]
        %v4229 = vld [vmem:[%s1120 + $0x2c0] sm:$0xf]
        %v4230 = vld [vmem:[%s1120 + $0x2c4] sm:$0xf]
        %v4231 = vld [vmem:[%s1120 + $0x2c8] sm:$0xf]
        %v4232 = vld [vmem:[%s1120 + $0x2cc] sm:$0xf]
        %v4233 = vld [vmem:[%s1120 + $0x2d0] sm:$0xf]
        %v4234 = vld [vmem:[%s1120 + $0x2d4] sm:$0xf]
        %v4235 = vld [vmem:[%s1120 + $0x2d8] sm:$0xf]
        %v4236 = vld [vmem:[%s1120 + $0x2dc] sm:$0xf]
        %v4237 = vld [vmem:[%s1120 + $0x2e0] sm:$0xf]
        %v4238 = vld [vmem:[%s1120 + $0x2e4] sm:$0xf]
        %v4239 = vld [vmem:[%s1120 + $0x2e8] sm:$0xf]
        %v4240 = vld [vmem:[%s1120 + $0x2ec] sm:$0xf]
        %v4241 = vld [vmem:[%s1120 + $0x2f0] sm:$0xf]
        %v4242 = vld [vmem:[%s1120 + $0x2f4] sm:$0xf]
        %v4243 = vld [vmem:[%s1120 + $0x2f8] sm:$0xf]
        %v4244 = vld [vmem:[%s1120 + $0x2fc] sm:$0xf]
        %v4245 = vld [vmem:[%s1120 + $0x300] sm:$0xf]
        %v4246 = vld [vmem:[%s1120 + $0x304] sm:$0xf]
        %v4247 = vld [vmem:[%s1120 + $0x308] sm:$0xf]
        %v4248 = vld [vmem:[%s1120 + $0x30c] sm:$0xf]
        %v4249 = vld [vmem:[%s1120 + $0x310] sm:$0xf]
        %v4250 = vld [vmem:[%s1120 + $0x314] sm:$0xf]
        %v4251 = vld [vmem:[%s1120 + $0x318] sm:$0xf]
        %v4252 = vld [vmem:[%s1120 + $0x31c] sm:$0xf]
        %v4253 = vld [vmem:[%s1120 + $0x320] sm:$0xf]
        %v4254 = vld [vmem:[%s1120 + $0x324] sm:$0xf]
        %v4255 = vld [vmem:[%s1120 + $0x328] sm:$0xf]
        %v4256 = vld [vmem:[%s1120 + $0x32c] sm:$0xf]
        %v4257 = vld [vmem:[%s1120 + $0x330] sm:$0xf]
        %v4258 = vld [vmem:[%s1120 + $0x334] sm:$0xf]
        %v4259 = vld [vmem:[%s1120 + $0x338] sm:$0xf]
        %v4260 = vld [vmem:[%s1120 + $0x33c] sm:$0xf]
        %v4261 = vld [vmem:[%s1120 + $0x340] sm:$0xf]
        %v4262 = vld [vmem:[%s1120 + $0x344] sm:$0xf]
        %v4263 = vld [vmem:[%s1120 + $0x348] sm:$0xf]
        %v4264 = vld [vmem:[%s1120 + $0x34c] sm:$0xf]
        %v4265 = vld [vmem:[%s1120 + $0x350] sm:$0xf]
        %v4266 = vld [vmem:[%s1120 + $0x354] sm:$0xf]
        %v4267 = vld [vmem:[%s1120 + $0x358] sm:$0xf]
        %v4268 = vld [vmem:[%s1120 + $0x35c] sm:$0xf]
        %v4269 = vld [vmem:[%s1120 + $0x360] sm:$0xf]
        %v4270 = vld [vmem:[%s1120 + $0x364] sm:$0xf]
        %v4271 = vld [vmem:[%s1120 + $0x368] sm:$0xf]
        %v4272 = vld [vmem:[%s1120 + $0x36c] sm:$0xf]
        %v4273 = vld [vmem:[%s1120 + $0x370] sm:$0xf]
        %v4274 = vld [vmem:[%s1120 + $0x374] sm:$0xf]
        %v4275 = vld [vmem:[%s1120 + $0x378] sm:$0xf]
        %v4276 = vld [vmem:[%s1120 + $0x37c] sm:$0xf]
        %v4277 = vld [vmem:[%s1120 + $0x380] sm:$0xf]
        %v4278 = vld [vmem:[%s1120 + $0x384] sm:$0xf]
        %v4279 = vld [vmem:[%s1120 + $0x388] sm:$0xf]
        %v4280 = vld [vmem:[%s1120 + $0x38c] sm:$0xf]
        %v4281 = vld [vmem:[%s1120 + $0x390] sm:$0xf]
        %v4282 = vld [vmem:[%s1120 + $0x394] sm:$0xf]
        %v4283 = vld [vmem:[%s1120 + $0x398] sm:$0xf]
        %v4284 = vld [vmem:[%s1120 + $0x39c] sm:$0xf]
        %v4285 = vld [vmem:[%s1120 + $0x3a0] sm:$0xf]
        %v4286 = vld [vmem:[%s1120 + $0x3a4] sm:$0xf]
        %v4287 = vld [vmem:[%s1120 + $0x3a8] sm:$0xf]
        %v4288 = vld [vmem:[%s1120 + $0x3ac] sm:$0xf]
        %v4289 = vld [vmem:[%s1120 + $0x3b0] sm:$0xf]
        %v4290 = vld [vmem:[%s1120 + $0x3b4] sm:$0xf]
        %v4291 = vld [vmem:[%s1120 + $0x3b8] sm:$0xf]
        %v4292 = vld [vmem:[%s1120 + $0x3bc] sm:$0xf]
        %v4293 = vld [vmem:[%s1120 + $0x3c0] sm:$0xf]
        %v4294 = vld [vmem:[%s1120 + $0x3c4] sm:$0xf]
        %v4295 = vld [vmem:[%s1120 + $0x3c8] sm:$0xf]
        %v4296 = vld [vmem:[%s1120 + $0x3cc] sm:$0xf]
        %v4297 = vld [vmem:[%s1120 + $0x3d0] sm:$0xf]
        %v4298 = vld [vmem:[%s1120 + $0x3d4] sm:$0xf]
        %v4299 = vld [vmem:[%s1120 + $0x3d8] sm:$0xf]
        %v4300 = vld [vmem:[%s1120 + $0x3dc] sm:$0xf]
        %v4301 = vld [vmem:[%s1120 + $0x3e0] sm:$0xf]
        %v4302 = vld [vmem:[%s1120 + $0x3e4] sm:$0xf]
        %v4303 = vld [vmem:[%s1120 + $0x3e8] sm:$0xf]
        %v4304 = vld [vmem:[%s1120 + $0x3ec] sm:$0xf]
        %v4305 = vld [vmem:[%s1120 + $0x3f0] sm:$0xf]
        %v4306 = vld [vmem:[%s1120 + $0x3f4] sm:$0xf]
        %v4307 = vld [vmem:[%s1120 + $0x3f8] sm:$0xf]
        %v4308 = vld [vmem:[%s1120 + $0x3fc] sm:$0xf]
        %v4309 = vld [vmem:[%s1123] sm:$0x1]
        %v4310 = vpack.c.bf16 %v4037, %v4037
        %v4311 = vpack.c.bf16 %v4038, %v4038
        %v4312 = vpack.c.bf16 %v4039, %v4039
        %v4313 = vpack.c.bf16 %v4040, %v4040
        %v4314 = vpack.c.bf16 %v4041, %v4041
        %v4315 = vpack.c.bf16 %v4042, %v4042
        %v4316 = vpack.c.bf16 %v4043, %v4043
        %v4317 = vpack.c.bf16 %v4044, %v4044
        %v4318 = vpack.c.bf16 %v4045, %v4045
        %v4319 = vpack.c.bf16 %v4046, %v4046
        %v4320 = vpack.c.bf16 %v4047, %v4047
        %v4321 = vpack.c.bf16 %v4048, %v4048
        %v4322 = vpack.c.bf16 %v4049, %v4049
        %v4323 = vpack.c.bf16 %v4050, %v4050
        %v4324 = vpack.c.bf16 %v4051, %v4051
        %v4325 = vpack.c.bf16 %v4052, %v4052
        %v4327 = vlaneseq
        %v4328 = vshrl.u32 %v4327, 7
        %v4329 = vsub.s32 0, %v4328
        %v4330 = vrot.slane %v4309, %v4329
        %v4588 = vunpack.c.l.b16 %v4053
        %v4589 = vunpack.c.l.b16 %v4054
        %v4590 = vunpack.c.l.b16 %v4055
        %v4591 = vunpack.c.l.b16 %v4056
        %v4592 = vunpack.c.l.b16 %v4057
        %v4593 = vunpack.c.l.b16 %v4058
        %v4594 = vunpack.c.l.b16 %v4059
        %v4595 = vunpack.c.l.b16 %v4060
        %v4596 = vunpack.c.l.b16 %v4061
        %v4597 = vunpack.c.l.b16 %v4062
        %v4598 = vunpack.c.l.b16 %v4063
        %v4599 = vunpack.c.l.b16 %v4064
        %v4600 = vunpack.c.l.b16 %v4065
        %v4601 = vunpack.c.l.b16 %v4066
        %v4602 = vunpack.c.l.b16 %v4067
        %v4603 = vunpack.c.l.b16 %v4068
        %v4604 = vunpack.c.l.b16 %v4069
        %v4605 = vunpack.c.l.b16 %v4070
        %v4606 = vunpack.c.l.b16 %v4071
        %v4607 = vunpack.c.l.b16 %v4072
        %v4608 = vunpack.c.l.b16 %v4073
        %v4609 = vunpack.c.l.b16 %v4074
        %v4610 = vunpack.c.l.b16 %v4075
        %v4611 = vunpack.c.l.b16 %v4076
        %v4612 = vunpack.c.l.b16 %v4077
        %v4613 = vunpack.c.l.b16 %v4078
        %v4614 = vunpack.c.l.b16 %v4079
        %v4615 = vunpack.c.l.b16 %v4080
        %v4616 = vunpack.c.l.b16 %v4081
        %v4617 = vunpack.c.l.b16 %v4082
        %v4618 = vunpack.c.l.b16 %v4083
        %v4619 = vunpack.c.l.b16 %v4084
        %v4620 = vunpack.c.l.b16 %v4085
        %v4621 = vunpack.c.l.b16 %v4086
        %v4622 = vunpack.c.l.b16 %v4087
        %v4623 = vunpack.c.l.b16 %v4088
        %v4624 = vunpack.c.l.b16 %v4089
        %v4625 = vunpack.c.l.b16 %v4090
        %v4626 = vunpack.c.l.b16 %v4091
        %v4627 = vunpack.c.l.b16 %v4092
        %v4628 = vunpack.c.l.b16 %v4093
        %v4629 = vunpack.c.l.b16 %v4094
        %v4630 = vunpack.c.l.b16 %v4095
        %v4631 = vunpack.c.l.b16 %v4096
        %v4632 = vunpack.c.l.b16 %v4097
        %v4633 = vunpack.c.l.b16 %v4098
        %v4634 = vunpack.c.l.b16 %v4099
        %v4635 = vunpack.c.l.b16 %v4100
        %v4636 = vunpack.c.l.b16 %v4101
        %v4637 = vunpack.c.l.b16 %v4102
        %v4638 = vunpack.c.l.b16 %v4103
        %v4639 = vunpack.c.l.b16 %v4104
        %v4640 = vunpack.c.l.b16 %v4105
        %v4641 = vunpack.c.l.b16 %v4106
        %v4642 = vunpack.c.l.b16 %v4107
        %v4643 = vunpack.c.l.b16 %v4108
        %v4644 = vunpack.c.l.b16 %v4109
        %v4645 = vunpack.c.l.b16 %v4110
        %v4646 = vunpack.c.l.b16 %v4111
        %v4647 = vunpack.c.l.b16 %v4112
        %v4648 = vunpack.c.l.b16 %v4113
        %v4649 = vunpack.c.l.b16 %v4114
        %v4650 = vunpack.c.l.b16 %v4115
        %v4651 = vunpack.c.l.b16 %v4116
        %v4652 = vunpack.c.l.b16 %v4117
        %v4653 = vunpack.c.l.b16 %v4118
        %v4654 = vunpack.c.l.b16 %v4119
        %v4655 = vunpack.c.l.b16 %v4120
        %v4656 = vunpack.c.l.b16 %v4121
        %v4657 = vunpack.c.l.b16 %v4122
        %v4658 = vunpack.c.l.b16 %v4123
        %v4659 = vunpack.c.l.b16 %v4124
        %v4660 = vunpack.c.l.b16 %v4125
        %v4661 = vunpack.c.l.b16 %v4126
        %v4662 = vunpack.c.l.b16 %v4127
        %v4663 = vunpack.c.l.b16 %v4128
        %v4664 = vunpack.c.l.b16 %v4129
        %v4665 = vunpack.c.l.b16 %v4130
        %v4666 = vunpack.c.l.b16 %v4131
        %v4667 = vunpack.c.l.b16 %v4132
        %v4668 = vunpack.c.l.b16 %v4133
        %v4669 = vunpack.c.l.b16 %v4134
        %v4670 = vunpack.c.l.b16 %v4135
        %v4671 = vunpack.c.l.b16 %v4136
        %v4672 = vunpack.c.l.b16 %v4137
        %v4673 = vunpack.c.l.b16 %v4138
        %v4674 = vunpack.c.l.b16 %v4139
        %v4675 = vunpack.c.l.b16 %v4140
        %v4676 = vunpack.c.l.b16 %v4141
        %v4677 = vunpack.c.l.b16 %v4142
        %v4678 = vunpack.c.l.b16 %v4143
        %v4679 = vunpack.c.l.b16 %v4144
        %v4680 = vunpack.c.l.b16 %v4145
        %v4681 = vunpack.c.l.b16 %v4146
        %v4682 = vunpack.c.l.b16 %v4147
        %v4683 = vunpack.c.l.b16 %v4148
        %v4684 = vunpack.c.l.b16 %v4149
        %v4685 = vunpack.c.l.b16 %v4150
        %v4686 = vunpack.c.l.b16 %v4151
        %v4687 = vunpack.c.l.b16 %v4152
        %v4688 = vunpack.c.l.b16 %v4153
        %v4689 = vunpack.c.l.b16 %v4154
        %v4690 = vunpack.c.l.b16 %v4155
        %v4691 = vunpack.c.l.b16 %v4156
        %v4692 = vunpack.c.l.b16 %v4157
        %v4693 = vunpack.c.l.b16 %v4158
        %v4694 = vunpack.c.l.b16 %v4159
        %v4695 = vunpack.c.l.b16 %v4160
        %v4696 = vunpack.c.l.b16 %v4161
        %v4697 = vunpack.c.l.b16 %v4162
        %v4698 = vunpack.c.l.b16 %v4163
        %v4699 = vunpack.c.l.b16 %v4164
        %v4700 = vunpack.c.l.b16 %v4165
        %v4701 = vunpack.c.l.b16 %v4166
        %v4702 = vunpack.c.l.b16 %v4167
        %v4703 = vunpack.c.l.b16 %v4168
        %v4704 = vunpack.c.l.b16 %v4169
        %v4705 = vunpack.c.l.b16 %v4170
        %v4706 = vunpack.c.l.b16 %v4171
        %v4707 = vunpack.c.l.b16 %v4172
        %v4708 = vunpack.c.l.b16 %v4173
        %v4709 = vunpack.c.l.b16 %v4174
        %v4710 = vunpack.c.l.b16 %v4175
        %v4711 = vunpack.c.l.b16 %v4176
        %v4712 = vunpack.c.l.b16 %v4177
        %v4713 = vunpack.c.l.b16 %v4178
        %v4714 = vunpack.c.l.b16 %v4179
        %v4715 = vunpack.c.l.b16 %v4180
        %v4716 = vunpack.c.l.b16 %v4181
        %v4717 = vunpack.c.l.b16 %v4182
        %v4718 = vunpack.c.l.b16 %v4183
        %v4719 = vunpack.c.l.b16 %v4184
        %v4720 = vunpack.c.l.b16 %v4185
        %v4721 = vunpack.c.l.b16 %v4186
        %v4722 = vunpack.c.l.b16 %v4187
        %v4723 = vunpack.c.l.b16 %v4188
        %v4724 = vunpack.c.l.b16 %v4189
        %v4725 = vunpack.c.l.b16 %v4190
        %v4726 = vunpack.c.l.b16 %v4191
        %v4727 = vunpack.c.l.b16 %v4192
        %v4728 = vunpack.c.l.b16 %v4193
        %v4729 = vunpack.c.l.b16 %v4194
        %v4730 = vunpack.c.l.b16 %v4195
        %v4731 = vunpack.c.l.b16 %v4196
        %v4732 = vunpack.c.l.b16 %v4197
        %v4733 = vunpack.c.l.b16 %v4198
        %v4734 = vunpack.c.l.b16 %v4199
        %v4735 = vunpack.c.l.b16 %v4200
        %v4736 = vunpack.c.l.b16 %v4201
        %v4737 = vunpack.c.l.b16 %v4202
        %v4738 = vunpack.c.l.b16 %v4203
        %v4739 = vunpack.c.l.b16 %v4204
        %v4740 = vunpack.c.l.b16 %v4205
        %v4741 = vunpack.c.l.b16 %v4206
        %v4742 = vunpack.c.l.b16 %v4207
        %v4743 = vunpack.c.l.b16 %v4208
        %v4744 = vunpack.c.l.b16 %v4209
        %v4745 = vunpack.c.l.b16 %v4210
        %v4746 = vunpack.c.l.b16 %v4211
        %v4747 = vunpack.c.l.b16 %v4212
        %v4748 = vunpack.c.l.b16 %v4213
        %v4749 = vunpack.c.l.b16 %v4214
        %v4750 = vunpack.c.l.b16 %v4215
        %v4751 = vunpack.c.l.b16 %v4216
        %v4752 = vunpack.c.l.b16 %v4217
        %v4753 = vunpack.c.l.b16 %v4218
        %v4754 = vunpack.c.l.b16 %v4219
        %v4755 = vunpack.c.l.b16 %v4220
        %v4756 = vunpack.c.l.b16 %v4221
        %v4757 = vunpack.c.l.b16 %v4222
        %v4758 = vunpack.c.l.b16 %v4223
        %v4759 = vunpack.c.l.b16 %v4224
        %v4760 = vunpack.c.l.b16 %v4225
        %v4761 = vunpack.c.l.b16 %v4226
        %v4762 = vunpack.c.l.b16 %v4227
        %v4763 = vunpack.c.l.b16 %v4228
        %v4764 = vunpack.c.l.b16 %v4229
        %v4765 = vunpack.c.l.b16 %v4230
        %v4766 = vunpack.c.l.b16 %v4231
        %v4767 = vunpack.c.l.b16 %v4232
        %v4768 = vunpack.c.l.b16 %v4233
        %v4769 = vunpack.c.l.b16 %v4234
        %v4770 = vunpack.c.l.b16 %v4235
        %v4771 = vunpack.c.l.b16 %v4236
        %v4772 = vunpack.c.l.b16 %v4237
        %v4773 = vunpack.c.l.b16 %v4238
        %v4774 = vunpack.c.l.b16 %v4239
        %v4775 = vunpack.c.l.b16 %v4240
        %v4776 = vunpack.c.l.b16 %v4241
        %v4777 = vunpack.c.l.b16 %v4242
        %v4778 = vunpack.c.l.b16 %v4243
        %v4779 = vunpack.c.l.b16 %v4244
        %v4780 = vunpack.c.l.b16 %v4245
        %v4781 = vunpack.c.l.b16 %v4246
        %v4782 = vunpack.c.l.b16 %v4247
        %v4783 = vunpack.c.l.b16 %v4248
        %v4784 = vunpack.c.l.b16 %v4249
        %v4785 = vunpack.c.l.b16 %v4250
        %v4786 = vunpack.c.l.b16 %v4251
        %v4787 = vunpack.c.l.b16 %v4252
        %v4788 = vunpack.c.l.b16 %v4253
        %v4789 = vunpack.c.l.b16 %v4254
        %v4790 = vunpack.c.l.b16 %v4255
        %v4791 = vunpack.c.l.b16 %v4256
        %v4792 = vunpack.c.l.b16 %v4257
        %v4793 = vunpack.c.l.b16 %v4258
        %v4794 = vunpack.c.l.b16 %v4259
        %v4795 = vunpack.c.l.b16 %v4260
        %v4796 = vunpack.c.l.b16 %v4261
        %v4797 = vunpack.c.l.b16 %v4262
        %v4798 = vunpack.c.l.b16 %v4263
        %v4799 = vunpack.c.l.b16 %v4264
        %v4800 = vunpack.c.l.b16 %v4265
        %v4801 = vunpack.c.l.b16 %v4266
        %v4802 = vunpack.c.l.b16 %v4267
        %v4803 = vunpack.c.l.b16 %v4268
        %v4804 = vunpack.c.l.b16 %v4269
        %v4805 = vunpack.c.l.b16 %v4270
        %v4806 = vunpack.c.l.b16 %v4271
        %v4807 = vunpack.c.l.b16 %v4272
        %v4808 = vunpack.c.l.b16 %v4273
        %v4809 = vunpack.c.l.b16 %v4274
        %v4810 = vunpack.c.l.b16 %v4275
        %v4811 = vunpack.c.l.b16 %v4276
        %v4812 = vunpack.c.l.b16 %v4277
        %v4813 = vunpack.c.l.b16 %v4278
        %v4814 = vunpack.c.l.b16 %v4279
        %v4815 = vunpack.c.l.b16 %v4280
        %v4816 = vunpack.c.l.b16 %v4281
        %v4817 = vunpack.c.l.b16 %v4282
        %v4818 = vunpack.c.l.b16 %v4283
        %v4819 = vunpack.c.l.b16 %v4284
        %v4820 = vunpack.c.l.b16 %v4285
        %v4821 = vunpack.c.l.b16 %v4286
        %v4822 = vunpack.c.l.b16 %v4287
        %v4823 = vunpack.c.l.b16 %v4288
        %v4824 = vunpack.c.l.b16 %v4289
        %v4825 = vunpack.c.l.b16 %v4290
        %v4826 = vunpack.c.l.b16 %v4291
        %v4827 = vunpack.c.l.b16 %v4292
        %v4828 = vunpack.c.l.b16 %v4293
        %v4829 = vunpack.c.l.b16 %v4294
        %v4830 = vunpack.c.l.b16 %v4295
        %v4831 = vunpack.c.l.b16 %v4296
        %v4832 = vunpack.c.l.b16 %v4297
        %v4833 = vunpack.c.l.b16 %v4298
        %v4834 = vunpack.c.l.b16 %v4299
        %v4835 = vunpack.c.l.b16 %v4300
        %v4836 = vunpack.c.l.b16 %v4301
        %v4837 = vunpack.c.l.b16 %v4302
        %v4838 = vunpack.c.l.b16 %v4303
        %v4839 = vunpack.c.l.b16 %v4304
        %v4840 = vunpack.c.l.b16 %v4305
        %v4841 = vunpack.c.l.b16 %v4306
        %v4842 = vunpack.c.l.b16 %v4307
        %v4843 = vunpack.c.l.b16 %v4308
        %v4844 = vpack.c.b16 %v4589, %v4588
        %v4845 = vpack.c.b16 %v4591, %v4590
        %v4846 = vpack.c.b16 %v4593, %v4592
        %v4847 = vpack.c.b16 %v4595, %v4594
        %v4848 = vpack.c.b16 %v4597, %v4596
        %v4849 = vpack.c.b16 %v4599, %v4598
        %v4850 = vpack.c.b16 %v4601, %v4600
        %v4851 = vpack.c.b16 %v4603, %v4602
        %v4852 = vpack.c.b16 %v4605, %v4604
        %v4853 = vpack.c.b16 %v4607, %v4606
        %v4854 = vpack.c.b16 %v4609, %v4608
        %v4855 = vpack.c.b16 %v4611, %v4610
        %v4856 = vpack.c.b16 %v4613, %v4612
        %v4857 = vpack.c.b16 %v4615, %v4614
        %v4858 = vpack.c.b16 %v4617, %v4616
        %v4859 = vpack.c.b16 %v4619, %v4618
        %v4860 = vpack.c.b16 %v4621, %v4620
        %v4861 = vpack.c.b16 %v4623, %v4622
        %v4862 = vpack.c.b16 %v4625, %v4624
        %v4863 = vpack.c.b16 %v4627, %v4626
        %v4864 = vpack.c.b16 %v4629, %v4628
        %v4865 = vpack.c.b16 %v4631, %v4630
        %v4866 = vpack.c.b16 %v4633, %v4632
        %v4867 = vpack.c.b16 %v4635, %v4634
        %v4868 = vpack.c.b16 %v4637, %v4636
        %v4869 = vpack.c.b16 %v4639, %v4638
        %v4870 = vpack.c.b16 %v4641, %v4640
        %v4871 = vpack.c.b16 %v4643, %v4642
        %v4872 = vpack.c.b16 %v4645, %v4644
        %v4873 = vpack.c.b16 %v4647, %v4646
        %v4874 = vpack.c.b16 %v4649, %v4648
        %v4875 = vpack.c.b16 %v4651, %v4650
        %v4876 = vpack.c.b16 %v4653, %v4652
        %v4877 = vpack.c.b16 %v4655, %v4654
        %v4878 = vpack.c.b16 %v4657, %v4656
        %v4879 = vpack.c.b16 %v4659, %v4658
        %v4880 = vpack.c.b16 %v4661, %v4660
        %v4881 = vpack.c.b16 %v4663, %v4662
        %v4882 = vpack.c.b16 %v4665, %v4664
        %v4883 = vpack.c.b16 %v4667, %v4666
        %v4884 = vpack.c.b16 %v4669, %v4668
        %v4885 = vpack.c.b16 %v4671, %v4670
        %v4886 = vpack.c.b16 %v4673, %v4672
        %v4887 = vpack.c.b16 %v4675, %v4674
        %v4888 = vpack.c.b16 %v4677, %v4676
        %v4889 = vpack.c.b16 %v4679, %v4678
        %v4890 = vpack.c.b16 %v4681, %v4680
        %v4891 = vpack.c.b16 %v4683, %v4682
        %v4892 = vpack.c.b16 %v4685, %v4684
        %v4893 = vpack.c.b16 %v4687, %v4686
        %v4894 = vpack.c.b16 %v4689, %v4688
        %v4895 = vpack.c.b16 %v4691, %v4690
        %v4896 = vpack.c.b16 %v4693, %v4692
        %v4897 = vpack.c.b16 %v4695, %v4694
        %v4898 = vpack.c.b16 %v4697, %v4696
        %v4899 = vpack.c.b16 %v4699, %v4698
        %v4900 = vpack.c.b16 %v4701, %v4700
        %v4901 = vpack.c.b16 %v4703, %v4702
        %v4902 = vpack.c.b16 %v4705, %v4704
        %v4903 = vpack.c.b16 %v4707, %v4706
        %v4904 = vpack.c.b16 %v4709, %v4708
        %v4905 = vpack.c.b16 %v4711, %v4710
        %v4906 = vpack.c.b16 %v4713, %v4712
        %v4907 = vpack.c.b16 %v4715, %v4714
        %v4908 = vpack.c.b16 %v4717, %v4716
        %v4909 = vpack.c.b16 %v4719, %v4718
        %v4910 = vpack.c.b16 %v4721, %v4720
        %v4911 = vpack.c.b16 %v4723, %v4722
        %v4912 = vpack.c.b16 %v4725, %v4724
        %v4913 = vpack.c.b16 %v4727, %v4726
        %v4914 = vpack.c.b16 %v4729, %v4728
        %v4915 = vpack.c.b16 %v4731, %v4730
        %v4916 = vpack.c.b16 %v4733, %v4732
        %v4917 = vpack.c.b16 %v4735, %v4734
        %v4918 = vpack.c.b16 %v4737, %v4736
        %v4919 = vpack.c.b16 %v4739, %v4738
        %v4920 = vpack.c.b16 %v4741, %v4740
        %v4921 = vpack.c.b16 %v4743, %v4742
        %v4922 = vpack.c.b16 %v4745, %v4744
        %v4923 = vpack.c.b16 %v4747, %v4746
        %v4924 = vpack.c.b16 %v4749, %v4748
        %v4925 = vpack.c.b16 %v4751, %v4750
        %v4926 = vpack.c.b16 %v4753, %v4752
        %v4927 = vpack.c.b16 %v4755, %v4754
        %v4928 = vpack.c.b16 %v4757, %v4756
        %v4929 = vpack.c.b16 %v4759, %v4758
        %v4930 = vpack.c.b16 %v4761, %v4760
        %v4931 = vpack.c.b16 %v4763, %v4762
        %v4932 = vpack.c.b16 %v4765, %v4764
        %v4933 = vpack.c.b16 %v4767, %v4766
        %v4934 = vpack.c.b16 %v4769, %v4768
        %v4935 = vpack.c.b16 %v4771, %v4770
        %v4936 = vpack.c.b16 %v4773, %v4772
        %v4937 = vpack.c.b16 %v4775, %v4774
        %v4938 = vpack.c.b16 %v4777, %v4776
        %v4939 = vpack.c.b16 %v4779, %v4778
        %v4940 = vpack.c.b16 %v4781, %v4780
        %v4941 = vpack.c.b16 %v4783, %v4782
        %v4942 = vpack.c.b16 %v4785, %v4784
        %v4943 = vpack.c.b16 %v4787, %v4786
        %v4944 = vpack.c.b16 %v4789, %v4788
        %v4945 = vpack.c.b16 %v4791, %v4790
        %v4946 = vpack.c.b16 %v4793, %v4792
        %v4947 = vpack.c.b16 %v4795, %v4794
        %v4948 = vpack.c.b16 %v4797, %v4796
        %v4949 = vpack.c.b16 %v4799, %v4798
        %v4950 = vpack.c.b16 %v4801, %v4800
        %v4951 = vpack.c.b16 %v4803, %v4802
        %v4952 = vpack.c.b16 %v4805, %v4804
        %v4953 = vpack.c.b16 %v4807, %v4806
        %v4954 = vpack.c.b16 %v4809, %v4808
        %v4955 = vpack.c.b16 %v4811, %v4810
        %v4956 = vpack.c.b16 %v4813, %v4812
        %v4957 = vpack.c.b16 %v4815, %v4814
        %v4958 = vpack.c.b16 %v4817, %v4816
        %v4959 = vpack.c.b16 %v4819, %v4818
        %v4960 = vpack.c.b16 %v4821, %v4820
        %v4961 = vpack.c.b16 %v4823, %v4822
        %v4962 = vpack.c.b16 %v4825, %v4824
        %v4963 = vpack.c.b16 %v4827, %v4826
        %v4964 = vpack.c.b16 %v4829, %v4828
        %v4965 = vpack.c.b16 %v4831, %v4830
        %v4966 = vpack.c.b16 %v4833, %v4832
        %v4967 = vpack.c.b16 %v4835, %v4834
        %v4968 = vpack.c.b16 %v4837, %v4836
        %v4969 = vpack.c.b16 %v4839, %v4838
        %v4970 = vpack.c.b16 %v4841, %v4840
        %v4971 = vpack.c.b16 %v4843, %v4842
        %5100 = vmatprep.subr.bf16.mxu0 0
        %5101 = vmatpush1.bf16.msra.mxu0 %v4844
        %5102 = vmatprep.subr.bf16.mxu0 0
        %5103 = vmatpush1.bf16.msra.mxu0 %v4845
        %5104 = vmatprep.subr.bf16.mxu0 0
        %5105 = vmatpush1.bf16.msra.mxu0 %v4846
        %5106 = vmatprep.subr.bf16.mxu0 0
        %5107 = vmatpush1.bf16.msra.mxu0 %v4847
        %5108 = vmatprep.subr.bf16.mxu0 0
        %5109 = vmatpush1.bf16.msra.mxu0 %v4848
        %5110 = vmatprep.subr.bf16.mxu0 0
        %5111 = vmatpush1.bf16.msra.mxu0 %v4849
        %5112 = vmatprep.subr.bf16.mxu0 0
        %5113 = vmatpush1.bf16.msra.mxu0 %v4850
        %5114 = vmatprep.subr.bf16.mxu0 0
        %5115 = vmatpush1.bf16.msra.mxu0 %v4851
        %5116 = vmatprep.subr.bf16.mxu0 0
        %5117 = vmatpush1.bf16.msra.mxu0 %v4852
        %5118 = vmatprep.subr.bf16.mxu0 0
        %5119 = vmatpush1.bf16.msra.mxu0 %v4853
        %5120 = vmatprep.subr.bf16.mxu0 0
        %5121 = vmatpush1.bf16.msra.mxu0 %v4854
        %5122 = vmatprep.subr.bf16.mxu0 0
        %5123 = vmatpush1.bf16.msra.mxu0 %v4855
        %5124 = vmatprep.subr.bf16.mxu0 0
        %5125 = vmatpush1.bf16.msra.mxu0 %v4856
        %5126 = vmatprep.subr.bf16.mxu0 0
        %5127 = vmatpush1.bf16.msra.mxu0 %v4857
        %5128 = vmatprep.subr.bf16.mxu0 0
        %5129 = vmatpush1.bf16.msra.mxu0 %v4858
        %5130 = vmatprep.subr.bf16.mxu0 0
        %5131 = vmatpush1.bf16.msra.mxu0 %v4859
        %5132 = vmatprep.mubr.bf16.mxu0 %v4311
        %5133 = vmatmul.mubr.bf16.gmra.mrb[0].mxu0 %v4310
        %v5134 = vpop.f32.mrb[0].mxu0
        %v5135 = vadd.f32 %v4330, %v5134
        %v5136 = vpop.f32.mrb[0].mxu0
        %v5137 = vpop.f32.mrb[0].mxu0
        %v5138 = vpop.f32.mrb[0].mxu0
        %5139 = vdwg.mxu0
        %5140 = vmatprep.subr.bf16.mxu0 0
        %5141 = vmatpush1.bf16.msra.mxu0 %v4860
        %5142 = vmatprep.subr.bf16.mxu0 0
        %5143 = vmatpush1.bf16.msra.mxu0 %v4861
        %5144 = vmatprep.subr.bf16.mxu0 0
        %5145 = vmatpush1.bf16.msra.mxu0 %v4862
        %5146 = vmatprep.subr.bf16.mxu0 0
        %5147 = vmatpush1.bf16.msra.mxu0 %v4863
        %5148 = vmatprep.subr.bf16.mxu0 0
        %5149 = vmatpush1.bf16.msra.mxu0 %v4864
        %5150 = vmatprep.subr.bf16.mxu0 0
        %5151 = vmatpush1.bf16.msra.mxu0 %v4865
        %5152 = vmatprep.subr.bf16.mxu0 0
        %5153 = vmatpush1.bf16.msra.mxu0 %v4866
        %5154 = vmatprep.subr.bf16.mxu0 0
        %5155 = vmatpush1.bf16.msra.mxu0 %v4867
        %5156 = vmatprep.subr.bf16.mxu0 0
        %5157 = vmatpush1.bf16.msra.mxu0 %v4868
        %5158 = vmatprep.subr.bf16.mxu0 0
        %5159 = vmatpush1.bf16.msra.mxu0 %v4869
        %5160 = vmatprep.subr.bf16.mxu0 0
        %5161 = vmatpush1.bf16.msra.mxu0 %v4870
        %5162 = vmatprep.subr.bf16.mxu0 0
        %5163 = vmatpush1.bf16.msra.mxu0 %v4871
        %5164 = vmatprep.subr.bf16.mxu0 0
        %5165 = vmatpush1.bf16.msra.mxu0 %v4872
        %5166 = vmatprep.subr.bf16.mxu0 0
        %5167 = vmatpush1.bf16.msra.mxu0 %v4873
        %5168 = vmatprep.subr.bf16.mxu0 0
        %5169 = vmatpush1.bf16.msra.mxu0 %v4874
        %5170 = vmatprep.subr.bf16.mxu0 0
        %5171 = vmatpush1.bf16.msra.mxu0 %v4875
        %5172 = vmatprep.mubr.bf16.mxu0 %v4313
        %5173 = vmatmul.mubr.bf16.gmra.mrb[0].mxu0 %v4312
        %v5174 = vpop.f32.mrb[0].mxu0
        %v5175 = vadd.f32 %v5135, %v5174
        %v5176 = vpop.f32.mrb[0].mxu0
        %v5177 = vpop.f32.mrb[0].mxu0
        %v5178 = vpop.f32.mrb[0].mxu0
        %5179 = vdwg.mxu0
        %5180 = vmatprep.subr.bf16.mxu0 0
        %5181 = vmatpush1.bf16.msra.mxu0 %v4876
        %5182 = vmatprep.subr.bf16.mxu0 0
        %5183 = vmatpush1.bf16.msra.mxu0 %v4877
        %5184 = vmatprep.subr.bf16.mxu0 0
        %5185 = vmatpush1.bf16.msra.mxu0 %v4878
        %5186 = vmatprep.subr.bf16.mxu0 0
        %5187 = vmatpush1.bf16.msra.mxu0 %v4879
        %5188 = vmatprep.subr.bf16.mxu0 0
        %5189 = vmatpush1.bf16.msra.mxu0 %v4880
        %5190 = vmatprep.subr.bf16.mxu0 0
        %5191 = vmatpush1.bf16.msra.mxu0 %v4881
        %5192 = vmatprep.subr.bf16.mxu0 0
        %5193 = vmatpush1.bf16.msra.mxu0 %v4882
        %5194 = vmatprep.subr.bf16.mxu0 0
        %5195 = vmatpush1.bf16.msra.mxu0 %v4883
        %5196 = vmatprep.subr.bf16.mxu0 0
        %5197 = vmatpush1.bf16.msra.mxu0 %v4884
        %5198 = vmatprep.subr.bf16.mxu0 0
        %5199 = vmatpush1.bf16.msra.mxu0 %v4885
        %5200 = vmatprep.subr.bf16.mxu0 0
        %5201 = vmatpush1.bf16.msra.mxu0 %v4886
        %5202 = vmatprep.subr.bf16.mxu0 0
        %5203 = vmatpush1.bf16.msra.mxu0 %v4887
        %5204 = vmatprep.subr.bf16.mxu0 0
        %5205 = vmatpush1.bf16.msra.mxu0 %v4888
        %5206 = vmatprep.subr.bf16.mxu0 0
        %5207 = vmatpush1.bf16.msra.mxu0 %v4889
        %5208 = vmatprep.subr.bf16.mxu0 0
        %5209 = vmatpush1.bf16.msra.mxu0 %v4890
        %5210 = vmatprep.subr.bf16.mxu0 0
        %5211 = vmatpush1.bf16.msra.mxu0 %v4891
        %5212 = vmatprep.mubr.bf16.mxu0 %v4315
        %5213 = vmatmul.mubr.bf16.gmra.mrb[0].mxu0 %v4314
        %v5214 = vpop.f32.mrb[0].mxu0
        %v5215 = vadd.f32 %v5175, %v5214
        %v5216 = vpop.f32.mrb[0].mxu0
        %v5217 = vpop.f32.mrb[0].mxu0
        %v5218 = vpop.f32.mrb[0].mxu0
        %5219 = vdwg.mxu0
        %5220 = vmatprep.subr.bf16.mxu0 0
        %5221 = vmatpush1.bf16.msra.mxu0 %v4892
        %5222 = vmatprep.subr.bf16.mxu0 0
        %5223 = vmatpush1.bf16.msra.mxu0 %v4893
        %5224 = vmatprep.subr.bf16.mxu0 0
        %5225 = vmatpush1.bf16.msra.mxu0 %v4894
        %5226 = vmatprep.subr.bf16.mxu0 0
        %5227 = vmatpush1.bf16.msra.mxu0 %v4895
        %5228 = vmatprep.subr.bf16.mxu0 0
        %5229 = vmatpush1.bf16.msra.mxu0 %v4896
        %5230 = vmatprep.subr.bf16.mxu0 0
        %5231 = vmatpush1.bf16.msra.mxu0 %v4897
        %5232 = vmatprep.subr.bf16.mxu0 0
        %5233 = vmatpush1.bf16.msra.mxu0 %v4898
        %5234 = vmatprep.subr.bf16.mxu0 0
        %5235 = vmatpush1.bf16.msra.mxu0 %v4899
        %5236 = vmatprep.subr.bf16.mxu0 0
        %5237 = vmatpush1.bf16.msra.mxu0 %v4900
        %5238 = vmatprep.subr.bf16.mxu0 0
        %5239 = vmatpush1.bf16.msra.mxu0 %v4901
        %5240 = vmatprep.subr.bf16.mxu0 0
        %5241 = vmatpush1.bf16.msra.mxu0 %v4902
        %5242 = vmatprep.subr.bf16.mxu0 0
        %5243 = vmatpush1.bf16.msra.mxu0 %v4903
        %5244 = vmatprep.subr.bf16.mxu0 0
        %5245 = vmatpush1.bf16.msra.mxu0 %v4904
        %5246 = vmatprep.subr.bf16.mxu0 0
        %5247 = vmatpush1.bf16.msra.mxu0 %v4905
        %5248 = vmatprep.subr.bf16.mxu0 0
        %5249 = vmatpush1.bf16.msra.mxu0 %v4906
        %5250 = vmatprep.subr.bf16.mxu0 0
        %5251 = vmatpush1.bf16.msra.mxu0 %v4907
        %5252 = vmatprep.mubr.bf16.mxu0 %v4317
        %5253 = vmatmul.mubr.bf16.gmra.mrb[0].mxu0 %v4316
        %v5254 = vpop.f32.mrb[0].mxu0
        %v5255 = vadd.f32 %v5215, %v5254
        %v5256 = vpop.f32.mrb[0].mxu0
        %v5257 = vpop.f32.mrb[0].mxu0
        %v5258 = vpop.f32.mrb[0].mxu0
        %5259 = vdwg.mxu0
        %5260 = vmatprep.subr.bf16.mxu0 0
        %5261 = vmatpush1.bf16.msra.mxu0 %v4908
        %5262 = vmatprep.subr.bf16.mxu0 0
        %5263 = vmatpush1.bf16.msra.mxu0 %v4909
        %5264 = vmatprep.subr.bf16.mxu0 0
        %5265 = vmatpush1.bf16.msra.mxu0 %v4910
        %5266 = vmatprep.subr.bf16.mxu0 0
        %5267 = vmatpush1.bf16.msra.mxu0 %v4911
        %5268 = vmatprep.subr.bf16.mxu0 0
        %5269 = vmatpush1.bf16.msra.mxu0 %v4912
        %5270 = vmatprep.subr.bf16.mxu0 0
        %5271 = vmatpush1.bf16.msra.mxu0 %v4913
        %5272 = vmatprep.subr.bf16.mxu0 0
        %5273 = vmatpush1.bf16.msra.mxu0 %v4914
        %5274 = vmatprep.subr.bf16.mxu0 0
        %5275 = vmatpush1.bf16.msra.mxu0 %v4915
        %5276 = vmatprep.subr.bf16.mxu0 0
        %5277 = vmatpush1.bf16.msra.mxu0 %v4916
        %5278 = vmatprep.subr.bf16.mxu0 0
        %5279 = vmatpush1.bf16.msra.mxu0 %v4917
        %5280 = vmatprep.subr.bf16.mxu0 0
        %5281 = vmatpush1.bf16.msra.mxu0 %v4918
        %5282 = vmatprep.subr.bf16.mxu0 0
        %5283 = vmatpush1.bf16.msra.mxu0 %v4919
        %5284 = vmatprep.subr.bf16.mxu0 0
        %5285 = vmatpush1.bf16.msra.mxu0 %v4920
        %5286 = vmatprep.subr.bf16.mxu0 0
        %5287 = vmatpush1.bf16.msra.mxu0 %v4921
        %5288 = vmatprep.subr.bf16.mxu0 0
        %5289 = vmatpush1.bf16.msra.mxu0 %v4922
        %5290 = vmatprep.subr.bf16.mxu0 0
        %5291 = vmatpush1.bf16.msra.mxu0 %v4923
        %5292 = vmatprep.mubr.bf16.mxu0 %v4319
        %5293 = vmatmul.mubr.bf16.gmra.mrb[0].mxu0 %v4318
        %v5294 = vpop.f32.mrb[0].mxu0
        %v5295 = vadd.f32 %v5255, %v5294
        %v5296 = vpop.f32.mrb[0].mxu0
        %v5297 = vpop.f32.mrb[0].mxu0
        %v5298 = vpop.f32.mrb[0].mxu0
        %5299 = vdwg.mxu0
        %5300 = vmatprep.subr.bf16.mxu0 0
        %5301 = vmatpush1.bf16.msra.mxu0 %v4924
        %5302 = vmatprep.subr.bf16.mxu0 0
        %5303 = vmatpush1.bf16.msra.mxu0 %v4925
        %5304 = vmatprep.subr.bf16.mxu0 0
        %5305 = vmatpush1.bf16.msra.mxu0 %v4926
        %5306 = vmatprep.subr.bf16.mxu0 0
        %5307 = vmatpush1.bf16.msra.mxu0 %v4927
        %5308 = vmatprep.subr.bf16.mxu0 0
        %5309 = vmatpush1.bf16.msra.mxu0 %v4928
        %5310 = vmatprep.subr.bf16.mxu0 0
        %5311 = vmatpush1.bf16.msra.mxu0 %v4929
        %5312 = vmatprep.subr.bf16.mxu0 0
        %5313 = vmatpush1.bf16.msra.mxu0 %v4930
        %5314 = vmatprep.subr.bf16.mxu0 0
        %5315 = vmatpush1.bf16.msra.mxu0 %v4931
        %5316 = vmatprep.subr.bf16.mxu0 0
        %5317 = vmatpush1.bf16.msra.mxu0 %v4932
        %5318 = vmatprep.subr.bf16.mxu0 0
        %5319 = vmatpush1.bf16.msra.mxu0 %v4933
        %5320 = vmatprep.subr.bf16.mxu0 0
        %5321 = vmatpush1.bf16.msra.mxu0 %v4934
        %5322 = vmatprep.subr.bf16.mxu0 0
        %5323 = vmatpush1.bf16.msra.mxu0 %v4935
        %5324 = vmatprep.subr.bf16.mxu0 0
        %5325 = vmatpush1.bf16.msra.mxu0 %v4936
        %5326 = vmatprep.subr.bf16.mxu0 0
        %5327 = vmatpush1.bf16.msra.mxu0 %v4937
        %5328 = vmatprep.subr.bf16.mxu0 0
        %5329 = vmatpush1.bf16.msra.mxu0 %v4938
        %5330 = vmatprep.subr.bf16.mxu0 0
        %5331 = vmatpush1.bf16.msra.mxu0 %v4939
        %5332 = vmatprep.mubr.bf16.mxu0 %v4321
        %5333 = vmatmul.mubr.bf16.gmra.mrb[0].mxu0 %v4320
        %v5334 = vpop.f32.mrb[0].mxu0
        %v5335 = vadd.f32 %v5295, %v5334
        %v5336 = vpop.f32.mrb[0].mxu0
        %v5337 = vpop.f32.mrb[0].mxu0
        %v5338 = vpop.f32.mrb[0].mxu0
        %5339 = vdwg.mxu0
        %5340 = vmatprep.subr.bf16.mxu0 0
        %5341 = vmatpush1.bf16.msra.mxu0 %v4940
        %5342 = vmatprep.subr.bf16.mxu0 0
        %5343 = vmatpush1.bf16.msra.mxu0 %v4941
        %5344 = vmatprep.subr.bf16.mxu0 0
        %5345 = vmatpush1.bf16.msra.mxu0 %v4942
        %5346 = vmatprep.subr.bf16.mxu0 0
        %5347 = vmatpush1.bf16.msra.mxu0 %v4943
        %5348 = vmatprep.subr.bf16.mxu0 0
        %5349 = vmatpush1.bf16.msra.mxu0 %v4944
        %5350 = vmatprep.subr.bf16.mxu0 0
        %5351 = vmatpush1.bf16.msra.mxu0 %v4945
        %5352 = vmatprep.subr.bf16.mxu0 0
        %5353 = vmatpush1.bf16.msra.mxu0 %v4946
        %5354 = vmatprep.subr.bf16.mxu0 0
        %5355 = vmatpush1.bf16.msra.mxu0 %v4947
        %5356 = vmatprep.subr.bf16.mxu0 0
        %5357 = vmatpush1.bf16.msra.mxu0 %v4948
        %5358 = vmatprep.subr.bf16.mxu0 0
        %5359 = vmatpush1.bf16.msra.mxu0 %v4949
        %5360 = vmatprep.subr.bf16.mxu0 0
        %5361 = vmatpush1.bf16.msra.mxu0 %v4950
        %5362 = vmatprep.subr.bf16.mxu0 0
        %5363 = vmatpush1.bf16.msra.mxu0 %v4951
        %5364 = vmatprep.subr.bf16.mxu0 0
        %5365 = vmatpush1.bf16.msra.mxu0 %v4952
        %5366 = vmatprep.subr.bf16.mxu0 0
        %5367 = vmatpush1.bf16.msra.mxu0 %v4953
        %5368 = vmatprep.subr.bf16.mxu0 0
        %5369 = vmatpush1.bf16.msra.mxu0 %v4954
        %5370 = vmatprep.subr.bf16.mxu0 0
        %5371 = vmatpush1.bf16.msra.mxu0 %v4955
        %5372 = vmatprep.mubr.bf16.mxu0 %v4323
        %5373 = vmatmul.mubr.bf16.gmra.mrb[0].mxu0 %v4322
        %v5374 = vpop.f32.mrb[0].mxu0
        %v5375 = vadd.f32 %v5335, %v5374
        %v5376 = vpop.f32.mrb[0].mxu0
        %v5377 = vpop.f32.mrb[0].mxu0
        %v5378 = vpop.f32.mrb[0].mxu0
        %5379 = vdwg.mxu0
        %5380 = vmatprep.subr.bf16.mxu0 0
        %5381 = vmatpush1.bf16.msra.mxu0 %v4956
        %5382 = vmatprep.subr.bf16.mxu0 0
        %5383 = vmatpush1.bf16.msra.mxu0 %v4957
        %5384 = vmatprep.subr.bf16.mxu0 0
        %5385 = vmatpush1.bf16.msra.mxu0 %v4958
        %5386 = vmatprep.subr.bf16.mxu0 0
        %5387 = vmatpush1.bf16.msra.mxu0 %v4959
        %5388 = vmatprep.subr.bf16.mxu0 0
        %5389 = vmatpush1.bf16.msra.mxu0 %v4960
        %5390 = vmatprep.subr.bf16.mxu0 0
        %5391 = vmatpush1.bf16.msra.mxu0 %v4961
        %5392 = vmatprep.subr.bf16.mxu0 0
        %5393 = vmatpush1.bf16.msra.mxu0 %v4962
        %5394 = vmatprep.subr.bf16.mxu0 0
        %5395 = vmatpush1.bf16.msra.mxu0 %v4963
        %5396 = vmatprep.subr.bf16.mxu0 0
        %5397 = vmatpush1.bf16.msra.mxu0 %v4964
        %5398 = vmatprep.subr.bf16.mxu0 0
        %5399 = vmatpush1.bf16.msra.mxu0 %v4965
        %5400 = vmatprep.subr.bf16.mxu0 0
        %5401 = vmatpush1.bf16.msra.mxu0 %v4966
        %5402 = vmatprep.subr.bf16.mxu0 0
        %5403 = vmatpush1.bf16.msra.mxu0 %v4967
        %5404 = vmatprep.subr.bf16.mxu0 0
        %5405 = vmatpush1.bf16.msra.mxu0 %v4968
        %5406 = vmatprep.subr.bf16.mxu0 0
        %5407 = vmatpush1.bf16.msra.mxu0 %v4969
        %5408 = vmatprep.subr.bf16.mxu0 0
        %5409 = vmatpush1.bf16.msra.mxu0 %v4970
        %5410 = vmatprep.subr.bf16.mxu0 0
        %5411 = vmatpush1.bf16.msra.mxu0 %v4971
        %5412 = vmatprep.mubr.bf16.mxu0 %v4325
        %5413 = vmatmul.mubr.bf16.gmra.mrb[0].mxu0 %v4324
        %v5414 = vpop.f32.mrb[0].mxu0
        %v5415 = vadd.f32 %v5375, %v5414
        %v5416 = vpop.f32.mrb[0].mxu0
        %v5417 = vpop.f32.mrb[0].mxu0
        %v5418 = vpop.f32.mrb[0].mxu0
        %5419 = vdwg.mxu0
        %v5420 = vadd.f32 %v2855, %v5415
        %v5421 = vld [vmem:[%s1126] sm:$0x1]
        %v5422 = vld [vmem:[%s1129] sm:$0x1]
        %v5423 = vsel %vm1425, %v5420, 0.0
        %5424 = vadd.xlane.f32.xlu0 %v5423
        %v5425 = vpop.xlane.xlu0 %5424
        %v5426 = vmul.f32 %v5425, 0.03125
        %v5427 = vsub.f32 %v5420, %v5426
        %v5428 = vsel %vm1445, %v5427, 0.0
        %v5429 = vmul.f32 %v5428, %v5428
        %v5430 = vsel %vm1425, %v5429, 0.0
        %5431 = vadd.xlane.f32.xlu0 %v5430
        %v5432 = vpop.xlane.xlu0 %5431
        %v5433 = vmul.f32 %v5432, 0.03125
        %v5434 = vadd.f32 %v5433, 1e-05
        %v5435 = vrsqrt.pop %v5434
        %v5436 = vmul.f32 %v5428, %v5435
        %v5438 = vlaneseq
        %v5439 = vshrl.u32 %v5438, 7
        %v5440 = vsub.s32 0, %v5439
        %v5441 = vrot.slane %v5421, %v5440
        %v5443 = vmul.f32 %v5436, %v5441
        %v5445 = vlaneseq
        %v5446 = vshrl.u32 %v5445, 7
        %v5447 = vsub.s32 0, %v5446
        %v5448 = vrot.slane %v5422, %v5447
        %v5450 = vadd.f32 %v5443, %v5448
        %p5451 = scmp.eq.s32.totalorder %s47, 5
        %p5452 = scmp.ne.s32.totalorder %s47, 5
        // Predicated region
        $region129: #{transformer_model_forward.3} parent=115 // pred_check
          %p5453 = pneg %p5452
        $region130: #{transformer_model_forward.3} parent=115 // pred_check_branch
          %5455 = sbr.rel (%p5453) target = $region132
        $region131: #{transformer_model_forward.3} parent=115 // pred_region
          %v5458 = vunpack.c.l.s4 1966171168
          %v5459 = vunpack.c.0.s8 %v5458
          %v5460 = vlaneseq
          %v5461 = vshrl.u32 %v5460, 7
          %v5462 = vsub.s32 %v5459, %v5461
          %v5463 = vrot.slane %v5450, %v5462
          %v5464 = vcombine.high %v5463, %v5463
          %v5466 = vunpack.c.l.s4 1966171168
          %v5467 = vunpack.c.0.s8 %v5466
          %v5468 = vlaneseq
          %v5469 = vshrl.u32 %v5468, 7
          %v5470 = vsub.s32 %v5467, %v5469
          %v5471 = vrot.slane %v5463, %v5470
          %v5473 = vunpack.c.l.s4 1966171168
          %v5474 = vunpack.c.0.s8 %v5473
          %v5475 = vlaneseq
          %v5476 = vshrl.u32 %v5475, 7
          %v5477 = vsub.s32 %v5474, %v5476
          %v5478 = vrot.slane %v5464, %v5477
          %5481 = vst [vmem:[#allocation7] sm:$0x1] %v5471
          %5482 = vst [vmem:[#allocation7 + $0x1] sm:$0x1] %v5478
        $region132: #{transformer_model_forward.3} parent=115 // pred_fallthru
          _
        // Predicated region
        $region133: #{transformer_model_forward.3} parent=115 // pred_check
          %p5483 = pneg %p5451
        $region134: #{transformer_model_forward.3} parent=115 // pred_check_branch
          %5485 = sbr.rel (%p5483) target = $region136
        $region135: #{transformer_model_forward.3} parent=115 // pred_region
          %v5486 = vld [vmem:[%s22] sm:$0x1]
          %v5487 = vld [vmem:[%s23] sm:$0x1]
          %v5488 = vsel %vm1425, %v5450, 0.0
          %5489 = vadd.xlane.f32.xlu0 %v5488
          %v5490 = vpop.xlane.xlu0 %5489
          %v5491 = vmul.f32 %v5490, 0.03125
          %v5492 = vsub.f32 %v5450, %v5491
          %v5493 = vsel %vm1445, %v5492, 0.0
          %v5494 = vmul.f32 %v5493, %v5493
          %v5495 = vsel %vm1425, %v5494, 0.0
          %5496 = vadd.xlane.f32.xlu0 %v5495
          %v5497 = vpop.xlane.xlu0 %5496
          %v5498 = vmul.f32 %v5497, 0.03125
          %v5499 = vadd.f32 %v5498, 1e-05
          %v5500 = vrsqrt.pop %v5499
          %v5501 = vmul.f32 %v5493, %v5500
          %v5503 = vlaneseq
          %v5504 = vshrl.u32 %v5503, 7
          %v5505 = vsub.s32 0, %v5504
          %v5506 = vrot.slane %v5486, %v5505
          %v5508 = vmul.f32 %v5501, %v5506
          %v5510 = vlaneseq
          %v5511 = vshrl.u32 %v5510, 7
          %v5512 = vsub.s32 0, %v5511
          %v5513 = vrot.slane %v5487, %v5512
          %v5515 = vadd.f32 %v5508, %v5513
          %v5518 = vunpack.c.l.s4 1966171168
          %v5519 = vunpack.c.0.s8 %v5518
          %v5520 = vlaneseq
          %v5521 = vshrl.u32 %v5520, 7
          %v5522 = vsub.s32 %v5519, %v5521
          %v5523 = vrot.slane %v5515, %v5522
          %v5524 = vcombine.high %v5523, %v5523
          %v5526 = vunpack.c.l.s4 1966171168
          %v5527 = vunpack.c.0.s8 %v5526
          %v5528 = vlaneseq
          %v5529 = vshrl.u32 %v5528, 7
          %v5530 = vsub.s32 %v5527, %v5529
          %v5531 = vrot.slane %v5523, %v5530
          %v5533 = vunpack.c.l.s4 1966171168
          %v5534 = vunpack.c.0.s8 %v5533
          %v5535 = vlaneseq
          %v5536 = vshrl.u32 %v5535, 7
          %v5537 = vsub.s32 %v5534, %v5536
          %v5538 = vrot.slane %v5524, %v5537
          %5541 = vst [vmem:[#allocation7] sm:$0x1] %v5531
          %5542 = vst [vmem:[#allocation7 + $0x1] sm:$0x1] %v5538
        $region136: #{transformer_model_forward.3} parent=115 // pred_fallthru
          _
        // Predicated region
        $region137: #{transformer_model_forward.3} parent=115 // pred_check
          %p5543 = pneg %p686
        $region138: #{transformer_model_forward.3} parent=115 // pred_check_branch
          %5545 = sbr.rel (%p5543) target = $region140
        $region139: #{transformer_model_forward.3} parent=115 // pred_region
          %s5546 = smul.u32 2, %s46
          %s5548 = ssub.s32 32, 32
          %5549 = vsyncadd [#allocation4], %s5548
          %s5550 = smul.addr %s5546, 16
          %s5551 = scalar_lea.hbm %s24, %s5550
          %s5552 = sshll.u32 [#allocation7], 4
          %s5553 = int_to_ptr.vmem [resolvable:$true] %s5552
          %5558 = dma.vmem_to_hbm [thread:$0]  %s5553, 32, %s5551, [#allocation4], 16, 16, 1
        $region140: #{transformer_model_forward.3} parent=115 // pred_fallthru
          _
        // Predicated region
        $region141: #{transformer_model_forward.3} parent=115 // pred_check
          %p5559 = pneg %p686
        $region142: #{transformer_model_forward.3} parent=115 // pred_check_branch
          %5561 = sbr.rel (%p5559) target = $region144
        $region143: #{transformer_model_forward.3} parent=115 // pred_region
          %5562 = dma.done [#allocation4], 32
        $region144: #{transformer_model_forward.3} parent=115 // pred_fallthru
          _
      $region116: #{transformer_model_forward.3} parent=5 // pred_fallthru
        _
      %p5563 = scmp.le.s32.totalorder 2, %s37
      // Predicated region
      $region145: #{transformer_model_forward.3} parent=5 // pred_check
        %p5564 = pneg %p5563
      $region146: #{transformer_model_forward.3} parent=5 // pred_check_branch
        %5566 = sbr.rel (%p5564) target = $region148
      $region147: #{transformer_model_forward.3} parent=5 // pred_region
        %s5567 = ssub.s32 %s37, 2
      $region148: #{transformer_model_forward.3} parent=5 // pred_fallthru
        _
    $region6: #{transformer_model_forward.3} parent=1 // loop_footer
      %s41 = sadd.s32 1, %s37
    $region7: #{transformer_model_forward.3} parent=1 // loop_footer_branch
      %36 = sbr.rel target = $region3
    $region8: #{transformer_model_forward.3} parent=1 // loop_exit
      _
    %5568 = vsyncpa [#allocation3], 1
    %s5569 = scalar_lea.sflag [#allocation3], 1
    %5570 = vsyncpa %s5569, 1
    %5571 = vsyncpa [#allocation6], 1
    %s5572 = scalar_lea.sflag [#allocation6], 1
    %5573 = vsyncpa %s5572, 1
    %5574 = vsyncpa [#allocation4], 1
    %s5575 = scalar_lea.sflag [#allocation4], 1
    %5576 = vsyncpa %s5575, 1

</llo_original>
